<compile_context>
chip_gen: v6e
topology: v6e:2x2x1
jax: 0.10.0
libtpu: 0.0.40
codegen_flags: <defaults>
</compile_context>

<pallas_src>
import numpy as np
import jax
import jax.numpy as jnp
from jax import lax
from jax.experimental import pallas as pl
from jax.experimental.pallas import tpu as pltpu


def _round_up(x, m):
    return (x + m - 1) // m * m


def _pick_tile_rows(h, cap):
    # Largest divisor of H that is <= cap (keeps the grid exact).
    for th in range(min(h, cap), 0, -1):
        if h % th == 0:
            return th
    return h


def _conv3x3_im2col(src, w_ref, hn, wn):
    """3x3 'valid' conv over `src` as 3 accumulated MXU matmuls (one per kernel row).

    src:   (hn+2, >=wn+2, C) bf16 spatial view (1-px halo already present).
    w_ref: (9*C, Cout) bf16 ref, rows ordered (ky, kx, ci) -- BN scale pre-folded.
    Returns (hn*wn, Cout) f32 accumulator.
    """
    c = src.shape[-1]
    k3 = 3 * c
    acc = jnp.zeros((hn * wn, w_ref.shape[-1]), jnp.float32)
    for ky in range(3):
        # K = 3*C (>= 384 once C is lane-padded) already fills the MXU depth; only
        # a (hn*wn, 3*C) patch is materialized at a time instead of the 9*C slab.
        patch = jnp.concatenate(
            [src[ky:ky + hn, kx:kx + wn, :].reshape(hn * wn, c) for kx in range(3)],
            axis=-1)
        acc = acc + jnp.dot(patch, w_ref[ky * k3:(ky + 1) * k3, :],
                            preferred_element_type=jnp.float32)
    return acc


def basic_block_kernel(x_hbm, w1_ref, b1_ref, w2_ref, b2_ref, o_ref,
                       xt_ref, copy_sem):
    # x_hbm:  (N, H+4, Wp, Cp) bf16 pre-padded activations, left in HBM (pl.ANY).
    # w*_ref: (9*Cp, Cp) bf16 conv taps with eval-BN scale folded in (resident).
    # b*_ref: (1, Cp)  f32 folded eval-BN bias.
    # o_ref:  (1, TH, W, Cp) bf16 output tile.
    # xt_ref: (TH+4, Wp, Cp) bf16 VMEM scratch for the haloed input slab.
    n = pl.program_id(0)
    i = pl.program_id(1)
    thp, wp, cpad = xt_ref.shape
    th = thp - 4
    w = o_ref.shape[2]
    ho, wo = th + 2, w + 2            # conv1 is evaluated on a 1-px halo grid

    # ---- halo fetch: TH+4 padded rows starting at padded row i*TH --------------
    dma = pltpu.make_async_copy(x_hbm.at[n, pl.ds(i * th, thp)], xt_ref, copy_sem)
    dma.start()
    dma.wait()
    xt = xt_ref[...]

    # ---- conv1 (+ folded bn1) + ReLU on the (TH+2)x(W+2) halo grid --------------
    acc1 = _conv3x3_im2col(xt, w1_ref, ho, wo)                   # (ho*wo, Cp) f32
    out1 = jnp.maximum(acc1 + b1_ref[...], 0.0).reshape(ho, wo, cpad)
    # TODO(synk): training-mode Dropout2d -- per-(image, channel) Bernoulli mask
    # via pltpu.prng_seed / pltpu.prng_random_bits scaled by 1/(1-p); identity at
    # inference, which is what this kernel implements.

    # ---- zero the out1 halo positions that lie outside the image (conv2 pad=1) --
    r = lax.broadcasted_iota(jnp.int32, (ho, wo, 1), 0)
    c = lax.broadcasted_iota(jnp.int32, (ho, wo, 1), 1)
    valid = (c > 0) & (c < wo - 1)                               # left/right cols: always pad
    valid &= (r > 0) | (i != 0)                                  # top row: only at image top
    valid &= (r < ho - 1) | (i != pl.num_programs(1) - 1)        # bottom row: only at image bottom
    out1 = jnp.where(valid, out1, 0.0).astype(xt.dtype)          # bf16 for the MXU

    # ---- conv2 (+ folded bn2) + residual + ReLU --------------------------------
    acc2 = _conv3x3_im2col(out1, w2_ref, th, w)                  # (th*w, Cp) f32
    residual = xt[2:2 + th, 2:2 + w, :].reshape(th * w, cpad).astype(jnp.float32)
    out2 = jnp.maximum(acc2 + b2_ref[...] + residual, 0.0)
    o_ref[...] = out2.reshape(1, th, w, cpad).astype(o_ref.dtype)


def basic_dropout_block(x_nchw, w1, g1, b1, rm1, rv1, w2, g2, b2, rm2, rv2,
                        eps=1e-5, mxu_dtype=jnp.bfloat16, max_tile_rows=8):
    """NCHW in / NCHW out (bf16), matching BasicDropoutBlock eval forward
    (stride=1, no downsample, Dropout2d = identity)."""
    x = jnp.transpose(x_nchw, (0, 2, 3, 1)).astype(jnp.float32)   # NHWC
    n, h, w, c_in = x.shape
    c_out = w1.shape[0]
    assert c_in == c_out, "identity residual requires inplanes == planes (stride=1)"
    c = c_in

    # Lane-pad channels so the im2col concat, the MXU N dim and the output store
    # are lane-dense; sublane-pad the width (2-px halo each side + round to 8).
    cpad = _round_up(c, 128)
    wp = _round_up(w + 4, 8)

    th = _pick_tile_rows(h, max_tile_rows)
    nh = h // th
    # TODO(synk): ragged last H-tile (H % TH != 0) -- currently TH must divide H.

    # ---- fold eval-mode BatchNorm: scale -> weight columns (f32, single bf16
    # ---- cast), mean/bias -> per-channel bias ----------------------------------
    inv1 = 1.0 / jnp.sqrt(rv1.astype(jnp.float32) + eps)
    inv2 = 1.0 / jnp.sqrt(rv2.astype(jnp.float32) + eps)
    s1 = g1.astype(jnp.float32) * inv1
    s2 = g2.astype(jnp.float32) * inv2
    bb1 = b1.astype(jnp.float32) - rm1.astype(jnp.float32) * s1
    bb2 = b2.astype(jnp.float32) - rm2.astype(jnp.float32) * s2

    def fold_weight(wt, s):
        # PyTorch (Cout, Cin, 3, 3) -> (ky, kx, Cin, Cout), * BN scale, channel-pad,
        # flatten taps into the contraction dim: rows ordered (ky, kx, ci).
        wt = jnp.transpose(wt.astype(jnp.float32), (2, 3, 1, 0)) * s[None, None, None, :]
        wt = jnp.pad(wt, ((0, 0), (0, 0), (0, cpad - c), (0, cpad - c)))
        return wt.reshape(9 * cpad, cpad).astype(mxu_dtype)

    w1f = fold_weight(w1, s1)
    w2f = fold_weight(w2, s2)
    b1f = jnp.pad(bb1, (0, cpad - c)).reshape(1, cpad)
    b2f = jnp.pad(bb2, (0, cpad - c)).reshape(1, cpad)

    # Pre-padded bf16 activations (2-row/2-col zero halo + alignment padding).
    # In a real NHWC, 128-aligned pipeline this transpose/pad pass disappears.
    xpad = jnp.pad(x, ((0, 0), (2, 2), (2, wp - w - 2), (0, cpad - c))).astype(mxu_dtype)

    out = pl.pallas_call(
        basic_block_kernel,
        out_shape=jax.ShapeDtypeStruct((n, h, w, cpad), mxu_dtype),   # bf16 writeback
        grid=(n, nh),
        in_specs=[
            pl.BlockSpec(memory_space=pl.ANY),                        # x stays in HBM
            pl.BlockSpec((9 * cpad, cpad), lambda b, i: (0, 0)),      # w1 (resident)
            pl.BlockSpec((1, cpad), lambda b, i: (0, 0)),             # b1
            pl.BlockSpec((9 * cpad, cpad), lambda b, i: (0, 0)),      # w2 (resident)
            pl.BlockSpec((1, cpad), lambda b, i: (0, 0)),             # b2
        ],
        out_specs=pl.BlockSpec((1, th, w, cpad), lambda b, i: (b, i, 0, 0)),
        scratch_shapes=[pltpu.VMEM((th + 4, wp, cpad), mxu_dtype),
                        pltpu.SemaphoreType.DMA],
        compiler_params=pltpu.CompilerParams(
            dimension_semantics=("parallel", "parallel"),
            # <= 32 MiB keeps this plan valid on v7x (64 MiB VMEM per TC); raise
            # together with max_tile_rows on v5e/v6e (128 MiB VMEM).
            vmem_limit_bytes=32 * 1024 * 1024),
    )(xpad, w1f, b1f, w2f, b2f)

    # Drop the channel padding, back to NCHW.  Output stays bf16 by design (the
    # skip connection and the HBM writeback are bf16); cast downstream if needed.
    return jnp.transpose(out[..., :c], (0, 3, 1, 2))


def reference_nchw(x, w1, g1, b1, rm1, rv1, w2, g2, b2, rm2, rv2, eps=1e-5):
    """Pure-JAX f32 reference mirroring the PyTorch forward (eval mode)."""
    def conv3x3(x, w):
        return jax.lax.conv_general_dilated(
            x, w, window_strides=(1, 1), padding=((1, 1), (1, 1)),
            dimension_numbers=('NCHW', 'OIHW', 'NCHW'))

    def bn(x, g, b, rm, rv):
        return (x - rm[None, :, None, None]) / jnp.sqrt(rv + eps)[None, :, None, None] \
               * g[None, :, None, None] + b[None, :, None, None]

    residual = x
    out = conv3x3(x, w1)
    out = bn(out, g1, b1, rm1, rv1)
    out = jnp.maximum(out, 0.0)
    # Dropout2d -> identity (eval)
    out = conv3x3(out, w2)
    out = bn(out, g2, b2, rm2, rv2)
    out = out + residual
    return jnp.maximum(out, 0.0)


if __name__ == "__main__":
    # Small shapes consistent with the module: inplanes = planes = 4, stride = 1.
    N, C, H, W = 2, 4, 16, 16

    key = jax.random.PRNGKey(0)
    k_x, k_w1, k_w2 = jax.random.split(key, 3)

    x = jax.random.normal(k_x, (N, C, H, W), dtype=jnp.float32)
    # conv3x3 weights: (Cout, Cin, 3, 3), no bias (as in the conv3x3 helper).
    w1 = jax.random.normal(k_w1, (C, C, 3, 3), dtype=jnp.float32) * 0.1
    w2 = jax.random.normal(k_w2, (C, C, 3, 3), dtype=jnp.float32) * 0.1

    # Deterministic, non-trivial BatchNorm params / running stats.
    g1 = jnp.linspace(0.5, 1.5, C, dtype=jnp.float32)
    b1 = jnp.linspace(-0.2, 0.2, C, dtype=jnp.float32)
    rm1 = jnp.linspace(-0.1, 0.1, C, dtype=jnp.float32)
    rv1 = jnp.linspace(0.8, 1.2, C, dtype=jnp.float32)

    g2 = jnp.linspace(1.2, 0.6, C, dtype=jnp.float32)
    b2 = jnp.linspace(0.1, -0.1, C, dtype=jnp.float32)
    rm2 = jnp.linspace(0.05, -0.05, C, dtype=jnp.float32)
    rv2 = jnp.linspace(0.9, 1.1, C, dtype=jnp.float32)

    out = basic_dropout_block(x, w1, g1, b1, rm1, rv1, w2, g2, b2, rm2, rv2)
    out = jax.block_until_ready(out)

    ref = reference_nchw(x, w1, g1, b1, rm1, rv1, w2, g2, b2, rm2, rv2)
    ref = jax.block_until_ready(ref)

    assert out.shape == (N, C, H, W)
    # Tolerance reflects bf16 activations/weights/skip/output vs the pure-f32
    # reference (accumulation and elementwise math stay f32 in the kernel).
    np.testing.assert_allclose(np.asarray(out.astype(jnp.float32)), np.asarray(ref),
                               rtol=5e-2, atol=5e-2)
    print("KERNEL_OK")
</pallas_src>

<mosaic_0001>
module attributes {stable_mosaic.version = 11 : i64} {
  func.func @basic_block_kernel(%arg0: i32, %arg1: i32, %arg2: memref<2x20x24x128xbf16, #tpu.memory_space<any>>, %arg3: memref<1152x128xbf16, #tpu.memory_space<vmem>>, %arg4: memref<1x128xf32, #tpu.memory_space<vmem>>, %arg5: memref<1152x128xbf16, #tpu.memory_space<vmem>>, %arg6: memref<1x128xf32, #tpu.memory_space<vmem>>, %arg7: memref<1x8x16x128xbf16, #tpu.memory_space<vmem>>, %arg8: memref<12x24x128xbf16, #tpu.memory_space<vmem>>, %arg9: memref<!tpu.dma_semaphore, #tpu.memory_space<semaphore_mem>>) attributes {dimension_semantics = [#tpu.dimension_semantics<parallel>, #tpu.dimension_semantics<parallel>], iteration_bounds = array<i64: 2, 2>, scalar_prefetch = 0 : i64, scratch_operands = 2 : i64, tpu.core_type = #tpu.core_type<tc>, window_params = [{}, {pipeline_mode = #tpu.pipeline_mode<synchronous>, transform_indices = @transform_1, window_bounds = array<i64: 1152, 128>}, {pipeline_mode = #tpu.pipeline_mode<synchronous>, transform_indices = @transform_2, window_bounds = array<i64: 1, 128>}, {pipeline_mode = #tpu.pipeline_mode<synchronous>, transform_indices = @transform_3, window_bounds = array<i64: 1152, 128>}, {pipeline_mode = #tpu.pipeline_mode<synchronous>, transform_indices = @transform_4, window_bounds = array<i64: 1, 128>}, {transform_indices = @transform_5, window_bounds = array<i64: 1, 8, 16, 128>}]} {
    %c8_i32 = arith.constant 8 : i32
    %0 = arith.muli %arg1, %c8_i32 : i32
    %c0_i32 = arith.constant 0 : i32
    %c0_i32_0 = arith.constant 0 : i32
    %1 = tpu.memref_slice %arg2[%arg0, %0, %c0_i32, %c0_i32_0] : memref<2x20x24x128xbf16, #tpu.memory_space<any>> -> memref<1x12x24x128xbf16, #tpu.memory_space<any>>
    %2 = tpu.memref_squeeze %1 : memref<1x12x24x128xbf16, #tpu.memory_space<any>> -> memref<12x24x128xbf16, #tpu.memory_space<any>>
    tpu.enqueue_dma source(%2 : memref<12x24x128xbf16, #tpu.memory_space<any>>) target(%arg8 : memref<12x24x128xbf16, #tpu.memory_space<vmem>>) target_semaphore(%arg9 : memref<!tpu.dma_semaphore, #tpu.memory_space<semaphore_mem>>)
    %c0_i32_1 = arith.constant 0 : i32
    %c0_i32_2 = arith.constant 0 : i32
    %3 = tpu.memref_slice %arg2[%arg0, %0, %c0_i32_1, %c0_i32_2] : memref<2x20x24x128xbf16, #tpu.memory_space<any>> -> memref<1x12x24x128xbf16, #tpu.memory_space<any>>
    %4 = tpu.memref_squeeze %3 : memref<1x12x24x128xbf16, #tpu.memory_space<any>> -> memref<12x24x128xbf16, #tpu.memory_space<any>>
    tpu.wait_dma2 semaphore(%arg9 : memref<!tpu.dma_semaphore, #tpu.memory_space<semaphore_mem>>) src(%4 : memref<12x24x128xbf16, #tpu.memory_space<any>>) dst(%arg8 : memref<12x24x128xbf16, #tpu.memory_space<vmem>>)
    %c0 = arith.constant 0 : index
    %c0_3 = arith.constant 0 : index
    %c0_4 = arith.constant 0 : index
    %5 = vector.load %arg8[%c0, %c0_3, %c0_4] : memref<12x24x128xbf16, #tpu.memory_space<vmem>>, vector<12x24x128xbf16>
    %cst = arith.constant 0.000000e+00 : f32
    %6 = vector.broadcast %cst : f32 to vector<180x128xf32>
    %7 = vector.extract_strided_slice %5 {offsets = [0, 0, 0], sizes = [10, 18, 128], strides = [1, 1, 1]} : vector<12x24x128xbf16> to vector<10x18x128xbf16>
    %8 = vector.shape_cast %7 : vector<10x18x128xbf16> to vector<180x128xbf16>
    %9 = vector.extract_strided_slice %5 {offsets = [0, 1, 0], sizes = [10, 18, 128], strides = [1, 1, 1]} : vector<12x24x128xbf16> to vector<10x18x128xbf16>
    %10 = vector.shape_cast %9 : vector<10x18x128xbf16> to vector<180x128xbf16>
    %11 = vector.extract_strided_slice %5 {offsets = [0, 2, 0], sizes = [10, 18, 128], strides = [1, 1, 1]} : vector<12x24x128xbf16> to vector<10x18x128xbf16>
    %12 = vector.shape_cast %11 : vector<10x18x128xbf16> to vector<180x128xbf16>
    %13 = tpu.concatenate %8, %10, %12 in 1 : vector<180x128xbf16>, vector<180x128xbf16>, vector<180x128xbf16> -> vector<180x384xbf16>
    %c0_5 = arith.constant 0 : index
    %c0_6 = arith.constant 0 : index
    %14 = vector.load %arg3[%c0_5, %c0_6] : memref<1152x128xbf16, #tpu.memory_space<vmem>>, vector<384x128xbf16>
    %cst_7 = arith.constant dense<0.000000e+00> : vector<180x128xf32>
    %15 = tpu.matmul %13, %14, %cst_7 {dimension_numbers = #tpu.dot_dimension_numbers<[1], [0], [0], [1], [0, 0, 1, 1], [], []>} : vector<180x384xbf16>, vector<384x128xbf16>, vector<180x128xf32> -> vector<180x128xf32>
    %16 = arith.addf %6, %15 : vector<180x128xf32>
    %17 = vector.extract_strided_slice %5 {offsets = [1, 0, 0], sizes = [10, 18, 128], strides = [1, 1, 1]} : vector<12x24x128xbf16> to vector<10x18x128xbf16>
    %18 = vector.shape_cast %17 : vector<10x18x128xbf16> to vector<180x128xbf16>
    %19 = vector.extract_strided_slice %5 {offsets = [1, 1, 0], sizes = [10, 18, 128], strides = [1, 1, 1]} : vector<12x24x128xbf16> to vector<10x18x128xbf16>
    %20 = vector.shape_cast %19 : vector<10x18x128xbf16> to vector<180x128xbf16>
    %21 = vector.extract_strided_slice %5 {offsets = [1, 2, 0], sizes = [10, 18, 128], strides = [1, 1, 1]} : vector<12x24x128xbf16> to vector<10x18x128xbf16>
    %22 = vector.shape_cast %21 : vector<10x18x128xbf16> to vector<180x128xbf16>
    %23 = tpu.concatenate %18, %20, %22 in 1 : vector<180x128xbf16>, vector<180x128xbf16>, vector<180x128xbf16> -> vector<180x384xbf16>
    %c384 = arith.constant 384 : index
    %c0_8 = arith.constant 0 : index
    %24 = vector.load %arg3[%c384, %c0_8] : memref<1152x128xbf16, #tpu.memory_space<vmem>>, vector<384x128xbf16>
    %cst_9 = arith.constant dense<0.000000e+00> : vector<180x128xf32>
    %25 = tpu.matmul %23, %24, %cst_9 {dimension_numbers = #tpu.dot_dimension_numbers<[1], [0], [0], [1], [0, 0, 1, 1], [], []>} : vector<180x384xbf16>, vector<384x128xbf16>, vector<180x128xf32> -> vector<180x128xf32>
    %26 = arith.addf %16, %25 : vector<180x128xf32>
    %27 = vector.extract_strided_slice %5 {offsets = [2, 0, 0], sizes = [10, 18, 128], strides = [1, 1, 1]} : vector<12x24x128xbf16> to vector<10x18x128xbf16>
    %28 = vector.shape_cast %27 : vector<10x18x128xbf16> to vector<180x128xbf16>
    %29 = vector.extract_strided_slice %5 {offsets = [2, 1, 0], sizes = [10, 18, 128], strides = [1, 1, 1]} : vector<12x24x128xbf16> to vector<10x18x128xbf16>
    %30 = vector.shape_cast %29 : vector<10x18x128xbf16> to vector<180x128xbf16>
    %31 = vector.extract_strided_slice %5 {offsets = [2, 2, 0], sizes = [10, 18, 128], strides = [1, 1, 1]} : vector<12x24x128xbf16> to vector<10x18x128xbf16>
    %32 = vector.shape_cast %31 : vector<10x18x128xbf16> to vector<180x128xbf16>
    %33 = tpu.concatenate %28, %30, %32 in 1 : vector<180x128xbf16>, vector<180x128xbf16>, vector<180x128xbf16> -> vector<180x384xbf16>
    %c768 = arith.constant 768 : index
    %c0_10 = arith.constant 0 : index
    %34 = vector.load %arg3[%c768, %c0_10] : memref<1152x128xbf16, #tpu.memory_space<vmem>>, vector<384x128xbf16>
    %cst_11 = arith.constant dense<0.000000e+00> : vector<180x128xf32>
    %35 = tpu.matmul %33, %34, %cst_11 {dimension_numbers = #tpu.dot_dimension_numbers<[1], [0], [0], [1], [0, 0, 1, 1], [], []>} : vector<180x384xbf16>, vector<384x128xbf16>, vector<180x128xf32> -> vector<180x128xf32>
    %36 = arith.addf %26, %35 : vector<180x128xf32>
    %c0_12 = arith.constant 0 : index
    %c0_13 = arith.constant 0 : index
    %37 = vector.load %arg4[%c0_12, %c0_13] : memref<1x128xf32, #tpu.memory_space<vmem>>, vector<1x128xf32>
    %38 = vector.broadcast %37 : vector<1x128xf32> to vector<180x128xf32>
    %39 = arith.addf %36, %38 : vector<180x128xf32>
    %cst_14 = arith.constant 0.000000e+00 : f32
    %40 = vector.broadcast %cst_14 : f32 to vector<180x128xf32>
    %41 = arith.maximumf %39, %40 : vector<180x128xf32>
    %42 = vector.shape_cast %41 : vector<180x128xf32> to vector<10x18x128xf32>
    %43 = tpu.iota {dimensions = array<i32: 0>} : vector<10x18x1xi32>
    %44 = tpu.iota {dimensions = array<i32: 1>} : vector<10x18x1xi32>
    %c0_i32_15 = arith.constant 0 : i32
    %45 = vector.broadcast %c0_i32_15 : i32 to vector<10x18x1xi32>
    %46 = arith.cmpi sgt, %44, %45 : vector<10x18x1xi32>
    %c17_i32 = arith.constant 17 : i32
    %47 = vector.broadcast %c17_i32 : i32 to vector<10x18x1xi32>
    %48 = arith.cmpi slt, %44, %47 : vector<10x18x1xi32>
    %49 = arith.andi %46, %48 : vector<10x18x1xi1>
    %c0_i32_16 = arith.constant 0 : i32
    %50 = vector.broadcast %c0_i32_16 : i32 to vector<10x18x1xi32>
    %51 = arith.cmpi sgt, %43, %50 : vector<10x18x1xi32>
    %c0_i32_17 = arith.constant 0 : i32
    %52 = arith.cmpi ne, %arg1, %c0_i32_17 : i32
    %53 = vector.broadcast %52 : i1 to vector<10x18x1xi1>
    %54 = arith.ori %51, %53 : vector<10x18x1xi1>
    %55 = arith.andi %49, %54 : vector<10x18x1xi1>
    %c9_i32 = arith.constant 9 : i32
    %56 = vector.broadcast %c9_i32 : i32 to vector<10x18x1xi32>
    %57 = arith.cmpi slt, %43, %56 : vector<10x18x1xi32>
    %c1_i32 = arith.constant 1 : i32
    %58 = arith.cmpi ne, %arg1, %c1_i32 : i32
    %59 = vector.broadcast %58 : i1 to vector<10x18x1xi1>
    %60 = arith.ori %57, %59 : vector<10x18x1xi1>
    %61 = arith.andi %55, %60 : vector<10x18x1xi1>
    %cst_18 = arith.constant 0.000000e+00 : f32
    %62 = vector.shape_cast %61 : vector<10x18x1xi1> to vector<10x18x1xi1>
    %63 = vector.broadcast %62 : vector<10x18x1xi1> to vector<10x18x128xi1>
    %64 = vector.broadcast %cst_18 : f32 to vector<10x18x128xf32>
    %65 = arith.select %63, %42, %64 : vector<10x18x128xi1>, vector<10x18x128xf32>
    %66 = arith.truncf %65 : vector<10x18x128xf32> to vector<10x18x128xbf16>
    %cst_19 = arith.constant 0.000000e+00 : f32
    %67 = vector.broadcast %cst_19 : f32 to vector<128x128xf32>
    %68 = vector.extract_strided_slice %66 {offsets = [0, 0, 0], sizes = [8, 16, 128], strides = [1, 1, 1]} : vector<10x18x128xbf16> to vector<8x16x128xbf16>
    %69 = vector.shape_cast %68 : vector<8x16x128xbf16> to vector<128x128xbf16>
    %70 = vector.extract_strided_slice %66 {offsets = [0, 1, 0], sizes = [8, 16, 128], strides = [1, 1, 1]} : vector<10x18x128xbf16> to vector<8x16x128xbf16>
    %71 = vector.shape_cast %70 : vector<8x16x128xbf16> to vector<128x128xbf16>
    %72 = vector.extract_strided_slice %66 {offsets = [0, 2, 0], sizes = [8, 16, 128], strides = [1, 1, 1]} : vector<10x18x128xbf16> to vector<8x16x128xbf16>
    %73 = vector.shape_cast %72 : vector<8x16x128xbf16> to vector<128x128xbf16>
    %74 = tpu.concatenate %69, %71, %73 in 1 : vector<128x128xbf16>, vector<128x128xbf16>, vector<128x128xbf16> -> vector<128x384xbf16>
    %c0_20 = arith.constant 0 : index
    %c0_21 = arith.constant 0 : index
    %75 = vector.load %arg5[%c0_20, %c0_21] : memref<1152x128xbf16, #tpu.memory_space<vmem>>, vector<384x128xbf16>
    %cst_22 = arith.constant dense<0.000000e+00> : vector<128x128xf32>
    %76 = tpu.matmul %74, %75, %cst_22 {dimension_numbers = #tpu.dot_dimension_numbers<[1], [0], [0], [1], [0, 0, 1, 1], [], []>} : vector<128x384xbf16>, vector<384x128xbf16>, vector<128x128xf32> -> vector<128x128xf32>
    %77 = arith.addf %67, %76 : vector<128x128xf32>
    %78 = vector.extract_strided_slice %66 {offsets = [1, 0, 0], sizes = [8, 16, 128], strides = [1, 1, 1]} : vector<10x18x128xbf16> to vector<8x16x128xbf16>
    %79 = vector.shape_cast %78 : vector<8x16x128xbf16> to vector<128x128xbf16>
    %80 = vector.extract_strided_slice %66 {offsets = [1, 1, 0], sizes = [8, 16, 128], strides = [1, 1, 1]} : vector<10x18x128xbf16> to vector<8x16x128xbf16>
    %81 = vector.shape_cast %80 : vector<8x16x128xbf16> to vector<128x128xbf16>
    %82 = vector.extract_strided_slice %66 {offsets = [1, 2, 0], sizes = [8, 16, 128], strides = [1, 1, 1]} : vector<10x18x128xbf16> to vector<8x16x128xbf16>
    %83 = vector.shape_cast %82 : vector<8x16x128xbf16> to vector<128x128xbf16>
    %84 = tpu.concatenate %79, %81, %83 in 1 : vector<128x128xbf16>, vector<128x128xbf16>, vector<128x128xbf16> -> vector<128x384xbf16>
    %c384_23 = arith.constant 384 : index
    %c0_24 = arith.constant 0 : index
    %85 = vector.load %arg5[%c384_23, %c0_24] : memref<1152x128xbf16, #tpu.memory_space<vmem>>, vector<384x128xbf16>
    %cst_25 = arith.constant dense<0.000000e+00> : vector<128x128xf32>
    %86 = tpu.matmul %84, %85, %cst_25 {dimension_numbers = #tpu.dot_dimension_numbers<[1], [0], [0], [1], [0, 0, 1, 1], [], []>} : vector<128x384xbf16>, vector<384x128xbf16>, vector<128x128xf32> -> vector<128x128xf32>
    %87 = arith.addf %77, %86 : vector<128x128xf32>
    %88 = vector.extract_strided_slice %66 {offsets = [2, 0, 0], sizes = [8, 16, 128], strides = [1, 1, 1]} : vector<10x18x128xbf16> to vector<8x16x128xbf16>
    %89 = vector.shape_cast %88 : vector<8x16x128xbf16> to vector<128x128xbf16>
    %90 = vector.extract_strided_slice %66 {offsets = [2, 1, 0], sizes = [8, 16, 128], strides = [1, 1, 1]} : vector<10x18x128xbf16> to vector<8x16x128xbf16>
    %91 = vector.shape_cast %90 : vector<8x16x128xbf16> to vector<128x128xbf16>
    %92 = vector.extract_strided_slice %66 {offsets = [2, 2, 0], sizes = [8, 16, 128], strides = [1, 1, 1]} : vector<10x18x128xbf16> to vector<8x16x128xbf16>
    %93 = vector.shape_cast %92 : vector<8x16x128xbf16> to vector<128x128xbf16>
    %94 = tpu.concatenate %89, %91, %93 in 1 : vector<128x128xbf16>, vector<128x128xbf16>, vector<128x128xbf16> -> vector<128x384xbf16>
    %c768_26 = arith.constant 768 : index
    %c0_27 = arith.constant 0 : index
    %95 = vector.load %arg5[%c768_26, %c0_27] : memref<1152x128xbf16, #tpu.memory_space<vmem>>, vector<384x128xbf16>
    %cst_28 = arith.constant dense<0.000000e+00> : vector<128x128xf32>
    %96 = tpu.matmul %94, %95, %cst_28 {dimension_numbers = #tpu.dot_dimension_numbers<[1], [0], [0], [1], [0, 0, 1, 1], [], []>} : vector<128x384xbf16>, vector<384x128xbf16>, vector<128x128xf32> -> vector<128x128xf32>
    %97 = arith.addf %87, %96 : vector<128x128xf32>
    %98 = vector.extract_strided_slice %5 {offsets = [2, 2, 0], sizes = [8, 16, 128], strides = [1, 1, 1]} : vector<12x24x128xbf16> to vector<8x16x128xbf16>
    %99 = vector.shape_cast %98 : vector<8x16x128xbf16> to vector<128x128xbf16>
    %100 = arith.extf %99 : vector<128x128xbf16> to vector<128x128xf32>
    %c0_29 = arith.constant 0 : index
    %c0_30 = arith.constant 0 : index
    %101 = vector.load %arg6[%c0_29, %c0_30] : memref<1x128xf32, #tpu.memory_space<vmem>>, vector<1x128xf32>
    %102 = vector.broadcast %101 : vector<1x128xf32> to vector<128x128xf32>
    %103 = arith.addf %97, %102 : vector<128x128xf32>
    %104 = arith.addf %103, %100 : vector<128x128xf32>
    %cst_31 = arith.constant 0.000000e+00 : f32
    %105 = vector.broadcast %cst_31 : f32 to vector<128x128xf32>
    %106 = arith.maximumf %104, %105 : vector<128x128xf32>
    %107 = vector.shape_cast %106 : vector<128x128xf32> to vector<1x8x16x128xf32>
    %108 = arith.truncf %107 : vector<1x8x16x128xf32> to vector<1x8x16x128xbf16>
    %c0_32 = arith.constant 0 : index
    %c0_33 = arith.constant 0 : index
    %c0_34 = arith.constant 0 : index
    %c0_35 = arith.constant 0 : index
    %109 = vector.load %arg7[%c0_32, %c0_33, %c0_34, %c0_35] : memref<1x8x16x128xbf16, #tpu.memory_space<vmem>>, vector<1x8x16x128xbf16>
    tpu.vector_store %arg7[%c0_32, %c0_33, %c0_34, %c0_35], %108 {strides = array<i32>} : memref<1x8x16x128xbf16, #tpu.memory_space<vmem>>, vector<1x8x16x128xbf16>,
    return
  }
  func.func @transform_1(%arg0: i32, %arg1: i32) -> (i32, i32) {
    %c0_i32 = arith.constant 0 : i32
    %c0_i32_0 = arith.constant 0 : i32
    %c0_i32_1 = arith.constant 0 : i32
    return %c0_i32, %c0_i32_0 : i32, i32
  }
  func.func @transform_2(%arg0: i32, %arg1: i32) -> (i32, i32) {
    %c0_i32 = arith.constant 0 : i32
    %c0_i32_0 = arith.constant 0 : i32
    %c0_i32_1 = arith.constant 0 : i32
    return %c0_i32, %c0_i32_0 : i32, i32
  }
  func.func @transform_3(%arg0: i32, %arg1: i32) -> (i32, i32) {
    %c0_i32 = arith.constant 0 : i32
    %c0_i32_0 = arith.constant 0 : i32
    %c0_i32_1 = arith.constant 0 : i32
    return %c0_i32, %c0_i32_0 : i32, i32
  }
  func.func @transform_4(%arg0: i32, %arg1: i32) -> (i32, i32) {
    %c0_i32 = arith.constant 0 : i32
    %c0_i32_0 = arith.constant 0 : i32
    %c0_i32_1 = arith.constant 0 : i32
    return %c0_i32, %c0_i32_0 : i32, i32
  }
  func.func @transform_5(%arg0: i32, %arg1: i32) -> (i32, i32, i32, i32) {
    %c0_i32 = arith.constant 0 : i32
    %c0_i32_0 = arith.constant 0 : i32
    %c0_i32_1 = arith.constant 0 : i32
    return %arg0, %arg1, %c0_i32, %c0_i32_0 : i32, i32, i32, i32
  }
}

</mosaic_0001>

<llo_original>
// kernel: tpu_custom_call.1
$region0: #{tpu_custom_call.1}
  #allocation0 [shape = 'u32[]', space=smem, size = 0x4, offset = 0x4, fixed_abs, tag = 'smem constant byte address 0x4 - core index']
  #allocation1 [shape = 'u32[144,128]{1,0:T(1,128)}', space=vmem, size = 0x12000, scoped, tag = 'internal scratch']
  #allocation2 [shape = 'bf16[12,24,128]{2,1,0:T(8,128)(2,1)}', space=vmem, size = 0x12000, scoped, tag = 'scratch operand']
  #allocation3 [shape = 's32[1]{0}', space=sflag, size = 0x4, scoped, tag = 'scratch operand']
  #allocation10 [shape = 's32[]', space=sflag, size = 0x4, offset = 0, fixed_abs, tag = 'sflag constant byte address 0x0 - dummy sync flag']
  #allocation11 [shape = 's32[]', space=sflag, size = 0x4, offset = 0, fixed_abs, tag = 'sflag constant byte address 0x0 - dummy sync flag']
  #allocation12 [shape = 'u32[]', space=smem, size = 0x4, offset = 0x44, fixed_abs, tag = 'smem constant byte address 0x44 - assertion arg 0']
  #allocation13 [shape = 'u32[]', space=smem, size = 0x4, offset = 0x48, fixed_abs, tag = 'smem constant byte address 0x48 - assertion arg 1']
  %s0 = inlined_call_operand.hbm [shape: bf16[2,20,24,128], index: 0, kind: input, shape index: {}]
  %s1 = inlined_call_operand.hbm [shape: bf16[1152,128], index: 1, kind: input, shape index: {}]
  %s2 = inlined_call_operand.vmem [shape: f32[1,128], index: 2, kind: input, shape index: {}]
  %s3 = inlined_call_operand.hbm [shape: bf16[1152,128], index: 3, kind: input, shape index: {}]
  %s4 = inlined_call_operand.vmem [shape: f32[1,128], index: 4, kind: input, shape index: {}]
  %s5 = inlined_call_operand.hbm [shape: bf16[2,16,16,128], index: 5, kind: output, shape index: {}]
  %s6 = sld [smem:[#allocation0]]
  $region61: #{tpu_custom_call.1} parent=0
    _
  %s8 = ssub.s32 1, %s6
  %s9 = scalar_select 0, %s8, %s6
  $region1: #{tpu_custom_call.1} parent=0
    #allocation4 [shape = 'u8[294912]{0}', space=vmem, size = 0x48000, scoped, tag = 'input window, operand 1, single buffered']
    #allocation5 [shape = 's32[2]{0}', space=sflag, size = 0x8, scoped, tag = 'scoped memory for tpu_custom_call.1']
    #allocation6 [shape = 's32[2]{0}', space=sflag, size = 0x8, scoped, tag = 'scoped memory for tpu_custom_call.1']
    #allocation7 [shape = 'u8[294912]{0}', space=vmem, size = 0x48000, scoped, tag = 'input window, operand 3, single buffered']
    #allocation8 [shape = 's32[1]{0}', space=sflag, size = 0x4, scoped, tag = 'scoped memory for tpu_custom_call.1']
    #allocation9 [shape = 'u8[65536]{0}', space=vmem, size = 0x10000, scoped, tag = 'output window, operand 0']
    %10 = vsyncpa [#allocation5], 0
    %11 = vsyncpa [#allocation8], 0
    %12 = vsyncpa [#allocation6], 0
    %s13 = scalar_lea.sflag [#allocation6], 1
    %14 = vsyncpa %s13, 0
    loop: start=0, step=1, limit=6
    $region2: #{tpu_custom_call.1} parent=1 // loop_pre_header
      _
    $region3: #{tpu_custom_call.1} parent=1 // loop_header
      %s16 = sphi 0, %s20
      %p17 = scmp.ge.s32.totalorder %s16, 6
      %s23 = sphi 0, %s35
      %s24 = sphi 0, %s31
      %s25 = sphi 0, %s23
      %s26 = sphi 0, %s24
      %s27 = sphi 0, %s25
      %s28 = sphi 0, %s26
      %s36 = sphi 0, %s36
      %s38 = sphi 0, %s36
      %s39 = sphi 0, %s38
      %s53 = sphi 0, %s39
      %s57 = sphi 0, %s57
      %s59 = sphi 0, %s57
      %s60 = sphi 0, %s59
      %s74 = sphi 0, %s60
      %s78 = sphi 0, %s78
      %s80 = sphi 0, %s78
      %s81 = sphi 0, %s80
      %s95 = sphi 0, %s81
      %s99 = sphi 0, %s99
      %s101 = sphi 0, %s99
      %s102 = sphi 0, %s101
      %s116 = sphi 0, %s102
      %s124 = sphi 0, %s126
      %s127 = sphi 0, %s124
      %s128 = sphi 0, %s127
      %s144 = sphi 0, %s128
    $region4: #{tpu_custom_call.1} parent=1 // loop_header_branch
      %19 = sbr.rel (%p17) target = $region8
    $region5: #{tpu_custom_call.1} parent=1 // loop_body
      %s21 = ssub.s32 %s16, 1
      %s22 = ssub.s32 %s16, 2
      %s29 = sadd.s32 1, %s24
      %p30 = scmp.ge.s32.totalorder %s29, 2
      %s31 = scalar_select %p30, 0, %s29
      %s32 = sadd.s32 1, %s23
      %s33 = scalar_select %p30, %s32, %s23
      %p34 = scmp.ge.s32.totalorder %s33, 2
      %s35 = scalar_select %p34, 0, %s33
      %s37 = sadd.s32 %s36, 1
      %p40 = scmp.eq.s32.totalorder %s16, 3
      %p41 = scmp.ne.s32.totalorder %s36, %s38
      %p42 = scmp.eq.s32.totalorder %s16, 0
      %p43 = por %p41, %p42
      %p44 = scmp.ne.s32.totalorder %s36, %s38
      %p45 = scmp.eq.s32.totalorder %s21, 3
      %p46 = por %p44, %p45
      %p47 = scmp.ne.s32.totalorder %s38, %s39
      %p48 = scmp.eq.s32.totalorder %s21, 0
      %p49 = por %p47, %p48
      %p50 = scmp.ne.s32.totalorder %s38, %s39
      %p51 = scmp.eq.s32.totalorder %s22, 3
      %p52 = por %p50, %p51
      %p54 = scmp.ne.s32.totalorder %s39, %s53
      %p55 = scmp.eq.s32.totalorder %s22, 0
      %p56 = por %p54, %p55
      %s58 = sadd.s32 %s57, 1
      %p61 = scmp.eq.s32.totalorder %s16, 3
      %p62 = scmp.ne.s32.totalorder %s57, %s59
      %p63 = scmp.eq.s32.totalorder %s16, 0
      %p64 = por %p62, %p63
      %p65 = scmp.ne.s32.totalorder %s57, %s59
      %p66 = scmp.eq.s32.totalorder %s21, 3
      %p67 = por %p65, %p66
      %p68 = scmp.ne.s32.totalorder %s59, %s60
      %p69 = scmp.eq.s32.totalorder %s21, 0
      %p70 = por %p68, %p69
      %p71 = scmp.ne.s32.totalorder %s59, %s60
      %p72 = scmp.eq.s32.totalorder %s22, 3
      %p73 = por %p71, %p72
      %p75 = scmp.ne.s32.totalorder %s60, %s74
      %p76 = scmp.eq.s32.totalorder %s22, 0
      %p77 = por %p75, %p76
      %s79 = sadd.s32 %s78, 1
      %p82 = scmp.eq.s32.totalorder %s16, 3
      %p83 = scmp.ne.s32.totalorder %s78, %s80
      %p84 = scmp.eq.s32.totalorder %s16, 0
      %p85 = por %p83, %p84
      %p86 = scmp.ne.s32.totalorder %s78, %s80
      %p87 = scmp.eq.s32.totalorder %s21, 3
      %p88 = por %p86, %p87
      %p89 = scmp.ne.s32.totalorder %s80, %s81
      %p90 = scmp.eq.s32.totalorder %s21, 0
      %p91 = por %p89, %p90
      %p92 = scmp.ne.s32.totalorder %s80, %s81
      %p93 = scmp.eq.s32.totalorder %s22, 3
      %p94 = por %p92, %p93
      %p96 = scmp.ne.s32.totalorder %s81, %s95
      %p97 = scmp.eq.s32.totalorder %s22, 0
      %p98 = por %p96, %p97
      %s100 = sadd.s32 %s99, 1
      %p103 = scmp.eq.s32.totalorder %s16, 3
      %p104 = scmp.ne.s32.totalorder %s99, %s101
      %p105 = scmp.eq.s32.totalorder %s16, 0
      %p106 = por %p104, %p105
      %p107 = scmp.ne.s32.totalorder %s99, %s101
      %p108 = scmp.eq.s32.totalorder %s21, 3
      %p109 = por %p107, %p108
      %p110 = scmp.ne.s32.totalorder %s101, %s102
      %p111 = scmp.eq.s32.totalorder %s21, 0
      %p112 = por %p110, %p111
      %p113 = scmp.ne.s32.totalorder %s101, %s102
      %p114 = scmp.eq.s32.totalorder %s22, 3
      %p115 = por %p113, %p114
      %p117 = scmp.ne.s32.totalorder %s102, %s116
      %p118 = scmp.eq.s32.totalorder %s22, 0
      %p119 = por %p117, %p118
      %s120 = ssub.s32 %s23, %s35
      %s121 = ssub.s32 %s24, %s31
      %s122 = sor.u32 %s120, %s121
      %p123 = scmp.eq.s32.totalorder %s122, 0
      %s125 = sadd.s32 %s124, 1
      %s126 = scalar_select %p123, %s124, %s125
      %p129 = pneg %p123
      %p130 = scmp.eq.s32.totalorder %s16, 3
      %p131 = por %p129, %p130
      %p132 = scmp.ne.s32.totalorder %s124, %s127
      %p133 = scmp.eq.s32.totalorder %s16, 0
      %p134 = por %p132, %p133
      %p135 = scmp.ne.s32.totalorder %s124, %s127
      %p136 = scmp.eq.s32.totalorder %s21, 3
      %p137 = por %p135, %p136
      %p138 = scmp.ne.s32.totalorder %s127, %s128
      %p139 = scmp.eq.s32.totalorder %s21, 0
      %p140 = por %p138, %p139
      %p141 = scmp.ne.s32.totalorder %s127, %s128
      %p142 = scmp.eq.s32.totalorder %s22, 3
      %p143 = por %p141, %p142
      %p145 = scmp.ne.s32.totalorder %s128, %s144
      %p146 = scmp.eq.s32.totalorder %s22, 0
      %p147 = por %p145, %p146
      %p148 = scmp.le.s32.totalorder 1, %s16
      %p149 = scmp.lt.s32.totalorder %s16, 5
      %p150 = pnand %p148, %p149
      %p151 = pneg %p150
      // Predicated region
      $region9: #{tpu_custom_call.1} parent=5 // pred_check
        _
      $region10: #{tpu_custom_call.1} parent=5 // pred_check_branch
        %153 = sbr.rel (%p150) target = $region12
      $region11: #{tpu_custom_call.1} parent=5 // pred_region
        %s154 = ssub.s32 %s16, 1
        // Predicated region
        $region13: #{tpu_custom_call.1} parent=11 // pred_check
          %p155 = pneg %p49
        $region14: #{tpu_custom_call.1} parent=11 // pred_check_branch
          %157 = sbr.rel (%p155) target = $region16
        $region15: #{tpu_custom_call.1} parent=11 // pred_region
          %s159 = ssub.s32 9216, 9216
          %160 = vsyncadd [#allocation5], %s159
          %s161 = sshll.u32 [#allocation4], 4
          %s162 = int_to_ptr.vmem [resolvable:$true] %s161
          %167 = dma.hbm_to_vmem [thread:$0]  %s1, 9216, %s162, [#allocation5], 64, 64, 4
        $region16: #{tpu_custom_call.1} parent=11 // pred_fallthru
          _
        // Predicated region
        $region17: #{tpu_custom_call.1} parent=11 // pred_check
          %p168 = pneg %p70
        $region18: #{tpu_custom_call.1} parent=11 // pred_check_branch
          %170 = sbr.rel (%p168) target = $region20
        $region19: #{tpu_custom_call.1} parent=11 // pred_region
          _
        $region20: #{tpu_custom_call.1} parent=11 // pred_fallthru
          _
        // Predicated region
        $region21: #{tpu_custom_call.1} parent=11 // pred_check
          %p171 = pneg %p91
        $region22: #{tpu_custom_call.1} parent=11 // pred_check_branch
          %173 = sbr.rel (%p171) target = $region24
        $region23: #{tpu_custom_call.1} parent=11 // pred_region
          %s175 = ssub.s32 9216, 9216
          %176 = vsyncadd [#allocation8], %s175
          %s177 = sshll.u32 [#allocation7], 4
          %s178 = int_to_ptr.vmem [resolvable:$true] %s177
          %183 = dma.hbm_to_vmem [thread:$0]  %s3, 9216, %s178, [#allocation8], 64, 64, 4
        $region24: #{tpu_custom_call.1} parent=11 // pred_fallthru
          _
        // Predicated region
        $region25: #{tpu_custom_call.1} parent=11 // pred_check
          %p184 = pneg %p112
        $region26: #{tpu_custom_call.1} parent=11 // pred_check_branch
          %186 = sbr.rel (%p184) target = $region28
        $region27: #{tpu_custom_call.1} parent=11 // pred_region
          _
        $region28: #{tpu_custom_call.1} parent=11 // pred_fallthru
          _
      $region12: #{tpu_custom_call.1} parent=5 // pred_fallthru
        _
      %p187 = scmp.lt.s32.totalorder %s16, 4
      // Predicated region
      $region29: #{tpu_custom_call.1} parent=5 // pred_check
        %p188 = pneg %p187
      $region30: #{tpu_custom_call.1} parent=5 // pred_check_branch
        %190 = sbr.rel (%p188) target = $region32
      $region31: #{tpu_custom_call.1} parent=5 // pred_region
        _
      $region32: #{tpu_custom_call.1} parent=5 // pred_fallthru
        _
      %p191 = scmp.le.s32.totalorder 1, %s16
      %p192 = scmp.lt.s32.totalorder %s16, 5
      %p193 = pnand %p191, %p192
      %p194 = pneg %p193
      // Predicated region
      $region33: #{tpu_custom_call.1} parent=5 // pred_check
        _
      $region34: #{tpu_custom_call.1} parent=5 // pred_check_branch
        %196 = sbr.rel (%p193) target = $region36
      $region35: #{tpu_custom_call.1} parent=5 // pred_region
        %s197 = ssub.s32 %s16, 1
        // Predicated region
        $region37: #{tpu_custom_call.1} parent=35 // pred_check
          %p198 = pneg %p49
        $region38: #{tpu_custom_call.1} parent=35 // pred_check_branch
          %200 = sbr.rel (%p198) target = $region40
        $region39: #{tpu_custom_call.1} parent=35 // pred_region
          %201 = dma.done [#allocation5], 9216
        $region40: #{tpu_custom_call.1} parent=35 // pred_fallthru
          _
        // Predicated region
        $region41: #{tpu_custom_call.1} parent=35 // pred_check
          %p202 = pneg %p91
        $region42: #{tpu_custom_call.1} parent=35 // pred_check_branch
          %204 = sbr.rel (%p202) target = $region44
        $region43: #{tpu_custom_call.1} parent=35 // pred_region
          %205 = dma.done [#allocation8], 9216
        $region44: #{tpu_custom_call.1} parent=35 // pred_fallthru
          _
        %p206 = pneg %p49
        %p207 = pneg %p46
        %p208 = pneg %p70
        %p209 = pneg %p67
        %p210 = pneg %p91
        %p211 = pneg %p88
        %p212 = pneg %p112
        %p213 = pneg %p109
        %p214 = pneg %p140
        %p215 = pneg %p137
        %s216 = sand.u32 %s127, 1
        %s217 = scalar_lea.sflag [#allocation6], %s216
        %s218 = sand.u32 %s127, 1
        %s219 = smul.addr %s218, 64
        %s220 = scalar_lea.vmem [#allocation9], %s219
        %s221 = smul.u32 8, %s26
        %s223 = smul.u32 %s26, 8
        %s224 = smul.u32 %s223, 3
        %s225 = smul.u32 %s25, 60
        %s226 = sadd.s32 %s224, %s225
        %s227 = smul.addr %s226, 64
        %s228 = scalar_lea.hbm %s0, %s227
        // Predicated region
        $region45: #{tpu_custom_call.1} parent=35 // pred_check
          _
        $region46: #{tpu_custom_call.1} parent=35 // pred_check_branch
          %230 = sbr.rel target = $region48
        $region47: #{tpu_custom_call.1} parent=35 // pred_region
          %231 = sst [smem:[#allocation12]] [#allocation11]
          %232 = sst [smem:[#allocation13]] [#allocation10]
        $region48: #{tpu_custom_call.1} parent=35 // pred_fallthru
          _
        %234 = shalt.err (0)
        %s236 = sshll.u32 [#allocation2], 4
        %s237 = int_to_ptr.vmem [resolvable:$true] %s236
        %239 = dma.hbm_to_vmem [thread:$0]  %s228, 2304, %s237, [#allocation3]
        %s240 = smul.u32 4, 12
        %s241 = smul.u32 %s240, 3
        %s242 = smul.u32 %s241, 1
        %s243 = sshll.u32 %s242, 4
        %244 = dma.done [#allocation3], %s243
        %v245 = vld [vmem:[#allocation2] sm:$0xf]
        %v246 = vld [vmem:[#allocation2 + $0x4] sm:$0xf]
        %v247 = vld [vmem:[#allocation2 + $0x8] sm:$0xf]
        %v248 = vld [vmem:[#allocation2 + $0xc] sm:$0xf]
        %v249 = vld [vmem:[#allocation2 + $0x10] sm:$0xf]
        %v250 = vld [vmem:[#allocation2 + $0x14] sm:$0xf]
        %v251 = vld [vmem:[#allocation2 + $0x18] sm:$0xf]
        %v252 = vld [vmem:[#allocation2 + $0x1c] sm:$0xf]
        %v253 = vld [vmem:[#allocation2 + $0x20] sm:$0xf]
        %v254 = vld [vmem:[#allocation2 + $0x24] sm:$0xf]
        %v255 = vld [vmem:[#allocation2 + $0x28] sm:$0xf]
        %v256 = vld [vmem:[#allocation2 + $0x2c] sm:$0xf]
        %v257 = vld [vmem:[#allocation2 + $0x30] sm:$0xf]
        %v258 = vld [vmem:[#allocation2 + $0x34] sm:$0xf]
        %v259 = vld [vmem:[#allocation2 + $0x38] sm:$0xf]
        %v260 = vld [vmem:[#allocation2 + $0x3c] sm:$0xf]
        %v261 = vld [vmem:[#allocation2 + $0x40] sm:$0xf]
        %v262 = vld [vmem:[#allocation2 + $0x44] sm:$0xf]
        %v263 = vld [vmem:[#allocation2 + $0x48] sm:$0xf]
        %v264 = vld [vmem:[#allocation2 + $0x4c] sm:$0xf]
        %v265 = vld [vmem:[#allocation2 + $0x50] sm:$0xf]
        %v266 = vld [vmem:[#allocation2 + $0x54] sm:$0xf]
        %v267 = vld [vmem:[#allocation2 + $0x58] sm:$0xf]
        %v268 = vld [vmem:[#allocation2 + $0x5c] sm:$0xf]
        %v269 = vld [vmem:[#allocation2 + $0x60] sm:$0xf]
        %v270 = vld [vmem:[#allocation2 + $0x64] sm:$0xf]
        %v271 = vld [vmem:[#allocation2 + $0x68] sm:$0xf]
        %v272 = vld [vmem:[#allocation2 + $0x6c] sm:$0xf]
        %v273 = vld [vmem:[#allocation2 + $0x70] sm:$0xf]
        %v274 = vld [vmem:[#allocation2 + $0x74] sm:$0xf]
        %v275 = vld [vmem:[#allocation2 + $0x78] sm:$0xf]
        %v276 = vld [vmem:[#allocation2 + $0x7c] sm:$0xf]
        %v277 = vld [vmem:[#allocation2 + $0x80] sm:$0xf]
        %v278 = vld [vmem:[#allocation2 + $0x84] sm:$0xf]
        %v279 = vld [vmem:[#allocation2 + $0x88] sm:$0xf]
        %v280 = vld [vmem:[#allocation2 + $0x8c] sm:$0xf]
        %v312 = vunpack.c.l.s4 1966171168
        %v313 = vunpack.c.0.s8 %v312
        %v314 = vlaneseq
        %v315 = vshrl.u32 %v314, 7
        %v316 = vsub.s32 %v313, %v315
        %v317 = vrot.slane %v245, %v316
        %v318 = vcombine.high %v317, %v317
        %v320 = vunpack.c.l.s4 1966171168
        %v321 = vunpack.c.0.s8 %v320
        %v322 = vlaneseq
        %v323 = vshrl.u32 %v322, 7
        %v324 = vsub.s32 %v321, %v323
        %v325 = vrot.slane %v317, %v324
        %v327 = vunpack.c.l.s4 1966171168
        %v328 = vunpack.c.0.s8 %v327
        %v329 = vlaneseq
        %v330 = vshrl.u32 %v329, 7
        %v331 = vsub.s32 %v328, %v330
        %v332 = vrot.slane %v318, %v331
        %v333 = vcombine.high %v325, %v325
        %v334 = vcombine.high %v332, %v332
        %v336 = vunpack.c.l.s4 1966171168
        %v337 = vunpack.c.0.s8 %v336
        %v338 = vlaneseq
        %v339 = vshrl.u32 %v338, 7
        %v340 = vsub.s32 %v337, %v339
        %v341 = vrot.slane %v246, %v340
        %v342 = vcombine.high %v341, %v341
        %v344 = vunpack.c.l.s4 1966171168
        %v345 = vunpack.c.0.s8 %v344
        %v346 = vlaneseq
        %v347 = vshrl.u32 %v346, 7
        %v348 = vsub.s32 %v345, %v347
        %v349 = vrot.slane %v341, %v348
        %v351 = vunpack.c.l.s4 1966171168
        %v352 = vunpack.c.0.s8 %v351
        %v353 = vlaneseq
        %v354 = vshrl.u32 %v353, 7
        %v355 = vsub.s32 %v352, %v354
        %v356 = vrot.slane %v342, %v355
        %v357 = vcombine.high %v349, %v349
        %v358 = vcombine.high %v356, %v356
        %v360 = vunpack.c.l.s4 1966171168
        %v361 = vunpack.c.0.s8 %v360
        %v362 = vlaneseq
        %v363 = vshrl.u32 %v362, 7
        %v364 = vsub.s32 %v361, %v363
        %v365 = vrot.slane %v247, %v364
        %v367 = vunpack.c.l.s4 1966171168
        %v368 = vunpack.c.0.s8 %v367
        %v369 = vlaneseq
        %v370 = vshrl.u32 %v369, 7
        %v371 = vsub.s32 %v368, %v370
        %v372 = vrot.slane %v365, %v371
        %v374 = vunpack.c.l.s4 1966171168
        %v375 = vunpack.c.0.s8 %v374
        %v376 = vlaneseq
        %v377 = vshrl.u32 %v376, 7
        %v378 = vsub.s32 %v375, %v377
        %v379 = vrot.slane %v248, %v378
        %v380 = vcombine.high %v379, %v379
        %v382 = vunpack.c.l.s4 1966171168
        %v383 = vunpack.c.0.s8 %v382
        %v384 = vlaneseq
        %v385 = vshrl.u32 %v384, 7
        %v386 = vsub.s32 %v383, %v385
        %v387 = vrot.slane %v379, %v386
        %v389 = vunpack.c.l.s4 1966171168
        %v390 = vunpack.c.0.s8 %v389
        %v391 = vlaneseq
        %v392 = vshrl.u32 %v391, 7
        %v393 = vsub.s32 %v390, %v392
        %v394 = vrot.slane %v380, %v393
        %v395 = vcombine.high %v387, %v387
        %v396 = vcombine.high %v394, %v394
        %v398 = vunpack.c.l.s4 1966171168
        %v399 = vunpack.c.0.s8 %v398
        %v400 = vlaneseq
        %v401 = vshrl.u32 %v400, 7
        %v402 = vsub.s32 %v399, %v401
        %v403 = vrot.slane %v249, %v402
        %v404 = vcombine.high %v403, %v403
        %v406 = vunpack.c.l.s4 1966171168
        %v407 = vunpack.c.0.s8 %v406
        %v408 = vlaneseq
        %v409 = vshrl.u32 %v408, 7
        %v410 = vsub.s32 %v407, %v409
        %v411 = vrot.slane %v403, %v410
        %v413 = vunpack.c.l.s4 1966171168
        %v414 = vunpack.c.0.s8 %v413
        %v415 = vlaneseq
        %v416 = vshrl.u32 %v415, 7
        %v417 = vsub.s32 %v414, %v416
        %v418 = vrot.slane %v404, %v417
        %v419 = vcombine.high %v411, %v411
        %v420 = vcombine.high %v418, %v418
        %v422 = vunpack.c.l.s4 1966171168
        %v423 = vunpack.c.0.s8 %v422
        %v424 = vlaneseq
        %v425 = vshrl.u32 %v424, 7
        %v426 = vsub.s32 %v423, %v425
        %v427 = vrot.slane %v250, %v426
        %v429 = vunpack.c.l.s4 1966171168
        %v430 = vunpack.c.0.s8 %v429
        %v431 = vlaneseq
        %v432 = vshrl.u32 %v431, 7
        %v433 = vsub.s32 %v430, %v432
        %v434 = vrot.slane %v427, %v433
        %v436 = vunpack.c.l.s4 1966171168
        %v437 = vunpack.c.0.s8 %v436
        %v438 = vlaneseq
        %v439 = vshrl.u32 %v438, 7
        %v440 = vsub.s32 %v437, %v439
        %v441 = vrot.slane %v251, %v440
        %v442 = vcombine.high %v441, %v441
        %v444 = vunpack.c.l.s4 1966171168
        %v445 = vunpack.c.0.s8 %v444
        %v446 = vlaneseq
        %v447 = vshrl.u32 %v446, 7
        %v448 = vsub.s32 %v445, %v447
        %v449 = vrot.slane %v441, %v448
        %v451 = vunpack.c.l.s4 1966171168
        %v452 = vunpack.c.0.s8 %v451
        %v453 = vlaneseq
        %v454 = vshrl.u32 %v453, 7
        %v455 = vsub.s32 %v452, %v454
        %v456 = vrot.slane %v442, %v455
        %v457 = vcombine.high %v449, %v449
        %v458 = vcombine.high %v456, %v456
        %v460 = vunpack.c.l.s4 1966171168
        %v461 = vunpack.c.0.s8 %v460
        %v462 = vlaneseq
        %v463 = vshrl.u32 %v462, 7
        %v464 = vsub.s32 %v461, %v463
        %v465 = vrot.slane %v252, %v464
        %v466 = vcombine.high %v465, %v465
        %v468 = vunpack.c.l.s4 1966171168
        %v469 = vunpack.c.0.s8 %v468
        %v470 = vlaneseq
        %v471 = vshrl.u32 %v470, 7
        %v472 = vsub.s32 %v469, %v471
        %v473 = vrot.slane %v465, %v472
        %v475 = vunpack.c.l.s4 1966171168
        %v476 = vunpack.c.0.s8 %v475
        %v477 = vlaneseq
        %v478 = vshrl.u32 %v477, 7
        %v479 = vsub.s32 %v476, %v478
        %v480 = vrot.slane %v466, %v479
        %v481 = vcombine.high %v473, %v473
        %v482 = vcombine.high %v480, %v480
        %v484 = vunpack.c.l.s4 1966171168
        %v485 = vunpack.c.0.s8 %v484
        %v486 = vlaneseq
        %v487 = vshrl.u32 %v486, 7
        %v488 = vsub.s32 %v485, %v487
        %v489 = vrot.slane %v253, %v488
        %v491 = vunpack.c.l.s4 1966171168
        %v492 = vunpack.c.0.s8 %v491
        %v493 = vlaneseq
        %v494 = vshrl.u32 %v493, 7
        %v495 = vsub.s32 %v492, %v494
        %v496 = vrot.slane %v489, %v495
        %v498 = vunpack.c.l.s4 1966171168
        %v499 = vunpack.c.0.s8 %v498
        %v500 = vlaneseq
        %v501 = vshrl.u32 %v500, 7
        %v502 = vsub.s32 %v499, %v501
        %v503 = vrot.slane %v254, %v502
        %v504 = vcombine.high %v503, %v503
        %v506 = vunpack.c.l.s4 1966171168
        %v507 = vunpack.c.0.s8 %v506
        %v508 = vlaneseq
        %v509 = vshrl.u32 %v508, 7
        %v510 = vsub.s32 %v507, %v509
        %v511 = vrot.slane %v503, %v510
        %v513 = vunpack.c.l.s4 1966171168
        %v514 = vunpack.c.0.s8 %v513
        %v515 = vlaneseq
        %v516 = vshrl.u32 %v515, 7
        %v517 = vsub.s32 %v514, %v516
        %v518 = vrot.slane %v504, %v517
        %v519 = vcombine.high %v511, %v511
        %v520 = vcombine.high %v518, %v518
        %v522 = vunpack.c.l.s4 1966171168
        %v523 = vunpack.c.0.s8 %v522
        %v524 = vlaneseq
        %v525 = vshrl.u32 %v524, 7
        %v526 = vsub.s32 %v523, %v525
        %v527 = vrot.slane %v255, %v526
        %v528 = vcombine.high %v527, %v527
        %v530 = vunpack.c.l.s4 1966171168
        %v531 = vunpack.c.0.s8 %v530
        %v532 = vlaneseq
        %v533 = vshrl.u32 %v532, 7
        %v534 = vsub.s32 %v531, %v533
        %v535 = vrot.slane %v527, %v534
        %v537 = vunpack.c.l.s4 1966171168
        %v538 = vunpack.c.0.s8 %v537
        %v539 = vlaneseq
        %v540 = vshrl.u32 %v539, 7
        %v541 = vsub.s32 %v538, %v540
        %v542 = vrot.slane %v528, %v541
        %v543 = vcombine.high %v535, %v535
        %v544 = vcombine.high %v542, %v542
        %v546 = vunpack.c.l.s4 1966171168
        %v547 = vunpack.c.0.s8 %v546
        %v548 = vlaneseq
        %v549 = vshrl.u32 %v548, 7
        %v550 = vsub.s32 %v547, %v549
        %v551 = vrot.slane %v256, %v550
        %v553 = vunpack.c.l.s4 1966171168
        %v554 = vunpack.c.0.s8 %v553
        %v555 = vlaneseq
        %v556 = vshrl.u32 %v555, 7
        %v557 = vsub.s32 %v554, %v556
        %v558 = vrot.slane %v551, %v557
        %v560 = vunpack.c.l.s4 1966171168
        %v561 = vunpack.c.0.s8 %v560
        %v562 = vlaneseq
        %v563 = vshrl.u32 %v562, 7
        %v564 = vsub.s32 %v561, %v563
        %v565 = vrot.slane %v257, %v564
        %v566 = vcombine.high %v565, %v565
        %v568 = vunpack.c.l.s4 1966171168
        %v569 = vunpack.c.0.s8 %v568
        %v570 = vlaneseq
        %v571 = vshrl.u32 %v570, 7
        %v572 = vsub.s32 %v569, %v571
        %v573 = vrot.slane %v565, %v572
        %v575 = vunpack.c.l.s4 1966171168
        %v576 = vunpack.c.0.s8 %v575
        %v577 = vlaneseq
        %v578 = vshrl.u32 %v577, 7
        %v579 = vsub.s32 %v576, %v578
        %v580 = vrot.slane %v566, %v579
        %v581 = vcombine.high %v573, %v573
        %v582 = vcombine.high %v580, %v580
        %v584 = vunpack.c.l.s4 1966171168
        %v585 = vunpack.c.0.s8 %v584
        %v586 = vlaneseq
        %v587 = vshrl.u32 %v586, 7
        %v588 = vsub.s32 %v585, %v587
        %v589 = vrot.slane %v258, %v588
        %v590 = vcombine.high %v589, %v589
        %v592 = vunpack.c.l.s4 1966171168
        %v593 = vunpack.c.0.s8 %v592
        %v594 = vlaneseq
        %v595 = vshrl.u32 %v594, 7
        %v596 = vsub.s32 %v593, %v595
        %v597 = vrot.slane %v589, %v596
        %v599 = vunpack.c.l.s4 1966171168
        %v600 = vunpack.c.0.s8 %v599
        %v601 = vlaneseq
        %v602 = vshrl.u32 %v601, 7
        %v603 = vsub.s32 %v600, %v602
        %v604 = vrot.slane %v590, %v603
        %v605 = vcombine.high %v597, %v597
        %v606 = vcombine.high %v604, %v604
        %v608 = vunpack.c.l.s4 1966171168
        %v609 = vunpack.c.0.s8 %v608
        %v610 = vlaneseq
        %v611 = vshrl.u32 %v610, 7
        %v612 = vsub.s32 %v609, %v611
        %v613 = vrot.slane %v259, %v612
        %v615 = vunpack.c.l.s4 1966171168
        %v616 = vunpack.c.0.s8 %v615
        %v617 = vlaneseq
        %v618 = vshrl.u32 %v617, 7
        %v619 = vsub.s32 %v616, %v618
        %v620 = vrot.slane %v613, %v619
        %v622 = vunpack.c.l.s4 1966171168
        %v623 = vunpack.c.0.s8 %v622
        %v624 = vlaneseq
        %v625 = vshrl.u32 %v624, 7
        %v626 = vsub.s32 %v623, %v625
        %v627 = vrot.slane %v260, %v626
        %v628 = vcombine.high %v627, %v627
        %v630 = vunpack.c.l.s4 1966171168
        %v631 = vunpack.c.0.s8 %v630
        %v632 = vlaneseq
        %v633 = vshrl.u32 %v632, 7
        %v634 = vsub.s32 %v631, %v633
        %v635 = vrot.slane %v627, %v634
        %v637 = vunpack.c.l.s4 1966171168
        %v638 = vunpack.c.0.s8 %v637
        %v639 = vlaneseq
        %v640 = vshrl.u32 %v639, 7
        %v641 = vsub.s32 %v638, %v640
        %v642 = vrot.slane %v628, %v641
        %v643 = vcombine.high %v635, %v635
        %v644 = vcombine.high %v642, %v642
        %v646 = vunpack.c.l.s4 1966171168
        %v647 = vunpack.c.0.s8 %v646
        %v648 = vlaneseq
        %v649 = vshrl.u32 %v648, 7
        %v650 = vsub.s32 %v647, %v649
        %v651 = vrot.slane %v261, %v650
        %v652 = vcombine.high %v651, %v651
        %v654 = vunpack.c.l.s4 1966171168
        %v655 = vunpack.c.0.s8 %v654
        %v656 = vlaneseq
        %v657 = vshrl.u32 %v656, 7
        %v658 = vsub.s32 %v655, %v657
        %v659 = vrot.slane %v651, %v658
        %v661 = vunpack.c.l.s4 1966171168
        %v662 = vunpack.c.0.s8 %v661
        %v663 = vlaneseq
        %v664 = vshrl.u32 %v663, 7
        %v665 = vsub.s32 %v662, %v664
        %v666 = vrot.slane %v652, %v665
        %v667 = vcombine.high %v659, %v659
        %v668 = vcombine.high %v666, %v666
        %v670 = vunpack.c.l.s4 1966171168
        %v671 = vunpack.c.0.s8 %v670
        %v672 = vlaneseq
        %v673 = vshrl.u32 %v672, 7
        %v674 = vsub.s32 %v671, %v673
        %v675 = vrot.slane %v262, %v674
        %v677 = vunpack.c.l.s4 1966171168
        %v678 = vunpack.c.0.s8 %v677
        %v679 = vlaneseq
        %v680 = vshrl.u32 %v679, 7
        %v681 = vsub.s32 %v678, %v680
        %v682 = vrot.slane %v675, %v681
        %v684 = vunpack.c.l.s4 1966171168
        %v685 = vunpack.c.0.s8 %v684
        %v686 = vlaneseq
        %v687 = vshrl.u32 %v686, 7
        %v688 = vsub.s32 %v685, %v687
        %v689 = vrot.slane %v263, %v688
        %v690 = vcombine.high %v689, %v689
        %v692 = vunpack.c.l.s4 1966171168
        %v693 = vunpack.c.0.s8 %v692
        %v694 = vlaneseq
        %v695 = vshrl.u32 %v694, 7
        %v696 = vsub.s32 %v693, %v695
        %v697 = vrot.slane %v689, %v696
        %v699 = vunpack.c.l.s4 1966171168
        %v700 = vunpack.c.0.s8 %v699
        %v701 = vlaneseq
        %v702 = vshrl.u32 %v701, 7
        %v703 = vsub.s32 %v700, %v702
        %v704 = vrot.slane %v690, %v703
        %v705 = vcombine.high %v697, %v697
        %v706 = vcombine.high %v704, %v704
        %v708 = vunpack.c.l.s4 1966171168
        %v709 = vunpack.c.0.s8 %v708
        %v710 = vlaneseq
        %v711 = vshrl.u32 %v710, 7
        %v712 = vsub.s32 %v709, %v711
        %v713 = vrot.slane %v264, %v712
        %v714 = vcombine.high %v713, %v713
        %v716 = vunpack.c.l.s4 1966171168
        %v717 = vunpack.c.0.s8 %v716
        %v718 = vlaneseq
        %v719 = vshrl.u32 %v718, 7
        %v720 = vsub.s32 %v717, %v719
        %v721 = vrot.slane %v713, %v720
        %v723 = vunpack.c.l.s4 1966171168
        %v724 = vunpack.c.0.s8 %v723
        %v725 = vlaneseq
        %v726 = vshrl.u32 %v725, 7
        %v727 = vsub.s32 %v724, %v726
        %v728 = vrot.slane %v714, %v727
        %v729 = vcombine.high %v721, %v721
        %v730 = vcombine.high %v728, %v728
        %v732 = vunpack.c.l.s4 1966171168
        %v733 = vunpack.c.0.s8 %v732
        %v734 = vlaneseq
        %v735 = vshrl.u32 %v734, 7
        %v736 = vsub.s32 %v733, %v735
        %v737 = vrot.slane %v265, %v736
        %v739 = vunpack.c.l.s4 1966171168
        %v740 = vunpack.c.0.s8 %v739
        %v741 = vlaneseq
        %v742 = vshrl.u32 %v741, 7
        %v743 = vsub.s32 %v740, %v742
        %v744 = vrot.slane %v737, %v743
        %v746 = vunpack.c.l.s4 1966171168
        %v747 = vunpack.c.0.s8 %v746
        %v748 = vlaneseq
        %v749 = vshrl.u32 %v748, 7
        %v750 = vsub.s32 %v747, %v749
        %v751 = vrot.slane %v266, %v750
        %v752 = vcombine.high %v751, %v751
        %v754 = vunpack.c.l.s4 1966171168
        %v755 = vunpack.c.0.s8 %v754
        %v756 = vlaneseq
        %v757 = vshrl.u32 %v756, 7
        %v758 = vsub.s32 %v755, %v757
        %v759 = vrot.slane %v751, %v758
        %v761 = vunpack.c.l.s4 1966171168
        %v762 = vunpack.c.0.s8 %v761
        %v763 = vlaneseq
        %v764 = vshrl.u32 %v763, 7
        %v765 = vsub.s32 %v762, %v764
        %v766 = vrot.slane %v752, %v765
        %v767 = vcombine.high %v759, %v759
        %v768 = vcombine.high %v766, %v766
        %v770 = vunpack.c.l.s4 1966171168
        %v771 = vunpack.c.0.s8 %v770
        %v772 = vlaneseq
        %v773 = vshrl.u32 %v772, 7
        %v774 = vsub.s32 %v771, %v773
        %v775 = vrot.slane %v267, %v774
        %v776 = vcombine.high %v775, %v775
        %v778 = vunpack.c.l.s4 1966171168
        %v779 = vunpack.c.0.s8 %v778
        %v780 = vlaneseq
        %v781 = vshrl.u32 %v780, 7
        %v782 = vsub.s32 %v779, %v781
        %v783 = vrot.slane %v775, %v782
        %v785 = vunpack.c.l.s4 1966171168
        %v786 = vunpack.c.0.s8 %v785
        %v787 = vlaneseq
        %v788 = vshrl.u32 %v787, 7
        %v789 = vsub.s32 %v786, %v788
        %v790 = vrot.slane %v776, %v789
        %v791 = vcombine.high %v783, %v783
        %v792 = vcombine.high %v790, %v790
        %v794 = vunpack.c.l.s4 1966171168
        %v795 = vunpack.c.0.s8 %v794
        %v796 = vlaneseq
        %v797 = vshrl.u32 %v796, 7
        %v798 = vsub.s32 %v795, %v797
        %v799 = vrot.slane %v268, %v798
        %v801 = vunpack.c.l.s4 1966171168
        %v802 = vunpack.c.0.s8 %v801
        %v803 = vlaneseq
        %v804 = vshrl.u32 %v803, 7
        %v805 = vsub.s32 %v802, %v804
        %v806 = vrot.slane %v799, %v805
        %v808 = vunpack.c.l.s4 1966171168
        %v809 = vunpack.c.0.s8 %v808
        %v810 = vlaneseq
        %v811 = vshrl.u32 %v810, 7
        %v812 = vsub.s32 %v809, %v811
        %v813 = vrot.slane %v269, %v812
        %v814 = vcombine.high %v813, %v813
        %v816 = vunpack.c.l.s4 1966171168
        %v817 = vunpack.c.0.s8 %v816
        %v818 = vlaneseq
        %v819 = vshrl.u32 %v818, 7
        %v820 = vsub.s32 %v817, %v819
        %v821 = vrot.slane %v813, %v820
        %v823 = vunpack.c.l.s4 1966171168
        %v824 = vunpack.c.0.s8 %v823
        %v825 = vlaneseq
        %v826 = vshrl.u32 %v825, 7
        %v827 = vsub.s32 %v824, %v826
        %v828 = vrot.slane %v814, %v827
        %v829 = vcombine.high %v821, %v821
        %v830 = vcombine.high %v828, %v828
        %v832 = vunpack.c.l.s4 1966171168
        %v833 = vunpack.c.0.s8 %v832
        %v834 = vlaneseq
        %v835 = vshrl.u32 %v834, 7
        %v836 = vsub.s32 %v833, %v835
        %v837 = vrot.slane %v270, %v836
        %v838 = vcombine.high %v837, %v837
        %v840 = vunpack.c.l.s4 1966171168
        %v841 = vunpack.c.0.s8 %v840
        %v842 = vlaneseq
        %v843 = vshrl.u32 %v842, 7
        %v844 = vsub.s32 %v841, %v843
        %v845 = vrot.slane %v837, %v844
        %v847 = vunpack.c.l.s4 1966171168
        %v848 = vunpack.c.0.s8 %v847
        %v849 = vlaneseq
        %v850 = vshrl.u32 %v849, 7
        %v851 = vsub.s32 %v848, %v850
        %v852 = vrot.slane %v838, %v851
        %v853 = vcombine.high %v845, %v845
        %v854 = vcombine.high %v852, %v852
        %v856 = vunpack.c.l.s4 1966171168
        %v857 = vunpack.c.0.s8 %v856
        %v858 = vlaneseq
        %v859 = vshrl.u32 %v858, 7
        %v860 = vsub.s32 %v857, %v859
        %v861 = vrot.slane %v271, %v860
        %v863 = vunpack.c.l.s4 1966171168
        %v864 = vunpack.c.0.s8 %v863
        %v865 = vlaneseq
        %v866 = vshrl.u32 %v865, 7
        %v867 = vsub.s32 %v864, %v866
        %v868 = vrot.slane %v861, %v867
        %v870 = vunpack.c.l.s4 1966171168
        %v871 = vunpack.c.0.s8 %v870
        %v872 = vlaneseq
        %v873 = vshrl.u32 %v872, 7
        %v874 = vsub.s32 %v871, %v873
        %v875 = vrot.slane %v272, %v874
        %v876 = vcombine.high %v875, %v875
        %v878 = vunpack.c.l.s4 1966171168
        %v879 = vunpack.c.0.s8 %v878
        %v880 = vlaneseq
        %v881 = vshrl.u32 %v880, 7
        %v882 = vsub.s32 %v879, %v881
        %v883 = vrot.slane %v875, %v882
        %v885 = vunpack.c.l.s4 1966171168
        %v886 = vunpack.c.0.s8 %v885
        %v887 = vlaneseq
        %v888 = vshrl.u32 %v887, 7
        %v889 = vsub.s32 %v886, %v888
        %v890 = vrot.slane %v876, %v889
        %v891 = vcombine.high %v883, %v883
        %v892 = vcombine.high %v890, %v890
        %v894 = vunpack.c.l.s4 1966171168
        %v895 = vunpack.c.0.s8 %v894
        %v896 = vlaneseq
        %v897 = vshrl.u32 %v896, 7
        %v898 = vsub.s32 %v895, %v897
        %v899 = vrot.slane %v273, %v898
        %v900 = vcombine.high %v899, %v899
        %v902 = vunpack.c.l.s4 1966171168
        %v903 = vunpack.c.0.s8 %v902
        %v904 = vlaneseq
        %v905 = vshrl.u32 %v904, 7
        %v906 = vsub.s32 %v903, %v905
        %v907 = vrot.slane %v899, %v906
        %v909 = vunpack.c.l.s4 1966171168
        %v910 = vunpack.c.0.s8 %v909
        %v911 = vlaneseq
        %v912 = vshrl.u32 %v911, 7
        %v913 = vsub.s32 %v910, %v912
        %v914 = vrot.slane %v900, %v913
        %v915 = vcombine.high %v907, %v907
        %v916 = vcombine.high %v914, %v914
        %v918 = vunpack.c.l.s4 1966171168
        %v919 = vunpack.c.0.s8 %v918
        %v920 = vlaneseq
        %v921 = vshrl.u32 %v920, 7
        %v922 = vsub.s32 %v919, %v921
        %v923 = vrot.slane %v274, %v922
        %v925 = vunpack.c.l.s4 1966171168
        %v926 = vunpack.c.0.s8 %v925
        %v927 = vlaneseq
        %v928 = vshrl.u32 %v927, 7
        %v929 = vsub.s32 %v926, %v928
        %v930 = vrot.slane %v923, %v929
        %v931 = vcombine.high %v365, %v365
        %v933 = vunpack.c.l.s4 1966171168
        %v934 = vunpack.c.0.s8 %v933
        %v935 = vlaneseq
        %v936 = vshrl.u32 %v935, 7
        %v937 = vsub.s32 %v934, %v936
        %v938 = vrot.slane %v931, %v937
        %v939 = vcombine.high %v427, %v427
        %v941 = vunpack.c.l.s4 1966171168
        %v942 = vunpack.c.0.s8 %v941
        %v943 = vlaneseq
        %v944 = vshrl.u32 %v943, 7
        %v945 = vsub.s32 %v942, %v944
        %v946 = vrot.slane %v939, %v945
        %v947 = vcombine.high %v489, %v489
        %v949 = vunpack.c.l.s4 1966171168
        %v950 = vunpack.c.0.s8 %v949
        %v951 = vlaneseq
        %v952 = vshrl.u32 %v951, 7
        %v953 = vsub.s32 %v950, %v952
        %v954 = vrot.slane %v947, %v953
        %v955 = vcombine.high %v551, %v551
        %v957 = vunpack.c.l.s4 1966171168
        %v958 = vunpack.c.0.s8 %v957
        %v959 = vlaneseq
        %v960 = vshrl.u32 %v959, 7
        %v961 = vsub.s32 %v958, %v960
        %v962 = vrot.slane %v955, %v961
        %v963 = vcombine.high %v613, %v613
        %v965 = vunpack.c.l.s4 1966171168
        %v966 = vunpack.c.0.s8 %v965
        %v967 = vlaneseq
        %v968 = vshrl.u32 %v967, 7
        %v969 = vsub.s32 %v966, %v968
        %v970 = vrot.slane %v963, %v969
        %v971 = vcombine.high %v675, %v675
        %v973 = vunpack.c.l.s4 1966171168
        %v974 = vunpack.c.0.s8 %v973
        %v975 = vlaneseq
        %v976 = vshrl.u32 %v975, 7
        %v977 = vsub.s32 %v974, %v976
        %v978 = vrot.slane %v971, %v977
        %v979 = vcombine.high %v737, %v737
        %v981 = vunpack.c.l.s4 1966171168
        %v982 = vunpack.c.0.s8 %v981
        %v983 = vlaneseq
        %v984 = vshrl.u32 %v983, 7
        %v985 = vsub.s32 %v982, %v984
        %v986 = vrot.slane %v979, %v985
        %v987 = vcombine.high %v799, %v799
        %v989 = vunpack.c.l.s4 1966171168
        %v990 = vunpack.c.0.s8 %v989
        %v991 = vlaneseq
        %v992 = vshrl.u32 %v991, 7
        %v993 = vsub.s32 %v990, %v992
        %v994 = vrot.slane %v987, %v993
        %v995 = vcombine.high %v861, %v861
        %v997 = vunpack.c.l.s4 1966171168
        %v998 = vunpack.c.0.s8 %v997
        %v999 = vlaneseq
        %v1000 = vshrl.u32 %v999, 7
        %v1001 = vsub.s32 %v998, %v1000
        %v1002 = vrot.slane %v995, %v1001
        %v1003 = vcombine.high %v923, %v923
        %v1005 = vunpack.c.l.s4 1966171168
        %v1006 = vunpack.c.0.s8 %v1005
        %v1007 = vlaneseq
        %v1008 = vshrl.u32 %v1007, 7
        %v1009 = vsub.s32 %v1006, %v1008
        %v1010 = vrot.slane %v1003, %v1009
        %vm1011 = vsmask.f32 256
        %vm1012 = vsmask.f32 1284
        %vm1013 = vmor %vm1011, %vm1012
        %vm1014 = vsmask.f32 2312
        %vm1015 = vmor %vm1013, %vm1014
        %vm1016 = vsmask.f32 3340
        %vm1017 = vmor %vm1015, %vm1016
        %vm1018 = vsmask.f32 4368
        %vm1019 = vmor %vm1017, %vm1018
        %vm1020 = vsmask.f32 5396
        %vm1021 = vmor %vm1019, %vm1020
        %vm1022 = vsmask.f32 6424
        %vm1023 = vmor %vm1021, %vm1022
        %vm1024 = vsmask.f32 7452
        %vm1025 = vmor %vm1023, %vm1024
        %v1027 = vshrl.u32 %v325, 16
        %v1029 = vrot.slane %v1027, 7
        %v1030 = vrot.slane %v1029, 1
        %v1032 = vshll.u32 %v332, 16
        %v1034 = vsel %vm1025, %v1030, %v1032
        %v1035 = vshrl.u32 %v332, 16
        %v1037 = vrot.slane %v1035, 7
        %v1038 = vrot.slane %v1037, 1
        %v1040 = vshll.u32 %v333, 16
        %v1042 = vsel %vm1025, %v1038, %v1040
        %v1043 = vshrl.u32 %v333, 16
        %v1045 = vrot.slane %v1043, 7
        %v1046 = vrot.slane %v1045, 1
        %v1048 = vshll.u32 %v334, 16
        %v1050 = vsel %vm1025, %v1046, %v1048
        %v1051 = vshrl.u32 %v334, 16
        %v1053 = vrot.slane %v1051, 7
        %v1054 = vrot.slane %v1053, 1
        %v1056 = vshll.u32 %v349, 16
        %v1058 = vsel %vm1025, %v1054, %v1056
        %v1059 = vshrl.u32 %v349, 16
        %v1061 = vrot.slane %v1059, 7
        %v1062 = vrot.slane %v1061, 1
        %v1064 = vshll.u32 %v356, 16
        %v1066 = vsel %vm1025, %v1062, %v1064
        %v1067 = vshrl.u32 %v356, 16
        %v1069 = vrot.slane %v1067, 7
        %v1070 = vrot.slane %v1069, 1
        %v1072 = vshll.u32 %v357, 16
        %v1074 = vsel %vm1025, %v1070, %v1072
        %v1075 = vshrl.u32 %v357, 16
        %v1077 = vrot.slane %v1075, 7
        %v1078 = vrot.slane %v1077, 1
        %v1080 = vshll.u32 %v358, 16
        %v1082 = vsel %vm1025, %v1078, %v1080
        %v1083 = vshrl.u32 %v358, 16
        %v1085 = vrot.slane %v1083, 7
        %v1086 = vrot.slane %v1085, 1
        %v1088 = vshll.u32 %v372, 16
        %v1090 = vsel %vm1025, %v1086, %v1088
        %v1091 = vshrl.u32 %v372, 16
        %v1093 = vrot.slane %v1091, 7
        %v1094 = vrot.slane %v1093, 1
        %v1096 = vshll.u32 %v938, 16
        %v1098 = vsel %vm1025, %v1094, %v1096
        %v1100 = vshrl.u32 %v387, 16
        %v1102 = vrot.slane %v1100, 7
        %v1103 = vrot.slane %v1102, 1
        %v1105 = vshll.u32 %v394, 16
        %v1107 = vsel %vm1025, %v1103, %v1105
        %v1108 = vshrl.u32 %v394, 16
        %v1110 = vrot.slane %v1108, 7
        %v1111 = vrot.slane %v1110, 1
        %v1113 = vshll.u32 %v395, 16
        %v1115 = vsel %vm1025, %v1111, %v1113
        %v1116 = vshrl.u32 %v395, 16
        %v1118 = vrot.slane %v1116, 7
        %v1119 = vrot.slane %v1118, 1
        %v1121 = vshll.u32 %v396, 16
        %v1123 = vsel %vm1025, %v1119, %v1121
        %v1124 = vshrl.u32 %v396, 16
        %v1126 = vrot.slane %v1124, 7
        %v1127 = vrot.slane %v1126, 1
        %v1129 = vshll.u32 %v411, 16
        %v1131 = vsel %vm1025, %v1127, %v1129
        %v1132 = vshrl.u32 %v411, 16
        %v1134 = vrot.slane %v1132, 7
        %v1135 = vrot.slane %v1134, 1
        %v1137 = vshll.u32 %v418, 16
        %v1139 = vsel %vm1025, %v1135, %v1137
        %v1140 = vshrl.u32 %v418, 16
        %v1142 = vrot.slane %v1140, 7
        %v1143 = vrot.slane %v1142, 1
        %v1145 = vshll.u32 %v419, 16
        %v1147 = vsel %vm1025, %v1143, %v1145
        %v1148 = vshrl.u32 %v419, 16
        %v1150 = vrot.slane %v1148, 7
        %v1151 = vrot.slane %v1150, 1
        %v1153 = vshll.u32 %v420, 16
        %v1155 = vsel %vm1025, %v1151, %v1153
        %v1156 = vshrl.u32 %v420, 16
        %v1158 = vrot.slane %v1156, 7
        %v1159 = vrot.slane %v1158, 1
        %v1161 = vshll.u32 %v434, 16
        %v1163 = vsel %vm1025, %v1159, %v1161
        %v1164 = vshrl.u32 %v434, 16
        %v1166 = vrot.slane %v1164, 7
        %v1167 = vrot.slane %v1166, 1
        %v1169 = vshll.u32 %v946, 16
        %v1171 = vsel %vm1025, %v1167, %v1169
        %v1173 = vshrl.u32 %v449, 16
        %v1175 = vrot.slane %v1173, 7
        %v1176 = vrot.slane %v1175, 1
        %v1178 = vshll.u32 %v456, 16
        %v1180 = vsel %vm1025, %v1176, %v1178
        %v1181 = vshrl.u32 %v456, 16
        %v1183 = vrot.slane %v1181, 7
        %v1184 = vrot.slane %v1183, 1
        %v1186 = vshll.u32 %v457, 16
        %v1188 = vsel %vm1025, %v1184, %v1186
        %v1189 = vshrl.u32 %v457, 16
        %v1191 = vrot.slane %v1189, 7
        %v1192 = vrot.slane %v1191, 1
        %v1194 = vshll.u32 %v458, 16
        %v1196 = vsel %vm1025, %v1192, %v1194
        %v1197 = vshrl.u32 %v458, 16
        %v1199 = vrot.slane %v1197, 7
        %v1200 = vrot.slane %v1199, 1
        %v1202 = vshll.u32 %v473, 16
        %v1204 = vsel %vm1025, %v1200, %v1202
        %v1205 = vshrl.u32 %v473, 16
        %v1207 = vrot.slane %v1205, 7
        %v1208 = vrot.slane %v1207, 1
        %v1210 = vshll.u32 %v480, 16
        %v1212 = vsel %vm1025, %v1208, %v1210
        %v1213 = vshrl.u32 %v480, 16
        %v1215 = vrot.slane %v1213, 7
        %v1216 = vrot.slane %v1215, 1
        %v1218 = vshll.u32 %v481, 16
        %v1220 = vsel %vm1025, %v1216, %v1218
        %v1221 = vshrl.u32 %v481, 16
        %v1223 = vrot.slane %v1221, 7
        %v1224 = vrot.slane %v1223, 1
        %v1226 = vshll.u32 %v482, 16
        %v1228 = vsel %vm1025, %v1224, %v1226
        %v1229 = vshrl.u32 %v482, 16
        %v1231 = vrot.slane %v1229, 7
        %v1232 = vrot.slane %v1231, 1
        %v1234 = vshll.u32 %v496, 16
        %v1236 = vsel %vm1025, %v1232, %v1234
        %v1237 = vshrl.u32 %v496, 16
        %v1239 = vrot.slane %v1237, 7
        %v1240 = vrot.slane %v1239, 1
        %v1242 = vshll.u32 %v954, 16
        %v1244 = vsel %vm1025, %v1240, %v1242
        %v1246 = vshrl.u32 %v511, 16
        %v1248 = vrot.slane %v1246, 7
        %v1249 = vrot.slane %v1248, 1
        %v1251 = vshll.u32 %v518, 16
        %v1253 = vsel %vm1025, %v1249, %v1251
        %v1254 = vshrl.u32 %v518, 16
        %v1256 = vrot.slane %v1254, 7
        %v1257 = vrot.slane %v1256, 1
        %v1259 = vshll.u32 %v519, 16
        %v1261 = vsel %vm1025, %v1257, %v1259
        %v1262 = vshrl.u32 %v519, 16
        %v1264 = vrot.slane %v1262, 7
        %v1265 = vrot.slane %v1264, 1
        %v1267 = vshll.u32 %v520, 16
        %v1269 = vsel %vm1025, %v1265, %v1267
        %v1270 = vshrl.u32 %v520, 16
        %v1272 = vrot.slane %v1270, 7
        %v1273 = vrot.slane %v1272, 1
        %v1275 = vshll.u32 %v535, 16
        %v1277 = vsel %vm1025, %v1273, %v1275
        %v1278 = vshrl.u32 %v535, 16
        %v1280 = vrot.slane %v1278, 7
        %v1281 = vrot.slane %v1280, 1
        %v1283 = vshll.u32 %v542, 16
        %v1285 = vsel %vm1025, %v1281, %v1283
        %v1286 = vshrl.u32 %v542, 16
        %v1288 = vrot.slane %v1286, 7
        %v1289 = vrot.slane %v1288, 1
        %v1291 = vshll.u32 %v543, 16
        %v1293 = vsel %vm1025, %v1289, %v1291
        %v1294 = vshrl.u32 %v543, 16
        %v1296 = vrot.slane %v1294, 7
        %v1297 = vrot.slane %v1296, 1
        %v1299 = vshll.u32 %v544, 16
        %v1301 = vsel %vm1025, %v1297, %v1299
        %v1302 = vshrl.u32 %v544, 16
        %v1304 = vrot.slane %v1302, 7
        %v1305 = vrot.slane %v1304, 1
        %v1307 = vshll.u32 %v558, 16
        %v1309 = vsel %vm1025, %v1305, %v1307
        %v1310 = vshrl.u32 %v558, 16
        %v1312 = vrot.slane %v1310, 7
        %v1313 = vrot.slane %v1312, 1
        %v1315 = vshll.u32 %v962, 16
        %v1317 = vsel %vm1025, %v1313, %v1315
        %v1319 = vshrl.u32 %v573, 16
        %v1321 = vrot.slane %v1319, 7
        %v1322 = vrot.slane %v1321, 1
        %v1324 = vshll.u32 %v580, 16
        %v1326 = vsel %vm1025, %v1322, %v1324
        %v1327 = vshrl.u32 %v580, 16
        %v1329 = vrot.slane %v1327, 7
        %v1330 = vrot.slane %v1329, 1
        %v1332 = vshll.u32 %v581, 16
        %v1334 = vsel %vm1025, %v1330, %v1332
        %v1335 = vshrl.u32 %v581, 16
        %v1337 = vrot.slane %v1335, 7
        %v1338 = vrot.slane %v1337, 1
        %v1340 = vshll.u32 %v582, 16
        %v1342 = vsel %vm1025, %v1338, %v1340
        %v1343 = vshrl.u32 %v582, 16
        %v1345 = vrot.slane %v1343, 7
        %v1346 = vrot.slane %v1345, 1
        %v1348 = vshll.u32 %v597, 16
        %v1350 = vsel %vm1025, %v1346, %v1348
        %v1351 = vshrl.u32 %v597, 16
        %v1353 = vrot.slane %v1351, 7
        %v1354 = vrot.slane %v1353, 1
        %v1356 = vshll.u32 %v604, 16
        %v1358 = vsel %vm1025, %v1354, %v1356
        %v1359 = vshrl.u32 %v604, 16
        %v1361 = vrot.slane %v1359, 7
        %v1362 = vrot.slane %v1361, 1
        %v1364 = vshll.u32 %v605, 16
        %v1366 = vsel %vm1025, %v1362, %v1364
        %v1367 = vshrl.u32 %v605, 16
        %v1369 = vrot.slane %v1367, 7
        %v1370 = vrot.slane %v1369, 1
        %v1372 = vshll.u32 %v606, 16
        %v1374 = vsel %vm1025, %v1370, %v1372
        %v1375 = vshrl.u32 %v606, 16
        %v1377 = vrot.slane %v1375, 7
        %v1378 = vrot.slane %v1377, 1
        %v1380 = vshll.u32 %v620, 16
        %v1382 = vsel %vm1025, %v1378, %v1380
        %v1383 = vshrl.u32 %v620, 16
        %v1385 = vrot.slane %v1383, 7
        %v1386 = vrot.slane %v1385, 1
        %v1388 = vshll.u32 %v970, 16
        %v1390 = vsel %vm1025, %v1386, %v1388
        %v1392 = vshrl.u32 %v635, 16
        %v1394 = vrot.slane %v1392, 7
        %v1395 = vrot.slane %v1394, 1
        %v1397 = vshll.u32 %v642, 16
        %v1399 = vsel %vm1025, %v1395, %v1397
        %v1400 = vshrl.u32 %v642, 16
        %v1402 = vrot.slane %v1400, 7
        %v1403 = vrot.slane %v1402, 1
        %v1405 = vshll.u32 %v643, 16
        %v1407 = vsel %vm1025, %v1403, %v1405
        %v1408 = vshrl.u32 %v643, 16
        %v1410 = vrot.slane %v1408, 7
        %v1411 = vrot.slane %v1410, 1
        %v1413 = vshll.u32 %v644, 16
        %v1415 = vsel %vm1025, %v1411, %v1413
        %v1416 = vshrl.u32 %v644, 16
        %v1418 = vrot.slane %v1416, 7
        %v1419 = vrot.slane %v1418, 1
        %v1421 = vshll.u32 %v659, 16
        %v1423 = vsel %vm1025, %v1419, %v1421
        %v1424 = vshrl.u32 %v659, 16
        %v1426 = vrot.slane %v1424, 7
        %v1427 = vrot.slane %v1426, 1
        %v1429 = vshll.u32 %v666, 16
        %v1431 = vsel %vm1025, %v1427, %v1429
        %v1432 = vshrl.u32 %v666, 16
        %v1434 = vrot.slane %v1432, 7
        %v1435 = vrot.slane %v1434, 1
        %v1437 = vshll.u32 %v667, 16
        %v1439 = vsel %vm1025, %v1435, %v1437
        %v1440 = vshrl.u32 %v667, 16
        %v1442 = vrot.slane %v1440, 7
        %v1443 = vrot.slane %v1442, 1
        %v1445 = vshll.u32 %v668, 16
        %v1447 = vsel %vm1025, %v1443, %v1445
        %v1448 = vshrl.u32 %v668, 16
        %v1450 = vrot.slane %v1448, 7
        %v1451 = vrot.slane %v1450, 1
        %v1453 = vshll.u32 %v682, 16
        %v1455 = vsel %vm1025, %v1451, %v1453
        %v1456 = vshrl.u32 %v682, 16
        %v1458 = vrot.slane %v1456, 7
        %v1459 = vrot.slane %v1458, 1
        %v1461 = vshll.u32 %v978, 16
        %v1463 = vsel %vm1025, %v1459, %v1461
        %v1465 = vshrl.u32 %v697, 16
        %v1467 = vrot.slane %v1465, 7
        %v1468 = vrot.slane %v1467, 1
        %v1470 = vshll.u32 %v704, 16
        %v1472 = vsel %vm1025, %v1468, %v1470
        %v1473 = vshrl.u32 %v704, 16
        %v1475 = vrot.slane %v1473, 7
        %v1476 = vrot.slane %v1475, 1
        %v1478 = vshll.u32 %v705, 16
        %v1480 = vsel %vm1025, %v1476, %v1478
        %v1481 = vshrl.u32 %v705, 16
        %v1483 = vrot.slane %v1481, 7
        %v1484 = vrot.slane %v1483, 1
        %v1486 = vshll.u32 %v706, 16
        %v1488 = vsel %vm1025, %v1484, %v1486
        %v1489 = vshrl.u32 %v706, 16
        %v1491 = vrot.slane %v1489, 7
        %v1492 = vrot.slane %v1491, 1
        %v1494 = vshll.u32 %v721, 16
        %v1496 = vsel %vm1025, %v1492, %v1494
        %v1497 = vshrl.u32 %v721, 16
        %v1499 = vrot.slane %v1497, 7
        %v1500 = vrot.slane %v1499, 1
        %v1502 = vshll.u32 %v728, 16
        %v1504 = vsel %vm1025, %v1500, %v1502
        %v1505 = vshrl.u32 %v728, 16
        %v1507 = vrot.slane %v1505, 7
        %v1508 = vrot.slane %v1507, 1
        %v1510 = vshll.u32 %v729, 16
        %v1512 = vsel %vm1025, %v1508, %v1510
        %v1513 = vshrl.u32 %v729, 16
        %v1515 = vrot.slane %v1513, 7
        %v1516 = vrot.slane %v1515, 1
        %v1518 = vshll.u32 %v730, 16
        %v1520 = vsel %vm1025, %v1516, %v1518
        %v1521 = vshrl.u32 %v730, 16
        %v1523 = vrot.slane %v1521, 7
        %v1524 = vrot.slane %v1523, 1
        %v1526 = vshll.u32 %v744, 16
        %v1528 = vsel %vm1025, %v1524, %v1526
        %v1529 = vshrl.u32 %v744, 16
        %v1531 = vrot.slane %v1529, 7
        %v1532 = vrot.slane %v1531, 1
        %v1534 = vshll.u32 %v986, 16
        %v1536 = vsel %vm1025, %v1532, %v1534
        %v1538 = vshrl.u32 %v759, 16
        %v1540 = vrot.slane %v1538, 7
        %v1541 = vrot.slane %v1540, 1
        %v1543 = vshll.u32 %v766, 16
        %v1545 = vsel %vm1025, %v1541, %v1543
        %v1546 = vshrl.u32 %v766, 16
        %v1548 = vrot.slane %v1546, 7
        %v1549 = vrot.slane %v1548, 1
        %v1551 = vshll.u32 %v767, 16
        %v1553 = vsel %vm1025, %v1549, %v1551
        %v1554 = vshrl.u32 %v767, 16
        %v1556 = vrot.slane %v1554, 7
        %v1557 = vrot.slane %v1556, 1
        %v1559 = vshll.u32 %v768, 16
        %v1561 = vsel %vm1025, %v1557, %v1559
        %v1562 = vshrl.u32 %v768, 16
        %v1564 = vrot.slane %v1562, 7
        %v1565 = vrot.slane %v1564, 1
        %v1567 = vshll.u32 %v783, 16
        %v1569 = vsel %vm1025, %v1565, %v1567
        %v1570 = vshrl.u32 %v783, 16
        %v1572 = vrot.slane %v1570, 7
        %v1573 = vrot.slane %v1572, 1
        %v1575 = vshll.u32 %v790, 16
        %v1577 = vsel %vm1025, %v1573, %v1575
        %v1578 = vshrl.u32 %v790, 16
        %v1580 = vrot.slane %v1578, 7
        %v1581 = vrot.slane %v1580, 1
        %v1583 = vshll.u32 %v791, 16
        %v1585 = vsel %vm1025, %v1581, %v1583
        %v1586 = vshrl.u32 %v791, 16
        %v1588 = vrot.slane %v1586, 7
        %v1589 = vrot.slane %v1588, 1
        %v1591 = vshll.u32 %v792, 16
        %v1593 = vsel %vm1025, %v1589, %v1591
        %v1594 = vshrl.u32 %v792, 16
        %v1596 = vrot.slane %v1594, 7
        %v1597 = vrot.slane %v1596, 1
        %v1599 = vshll.u32 %v806, 16
        %v1601 = vsel %vm1025, %v1597, %v1599
        %v1602 = vshrl.u32 %v806, 16
        %v1604 = vrot.slane %v1602, 7
        %v1605 = vrot.slane %v1604, 1
        %v1607 = vshll.u32 %v994, 16
        %v1609 = vsel %vm1025, %v1605, %v1607
        %v1611 = vshrl.u32 %v821, 16
        %v1613 = vrot.slane %v1611, 7
        %v1614 = vrot.slane %v1613, 1
        %v1616 = vshll.u32 %v828, 16
        %v1618 = vsel %vm1025, %v1614, %v1616
        %v1619 = vshrl.u32 %v828, 16
        %v1621 = vrot.slane %v1619, 7
        %v1622 = vrot.slane %v1621, 1
        %v1624 = vshll.u32 %v829, 16
        %v1626 = vsel %vm1025, %v1622, %v1624
        %v1627 = vshrl.u32 %v829, 16
        %v1629 = vrot.slane %v1627, 7
        %v1630 = vrot.slane %v1629, 1
        %v1632 = vshll.u32 %v830, 16
        %v1634 = vsel %vm1025, %v1630, %v1632
        %v1635 = vshrl.u32 %v830, 16
        %v1637 = vrot.slane %v1635, 7
        %v1638 = vrot.slane %v1637, 1
        %v1640 = vshll.u32 %v845, 16
        %v1642 = vsel %vm1025, %v1638, %v1640
        %v1643 = vshrl.u32 %v845, 16
        %v1645 = vrot.slane %v1643, 7
        %v1646 = vrot.slane %v1645, 1
        %v1648 = vshll.u32 %v852, 16
        %v1650 = vsel %vm1025, %v1646, %v1648
        %v1651 = vshrl.u32 %v852, 16
        %v1653 = vrot.slane %v1651, 7
        %v1654 = vrot.slane %v1653, 1
        %v1656 = vshll.u32 %v853, 16
        %v1658 = vsel %vm1025, %v1654, %v1656
        %v1659 = vshrl.u32 %v853, 16
        %v1661 = vrot.slane %v1659, 7
        %v1662 = vrot.slane %v1661, 1
        %v1664 = vshll.u32 %v854, 16
        %v1666 = vsel %vm1025, %v1662, %v1664
        %v1667 = vshrl.u32 %v854, 16
        %v1669 = vrot.slane %v1667, 7
        %v1670 = vrot.slane %v1669, 1
        %v1672 = vshll.u32 %v868, 16
        %v1674 = vsel %vm1025, %v1670, %v1672
        %v1675 = vshrl.u32 %v868, 16
        %v1677 = vrot.slane %v1675, 7
        %v1678 = vrot.slane %v1677, 1
        %v1680 = vshll.u32 %v1002, 16
        %v1682 = vsel %vm1025, %v1678, %v1680
        %v1684 = vshrl.u32 %v883, 16
        %v1686 = vrot.slane %v1684, 7
        %v1687 = vrot.slane %v1686, 1
        %v1689 = vshll.u32 %v890, 16
        %v1691 = vsel %vm1025, %v1687, %v1689
        %v1692 = vshrl.u32 %v890, 16
        %v1694 = vrot.slane %v1692, 7
        %v1695 = vrot.slane %v1694, 1
        %v1697 = vshll.u32 %v891, 16
        %v1699 = vsel %vm1025, %v1695, %v1697
        %v1700 = vshrl.u32 %v891, 16
        %v1702 = vrot.slane %v1700, 7
        %v1703 = vrot.slane %v1702, 1
        %v1705 = vshll.u32 %v892, 16
        %v1707 = vsel %vm1025, %v1703, %v1705
        %v1708 = vshrl.u32 %v892, 16
        %v1710 = vrot.slane %v1708, 7
        %v1711 = vrot.slane %v1710, 1
        %v1713 = vshll.u32 %v907, 16
        %v1715 = vsel %vm1025, %v1711, %v1713
        %v1716 = vshrl.u32 %v907, 16
        %v1718 = vrot.slane %v1716, 7
        %v1719 = vrot.slane %v1718, 1
        %v1721 = vshll.u32 %v914, 16
        %v1723 = vsel %vm1025, %v1719, %v1721
        %v1724 = vshrl.u32 %v914, 16
        %v1726 = vrot.slane %v1724, 7
        %v1727 = vrot.slane %v1726, 1
        %v1729 = vshll.u32 %v915, 16
        %v1731 = vsel %vm1025, %v1727, %v1729
        %v1732 = vshrl.u32 %v915, 16
        %v1734 = vrot.slane %v1732, 7
        %v1735 = vrot.slane %v1734, 1
        %v1737 = vshll.u32 %v916, 16
        %v1739 = vsel %vm1025, %v1735, %v1737
        %v1740 = vshrl.u32 %v916, 16
        %v1742 = vrot.slane %v1740, 7
        %v1743 = vrot.slane %v1742, 1
        %v1745 = vshll.u32 %v930, 16
        %v1747 = vsel %vm1025, %v1743, %v1745
        %v1748 = vshrl.u32 %v930, 16
        %v1750 = vrot.slane %v1748, 7
        %v1751 = vrot.slane %v1750, 1
        %v1753 = vshll.u32 %v1010, 16
        %v1755 = vsel %vm1025, %v1751, %v1753
        %v1756 = vcombine.low %v325, %v332
        %v1757 = vcombine.low %v333, %v334
        %v1758 = vcombine.low %v349, %v356
        %v1759 = vcombine.low %v357, %v358
        %v1761 = vunpack.c.l.s4 1966171168
        %v1762 = vunpack.c.0.s8 %v1761
        %v1763 = vlaneseq
        %v1764 = vshrl.u32 %v1763, 7
        %v1765 = vsub.s32 %v1762, %v1764
        %v1766 = vrot.slane %v1756, %v1765
        %v1768 = vunpack.c.l.s4 1966171168
        %v1769 = vunpack.c.0.s8 %v1768
        %v1770 = vlaneseq
        %v1771 = vshrl.u32 %v1770, 7
        %v1772 = vsub.s32 %v1769, %v1771
        %v1773 = vrot.slane %v1757, %v1772
        %v1775 = vunpack.c.l.s4 1966171168
        %v1776 = vunpack.c.0.s8 %v1775
        %v1777 = vlaneseq
        %v1778 = vshrl.u32 %v1777, 7
        %v1779 = vsub.s32 %v1776, %v1778
        %v1780 = vrot.slane %v1758, %v1779
        %v1782 = vunpack.c.l.s4 1966171168
        %v1783 = vunpack.c.0.s8 %v1782
        %v1784 = vlaneseq
        %v1785 = vshrl.u32 %v1784, 7
        %v1786 = vsub.s32 %v1783, %v1785
        %v1787 = vrot.slane %v1759, %v1786
        %v1788 = vcombine.low %v1766, %v1773
        %v1789 = vcombine.low %v1780, %v1787
        %v1791 = vunpack.c.l.s4 1966171168
        %v1792 = vunpack.c.0.s8 %v1791
        %v1793 = vlaneseq
        %v1794 = vshrl.u32 %v1793, 7
        %v1795 = vsub.s32 %v1792, %v1794
        %v1796 = vrot.slane %v1788, %v1795
        %v1798 = vunpack.c.l.s4 1966171168
        %v1799 = vunpack.c.0.s8 %v1798
        %v1800 = vlaneseq
        %v1801 = vshrl.u32 %v1800, 7
        %v1802 = vsub.s32 %v1799, %v1801
        %v1803 = vrot.slane %v1789, %v1802
        %v1804 = vcombine.low %v1796, %v1803
        %v1805 = vcombine.low %v372, %v387
        %v1806 = vcombine.low %v394, %v395
        %v1807 = vcombine.low %v396, %v411
        %v1808 = vcombine.low %v418, %v419
        %v1810 = vunpack.c.l.s4 1966171168
        %v1811 = vunpack.c.0.s8 %v1810
        %v1812 = vlaneseq
        %v1813 = vshrl.u32 %v1812, 7
        %v1814 = vsub.s32 %v1811, %v1813
        %v1815 = vrot.slane %v1805, %v1814
        %v1817 = vunpack.c.l.s4 1966171168
        %v1818 = vunpack.c.0.s8 %v1817
        %v1819 = vlaneseq
        %v1820 = vshrl.u32 %v1819, 7
        %v1821 = vsub.s32 %v1818, %v1820
        %v1822 = vrot.slane %v1806, %v1821
        %v1824 = vunpack.c.l.s4 1966171168
        %v1825 = vunpack.c.0.s8 %v1824
        %v1826 = vlaneseq
        %v1827 = vshrl.u32 %v1826, 7
        %v1828 = vsub.s32 %v1825, %v1827
        %v1829 = vrot.slane %v1807, %v1828
        %v1831 = vunpack.c.l.s4 1966171168
        %v1832 = vunpack.c.0.s8 %v1831
        %v1833 = vlaneseq
        %v1834 = vshrl.u32 %v1833, 7
        %v1835 = vsub.s32 %v1832, %v1834
        %v1836 = vrot.slane %v1808, %v1835
        %v1837 = vcombine.low %v1815, %v1822
        %v1838 = vcombine.low %v1829, %v1836
        %v1840 = vunpack.c.l.s4 1966171168
        %v1841 = vunpack.c.0.s8 %v1840
        %v1842 = vlaneseq
        %v1843 = vshrl.u32 %v1842, 7
        %v1844 = vsub.s32 %v1841, %v1843
        %v1845 = vrot.slane %v1837, %v1844
        %v1847 = vunpack.c.l.s4 1966171168
        %v1848 = vunpack.c.0.s8 %v1847
        %v1849 = vlaneseq
        %v1850 = vshrl.u32 %v1849, 7
        %v1851 = vsub.s32 %v1848, %v1850
        %v1852 = vrot.slane %v1838, %v1851
        %v1853 = vcombine.low %v1845, %v1852
        %v1854 = vcombine.low %v420, %v434
        %v1855 = vcombine.low %v449, %v456
        %v1856 = vcombine.low %v457, %v458
        %v1857 = vcombine.low %v473, %v480
        %v1859 = vunpack.c.l.s4 1966171168
        %v1860 = vunpack.c.0.s8 %v1859
        %v1861 = vlaneseq
        %v1862 = vshrl.u32 %v1861, 7
        %v1863 = vsub.s32 %v1860, %v1862
        %v1864 = vrot.slane %v1854, %v1863
        %v1866 = vunpack.c.l.s4 1966171168
        %v1867 = vunpack.c.0.s8 %v1866
        %v1868 = vlaneseq
        %v1869 = vshrl.u32 %v1868, 7
        %v1870 = vsub.s32 %v1867, %v1869
        %v1871 = vrot.slane %v1855, %v1870
        %v1873 = vunpack.c.l.s4 1966171168
        %v1874 = vunpack.c.0.s8 %v1873
        %v1875 = vlaneseq
        %v1876 = vshrl.u32 %v1875, 7
        %v1877 = vsub.s32 %v1874, %v1876
        %v1878 = vrot.slane %v1856, %v1877
        %v1880 = vunpack.c.l.s4 1966171168
        %v1881 = vunpack.c.0.s8 %v1880
        %v1882 = vlaneseq
        %v1883 = vshrl.u32 %v1882, 7
        %v1884 = vsub.s32 %v1881, %v1883
        %v1885 = vrot.slane %v1857, %v1884
        %v1886 = vcombine.low %v1864, %v1871
        %v1887 = vcombine.low %v1878, %v1885
        %v1889 = vunpack.c.l.s4 1966171168
        %v1890 = vunpack.c.0.s8 %v1889
        %v1891 = vlaneseq
        %v1892 = vshrl.u32 %v1891, 7
        %v1893 = vsub.s32 %v1890, %v1892
        %v1894 = vrot.slane %v1886, %v1893
        %v1896 = vunpack.c.l.s4 1966171168
        %v1897 = vunpack.c.0.s8 %v1896
        %v1898 = vlaneseq
        %v1899 = vshrl.u32 %v1898, 7
        %v1900 = vsub.s32 %v1897, %v1899
        %v1901 = vrot.slane %v1887, %v1900
        %v1902 = vcombine.low %v1894, %v1901
        %v1903 = vcombine.low %v481, %v482
        %v1904 = vcombine.low %v496, %v511
        %v1905 = vcombine.low %v518, %v519
        %v1906 = vcombine.low %v520, %v535
        %v1908 = vunpack.c.l.s4 1966171168
        %v1909 = vunpack.c.0.s8 %v1908
        %v1910 = vlaneseq
        %v1911 = vshrl.u32 %v1910, 7
        %v1912 = vsub.s32 %v1909, %v1911
        %v1913 = vrot.slane %v1903, %v1912
        %v1915 = vunpack.c.l.s4 1966171168
        %v1916 = vunpack.c.0.s8 %v1915
        %v1917 = vlaneseq
        %v1918 = vshrl.u32 %v1917, 7
        %v1919 = vsub.s32 %v1916, %v1918
        %v1920 = vrot.slane %v1904, %v1919
        %v1922 = vunpack.c.l.s4 1966171168
        %v1923 = vunpack.c.0.s8 %v1922
        %v1924 = vlaneseq
        %v1925 = vshrl.u32 %v1924, 7
        %v1926 = vsub.s32 %v1923, %v1925
        %v1927 = vrot.slane %v1905, %v1926
        %v1929 = vunpack.c.l.s4 1966171168
        %v1930 = vunpack.c.0.s8 %v1929
        %v1931 = vlaneseq
        %v1932 = vshrl.u32 %v1931, 7
        %v1933 = vsub.s32 %v1930, %v1932
        %v1934 = vrot.slane %v1906, %v1933
        %v1935 = vcombine.low %v1913, %v1920
        %v1936 = vcombine.low %v1927, %v1934
        %v1938 = vunpack.c.l.s4 1966171168
        %v1939 = vunpack.c.0.s8 %v1938
        %v1940 = vlaneseq
        %v1941 = vshrl.u32 %v1940, 7
        %v1942 = vsub.s32 %v1939, %v1941
        %v1943 = vrot.slane %v1935, %v1942
        %v1945 = vunpack.c.l.s4 1966171168
        %v1946 = vunpack.c.0.s8 %v1945
        %v1947 = vlaneseq
        %v1948 = vshrl.u32 %v1947, 7
        %v1949 = vsub.s32 %v1946, %v1948
        %v1950 = vrot.slane %v1936, %v1949
        %v1951 = vcombine.low %v1943, %v1950
        %v1952 = vcombine.low %v542, %v543
        %v1953 = vcombine.low %v544, %v558
        %v1954 = vcombine.low %v573, %v580
        %v1955 = vcombine.low %v581, %v582
        %v1957 = vunpack.c.l.s4 1966171168
        %v1958 = vunpack.c.0.s8 %v1957
        %v1959 = vlaneseq
        %v1960 = vshrl.u32 %v1959, 7
        %v1961 = vsub.s32 %v1958, %v1960
        %v1962 = vrot.slane %v1952, %v1961
        %v1964 = vunpack.c.l.s4 1966171168
        %v1965 = vunpack.c.0.s8 %v1964
        %v1966 = vlaneseq
        %v1967 = vshrl.u32 %v1966, 7
        %v1968 = vsub.s32 %v1965, %v1967
        %v1969 = vrot.slane %v1953, %v1968
        %v1971 = vunpack.c.l.s4 1966171168
        %v1972 = vunpack.c.0.s8 %v1971
        %v1973 = vlaneseq
        %v1974 = vshrl.u32 %v1973, 7
        %v1975 = vsub.s32 %v1972, %v1974
        %v1976 = vrot.slane %v1954, %v1975
        %v1978 = vunpack.c.l.s4 1966171168
        %v1979 = vunpack.c.0.s8 %v1978
        %v1980 = vlaneseq
        %v1981 = vshrl.u32 %v1980, 7
        %v1982 = vsub.s32 %v1979, %v1981
        %v1983 = vrot.slane %v1955, %v1982
        %v1984 = vcombine.low %v1962, %v1969
        %v1985 = vcombine.low %v1976, %v1983
        %v1987 = vunpack.c.l.s4 1966171168
        %v1988 = vunpack.c.0.s8 %v1987
        %v1989 = vlaneseq
        %v1990 = vshrl.u32 %v1989, 7
        %v1991 = vsub.s32 %v1988, %v1990
        %v1992 = vrot.slane %v1984, %v1991
        %v1994 = vunpack.c.l.s4 1966171168
        %v1995 = vunpack.c.0.s8 %v1994
        %v1996 = vlaneseq
        %v1997 = vshrl.u32 %v1996, 7
        %v1998 = vsub.s32 %v1995, %v1997
        %v1999 = vrot.slane %v1985, %v1998
        %v2000 = vcombine.low %v1992, %v1999
        %v2001 = vcombine.low %v597, %v604
        %v2002 = vcombine.low %v605, %v606
        %v2003 = vcombine.low %v620, %v635
        %v2004 = vcombine.low %v642, %v643
        %v2006 = vunpack.c.l.s4 1966171168
        %v2007 = vunpack.c.0.s8 %v2006
        %v2008 = vlaneseq
        %v2009 = vshrl.u32 %v2008, 7
        %v2010 = vsub.s32 %v2007, %v2009
        %v2011 = vrot.slane %v2001, %v2010
        %v2013 = vunpack.c.l.s4 1966171168
        %v2014 = vunpack.c.0.s8 %v2013
        %v2015 = vlaneseq
        %v2016 = vshrl.u32 %v2015, 7
        %v2017 = vsub.s32 %v2014, %v2016
        %v2018 = vrot.slane %v2002, %v2017
        %v2020 = vunpack.c.l.s4 1966171168
        %v2021 = vunpack.c.0.s8 %v2020
        %v2022 = vlaneseq
        %v2023 = vshrl.u32 %v2022, 7
        %v2024 = vsub.s32 %v2021, %v2023
        %v2025 = vrot.slane %v2003, %v2024
        %v2027 = vunpack.c.l.s4 1966171168
        %v2028 = vunpack.c.0.s8 %v2027
        %v2029 = vlaneseq
        %v2030 = vshrl.u32 %v2029, 7
        %v2031 = vsub.s32 %v2028, %v2030
        %v2032 = vrot.slane %v2004, %v2031
        %v2033 = vcombine.low %v2011, %v2018
        %v2034 = vcombine.low %v2025, %v2032
        %v2036 = vunpack.c.l.s4 1966171168
        %v2037 = vunpack.c.0.s8 %v2036
        %v2038 = vlaneseq
        %v2039 = vshrl.u32 %v2038, 7
        %v2040 = vsub.s32 %v2037, %v2039
        %v2041 = vrot.slane %v2033, %v2040
        %v2043 = vunpack.c.l.s4 1966171168
        %v2044 = vunpack.c.0.s8 %v2043
        %v2045 = vlaneseq
        %v2046 = vshrl.u32 %v2045, 7
        %v2047 = vsub.s32 %v2044, %v2046
        %v2048 = vrot.slane %v2034, %v2047
        %v2049 = vcombine.low %v2041, %v2048
        %v2050 = vcombine.low %v644, %v659
        %v2051 = vcombine.low %v666, %v667
        %v2052 = vcombine.low %v668, %v682
        %v2053 = vcombine.low %v697, %v704
        %v2055 = vunpack.c.l.s4 1966171168
        %v2056 = vunpack.c.0.s8 %v2055
        %v2057 = vlaneseq
        %v2058 = vshrl.u32 %v2057, 7
        %v2059 = vsub.s32 %v2056, %v2058
        %v2060 = vrot.slane %v2050, %v2059
        %v2062 = vunpack.c.l.s4 1966171168
        %v2063 = vunpack.c.0.s8 %v2062
        %v2064 = vlaneseq
        %v2065 = vshrl.u32 %v2064, 7
        %v2066 = vsub.s32 %v2063, %v2065
        %v2067 = vrot.slane %v2051, %v2066
        %v2069 = vunpack.c.l.s4 1966171168
        %v2070 = vunpack.c.0.s8 %v2069
        %v2071 = vlaneseq
        %v2072 = vshrl.u32 %v2071, 7
        %v2073 = vsub.s32 %v2070, %v2072
        %v2074 = vrot.slane %v2052, %v2073
        %v2076 = vunpack.c.l.s4 1966171168
        %v2077 = vunpack.c.0.s8 %v2076
        %v2078 = vlaneseq
        %v2079 = vshrl.u32 %v2078, 7
        %v2080 = vsub.s32 %v2077, %v2079
        %v2081 = vrot.slane %v2053, %v2080
        %v2082 = vcombine.low %v2060, %v2067
        %v2083 = vcombine.low %v2074, %v2081
        %v2085 = vunpack.c.l.s4 1966171168
        %v2086 = vunpack.c.0.s8 %v2085
        %v2087 = vlaneseq
        %v2088 = vshrl.u32 %v2087, 7
        %v2089 = vsub.s32 %v2086, %v2088
        %v2090 = vrot.slane %v2082, %v2089
        %v2092 = vunpack.c.l.s4 1966171168
        %v2093 = vunpack.c.0.s8 %v2092
        %v2094 = vlaneseq
        %v2095 = vshrl.u32 %v2094, 7
        %v2096 = vsub.s32 %v2093, %v2095
        %v2097 = vrot.slane %v2083, %v2096
        %v2098 = vcombine.low %v2090, %v2097
        %v2099 = vcombine.low %v705, %v706
        %v2100 = vcombine.low %v721, %v728
        %v2101 = vcombine.low %v729, %v730
        %v2102 = vcombine.low %v744, %v759
        %v2104 = vunpack.c.l.s4 1966171168
        %v2105 = vunpack.c.0.s8 %v2104
        %v2106 = vlaneseq
        %v2107 = vshrl.u32 %v2106, 7
        %v2108 = vsub.s32 %v2105, %v2107
        %v2109 = vrot.slane %v2099, %v2108
        %v2111 = vunpack.c.l.s4 1966171168
        %v2112 = vunpack.c.0.s8 %v2111
        %v2113 = vlaneseq
        %v2114 = vshrl.u32 %v2113, 7
        %v2115 = vsub.s32 %v2112, %v2114
        %v2116 = vrot.slane %v2100, %v2115
        %v2118 = vunpack.c.l.s4 1966171168
        %v2119 = vunpack.c.0.s8 %v2118
        %v2120 = vlaneseq
        %v2121 = vshrl.u32 %v2120, 7
        %v2122 = vsub.s32 %v2119, %v2121
        %v2123 = vrot.slane %v2101, %v2122
        %v2125 = vunpack.c.l.s4 1966171168
        %v2126 = vunpack.c.0.s8 %v2125
        %v2127 = vlaneseq
        %v2128 = vshrl.u32 %v2127, 7
        %v2129 = vsub.s32 %v2126, %v2128
        %v2130 = vrot.slane %v2102, %v2129
        %v2131 = vcombine.low %v2109, %v2116
        %v2132 = vcombine.low %v2123, %v2130
        %v2134 = vunpack.c.l.s4 1966171168
        %v2135 = vunpack.c.0.s8 %v2134
        %v2136 = vlaneseq
        %v2137 = vshrl.u32 %v2136, 7
        %v2138 = vsub.s32 %v2135, %v2137
        %v2139 = vrot.slane %v2131, %v2138
        %v2141 = vunpack.c.l.s4 1966171168
        %v2142 = vunpack.c.0.s8 %v2141
        %v2143 = vlaneseq
        %v2144 = vshrl.u32 %v2143, 7
        %v2145 = vsub.s32 %v2142, %v2144
        %v2146 = vrot.slane %v2132, %v2145
        %v2147 = vcombine.low %v2139, %v2146
        %v2148 = vcombine.low %v766, %v767
        %v2149 = vcombine.low %v768, %v783
        %v2150 = vcombine.low %v790, %v791
        %v2151 = vcombine.low %v792, %v806
        %v2153 = vunpack.c.l.s4 1966171168
        %v2154 = vunpack.c.0.s8 %v2153
        %v2155 = vlaneseq
        %v2156 = vshrl.u32 %v2155, 7
        %v2157 = vsub.s32 %v2154, %v2156
        %v2158 = vrot.slane %v2148, %v2157
        %v2160 = vunpack.c.l.s4 1966171168
        %v2161 = vunpack.c.0.s8 %v2160
        %v2162 = vlaneseq
        %v2163 = vshrl.u32 %v2162, 7
        %v2164 = vsub.s32 %v2161, %v2163
        %v2165 = vrot.slane %v2149, %v2164
        %v2167 = vunpack.c.l.s4 1966171168
        %v2168 = vunpack.c.0.s8 %v2167
        %v2169 = vlaneseq
        %v2170 = vshrl.u32 %v2169, 7
        %v2171 = vsub.s32 %v2168, %v2170
        %v2172 = vrot.slane %v2150, %v2171
        %v2174 = vunpack.c.l.s4 1966171168
        %v2175 = vunpack.c.0.s8 %v2174
        %v2176 = vlaneseq
        %v2177 = vshrl.u32 %v2176, 7
        %v2178 = vsub.s32 %v2175, %v2177
        %v2179 = vrot.slane %v2151, %v2178
        %v2180 = vcombine.low %v2158, %v2165
        %v2181 = vcombine.low %v2172, %v2179
        %v2183 = vunpack.c.l.s4 1966171168
        %v2184 = vunpack.c.0.s8 %v2183
        %v2185 = vlaneseq
        %v2186 = vshrl.u32 %v2185, 7
        %v2187 = vsub.s32 %v2184, %v2186
        %v2188 = vrot.slane %v2180, %v2187
        %v2190 = vunpack.c.l.s4 1966171168
        %v2191 = vunpack.c.0.s8 %v2190
        %v2192 = vlaneseq
        %v2193 = vshrl.u32 %v2192, 7
        %v2194 = vsub.s32 %v2191, %v2193
        %v2195 = vrot.slane %v2181, %v2194
        %v2196 = vcombine.low %v2188, %v2195
        %v2197 = vcombine.low %v821, %v828
        %v2198 = vcombine.low %v829, %v830
        %v2199 = vcombine.low %v845, %v852
        %v2200 = vcombine.low %v853, %v854
        %v2202 = vunpack.c.l.s4 1966171168
        %v2203 = vunpack.c.0.s8 %v2202
        %v2204 = vlaneseq
        %v2205 = vshrl.u32 %v2204, 7
        %v2206 = vsub.s32 %v2203, %v2205
        %v2207 = vrot.slane %v2197, %v2206
        %v2209 = vunpack.c.l.s4 1966171168
        %v2210 = vunpack.c.0.s8 %v2209
        %v2211 = vlaneseq
        %v2212 = vshrl.u32 %v2211, 7
        %v2213 = vsub.s32 %v2210, %v2212
        %v2214 = vrot.slane %v2198, %v2213
        %v2216 = vunpack.c.l.s4 1966171168
        %v2217 = vunpack.c.0.s8 %v2216
        %v2218 = vlaneseq
        %v2219 = vshrl.u32 %v2218, 7
        %v2220 = vsub.s32 %v2217, %v2219
        %v2221 = vrot.slane %v2199, %v2220
        %v2223 = vunpack.c.l.s4 1966171168
        %v2224 = vunpack.c.0.s8 %v2223
        %v2225 = vlaneseq
        %v2226 = vshrl.u32 %v2225, 7
        %v2227 = vsub.s32 %v2224, %v2226
        %v2228 = vrot.slane %v2200, %v2227
        %v2229 = vcombine.low %v2207, %v2214
        %v2230 = vcombine.low %v2221, %v2228
        %v2232 = vunpack.c.l.s4 1966171168
        %v2233 = vunpack.c.0.s8 %v2232
        %v2234 = vlaneseq
        %v2235 = vshrl.u32 %v2234, 7
        %v2236 = vsub.s32 %v2233, %v2235
        %v2237 = vrot.slane %v2229, %v2236
        %v2239 = vunpack.c.l.s4 1966171168
        %v2240 = vunpack.c.0.s8 %v2239
        %v2241 = vlaneseq
        %v2242 = vshrl.u32 %v2241, 7
        %v2243 = vsub.s32 %v2240, %v2242
        %v2244 = vrot.slane %v2230, %v2243
        %v2245 = vcombine.low %v2237, %v2244
        %v2246 = vcombine.low %v868, %v883
        %v2247 = vcombine.low %v890, %v891
        %v2248 = vcombine.low %v892, %v907
        %v2249 = vcombine.low %v914, %v915
        %v2251 = vunpack.c.l.s4 1966171168
        %v2252 = vunpack.c.0.s8 %v2251
        %v2253 = vlaneseq
        %v2254 = vshrl.u32 %v2253, 7
        %v2255 = vsub.s32 %v2252, %v2254
        %v2256 = vrot.slane %v2246, %v2255
        %v2258 = vunpack.c.l.s4 1966171168
        %v2259 = vunpack.c.0.s8 %v2258
        %v2260 = vlaneseq
        %v2261 = vshrl.u32 %v2260, 7
        %v2262 = vsub.s32 %v2259, %v2261
        %v2263 = vrot.slane %v2247, %v2262
        %v2265 = vunpack.c.l.s4 1966171168
        %v2266 = vunpack.c.0.s8 %v2265
        %v2267 = vlaneseq
        %v2268 = vshrl.u32 %v2267, 7
        %v2269 = vsub.s32 %v2266, %v2268
        %v2270 = vrot.slane %v2248, %v2269
        %v2272 = vunpack.c.l.s4 1966171168
        %v2273 = vunpack.c.0.s8 %v2272
        %v2274 = vlaneseq
        %v2275 = vshrl.u32 %v2274, 7
        %v2276 = vsub.s32 %v2273, %v2275
        %v2277 = vrot.slane %v2249, %v2276
        %v2278 = vcombine.low %v2256, %v2263
        %v2279 = vcombine.low %v2270, %v2277
        %v2281 = vunpack.c.l.s4 1966171168
        %v2282 = vunpack.c.0.s8 %v2281
        %v2283 = vlaneseq
        %v2284 = vshrl.u32 %v2283, 7
        %v2285 = vsub.s32 %v2282, %v2284
        %v2286 = vrot.slane %v2278, %v2285
        %v2288 = vunpack.c.l.s4 1966171168
        %v2289 = vunpack.c.0.s8 %v2288
        %v2290 = vlaneseq
        %v2291 = vshrl.u32 %v2290, 7
        %v2292 = vsub.s32 %v2289, %v2291
        %v2293 = vrot.slane %v2279, %v2292
        %v2294 = vcombine.low %v2286, %v2293
        %v2295 = vcombine.low %v916, %v930
        %v2297 = vunpack.c.l.s4 1966171168
        %v2298 = vunpack.c.0.s8 %v2297
        %v2299 = vlaneseq
        %v2300 = vshrl.u32 %v2299, 7
        %v2301 = vsub.s32 %v2298, %v2300
        %v2302 = vrot.slane %v2295, %v2301
        %v2304 = vunpack.c.l.s4 1966171168
        %v2305 = vunpack.c.0.s8 %v2304
        %v2306 = vlaneseq
        %v2307 = vshrl.u32 %v2306, 7
        %v2308 = vsub.s32 %v2305, %v2307
        %v2309 = vrot.slane %v2302, %v2308
        %v2322 = vcombine.low %v1034, %v1042
        %v2323 = vcombine.low %v1050, %v1058
        %v2324 = vcombine.low %v1066, %v1074
        %v2325 = vcombine.low %v1082, %v1090
        %v2327 = vunpack.c.l.s4 1966171168
        %v2328 = vunpack.c.0.s8 %v2327
        %v2329 = vlaneseq
        %v2330 = vshrl.u32 %v2329, 7
        %v2331 = vsub.s32 %v2328, %v2330
        %v2332 = vrot.slane %v2322, %v2331
        %v2334 = vunpack.c.l.s4 1966171168
        %v2335 = vunpack.c.0.s8 %v2334
        %v2336 = vlaneseq
        %v2337 = vshrl.u32 %v2336, 7
        %v2338 = vsub.s32 %v2335, %v2337
        %v2339 = vrot.slane %v2323, %v2338
        %v2341 = vunpack.c.l.s4 1966171168
        %v2342 = vunpack.c.0.s8 %v2341
        %v2343 = vlaneseq
        %v2344 = vshrl.u32 %v2343, 7
        %v2345 = vsub.s32 %v2342, %v2344
        %v2346 = vrot.slane %v2324, %v2345
        %v2348 = vunpack.c.l.s4 1966171168
        %v2349 = vunpack.c.0.s8 %v2348
        %v2350 = vlaneseq
        %v2351 = vshrl.u32 %v2350, 7
        %v2352 = vsub.s32 %v2349, %v2351
        %v2353 = vrot.slane %v2325, %v2352
        %v2354 = vcombine.low %v2332, %v2339
        %v2355 = vcombine.low %v2346, %v2353
        %v2357 = vunpack.c.l.s4 1966171168
        %v2358 = vunpack.c.0.s8 %v2357
        %v2359 = vlaneseq
        %v2360 = vshrl.u32 %v2359, 7
        %v2361 = vsub.s32 %v2358, %v2360
        %v2362 = vrot.slane %v2354, %v2361
        %v2364 = vunpack.c.l.s4 1966171168
        %v2365 = vunpack.c.0.s8 %v2364
        %v2366 = vlaneseq
        %v2367 = vshrl.u32 %v2366, 7
        %v2368 = vsub.s32 %v2365, %v2367
        %v2369 = vrot.slane %v2355, %v2368
        %v2370 = vcombine.low %v2362, %v2369
        %v2371 = vcombine.low %v1098, %v1107
        %v2372 = vcombine.low %v1115, %v1123
        %v2373 = vcombine.low %v1131, %v1139
        %v2374 = vcombine.low %v1147, %v1155
        %v2376 = vunpack.c.l.s4 1966171168
        %v2377 = vunpack.c.0.s8 %v2376
        %v2378 = vlaneseq
        %v2379 = vshrl.u32 %v2378, 7
        %v2380 = vsub.s32 %v2377, %v2379
        %v2381 = vrot.slane %v2371, %v2380
        %v2383 = vunpack.c.l.s4 1966171168
        %v2384 = vunpack.c.0.s8 %v2383
        %v2385 = vlaneseq
        %v2386 = vshrl.u32 %v2385, 7
        %v2387 = vsub.s32 %v2384, %v2386
        %v2388 = vrot.slane %v2372, %v2387
        %v2390 = vunpack.c.l.s4 1966171168
        %v2391 = vunpack.c.0.s8 %v2390
        %v2392 = vlaneseq
        %v2393 = vshrl.u32 %v2392, 7
        %v2394 = vsub.s32 %v2391, %v2393
        %v2395 = vrot.slane %v2373, %v2394
        %v2397 = vunpack.c.l.s4 1966171168
        %v2398 = vunpack.c.0.s8 %v2397
        %v2399 = vlaneseq
        %v2400 = vshrl.u32 %v2399, 7
        %v2401 = vsub.s32 %v2398, %v2400
        %v2402 = vrot.slane %v2374, %v2401
        %v2403 = vcombine.low %v2381, %v2388
        %v2404 = vcombine.low %v2395, %v2402
        %v2406 = vunpack.c.l.s4 1966171168
        %v2407 = vunpack.c.0.s8 %v2406
        %v2408 = vlaneseq
        %v2409 = vshrl.u32 %v2408, 7
        %v2410 = vsub.s32 %v2407, %v2409
        %v2411 = vrot.slane %v2403, %v2410
        %v2413 = vunpack.c.l.s4 1966171168
        %v2414 = vunpack.c.0.s8 %v2413
        %v2415 = vlaneseq
        %v2416 = vshrl.u32 %v2415, 7
        %v2417 = vsub.s32 %v2414, %v2416
        %v2418 = vrot.slane %v2404, %v2417
        %v2419 = vcombine.low %v2411, %v2418
        %v2420 = vcombine.low %v1163, %v1171
        %v2421 = vcombine.low %v1180, %v1188
        %v2422 = vcombine.low %v1196, %v1204
        %v2423 = vcombine.low %v1212, %v1220
        %v2425 = vunpack.c.l.s4 1966171168
        %v2426 = vunpack.c.0.s8 %v2425
        %v2427 = vlaneseq
        %v2428 = vshrl.u32 %v2427, 7
        %v2429 = vsub.s32 %v2426, %v2428
        %v2430 = vrot.slane %v2420, %v2429
        %v2432 = vunpack.c.l.s4 1966171168
        %v2433 = vunpack.c.0.s8 %v2432
        %v2434 = vlaneseq
        %v2435 = vshrl.u32 %v2434, 7
        %v2436 = vsub.s32 %v2433, %v2435
        %v2437 = vrot.slane %v2421, %v2436
        %v2439 = vunpack.c.l.s4 1966171168
        %v2440 = vunpack.c.0.s8 %v2439
        %v2441 = vlaneseq
        %v2442 = vshrl.u32 %v2441, 7
        %v2443 = vsub.s32 %v2440, %v2442
        %v2444 = vrot.slane %v2422, %v2443
        %v2446 = vunpack.c.l.s4 1966171168
        %v2447 = vunpack.c.0.s8 %v2446
        %v2448 = vlaneseq
        %v2449 = vshrl.u32 %v2448, 7
        %v2450 = vsub.s32 %v2447, %v2449
        %v2451 = vrot.slane %v2423, %v2450
        %v2452 = vcombine.low %v2430, %v2437
        %v2453 = vcombine.low %v2444, %v2451
        %v2455 = vunpack.c.l.s4 1966171168
        %v2456 = vunpack.c.0.s8 %v2455
        %v2457 = vlaneseq
        %v2458 = vshrl.u32 %v2457, 7
        %v2459 = vsub.s32 %v2456, %v2458
        %v2460 = vrot.slane %v2452, %v2459
        %v2462 = vunpack.c.l.s4 1966171168
        %v2463 = vunpack.c.0.s8 %v2462
        %v2464 = vlaneseq
        %v2465 = vshrl.u32 %v2464, 7
        %v2466 = vsub.s32 %v2463, %v2465
        %v2467 = vrot.slane %v2453, %v2466
        %v2468 = vcombine.low %v2460, %v2467
        %v2469 = vcombine.low %v1228, %v1236
        %v2470 = vcombine.low %v1244, %v1253
        %v2471 = vcombine.low %v1261, %v1269
        %v2472 = vcombine.low %v1277, %v1285
        %v2474 = vunpack.c.l.s4 1966171168
        %v2475 = vunpack.c.0.s8 %v2474
        %v2476 = vlaneseq
        %v2477 = vshrl.u32 %v2476, 7
        %v2478 = vsub.s32 %v2475, %v2477
        %v2479 = vrot.slane %v2469, %v2478
        %v2481 = vunpack.c.l.s4 1966171168
        %v2482 = vunpack.c.0.s8 %v2481
        %v2483 = vlaneseq
        %v2484 = vshrl.u32 %v2483, 7
        %v2485 = vsub.s32 %v2482, %v2484
        %v2486 = vrot.slane %v2470, %v2485
        %v2488 = vunpack.c.l.s4 1966171168
        %v2489 = vunpack.c.0.s8 %v2488
        %v2490 = vlaneseq
        %v2491 = vshrl.u32 %v2490, 7
        %v2492 = vsub.s32 %v2489, %v2491
        %v2493 = vrot.slane %v2471, %v2492
        %v2495 = vunpack.c.l.s4 1966171168
        %v2496 = vunpack.c.0.s8 %v2495
        %v2497 = vlaneseq
        %v2498 = vshrl.u32 %v2497, 7
        %v2499 = vsub.s32 %v2496, %v2498
        %v2500 = vrot.slane %v2472, %v2499
        %v2501 = vcombine.low %v2479, %v2486
        %v2502 = vcombine.low %v2493, %v2500
        %v2504 = vunpack.c.l.s4 1966171168
        %v2505 = vunpack.c.0.s8 %v2504
        %v2506 = vlaneseq
        %v2507 = vshrl.u32 %v2506, 7
        %v2508 = vsub.s32 %v2505, %v2507
        %v2509 = vrot.slane %v2501, %v2508
        %v2511 = vunpack.c.l.s4 1966171168
        %v2512 = vunpack.c.0.s8 %v2511
        %v2513 = vlaneseq
        %v2514 = vshrl.u32 %v2513, 7
        %v2515 = vsub.s32 %v2512, %v2514
        %v2516 = vrot.slane %v2502, %v2515
        %v2517 = vcombine.low %v2509, %v2516
        %v2518 = vcombine.low %v1293, %v1301
        %v2519 = vcombine.low %v1309, %v1317
        %v2520 = vcombine.low %v1326, %v1334
        %v2521 = vcombine.low %v1342, %v1350
        %v2523 = vunpack.c.l.s4 1966171168
        %v2524 = vunpack.c.0.s8 %v2523
        %v2525 = vlaneseq
        %v2526 = vshrl.u32 %v2525, 7
        %v2527 = vsub.s32 %v2524, %v2526
        %v2528 = vrot.slane %v2518, %v2527
        %v2530 = vunpack.c.l.s4 1966171168
        %v2531 = vunpack.c.0.s8 %v2530
        %v2532 = vlaneseq
        %v2533 = vshrl.u32 %v2532, 7
        %v2534 = vsub.s32 %v2531, %v2533
        %v2535 = vrot.slane %v2519, %v2534
        %v2537 = vunpack.c.l.s4 1966171168
        %v2538 = vunpack.c.0.s8 %v2537
        %v2539 = vlaneseq
        %v2540 = vshrl.u32 %v2539, 7
        %v2541 = vsub.s32 %v2538, %v2540
        %v2542 = vrot.slane %v2520, %v2541
        %v2544 = vunpack.c.l.s4 1966171168
        %v2545 = vunpack.c.0.s8 %v2544
        %v2546 = vlaneseq
        %v2547 = vshrl.u32 %v2546, 7
        %v2548 = vsub.s32 %v2545, %v2547
        %v2549 = vrot.slane %v2521, %v2548
        %v2550 = vcombine.low %v2528, %v2535
        %v2551 = vcombine.low %v2542, %v2549
        %v2553 = vunpack.c.l.s4 1966171168
        %v2554 = vunpack.c.0.s8 %v2553
        %v2555 = vlaneseq
        %v2556 = vshrl.u32 %v2555, 7
        %v2557 = vsub.s32 %v2554, %v2556
        %v2558 = vrot.slane %v2550, %v2557
        %v2560 = vunpack.c.l.s4 1966171168
        %v2561 = vunpack.c.0.s8 %v2560
        %v2562 = vlaneseq
        %v2563 = vshrl.u32 %v2562, 7
        %v2564 = vsub.s32 %v2561, %v2563
        %v2565 = vrot.slane %v2551, %v2564
        %v2566 = vcombine.low %v2558, %v2565
        %v2567 = vcombine.low %v1358, %v1366
        %v2568 = vcombine.low %v1374, %v1382
        %v2569 = vcombine.low %v1390, %v1399
        %v2570 = vcombine.low %v1407, %v1415
        %v2572 = vunpack.c.l.s4 1966171168
        %v2573 = vunpack.c.0.s8 %v2572
        %v2574 = vlaneseq
        %v2575 = vshrl.u32 %v2574, 7
        %v2576 = vsub.s32 %v2573, %v2575
        %v2577 = vrot.slane %v2567, %v2576
        %v2579 = vunpack.c.l.s4 1966171168
        %v2580 = vunpack.c.0.s8 %v2579
        %v2581 = vlaneseq
        %v2582 = vshrl.u32 %v2581, 7
        %v2583 = vsub.s32 %v2580, %v2582
        %v2584 = vrot.slane %v2568, %v2583
        %v2586 = vunpack.c.l.s4 1966171168
        %v2587 = vunpack.c.0.s8 %v2586
        %v2588 = vlaneseq
        %v2589 = vshrl.u32 %v2588, 7
        %v2590 = vsub.s32 %v2587, %v2589
        %v2591 = vrot.slane %v2569, %v2590
        %v2593 = vunpack.c.l.s4 1966171168
        %v2594 = vunpack.c.0.s8 %v2593
        %v2595 = vlaneseq
        %v2596 = vshrl.u32 %v2595, 7
        %v2597 = vsub.s32 %v2594, %v2596
        %v2598 = vrot.slane %v2570, %v2597
        %v2599 = vcombine.low %v2577, %v2584
        %v2600 = vcombine.low %v2591, %v2598
        %v2602 = vunpack.c.l.s4 1966171168
        %v2603 = vunpack.c.0.s8 %v2602
        %v2604 = vlaneseq
        %v2605 = vshrl.u32 %v2604, 7
        %v2606 = vsub.s32 %v2603, %v2605
        %v2607 = vrot.slane %v2599, %v2606
        %v2609 = vunpack.c.l.s4 1966171168
        %v2610 = vunpack.c.0.s8 %v2609
        %v2611 = vlaneseq
        %v2612 = vshrl.u32 %v2611, 7
        %v2613 = vsub.s32 %v2610, %v2612
        %v2614 = vrot.slane %v2600, %v2613
        %v2615 = vcombine.low %v2607, %v2614
        %v2616 = vcombine.low %v1423, %v1431
        %v2617 = vcombine.low %v1439, %v1447
        %v2618 = vcombine.low %v1455, %v1463
        %v2619 = vcombine.low %v1472, %v1480
        %v2621 = vunpack.c.l.s4 1966171168
        %v2622 = vunpack.c.0.s8 %v2621
        %v2623 = vlaneseq
        %v2624 = vshrl.u32 %v2623, 7
        %v2625 = vsub.s32 %v2622, %v2624
        %v2626 = vrot.slane %v2616, %v2625
        %v2628 = vunpack.c.l.s4 1966171168
        %v2629 = vunpack.c.0.s8 %v2628
        %v2630 = vlaneseq
        %v2631 = vshrl.u32 %v2630, 7
        %v2632 = vsub.s32 %v2629, %v2631
        %v2633 = vrot.slane %v2617, %v2632
        %v2635 = vunpack.c.l.s4 1966171168
        %v2636 = vunpack.c.0.s8 %v2635
        %v2637 = vlaneseq
        %v2638 = vshrl.u32 %v2637, 7
        %v2639 = vsub.s32 %v2636, %v2638
        %v2640 = vrot.slane %v2618, %v2639
        %v2642 = vunpack.c.l.s4 1966171168
        %v2643 = vunpack.c.0.s8 %v2642
        %v2644 = vlaneseq
        %v2645 = vshrl.u32 %v2644, 7
        %v2646 = vsub.s32 %v2643, %v2645
        %v2647 = vrot.slane %v2619, %v2646
        %v2648 = vcombine.low %v2626, %v2633
        %v2649 = vcombine.low %v2640, %v2647
        %v2651 = vunpack.c.l.s4 1966171168
        %v2652 = vunpack.c.0.s8 %v2651
        %v2653 = vlaneseq
        %v2654 = vshrl.u32 %v2653, 7
        %v2655 = vsub.s32 %v2652, %v2654
        %v2656 = vrot.slane %v2648, %v2655
        %v2658 = vunpack.c.l.s4 1966171168
        %v2659 = vunpack.c.0.s8 %v2658
        %v2660 = vlaneseq
        %v2661 = vshrl.u32 %v2660, 7
        %v2662 = vsub.s32 %v2659, %v2661
        %v2663 = vrot.slane %v2649, %v2662
        %v2664 = vcombine.low %v2656, %v2663
        %v2665 = vcombine.low %v1488, %v1496
        %v2666 = vcombine.low %v1504, %v1512
        %v2667 = vcombine.low %v1520, %v1528
        %v2668 = vcombine.low %v1536, %v1545
        %v2670 = vunpack.c.l.s4 1966171168
        %v2671 = vunpack.c.0.s8 %v2670
        %v2672 = vlaneseq
        %v2673 = vshrl.u32 %v2672, 7
        %v2674 = vsub.s32 %v2671, %v2673
        %v2675 = vrot.slane %v2665, %v2674
        %v2677 = vunpack.c.l.s4 1966171168
        %v2678 = vunpack.c.0.s8 %v2677
        %v2679 = vlaneseq
        %v2680 = vshrl.u32 %v2679, 7
        %v2681 = vsub.s32 %v2678, %v2680
        %v2682 = vrot.slane %v2666, %v2681
        %v2684 = vunpack.c.l.s4 1966171168
        %v2685 = vunpack.c.0.s8 %v2684
        %v2686 = vlaneseq
        %v2687 = vshrl.u32 %v2686, 7
        %v2688 = vsub.s32 %v2685, %v2687
        %v2689 = vrot.slane %v2667, %v2688
        %v2691 = vunpack.c.l.s4 1966171168
        %v2692 = vunpack.c.0.s8 %v2691
        %v2693 = vlaneseq
        %v2694 = vshrl.u32 %v2693, 7
        %v2695 = vsub.s32 %v2692, %v2694
        %v2696 = vrot.slane %v2668, %v2695
        %v2697 = vcombine.low %v2675, %v2682
        %v2698 = vcombine.low %v2689, %v2696
        %v2700 = vunpack.c.l.s4 1966171168
        %v2701 = vunpack.c.0.s8 %v2700
        %v2702 = vlaneseq
        %v2703 = vshrl.u32 %v2702, 7
        %v2704 = vsub.s32 %v2701, %v2703
        %v2705 = vrot.slane %v2697, %v2704
        %v2707 = vunpack.c.l.s4 1966171168
        %v2708 = vunpack.c.0.s8 %v2707
        %v2709 = vlaneseq
        %v2710 = vshrl.u32 %v2709, 7
        %v2711 = vsub.s32 %v2708, %v2710
        %v2712 = vrot.slane %v2698, %v2711
        %v2713 = vcombine.low %v2705, %v2712
        %v2714 = vcombine.low %v1553, %v1561
        %v2715 = vcombine.low %v1569, %v1577
        %v2716 = vcombine.low %v1585, %v1593
        %v2717 = vcombine.low %v1601, %v1609
        %v2719 = vunpack.c.l.s4 1966171168
        %v2720 = vunpack.c.0.s8 %v2719
        %v2721 = vlaneseq
        %v2722 = vshrl.u32 %v2721, 7
        %v2723 = vsub.s32 %v2720, %v2722
        %v2724 = vrot.slane %v2714, %v2723
        %v2726 = vunpack.c.l.s4 1966171168
        %v2727 = vunpack.c.0.s8 %v2726
        %v2728 = vlaneseq
        %v2729 = vshrl.u32 %v2728, 7
        %v2730 = vsub.s32 %v2727, %v2729
        %v2731 = vrot.slane %v2715, %v2730
        %v2733 = vunpack.c.l.s4 1966171168
        %v2734 = vunpack.c.0.s8 %v2733
        %v2735 = vlaneseq
        %v2736 = vshrl.u32 %v2735, 7
        %v2737 = vsub.s32 %v2734, %v2736
        %v2738 = vrot.slane %v2716, %v2737
        %v2740 = vunpack.c.l.s4 1966171168
        %v2741 = vunpack.c.0.s8 %v2740
        %v2742 = vlaneseq
        %v2743 = vshrl.u32 %v2742, 7
        %v2744 = vsub.s32 %v2741, %v2743
        %v2745 = vrot.slane %v2717, %v2744
        %v2746 = vcombine.low %v2724, %v2731
        %v2747 = vcombine.low %v2738, %v2745
        %v2749 = vunpack.c.l.s4 1966171168
        %v2750 = vunpack.c.0.s8 %v2749
        %v2751 = vlaneseq
        %v2752 = vshrl.u32 %v2751, 7
        %v2753 = vsub.s32 %v2750, %v2752
        %v2754 = vrot.slane %v2746, %v2753
        %v2756 = vunpack.c.l.s4 1966171168
        %v2757 = vunpack.c.0.s8 %v2756
        %v2758 = vlaneseq
        %v2759 = vshrl.u32 %v2758, 7
        %v2760 = vsub.s32 %v2757, %v2759
        %v2761 = vrot.slane %v2747, %v2760
        %v2762 = vcombine.low %v2754, %v2761
        %v2763 = vcombine.low %v1618, %v1626
        %v2764 = vcombine.low %v1634, %v1642
        %v2765 = vcombine.low %v1650, %v1658
        %v2766 = vcombine.low %v1666, %v1674
        %v2768 = vunpack.c.l.s4 1966171168
        %v2769 = vunpack.c.0.s8 %v2768
        %v2770 = vlaneseq
        %v2771 = vshrl.u32 %v2770, 7
        %v2772 = vsub.s32 %v2769, %v2771
        %v2773 = vrot.slane %v2763, %v2772
        %v2775 = vunpack.c.l.s4 1966171168
        %v2776 = vunpack.c.0.s8 %v2775
        %v2777 = vlaneseq
        %v2778 = vshrl.u32 %v2777, 7
        %v2779 = vsub.s32 %v2776, %v2778
        %v2780 = vrot.slane %v2764, %v2779
        %v2782 = vunpack.c.l.s4 1966171168
        %v2783 = vunpack.c.0.s8 %v2782
        %v2784 = vlaneseq
        %v2785 = vshrl.u32 %v2784, 7
        %v2786 = vsub.s32 %v2783, %v2785
        %v2787 = vrot.slane %v2765, %v2786
        %v2789 = vunpack.c.l.s4 1966171168
        %v2790 = vunpack.c.0.s8 %v2789
        %v2791 = vlaneseq
        %v2792 = vshrl.u32 %v2791, 7
        %v2793 = vsub.s32 %v2790, %v2792
        %v2794 = vrot.slane %v2766, %v2793
        %v2795 = vcombine.low %v2773, %v2780
        %v2796 = vcombine.low %v2787, %v2794
        %v2798 = vunpack.c.l.s4 1966171168
        %v2799 = vunpack.c.0.s8 %v2798
        %v2800 = vlaneseq
        %v2801 = vshrl.u32 %v2800, 7
        %v2802 = vsub.s32 %v2799, %v2801
        %v2803 = vrot.slane %v2795, %v2802
        %v2805 = vunpack.c.l.s4 1966171168
        %v2806 = vunpack.c.0.s8 %v2805
        %v2807 = vlaneseq
        %v2808 = vshrl.u32 %v2807, 7
        %v2809 = vsub.s32 %v2806, %v2808
        %v2810 = vrot.slane %v2796, %v2809
        %v2811 = vcombine.low %v2803, %v2810
        %v2812 = vcombine.low %v1682, %v1691
        %v2813 = vcombine.low %v1699, %v1707
        %v2814 = vcombine.low %v1715, %v1723
        %v2815 = vcombine.low %v1731, %v1739
        %v2817 = vunpack.c.l.s4 1966171168
        %v2818 = vunpack.c.0.s8 %v2817
        %v2819 = vlaneseq
        %v2820 = vshrl.u32 %v2819, 7
        %v2821 = vsub.s32 %v2818, %v2820
        %v2822 = vrot.slane %v2812, %v2821
        %v2824 = vunpack.c.l.s4 1966171168
        %v2825 = vunpack.c.0.s8 %v2824
        %v2826 = vlaneseq
        %v2827 = vshrl.u32 %v2826, 7
        %v2828 = vsub.s32 %v2825, %v2827
        %v2829 = vrot.slane %v2813, %v2828
        %v2831 = vunpack.c.l.s4 1966171168
        %v2832 = vunpack.c.0.s8 %v2831
        %v2833 = vlaneseq
        %v2834 = vshrl.u32 %v2833, 7
        %v2835 = vsub.s32 %v2832, %v2834
        %v2836 = vrot.slane %v2814, %v2835
        %v2838 = vunpack.c.l.s4 1966171168
        %v2839 = vunpack.c.0.s8 %v2838
        %v2840 = vlaneseq
        %v2841 = vshrl.u32 %v2840, 7
        %v2842 = vsub.s32 %v2839, %v2841
        %v2843 = vrot.slane %v2815, %v2842
        %v2844 = vcombine.low %v2822, %v2829
        %v2845 = vcombine.low %v2836, %v2843
        %v2847 = vunpack.c.l.s4 1966171168
        %v2848 = vunpack.c.0.s8 %v2847
        %v2849 = vlaneseq
        %v2850 = vshrl.u32 %v2849, 7
        %v2851 = vsub.s32 %v2848, %v2850
        %v2852 = vrot.slane %v2844, %v2851
        %v2854 = vunpack.c.l.s4 1966171168
        %v2855 = vunpack.c.0.s8 %v2854
        %v2856 = vlaneseq
        %v2857 = vshrl.u32 %v2856, 7
        %v2858 = vsub.s32 %v2855, %v2857
        %v2859 = vrot.slane %v2845, %v2858
        %v2860 = vcombine.low %v2852, %v2859
        %v2861 = vcombine.low %v1747, %v1755
        %v2863 = vunpack.c.l.s4 1966171168
        %v2864 = vunpack.c.0.s8 %v2863
        %v2865 = vlaneseq
        %v2866 = vshrl.u32 %v2865, 7
        %v2867 = vsub.s32 %v2864, %v2866
        %v2868 = vrot.slane %v2861, %v2867
        %v2870 = vunpack.c.l.s4 1966171168
        %v2871 = vunpack.c.0.s8 %v2870
        %v2872 = vlaneseq
        %v2873 = vshrl.u32 %v2872, 7
        %v2874 = vsub.s32 %v2871, %v2873
        %v2875 = vrot.slane %v2868, %v2874
        %v2888 = vcombine.low %v332, %v333
        %v2889 = vcombine.low %v334, %v349
        %v2890 = vcombine.low %v356, %v357
        %v2891 = vcombine.low %v358, %v372
        %v2893 = vunpack.c.l.s4 1966171168
        %v2894 = vunpack.c.0.s8 %v2893
        %v2895 = vlaneseq
        %v2896 = vshrl.u32 %v2895, 7
        %v2897 = vsub.s32 %v2894, %v2896
        %v2898 = vrot.slane %v2888, %v2897
        %v2900 = vunpack.c.l.s4 1966171168
        %v2901 = vunpack.c.0.s8 %v2900
        %v2902 = vlaneseq
        %v2903 = vshrl.u32 %v2902, 7
        %v2904 = vsub.s32 %v2901, %v2903
        %v2905 = vrot.slane %v2889, %v2904
        %v2907 = vunpack.c.l.s4 1966171168
        %v2908 = vunpack.c.0.s8 %v2907
        %v2909 = vlaneseq
        %v2910 = vshrl.u32 %v2909, 7
        %v2911 = vsub.s32 %v2908, %v2910
        %v2912 = vrot.slane %v2890, %v2911
        %v2914 = vunpack.c.l.s4 1966171168
        %v2915 = vunpack.c.0.s8 %v2914
        %v2916 = vlaneseq
        %v2917 = vshrl.u32 %v2916, 7
        %v2918 = vsub.s32 %v2915, %v2917
        %v2919 = vrot.slane %v2891, %v2918
        %v2920 = vcombine.low %v2898, %v2905
        %v2921 = vcombine.low %v2912, %v2919
        %v2923 = vunpack.c.l.s4 1966171168
        %v2924 = vunpack.c.0.s8 %v2923
        %v2925 = vlaneseq
        %v2926 = vshrl.u32 %v2925, 7
        %v2927 = vsub.s32 %v2924, %v2926
        %v2928 = vrot.slane %v2920, %v2927
        %v2930 = vunpack.c.l.s4 1966171168
        %v2931 = vunpack.c.0.s8 %v2930
        %v2932 = vlaneseq
        %v2933 = vshrl.u32 %v2932, 7
        %v2934 = vsub.s32 %v2931, %v2933
        %v2935 = vrot.slane %v2921, %v2934
        %v2936 = vcombine.low %v2928, %v2935
        %v2937 = vcombine.low %v938, %v394
        %v2938 = vcombine.low %v395, %v396
        %v2939 = vcombine.low %v411, %v418
        %v2940 = vcombine.low %v419, %v420
        %v2942 = vunpack.c.l.s4 1966171168
        %v2943 = vunpack.c.0.s8 %v2942
        %v2944 = vlaneseq
        %v2945 = vshrl.u32 %v2944, 7
        %v2946 = vsub.s32 %v2943, %v2945
        %v2947 = vrot.slane %v2937, %v2946
        %v2949 = vunpack.c.l.s4 1966171168
        %v2950 = vunpack.c.0.s8 %v2949
        %v2951 = vlaneseq
        %v2952 = vshrl.u32 %v2951, 7
        %v2953 = vsub.s32 %v2950, %v2952
        %v2954 = vrot.slane %v2938, %v2953
        %v2956 = vunpack.c.l.s4 1966171168
        %v2957 = vunpack.c.0.s8 %v2956
        %v2958 = vlaneseq
        %v2959 = vshrl.u32 %v2958, 7
        %v2960 = vsub.s32 %v2957, %v2959
        %v2961 = vrot.slane %v2939, %v2960
        %v2963 = vunpack.c.l.s4 1966171168
        %v2964 = vunpack.c.0.s8 %v2963
        %v2965 = vlaneseq
        %v2966 = vshrl.u32 %v2965, 7
        %v2967 = vsub.s32 %v2964, %v2966
        %v2968 = vrot.slane %v2940, %v2967
        %v2969 = vcombine.low %v2947, %v2954
        %v2970 = vcombine.low %v2961, %v2968
        %v2972 = vunpack.c.l.s4 1966171168
        %v2973 = vunpack.c.0.s8 %v2972
        %v2974 = vlaneseq
        %v2975 = vshrl.u32 %v2974, 7
        %v2976 = vsub.s32 %v2973, %v2975
        %v2977 = vrot.slane %v2969, %v2976
        %v2979 = vunpack.c.l.s4 1966171168
        %v2980 = vunpack.c.0.s8 %v2979
        %v2981 = vlaneseq
        %v2982 = vshrl.u32 %v2981, 7
        %v2983 = vsub.s32 %v2980, %v2982
        %v2984 = vrot.slane %v2970, %v2983
        %v2985 = vcombine.low %v2977, %v2984
        %v2986 = vcombine.low %v434, %v946
        %v2987 = vcombine.low %v456, %v457
        %v2988 = vcombine.low %v458, %v473
        %v2989 = vcombine.low %v480, %v481
        %v2991 = vunpack.c.l.s4 1966171168
        %v2992 = vunpack.c.0.s8 %v2991
        %v2993 = vlaneseq
        %v2994 = vshrl.u32 %v2993, 7
        %v2995 = vsub.s32 %v2992, %v2994
        %v2996 = vrot.slane %v2986, %v2995
        %v2998 = vunpack.c.l.s4 1966171168
        %v2999 = vunpack.c.0.s8 %v2998
        %v3000 = vlaneseq
        %v3001 = vshrl.u32 %v3000, 7
        %v3002 = vsub.s32 %v2999, %v3001
        %v3003 = vrot.slane %v2987, %v3002
        %v3005 = vunpack.c.l.s4 1966171168
        %v3006 = vunpack.c.0.s8 %v3005
        %v3007 = vlaneseq
        %v3008 = vshrl.u32 %v3007, 7
        %v3009 = vsub.s32 %v3006, %v3008
        %v3010 = vrot.slane %v2988, %v3009
        %v3012 = vunpack.c.l.s4 1966171168
        %v3013 = vunpack.c.0.s8 %v3012
        %v3014 = vlaneseq
        %v3015 = vshrl.u32 %v3014, 7
        %v3016 = vsub.s32 %v3013, %v3015
        %v3017 = vrot.slane %v2989, %v3016
        %v3018 = vcombine.low %v2996, %v3003
        %v3019 = vcombine.low %v3010, %v3017
        %v3021 = vunpack.c.l.s4 1966171168
        %v3022 = vunpack.c.0.s8 %v3021
        %v3023 = vlaneseq
        %v3024 = vshrl.u32 %v3023, 7
        %v3025 = vsub.s32 %v3022, %v3024
        %v3026 = vrot.slane %v3018, %v3025
        %v3028 = vunpack.c.l.s4 1966171168
        %v3029 = vunpack.c.0.s8 %v3028
        %v3030 = vlaneseq
        %v3031 = vshrl.u32 %v3030, 7
        %v3032 = vsub.s32 %v3029, %v3031
        %v3033 = vrot.slane %v3019, %v3032
        %v3034 = vcombine.low %v3026, %v3033
        %v3035 = vcombine.low %v482, %v496
        %v3036 = vcombine.low %v954, %v518
        %v3037 = vcombine.low %v519, %v520
        %v3038 = vcombine.low %v535, %v542
        %v3040 = vunpack.c.l.s4 1966171168
        %v3041 = vunpack.c.0.s8 %v3040
        %v3042 = vlaneseq
        %v3043 = vshrl.u32 %v3042, 7
        %v3044 = vsub.s32 %v3041, %v3043
        %v3045 = vrot.slane %v3035, %v3044
        %v3047 = vunpack.c.l.s4 1966171168
        %v3048 = vunpack.c.0.s8 %v3047
        %v3049 = vlaneseq
        %v3050 = vshrl.u32 %v3049, 7
        %v3051 = vsub.s32 %v3048, %v3050
        %v3052 = vrot.slane %v3036, %v3051
        %v3054 = vunpack.c.l.s4 1966171168
        %v3055 = vunpack.c.0.s8 %v3054
        %v3056 = vlaneseq
        %v3057 = vshrl.u32 %v3056, 7
        %v3058 = vsub.s32 %v3055, %v3057
        %v3059 = vrot.slane %v3037, %v3058
        %v3061 = vunpack.c.l.s4 1966171168
        %v3062 = vunpack.c.0.s8 %v3061
        %v3063 = vlaneseq
        %v3064 = vshrl.u32 %v3063, 7
        %v3065 = vsub.s32 %v3062, %v3064
        %v3066 = vrot.slane %v3038, %v3065
        %v3067 = vcombine.low %v3045, %v3052
        %v3068 = vcombine.low %v3059, %v3066
        %v3070 = vunpack.c.l.s4 1966171168
        %v3071 = vunpack.c.0.s8 %v3070
        %v3072 = vlaneseq
        %v3073 = vshrl.u32 %v3072, 7
        %v3074 = vsub.s32 %v3071, %v3073
        %v3075 = vrot.slane %v3067, %v3074
        %v3077 = vunpack.c.l.s4 1966171168
        %v3078 = vunpack.c.0.s8 %v3077
        %v3079 = vlaneseq
        %v3080 = vshrl.u32 %v3079, 7
        %v3081 = vsub.s32 %v3078, %v3080
        %v3082 = vrot.slane %v3068, %v3081
        %v3083 = vcombine.low %v3075, %v3082
        %v3084 = vcombine.low %v543, %v544
        %v3085 = vcombine.low %v558, %v962
        %v3086 = vcombine.low %v580, %v581
        %v3087 = vcombine.low %v582, %v597
        %v3089 = vunpack.c.l.s4 1966171168
        %v3090 = vunpack.c.0.s8 %v3089
        %v3091 = vlaneseq
        %v3092 = vshrl.u32 %v3091, 7
        %v3093 = vsub.s32 %v3090, %v3092
        %v3094 = vrot.slane %v3084, %v3093
        %v3096 = vunpack.c.l.s4 1966171168
        %v3097 = vunpack.c.0.s8 %v3096
        %v3098 = vlaneseq
        %v3099 = vshrl.u32 %v3098, 7
        %v3100 = vsub.s32 %v3097, %v3099
        %v3101 = vrot.slane %v3085, %v3100
        %v3103 = vunpack.c.l.s4 1966171168
        %v3104 = vunpack.c.0.s8 %v3103
        %v3105 = vlaneseq
        %v3106 = vshrl.u32 %v3105, 7
        %v3107 = vsub.s32 %v3104, %v3106
        %v3108 = vrot.slane %v3086, %v3107
        %v3110 = vunpack.c.l.s4 1966171168
        %v3111 = vunpack.c.0.s8 %v3110
        %v3112 = vlaneseq
        %v3113 = vshrl.u32 %v3112, 7
        %v3114 = vsub.s32 %v3111, %v3113
        %v3115 = vrot.slane %v3087, %v3114
        %v3116 = vcombine.low %v3094, %v3101
        %v3117 = vcombine.low %v3108, %v3115
        %v3119 = vunpack.c.l.s4 1966171168
        %v3120 = vunpack.c.0.s8 %v3119
        %v3121 = vlaneseq
        %v3122 = vshrl.u32 %v3121, 7
        %v3123 = vsub.s32 %v3120, %v3122
        %v3124 = vrot.slane %v3116, %v3123
        %v3126 = vunpack.c.l.s4 1966171168
        %v3127 = vunpack.c.0.s8 %v3126
        %v3128 = vlaneseq
        %v3129 = vshrl.u32 %v3128, 7
        %v3130 = vsub.s32 %v3127, %v3129
        %v3131 = vrot.slane %v3117, %v3130
        %v3132 = vcombine.low %v3124, %v3131
        %v3133 = vcombine.low %v604, %v605
        %v3134 = vcombine.low %v606, %v620
        %v3135 = vcombine.low %v970, %v642
        %v3136 = vcombine.low %v643, %v644
        %v3138 = vunpack.c.l.s4 1966171168
        %v3139 = vunpack.c.0.s8 %v3138
        %v3140 = vlaneseq
        %v3141 = vshrl.u32 %v3140, 7
        %v3142 = vsub.s32 %v3139, %v3141
        %v3143 = vrot.slane %v3133, %v3142
        %v3145 = vunpack.c.l.s4 1966171168
        %v3146 = vunpack.c.0.s8 %v3145
        %v3147 = vlaneseq
        %v3148 = vshrl.u32 %v3147, 7
        %v3149 = vsub.s32 %v3146, %v3148
        %v3150 = vrot.slane %v3134, %v3149
        %v3152 = vunpack.c.l.s4 1966171168
        %v3153 = vunpack.c.0.s8 %v3152
        %v3154 = vlaneseq
        %v3155 = vshrl.u32 %v3154, 7
        %v3156 = vsub.s32 %v3153, %v3155
        %v3157 = vrot.slane %v3135, %v3156
        %v3159 = vunpack.c.l.s4 1966171168
        %v3160 = vunpack.c.0.s8 %v3159
        %v3161 = vlaneseq
        %v3162 = vshrl.u32 %v3161, 7
        %v3163 = vsub.s32 %v3160, %v3162
        %v3164 = vrot.slane %v3136, %v3163
        %v3165 = vcombine.low %v3143, %v3150
        %v3166 = vcombine.low %v3157, %v3164
        %v3168 = vunpack.c.l.s4 1966171168
        %v3169 = vunpack.c.0.s8 %v3168
        %v3170 = vlaneseq
        %v3171 = vshrl.u32 %v3170, 7
        %v3172 = vsub.s32 %v3169, %v3171
        %v3173 = vrot.slane %v3165, %v3172
        %v3175 = vunpack.c.l.s4 1966171168
        %v3176 = vunpack.c.0.s8 %v3175
        %v3177 = vlaneseq
        %v3178 = vshrl.u32 %v3177, 7
        %v3179 = vsub.s32 %v3176, %v3178
        %v3180 = vrot.slane %v3166, %v3179
        %v3181 = vcombine.low %v3173, %v3180
        %v3182 = vcombine.low %v659, %v666
        %v3183 = vcombine.low %v667, %v668
        %v3184 = vcombine.low %v682, %v978
        %v3185 = vcombine.low %v704, %v705
        %v3187 = vunpack.c.l.s4 1966171168
        %v3188 = vunpack.c.0.s8 %v3187
        %v3189 = vlaneseq
        %v3190 = vshrl.u32 %v3189, 7
        %v3191 = vsub.s32 %v3188, %v3190
        %v3192 = vrot.slane %v3182, %v3191
        %v3194 = vunpack.c.l.s4 1966171168
        %v3195 = vunpack.c.0.s8 %v3194
        %v3196 = vlaneseq
        %v3197 = vshrl.u32 %v3196, 7
        %v3198 = vsub.s32 %v3195, %v3197
        %v3199 = vrot.slane %v3183, %v3198
        %v3201 = vunpack.c.l.s4 1966171168
        %v3202 = vunpack.c.0.s8 %v3201
        %v3203 = vlaneseq
        %v3204 = vshrl.u32 %v3203, 7
        %v3205 = vsub.s32 %v3202, %v3204
        %v3206 = vrot.slane %v3184, %v3205
        %v3208 = vunpack.c.l.s4 1966171168
        %v3209 = vunpack.c.0.s8 %v3208
        %v3210 = vlaneseq
        %v3211 = vshrl.u32 %v3210, 7
        %v3212 = vsub.s32 %v3209, %v3211
        %v3213 = vrot.slane %v3185, %v3212
        %v3214 = vcombine.low %v3192, %v3199
        %v3215 = vcombine.low %v3206, %v3213
        %v3217 = vunpack.c.l.s4 1966171168
        %v3218 = vunpack.c.0.s8 %v3217
        %v3219 = vlaneseq
        %v3220 = vshrl.u32 %v3219, 7
        %v3221 = vsub.s32 %v3218, %v3220
        %v3222 = vrot.slane %v3214, %v3221
        %v3224 = vunpack.c.l.s4 1966171168
        %v3225 = vunpack.c.0.s8 %v3224
        %v3226 = vlaneseq
        %v3227 = vshrl.u32 %v3226, 7
        %v3228 = vsub.s32 %v3225, %v3227
        %v3229 = vrot.slane %v3215, %v3228
        %v3230 = vcombine.low %v3222, %v3229
        %v3231 = vcombine.low %v706, %v721
        %v3232 = vcombine.low %v728, %v729
        %v3233 = vcombine.low %v730, %v744
        %v3234 = vcombine.low %v986, %v766
        %v3236 = vunpack.c.l.s4 1966171168
        %v3237 = vunpack.c.0.s8 %v3236
        %v3238 = vlaneseq
        %v3239 = vshrl.u32 %v3238, 7
        %v3240 = vsub.s32 %v3237, %v3239
        %v3241 = vrot.slane %v3231, %v3240
        %v3243 = vunpack.c.l.s4 1966171168
        %v3244 = vunpack.c.0.s8 %v3243
        %v3245 = vlaneseq
        %v3246 = vshrl.u32 %v3245, 7
        %v3247 = vsub.s32 %v3244, %v3246
        %v3248 = vrot.slane %v3232, %v3247
        %v3250 = vunpack.c.l.s4 1966171168
        %v3251 = vunpack.c.0.s8 %v3250
        %v3252 = vlaneseq
        %v3253 = vshrl.u32 %v3252, 7
        %v3254 = vsub.s32 %v3251, %v3253
        %v3255 = vrot.slane %v3233, %v3254
        %v3257 = vunpack.c.l.s4 1966171168
        %v3258 = vunpack.c.0.s8 %v3257
        %v3259 = vlaneseq
        %v3260 = vshrl.u32 %v3259, 7
        %v3261 = vsub.s32 %v3258, %v3260
        %v3262 = vrot.slane %v3234, %v3261
        %v3263 = vcombine.low %v3241, %v3248
        %v3264 = vcombine.low %v3255, %v3262
        %v3266 = vunpack.c.l.s4 1966171168
        %v3267 = vunpack.c.0.s8 %v3266
        %v3268 = vlaneseq
        %v3269 = vshrl.u32 %v3268, 7
        %v3270 = vsub.s32 %v3267, %v3269
        %v3271 = vrot.slane %v3263, %v3270
        %v3273 = vunpack.c.l.s4 1966171168
        %v3274 = vunpack.c.0.s8 %v3273
        %v3275 = vlaneseq
        %v3276 = vshrl.u32 %v3275, 7
        %v3277 = vsub.s32 %v3274, %v3276
        %v3278 = vrot.slane %v3264, %v3277
        %v3279 = vcombine.low %v3271, %v3278
        %v3280 = vcombine.low %v767, %v768
        %v3281 = vcombine.low %v783, %v790
        %v3282 = vcombine.low %v791, %v792
        %v3283 = vcombine.low %v806, %v994
        %v3285 = vunpack.c.l.s4 1966171168
        %v3286 = vunpack.c.0.s8 %v3285
        %v3287 = vlaneseq
        %v3288 = vshrl.u32 %v3287, 7
        %v3289 = vsub.s32 %v3286, %v3288
        %v3290 = vrot.slane %v3280, %v3289
        %v3292 = vunpack.c.l.s4 1966171168
        %v3293 = vunpack.c.0.s8 %v3292
        %v3294 = vlaneseq
        %v3295 = vshrl.u32 %v3294, 7
        %v3296 = vsub.s32 %v3293, %v3295
        %v3297 = vrot.slane %v3281, %v3296
        %v3299 = vunpack.c.l.s4 1966171168
        %v3300 = vunpack.c.0.s8 %v3299
        %v3301 = vlaneseq
        %v3302 = vshrl.u32 %v3301, 7
        %v3303 = vsub.s32 %v3300, %v3302
        %v3304 = vrot.slane %v3282, %v3303
        %v3306 = vunpack.c.l.s4 1966171168
        %v3307 = vunpack.c.0.s8 %v3306
        %v3308 = vlaneseq
        %v3309 = vshrl.u32 %v3308, 7
        %v3310 = vsub.s32 %v3307, %v3309
        %v3311 = vrot.slane %v3283, %v3310
        %v3312 = vcombine.low %v3290, %v3297
        %v3313 = vcombine.low %v3304, %v3311
        %v3315 = vunpack.c.l.s4 1966171168
        %v3316 = vunpack.c.0.s8 %v3315
        %v3317 = vlaneseq
        %v3318 = vshrl.u32 %v3317, 7
        %v3319 = vsub.s32 %v3316, %v3318
        %v3320 = vrot.slane %v3312, %v3319
        %v3322 = vunpack.c.l.s4 1966171168
        %v3323 = vunpack.c.0.s8 %v3322
        %v3324 = vlaneseq
        %v3325 = vshrl.u32 %v3324, 7
        %v3326 = vsub.s32 %v3323, %v3325
        %v3327 = vrot.slane %v3313, %v3326
        %v3328 = vcombine.low %v3320, %v3327
        %v3329 = vcombine.low %v828, %v829
        %v3330 = vcombine.low %v830, %v845
        %v3331 = vcombine.low %v852, %v853
        %v3332 = vcombine.low %v854, %v868
        %v3334 = vunpack.c.l.s4 1966171168
        %v3335 = vunpack.c.0.s8 %v3334
        %v3336 = vlaneseq
        %v3337 = vshrl.u32 %v3336, 7
        %v3338 = vsub.s32 %v3335, %v3337
        %v3339 = vrot.slane %v3329, %v3338
        %v3341 = vunpack.c.l.s4 1966171168
        %v3342 = vunpack.c.0.s8 %v3341
        %v3343 = vlaneseq
        %v3344 = vshrl.u32 %v3343, 7
        %v3345 = vsub.s32 %v3342, %v3344
        %v3346 = vrot.slane %v3330, %v3345
        %v3348 = vunpack.c.l.s4 1966171168
        %v3349 = vunpack.c.0.s8 %v3348
        %v3350 = vlaneseq
        %v3351 = vshrl.u32 %v3350, 7
        %v3352 = vsub.s32 %v3349, %v3351
        %v3353 = vrot.slane %v3331, %v3352
        %v3355 = vunpack.c.l.s4 1966171168
        %v3356 = vunpack.c.0.s8 %v3355
        %v3357 = vlaneseq
        %v3358 = vshrl.u32 %v3357, 7
        %v3359 = vsub.s32 %v3356, %v3358
        %v3360 = vrot.slane %v3332, %v3359
        %v3361 = vcombine.low %v3339, %v3346
        %v3362 = vcombine.low %v3353, %v3360
        %v3364 = vunpack.c.l.s4 1966171168
        %v3365 = vunpack.c.0.s8 %v3364
        %v3366 = vlaneseq
        %v3367 = vshrl.u32 %v3366, 7
        %v3368 = vsub.s32 %v3365, %v3367
        %v3369 = vrot.slane %v3361, %v3368
        %v3371 = vunpack.c.l.s4 1966171168
        %v3372 = vunpack.c.0.s8 %v3371
        %v3373 = vlaneseq
        %v3374 = vshrl.u32 %v3373, 7
        %v3375 = vsub.s32 %v3372, %v3374
        %v3376 = vrot.slane %v3362, %v3375
        %v3377 = vcombine.low %v3369, %v3376
        %v3378 = vcombine.low %v1002, %v890
        %v3379 = vcombine.low %v891, %v892
        %v3380 = vcombine.low %v907, %v914
        %v3381 = vcombine.low %v915, %v916
        %v3383 = vunpack.c.l.s4 1966171168
        %v3384 = vunpack.c.0.s8 %v3383
        %v3385 = vlaneseq
        %v3386 = vshrl.u32 %v3385, 7
        %v3387 = vsub.s32 %v3384, %v3386
        %v3388 = vrot.slane %v3378, %v3387
        %v3390 = vunpack.c.l.s4 1966171168
        %v3391 = vunpack.c.0.s8 %v3390
        %v3392 = vlaneseq
        %v3393 = vshrl.u32 %v3392, 7
        %v3394 = vsub.s32 %v3391, %v3393
        %v3395 = vrot.slane %v3379, %v3394
        %v3397 = vunpack.c.l.s4 1966171168
        %v3398 = vunpack.c.0.s8 %v3397
        %v3399 = vlaneseq
        %v3400 = vshrl.u32 %v3399, 7
        %v3401 = vsub.s32 %v3398, %v3400
        %v3402 = vrot.slane %v3380, %v3401
        %v3404 = vunpack.c.l.s4 1966171168
        %v3405 = vunpack.c.0.s8 %v3404
        %v3406 = vlaneseq
        %v3407 = vshrl.u32 %v3406, 7
        %v3408 = vsub.s32 %v3405, %v3407
        %v3409 = vrot.slane %v3381, %v3408
        %v3410 = vcombine.low %v3388, %v3395
        %v3411 = vcombine.low %v3402, %v3409
        %v3413 = vunpack.c.l.s4 1966171168
        %v3414 = vunpack.c.0.s8 %v3413
        %v3415 = vlaneseq
        %v3416 = vshrl.u32 %v3415, 7
        %v3417 = vsub.s32 %v3414, %v3416
        %v3418 = vrot.slane %v3410, %v3417
        %v3420 = vunpack.c.l.s4 1966171168
        %v3421 = vunpack.c.0.s8 %v3420
        %v3422 = vlaneseq
        %v3423 = vshrl.u32 %v3422, 7
        %v3424 = vsub.s32 %v3421, %v3423
        %v3425 = vrot.slane %v3411, %v3424
        %v3426 = vcombine.low %v3418, %v3425
        %v3427 = vcombine.low %v930, %v1010
        %v3429 = vunpack.c.l.s4 1966171168
        %v3430 = vunpack.c.0.s8 %v3429
        %v3431 = vlaneseq
        %v3432 = vshrl.u32 %v3431, 7
        %v3433 = vsub.s32 %v3430, %v3432
        %v3434 = vrot.slane %v3427, %v3433
        %v3436 = vunpack.c.l.s4 1966171168
        %v3437 = vunpack.c.0.s8 %v3436
        %v3438 = vlaneseq
        %v3439 = vshrl.u32 %v3438, 7
        %v3440 = vsub.s32 %v3437, %v3439
        %v3441 = vrot.slane %v3434, %v3440
        %v3454 = vld [vmem:[#allocation4] sm:$0xf]
        %v3455 = vld [vmem:[#allocation4 + $0x4] sm:$0xf]
        %v3456 = vld [vmem:[#allocation4 + $0x8] sm:$0xf]
        %v3457 = vld [vmem:[#allocation4 + $0xc] sm:$0xf]
        %v3458 = vld [vmem:[#allocation4 + $0x10] sm:$0xf]
        %v3459 = vld [vmem:[#allocation4 + $0x14] sm:$0xf]
        %v3460 = vld [vmem:[#allocation4 + $0x18] sm:$0xf]
        %v3461 = vld [vmem:[#allocation4 + $0x1c] sm:$0xf]
        %v3462 = vld [vmem:[#allocation4 + $0x20] sm:$0xf]
        %v3463 = vld [vmem:[#allocation4 + $0x24] sm:$0xf]
        %v3464 = vld [vmem:[#allocation4 + $0x28] sm:$0xf]
        %v3465 = vld [vmem:[#allocation4 + $0x2c] sm:$0xf]
        %v3466 = vld [vmem:[#allocation4 + $0x30] sm:$0xf]
        %v3467 = vld [vmem:[#allocation4 + $0x34] sm:$0xf]
        %v3468 = vld [vmem:[#allocation4 + $0x38] sm:$0xf]
        %v3469 = vld [vmem:[#allocation4 + $0x3c] sm:$0xf]
        %v3470 = vld [vmem:[#allocation4 + $0x40] sm:$0xf]
        %v3471 = vld [vmem:[#allocation4 + $0x44] sm:$0xf]
        %v3472 = vld [vmem:[#allocation4 + $0x48] sm:$0xf]
        %v3473 = vld [vmem:[#allocation4 + $0x4c] sm:$0xf]
        %v3474 = vld [vmem:[#allocation4 + $0x50] sm:$0xf]
        %v3475 = vld [vmem:[#allocation4 + $0x54] sm:$0xf]
        %v3476 = vld [vmem:[#allocation4 + $0x58] sm:$0xf]
        %v3477 = vld [vmem:[#allocation4 + $0x5c] sm:$0xf]
        %v3478 = vld [vmem:[#allocation4 + $0x60] sm:$0xf]
        %v3479 = vld [vmem:[#allocation4 + $0x64] sm:$0xf]
        %v3480 = vld [vmem:[#allocation4 + $0x68] sm:$0xf]
        %v3481 = vld [vmem:[#allocation4 + $0x6c] sm:$0xf]
        %v3482 = vld [vmem:[#allocation4 + $0x70] sm:$0xf]
        %v3483 = vld [vmem:[#allocation4 + $0x74] sm:$0xf]
        %v3484 = vld [vmem:[#allocation4 + $0x78] sm:$0xf]
        %v3485 = vld [vmem:[#allocation4 + $0x7c] sm:$0xf]
        %v3486 = vld [vmem:[#allocation4 + $0x80] sm:$0xf]
        %v3487 = vld [vmem:[#allocation4 + $0x84] sm:$0xf]
        %v3488 = vld [vmem:[#allocation4 + $0x88] sm:$0xf]
        %v3489 = vld [vmem:[#allocation4 + $0x8c] sm:$0xf]
        %v3490 = vld [vmem:[#allocation4 + $0x90] sm:$0xf]
        %v3491 = vld [vmem:[#allocation4 + $0x94] sm:$0xf]
        %v3492 = vld [vmem:[#allocation4 + $0x98] sm:$0xf]
        %v3493 = vld [vmem:[#allocation4 + $0x9c] sm:$0xf]
        %v3494 = vld [vmem:[#allocation4 + $0xa0] sm:$0xf]
        %v3495 = vld [vmem:[#allocation4 + $0xa4] sm:$0xf]
        %v3496 = vld [vmem:[#allocation4 + $0xa8] sm:$0xf]
        %v3497 = vld [vmem:[#allocation4 + $0xac] sm:$0xf]
        %v3498 = vld [vmem:[#allocation4 + $0xb0] sm:$0xf]
        %v3499 = vld [vmem:[#allocation4 + $0xb4] sm:$0xf]
        %v3500 = vld [vmem:[#allocation4 + $0xb8] sm:$0xf]
        %v3501 = vld [vmem:[#allocation4 + $0xbc] sm:$0xf]
        %v3506 = vunpack.c.l.s4 1966171168
        %v3507 = vunpack.c.0.s8 %v3506
        %v3508 = vlaneseq
        %v3509 = vshrl.u32 %v3508, 7
        %v3510 = vsub.s32 %v3507, %v3509
        %v3511 = vrot.slane %v275, %v3510
        %v3512 = vcombine.high %v3511, %v3511
        %v3514 = vunpack.c.l.s4 1966171168
        %v3515 = vunpack.c.0.s8 %v3514
        %v3516 = vlaneseq
        %v3517 = vshrl.u32 %v3516, 7
        %v3518 = vsub.s32 %v3515, %v3517
        %v3519 = vrot.slane %v3511, %v3518
        %v3521 = vunpack.c.l.s4 1966171168
        %v3522 = vunpack.c.0.s8 %v3521
        %v3523 = vlaneseq
        %v3524 = vshrl.u32 %v3523, 7
        %v3525 = vsub.s32 %v3522, %v3524
        %v3526 = vrot.slane %v3512, %v3525
        %v3527 = vcombine.high %v3519, %v3519
        %v3528 = vcombine.high %v3526, %v3526
        %v3530 = vunpack.c.l.s4 1966171168
        %v3531 = vunpack.c.0.s8 %v3530
        %v3532 = vlaneseq
        %v3533 = vshrl.u32 %v3532, 7
        %v3534 = vsub.s32 %v3531, %v3533
        %v3535 = vrot.slane %v276, %v3534
        %v3536 = vcombine.high %v3535, %v3535
        %v3538 = vunpack.c.l.s4 1966171168
        %v3539 = vunpack.c.0.s8 %v3538
        %v3540 = vlaneseq
        %v3541 = vshrl.u32 %v3540, 7
        %v3542 = vsub.s32 %v3539, %v3541
        %v3543 = vrot.slane %v3535, %v3542
        %v3545 = vunpack.c.l.s4 1966171168
        %v3546 = vunpack.c.0.s8 %v3545
        %v3547 = vlaneseq
        %v3548 = vshrl.u32 %v3547, 7
        %v3549 = vsub.s32 %v3546, %v3548
        %v3550 = vrot.slane %v3536, %v3549
        %v3551 = vcombine.high %v3543, %v3543
        %v3552 = vcombine.high %v3550, %v3550
        %v3554 = vunpack.c.l.s4 1966171168
        %v3555 = vunpack.c.0.s8 %v3554
        %v3556 = vlaneseq
        %v3557 = vshrl.u32 %v3556, 7
        %v3558 = vsub.s32 %v3555, %v3557
        %v3559 = vrot.slane %v277, %v3558
        %v3561 = vunpack.c.l.s4 1966171168
        %v3562 = vunpack.c.0.s8 %v3561
        %v3563 = vlaneseq
        %v3564 = vshrl.u32 %v3563, 7
        %v3565 = vsub.s32 %v3562, %v3564
        %v3566 = vrot.slane %v3559, %v3565
        %v3567 = vcombine.high %v3559, %v3559
        %v3569 = vunpack.c.l.s4 1966171168
        %v3570 = vunpack.c.0.s8 %v3569
        %v3571 = vlaneseq
        %v3572 = vshrl.u32 %v3571, 7
        %v3573 = vsub.s32 %v3570, %v3572
        %v3574 = vrot.slane %v3567, %v3573
        %v3576 = vshrl.u32 %v3519, 16
        %v3578 = vrot.slane %v3576, 7
        %v3579 = vrot.slane %v3578, 1
        %v3581 = vshll.u32 %v3526, 16
        %v3583 = vsel %vm1025, %v3579, %v3581
        %v3584 = vshrl.u32 %v3526, 16
        %v3586 = vrot.slane %v3584, 7
        %v3587 = vrot.slane %v3586, 1
        %v3589 = vshll.u32 %v3527, 16
        %v3591 = vsel %vm1025, %v3587, %v3589
        %v3592 = vshrl.u32 %v3527, 16
        %v3594 = vrot.slane %v3592, 7
        %v3595 = vrot.slane %v3594, 1
        %v3597 = vshll.u32 %v3528, 16
        %v3599 = vsel %vm1025, %v3595, %v3597
        %v3600 = vshrl.u32 %v3528, 16
        %v3602 = vrot.slane %v3600, 7
        %v3603 = vrot.slane %v3602, 1
        %v3605 = vshll.u32 %v3543, 16
        %v3607 = vsel %vm1025, %v3603, %v3605
        %v3608 = vshrl.u32 %v3543, 16
        %v3610 = vrot.slane %v3608, 7
        %v3611 = vrot.slane %v3610, 1
        %v3613 = vshll.u32 %v3550, 16
        %v3615 = vsel %vm1025, %v3611, %v3613
        %v3616 = vshrl.u32 %v3550, 16
        %v3618 = vrot.slane %v3616, 7
        %v3619 = vrot.slane %v3618, 1
        %v3621 = vshll.u32 %v3551, 16
        %v3623 = vsel %vm1025, %v3619, %v3621
        %v3624 = vshrl.u32 %v3551, 16
        %v3626 = vrot.slane %v3624, 7
        %v3627 = vrot.slane %v3626, 1
        %v3629 = vshll.u32 %v3552, 16
        %v3631 = vsel %vm1025, %v3627, %v3629
        %v3632 = vshrl.u32 %v3552, 16
        %v3634 = vrot.slane %v3632, 7
        %v3635 = vrot.slane %v3634, 1
        %v3637 = vshll.u32 %v3566, 16
        %v3639 = vsel %vm1025, %v3635, %v3637
        %v3640 = vshrl.u32 %v3566, 16
        %v3642 = vrot.slane %v3640, 7
        %v3643 = vrot.slane %v3642, 1
        %v3645 = vshll.u32 %v3574, 16
        %v3647 = vsel %vm1025, %v3643, %v3645
        %v3648 = vcombine.low %v387, %v394
        %v3650 = vunpack.c.l.s4 1966171168
        %v3651 = vunpack.c.0.s8 %v3650
        %v3652 = vlaneseq
        %v3653 = vshrl.u32 %v3652, 7
        %v3654 = vsub.s32 %v3651, %v3653
        %v3655 = vrot.slane %v3648, %v3654
        %v3656 = vcombine.low %v3655, %v2954
        %v3658 = vunpack.c.l.s4 1966171168
        %v3659 = vunpack.c.0.s8 %v3658
        %v3660 = vlaneseq
        %v3661 = vshrl.u32 %v3660, 7
        %v3662 = vsub.s32 %v3659, %v3661
        %v3663 = vrot.slane %v3656, %v3662
        %v3664 = vcombine.low %v3663, %v2984
        %v3665 = vcombine.low %v434, %v449
        %v3667 = vunpack.c.l.s4 1966171168
        %v3668 = vunpack.c.0.s8 %v3667
        %v3669 = vlaneseq
        %v3670 = vshrl.u32 %v3669, 7
        %v3671 = vsub.s32 %v3668, %v3670
        %v3672 = vrot.slane %v3665, %v3671
        %v3673 = vcombine.low %v3672, %v3003
        %v3675 = vunpack.c.l.s4 1966171168
        %v3676 = vunpack.c.0.s8 %v3675
        %v3677 = vlaneseq
        %v3678 = vshrl.u32 %v3677, 7
        %v3679 = vsub.s32 %v3676, %v3678
        %v3680 = vrot.slane %v3673, %v3679
        %v3681 = vcombine.low %v3680, %v3033
        %v3682 = vcombine.low %v511, %v518
        %v3684 = vunpack.c.l.s4 1966171168
        %v3685 = vunpack.c.0.s8 %v3684
        %v3686 = vlaneseq
        %v3687 = vshrl.u32 %v3686, 7
        %v3688 = vsub.s32 %v3685, %v3687
        %v3689 = vrot.slane %v3682, %v3688
        %v3690 = vcombine.low %v3045, %v3689
        %v3692 = vunpack.c.l.s4 1966171168
        %v3693 = vunpack.c.0.s8 %v3692
        %v3694 = vlaneseq
        %v3695 = vshrl.u32 %v3694, 7
        %v3696 = vsub.s32 %v3693, %v3695
        %v3697 = vrot.slane %v3690, %v3696
        %v3698 = vcombine.low %v3697, %v3082
        %v3699 = vcombine.low %v558, %v573
        %v3701 = vunpack.c.l.s4 1966171168
        %v3702 = vunpack.c.0.s8 %v3701
        %v3703 = vlaneseq
        %v3704 = vshrl.u32 %v3703, 7
        %v3705 = vsub.s32 %v3702, %v3704
        %v3706 = vrot.slane %v3699, %v3705
        %v3707 = vcombine.low %v3094, %v3706
        %v3709 = vunpack.c.l.s4 1966171168
        %v3710 = vunpack.c.0.s8 %v3709
        %v3711 = vlaneseq
        %v3712 = vshrl.u32 %v3711, 7
        %v3713 = vsub.s32 %v3710, %v3712
        %v3714 = vrot.slane %v3707, %v3713
        %v3715 = vcombine.low %v3714, %v3131
        %v3716 = vcombine.low %v635, %v642
        %v3718 = vunpack.c.l.s4 1966171168
        %v3719 = vunpack.c.0.s8 %v3718
        %v3720 = vlaneseq
        %v3721 = vshrl.u32 %v3720, 7
        %v3722 = vsub.s32 %v3719, %v3721
        %v3723 = vrot.slane %v3716, %v3722
        %v3724 = vcombine.low %v3723, %v3164
        %v3726 = vunpack.c.l.s4 1966171168
        %v3727 = vunpack.c.0.s8 %v3726
        %v3728 = vlaneseq
        %v3729 = vshrl.u32 %v3728, 7
        %v3730 = vsub.s32 %v3727, %v3729
        %v3731 = vrot.slane %v3724, %v3730
        %v3732 = vcombine.low %v3173, %v3731
        %v3733 = vcombine.low %v682, %v697
        %v3735 = vunpack.c.l.s4 1966171168
        %v3736 = vunpack.c.0.s8 %v3735
        %v3737 = vlaneseq
        %v3738 = vshrl.u32 %v3737, 7
        %v3739 = vsub.s32 %v3736, %v3738
        %v3740 = vrot.slane %v3733, %v3739
        %v3741 = vcombine.low %v3740, %v3213
        %v3743 = vunpack.c.l.s4 1966171168
        %v3744 = vunpack.c.0.s8 %v3743
        %v3745 = vlaneseq
        %v3746 = vshrl.u32 %v3745, 7
        %v3747 = vsub.s32 %v3744, %v3746
        %v3748 = vrot.slane %v3741, %v3747
        %v3749 = vcombine.low %v3222, %v3748
        %v3750 = vcombine.low %v759, %v766
        %v3752 = vunpack.c.l.s4 1966171168
        %v3753 = vunpack.c.0.s8 %v3752
        %v3754 = vlaneseq
        %v3755 = vshrl.u32 %v3754, 7
        %v3756 = vsub.s32 %v3753, %v3755
        %v3757 = vrot.slane %v3750, %v3756
        %v3758 = vcombine.low %v3255, %v3757
        %v3760 = vunpack.c.l.s4 1966171168
        %v3761 = vunpack.c.0.s8 %v3760
        %v3762 = vlaneseq
        %v3763 = vshrl.u32 %v3762, 7
        %v3764 = vsub.s32 %v3761, %v3763
        %v3765 = vrot.slane %v3758, %v3764
        %v3766 = vcombine.low %v3271, %v3765
        %v3767 = vcombine.low %v806, %v821
        %v3769 = vunpack.c.l.s4 1966171168
        %v3770 = vunpack.c.0.s8 %v3769
        %v3771 = vlaneseq
        %v3772 = vshrl.u32 %v3771, 7
        %v3773 = vsub.s32 %v3770, %v3772
        %v3774 = vrot.slane %v3767, %v3773
        %v3775 = vcombine.low %v3304, %v3774
        %v3777 = vunpack.c.l.s4 1966171168
        %v3778 = vunpack.c.0.s8 %v3777
        %v3779 = vlaneseq
        %v3780 = vshrl.u32 %v3779, 7
        %v3781 = vsub.s32 %v3778, %v3780
        %v3782 = vrot.slane %v3775, %v3781
        %v3783 = vcombine.low %v3320, %v3782
        %v3784 = vcombine.low %v883, %v890
        %v3786 = vunpack.c.l.s4 1966171168
        %v3787 = vunpack.c.0.s8 %v3786
        %v3788 = vlaneseq
        %v3789 = vshrl.u32 %v3788, 7
        %v3790 = vsub.s32 %v3787, %v3789
        %v3791 = vrot.slane %v3784, %v3790
        %v3792 = vcombine.low %v3791, %v3395
        %v3794 = vunpack.c.l.s4 1966171168
        %v3795 = vunpack.c.0.s8 %v3794
        %v3796 = vlaneseq
        %v3797 = vshrl.u32 %v3796, 7
        %v3798 = vsub.s32 %v3795, %v3797
        %v3799 = vrot.slane %v3792, %v3798
        %v3800 = vcombine.low %v3799, %v3425
        %v3801 = vcombine.low %v930, %v3519
        %v3802 = vcombine.low %v3526, %v3527
        %v3803 = vcombine.low %v3528, %v3543
        %v3804 = vcombine.low %v3550, %v3551
        %v3806 = vunpack.c.l.s4 1966171168
        %v3807 = vunpack.c.0.s8 %v3806
        %v3808 = vlaneseq
        %v3809 = vshrl.u32 %v3808, 7
        %v3810 = vsub.s32 %v3807, %v3809
        %v3811 = vrot.slane %v3801, %v3810
        %v3813 = vunpack.c.l.s4 1966171168
        %v3814 = vunpack.c.0.s8 %v3813
        %v3815 = vlaneseq
        %v3816 = vshrl.u32 %v3815, 7
        %v3817 = vsub.s32 %v3814, %v3816
        %v3818 = vrot.slane %v3802, %v3817
        %v3820 = vunpack.c.l.s4 1966171168
        %v3821 = vunpack.c.0.s8 %v3820
        %v3822 = vlaneseq
        %v3823 = vshrl.u32 %v3822, 7
        %v3824 = vsub.s32 %v3821, %v3823
        %v3825 = vrot.slane %v3803, %v3824
        %v3827 = vunpack.c.l.s4 1966171168
        %v3828 = vunpack.c.0.s8 %v3827
        %v3829 = vlaneseq
        %v3830 = vshrl.u32 %v3829, 7
        %v3831 = vsub.s32 %v3828, %v3830
        %v3832 = vrot.slane %v3804, %v3831
        %v3833 = vcombine.low %v3811, %v3818
        %v3834 = vcombine.low %v3825, %v3832
        %v3836 = vunpack.c.l.s4 1966171168
        %v3837 = vunpack.c.0.s8 %v3836
        %v3838 = vlaneseq
        %v3839 = vshrl.u32 %v3838, 7
        %v3840 = vsub.s32 %v3837, %v3839
        %v3841 = vrot.slane %v3833, %v3840
        %v3843 = vunpack.c.l.s4 1966171168
        %v3844 = vunpack.c.0.s8 %v3843
        %v3845 = vlaneseq
        %v3846 = vshrl.u32 %v3845, 7
        %v3847 = vsub.s32 %v3844, %v3846
        %v3848 = vrot.slane %v3834, %v3847
        %v3849 = vcombine.low %v3841, %v3848
        %v3850 = vcombine.low %v3552, %v3566
        %v3852 = vunpack.c.l.s4 1966171168
        %v3853 = vunpack.c.0.s8 %v3852
        %v3854 = vlaneseq
        %v3855 = vshrl.u32 %v3854, 7
        %v3856 = vsub.s32 %v3853, %v3855
        %v3857 = vrot.slane %v3850, %v3856
        %v3859 = vunpack.c.l.s4 1966171168
        %v3860 = vunpack.c.0.s8 %v3859
        %v3861 = vlaneseq
        %v3862 = vshrl.u32 %v3861, 7
        %v3863 = vsub.s32 %v3860, %v3862
        %v3864 = vrot.slane %v3857, %v3863
        %v3876 = vcombine.low %v1107, %v1115
        %v3877 = vcombine.low %v1123, %v1131
        %v3878 = vcombine.low %v1139, %v1147
        %v3879 = vcombine.low %v1155, %v1163
        %v3881 = vunpack.c.l.s4 1966171168
        %v3882 = vunpack.c.0.s8 %v3881
        %v3883 = vlaneseq
        %v3884 = vshrl.u32 %v3883, 7
        %v3885 = vsub.s32 %v3882, %v3884
        %v3886 = vrot.slane %v3876, %v3885
        %v3888 = vunpack.c.l.s4 1966171168
        %v3889 = vunpack.c.0.s8 %v3888
        %v3890 = vlaneseq
        %v3891 = vshrl.u32 %v3890, 7
        %v3892 = vsub.s32 %v3889, %v3891
        %v3893 = vrot.slane %v3877, %v3892
        %v3895 = vunpack.c.l.s4 1966171168
        %v3896 = vunpack.c.0.s8 %v3895
        %v3897 = vlaneseq
        %v3898 = vshrl.u32 %v3897, 7
        %v3899 = vsub.s32 %v3896, %v3898
        %v3900 = vrot.slane %v3878, %v3899
        %v3902 = vunpack.c.l.s4 1966171168
        %v3903 = vunpack.c.0.s8 %v3902
        %v3904 = vlaneseq
        %v3905 = vshrl.u32 %v3904, 7
        %v3906 = vsub.s32 %v3903, %v3905
        %v3907 = vrot.slane %v3879, %v3906
        %v3908 = vcombine.low %v3886, %v3893
        %v3909 = vcombine.low %v3900, %v3907
        %v3911 = vunpack.c.l.s4 1966171168
        %v3912 = vunpack.c.0.s8 %v3911
        %v3913 = vlaneseq
        %v3914 = vshrl.u32 %v3913, 7
        %v3915 = vsub.s32 %v3912, %v3914
        %v3916 = vrot.slane %v3908, %v3915
        %v3918 = vunpack.c.l.s4 1966171168
        %v3919 = vunpack.c.0.s8 %v3918
        %v3920 = vlaneseq
        %v3921 = vshrl.u32 %v3920, 7
        %v3922 = vsub.s32 %v3919, %v3921
        %v3923 = vrot.slane %v3909, %v3922
        %v3924 = vcombine.low %v3916, %v3923
        %v3925 = vcombine.low %v1171, %v1180
        %v3926 = vcombine.low %v1188, %v1196
        %v3927 = vcombine.low %v1204, %v1212
        %v3928 = vcombine.low %v1220, %v1228
        %v3930 = vunpack.c.l.s4 1966171168
        %v3931 = vunpack.c.0.s8 %v3930
        %v3932 = vlaneseq
        %v3933 = vshrl.u32 %v3932, 7
        %v3934 = vsub.s32 %v3931, %v3933
        %v3935 = vrot.slane %v3925, %v3934
        %v3937 = vunpack.c.l.s4 1966171168
        %v3938 = vunpack.c.0.s8 %v3937
        %v3939 = vlaneseq
        %v3940 = vshrl.u32 %v3939, 7
        %v3941 = vsub.s32 %v3938, %v3940
        %v3942 = vrot.slane %v3926, %v3941
        %v3944 = vunpack.c.l.s4 1966171168
        %v3945 = vunpack.c.0.s8 %v3944
        %v3946 = vlaneseq
        %v3947 = vshrl.u32 %v3946, 7
        %v3948 = vsub.s32 %v3945, %v3947
        %v3949 = vrot.slane %v3927, %v3948
        %v3951 = vunpack.c.l.s4 1966171168
        %v3952 = vunpack.c.0.s8 %v3951
        %v3953 = vlaneseq
        %v3954 = vshrl.u32 %v3953, 7
        %v3955 = vsub.s32 %v3952, %v3954
        %v3956 = vrot.slane %v3928, %v3955
        %v3957 = vcombine.low %v3935, %v3942
        %v3958 = vcombine.low %v3949, %v3956
        %v3960 = vunpack.c.l.s4 1966171168
        %v3961 = vunpack.c.0.s8 %v3960
        %v3962 = vlaneseq
        %v3963 = vshrl.u32 %v3962, 7
        %v3964 = vsub.s32 %v3961, %v3963
        %v3965 = vrot.slane %v3957, %v3964
        %v3967 = vunpack.c.l.s4 1966171168
        %v3968 = vunpack.c.0.s8 %v3967
        %v3969 = vlaneseq
        %v3970 = vshrl.u32 %v3969, 7
        %v3971 = vsub.s32 %v3968, %v3970
        %v3972 = vrot.slane %v3958, %v3971
        %v3973 = vcombine.low %v3965, %v3972
        %v3974 = vcombine.low %v1236, %v1244
        %v3975 = vcombine.low %v1253, %v1261
        %v3976 = vcombine.low %v1269, %v1277
        %v3977 = vcombine.low %v1285, %v1293
        %v3979 = vunpack.c.l.s4 1966171168
        %v3980 = vunpack.c.0.s8 %v3979
        %v3981 = vlaneseq
        %v3982 = vshrl.u32 %v3981, 7
        %v3983 = vsub.s32 %v3980, %v3982
        %v3984 = vrot.slane %v3974, %v3983
        %v3986 = vunpack.c.l.s4 1966171168
        %v3987 = vunpack.c.0.s8 %v3986
        %v3988 = vlaneseq
        %v3989 = vshrl.u32 %v3988, 7
        %v3990 = vsub.s32 %v3987, %v3989
        %v3991 = vrot.slane %v3975, %v3990
        %v3993 = vunpack.c.l.s4 1966171168
        %v3994 = vunpack.c.0.s8 %v3993
        %v3995 = vlaneseq
        %v3996 = vshrl.u32 %v3995, 7
        %v3997 = vsub.s32 %v3994, %v3996
        %v3998 = vrot.slane %v3976, %v3997
        %v4000 = vunpack.c.l.s4 1966171168
        %v4001 = vunpack.c.0.s8 %v4000
        %v4002 = vlaneseq
        %v4003 = vshrl.u32 %v4002, 7
        %v4004 = vsub.s32 %v4001, %v4003
        %v4005 = vrot.slane %v3977, %v4004
        %v4006 = vcombine.low %v3984, %v3991
        %v4007 = vcombine.low %v3998, %v4005
        %v4009 = vunpack.c.l.s4 1966171168
        %v4010 = vunpack.c.0.s8 %v4009
        %v4011 = vlaneseq
        %v4012 = vshrl.u32 %v4011, 7
        %v4013 = vsub.s32 %v4010, %v4012
        %v4014 = vrot.slane %v4006, %v4013
        %v4016 = vunpack.c.l.s4 1966171168
        %v4017 = vunpack.c.0.s8 %v4016
        %v4018 = vlaneseq
        %v4019 = vshrl.u32 %v4018, 7
        %v4020 = vsub.s32 %v4017, %v4019
        %v4021 = vrot.slane %v4007, %v4020
        %v4022 = vcombine.low %v4014, %v4021
        %v4023 = vcombine.low %v1301, %v1309
        %v4024 = vcombine.low %v1317, %v1326
        %v4025 = vcombine.low %v1334, %v1342
        %v4026 = vcombine.low %v1350, %v1358
        %v4028 = vunpack.c.l.s4 1966171168
        %v4029 = vunpack.c.0.s8 %v4028
        %v4030 = vlaneseq
        %v4031 = vshrl.u32 %v4030, 7
        %v4032 = vsub.s32 %v4029, %v4031
        %v4033 = vrot.slane %v4023, %v4032
        %v4035 = vunpack.c.l.s4 1966171168
        %v4036 = vunpack.c.0.s8 %v4035
        %v4037 = vlaneseq
        %v4038 = vshrl.u32 %v4037, 7
        %v4039 = vsub.s32 %v4036, %v4038
        %v4040 = vrot.slane %v4024, %v4039
        %v4042 = vunpack.c.l.s4 1966171168
        %v4043 = vunpack.c.0.s8 %v4042
        %v4044 = vlaneseq
        %v4045 = vshrl.u32 %v4044, 7
        %v4046 = vsub.s32 %v4043, %v4045
        %v4047 = vrot.slane %v4025, %v4046
        %v4049 = vunpack.c.l.s4 1966171168
        %v4050 = vunpack.c.0.s8 %v4049
        %v4051 = vlaneseq
        %v4052 = vshrl.u32 %v4051, 7
        %v4053 = vsub.s32 %v4050, %v4052
        %v4054 = vrot.slane %v4026, %v4053
        %v4055 = vcombine.low %v4033, %v4040
        %v4056 = vcombine.low %v4047, %v4054
        %v4058 = vunpack.c.l.s4 1966171168
        %v4059 = vunpack.c.0.s8 %v4058
        %v4060 = vlaneseq
        %v4061 = vshrl.u32 %v4060, 7
        %v4062 = vsub.s32 %v4059, %v4061
        %v4063 = vrot.slane %v4055, %v4062
        %v4065 = vunpack.c.l.s4 1966171168
        %v4066 = vunpack.c.0.s8 %v4065
        %v4067 = vlaneseq
        %v4068 = vshrl.u32 %v4067, 7
        %v4069 = vsub.s32 %v4066, %v4068
        %v4070 = vrot.slane %v4056, %v4069
        %v4071 = vcombine.low %v4063, %v4070
        %v4072 = vcombine.low %v1366, %v1374
        %v4073 = vcombine.low %v1382, %v1390
        %v4074 = vcombine.low %v1399, %v1407
        %v4075 = vcombine.low %v1415, %v1423
        %v4077 = vunpack.c.l.s4 1966171168
        %v4078 = vunpack.c.0.s8 %v4077
        %v4079 = vlaneseq
        %v4080 = vshrl.u32 %v4079, 7
        %v4081 = vsub.s32 %v4078, %v4080
        %v4082 = vrot.slane %v4072, %v4081
        %v4084 = vunpack.c.l.s4 1966171168
        %v4085 = vunpack.c.0.s8 %v4084
        %v4086 = vlaneseq
        %v4087 = vshrl.u32 %v4086, 7
        %v4088 = vsub.s32 %v4085, %v4087
        %v4089 = vrot.slane %v4073, %v4088
        %v4091 = vunpack.c.l.s4 1966171168
        %v4092 = vunpack.c.0.s8 %v4091
        %v4093 = vlaneseq
        %v4094 = vshrl.u32 %v4093, 7
        %v4095 = vsub.s32 %v4092, %v4094
        %v4096 = vrot.slane %v4074, %v4095
        %v4098 = vunpack.c.l.s4 1966171168
        %v4099 = vunpack.c.0.s8 %v4098
        %v4100 = vlaneseq
        %v4101 = vshrl.u32 %v4100, 7
        %v4102 = vsub.s32 %v4099, %v4101
        %v4103 = vrot.slane %v4075, %v4102
        %v4104 = vcombine.low %v4082, %v4089
        %v4105 = vcombine.low %v4096, %v4103
        %v4107 = vunpack.c.l.s4 1966171168
        %v4108 = vunpack.c.0.s8 %v4107
        %v4109 = vlaneseq
        %v4110 = vshrl.u32 %v4109, 7
        %v4111 = vsub.s32 %v4108, %v4110
        %v4112 = vrot.slane %v4104, %v4111
        %v4114 = vunpack.c.l.s4 1966171168
        %v4115 = vunpack.c.0.s8 %v4114
        %v4116 = vlaneseq
        %v4117 = vshrl.u32 %v4116, 7
        %v4118 = vsub.s32 %v4115, %v4117
        %v4119 = vrot.slane %v4105, %v4118
        %v4120 = vcombine.low %v4112, %v4119
        %v4121 = vcombine.low %v1431, %v1439
        %v4122 = vcombine.low %v1447, %v1455
        %v4123 = vcombine.low %v1463, %v1472
        %v4124 = vcombine.low %v1480, %v1488
        %v4126 = vunpack.c.l.s4 1966171168
        %v4127 = vunpack.c.0.s8 %v4126
        %v4128 = vlaneseq
        %v4129 = vshrl.u32 %v4128, 7
        %v4130 = vsub.s32 %v4127, %v4129
        %v4131 = vrot.slane %v4121, %v4130
        %v4133 = vunpack.c.l.s4 1966171168
        %v4134 = vunpack.c.0.s8 %v4133
        %v4135 = vlaneseq
        %v4136 = vshrl.u32 %v4135, 7
        %v4137 = vsub.s32 %v4134, %v4136
        %v4138 = vrot.slane %v4122, %v4137
        %v4140 = vunpack.c.l.s4 1966171168
        %v4141 = vunpack.c.0.s8 %v4140
        %v4142 = vlaneseq
        %v4143 = vshrl.u32 %v4142, 7
        %v4144 = vsub.s32 %v4141, %v4143
        %v4145 = vrot.slane %v4123, %v4144
        %v4147 = vunpack.c.l.s4 1966171168
        %v4148 = vunpack.c.0.s8 %v4147
        %v4149 = vlaneseq
        %v4150 = vshrl.u32 %v4149, 7
        %v4151 = vsub.s32 %v4148, %v4150
        %v4152 = vrot.slane %v4124, %v4151
        %v4153 = vcombine.low %v4131, %v4138
        %v4154 = vcombine.low %v4145, %v4152
        %v4156 = vunpack.c.l.s4 1966171168
        %v4157 = vunpack.c.0.s8 %v4156
        %v4158 = vlaneseq
        %v4159 = vshrl.u32 %v4158, 7
        %v4160 = vsub.s32 %v4157, %v4159
        %v4161 = vrot.slane %v4153, %v4160
        %v4163 = vunpack.c.l.s4 1966171168
        %v4164 = vunpack.c.0.s8 %v4163
        %v4165 = vlaneseq
        %v4166 = vshrl.u32 %v4165, 7
        %v4167 = vsub.s32 %v4164, %v4166
        %v4168 = vrot.slane %v4154, %v4167
        %v4169 = vcombine.low %v4161, %v4168
        %v4170 = vcombine.low %v1496, %v1504
        %v4171 = vcombine.low %v1512, %v1520
        %v4172 = vcombine.low %v1528, %v1536
        %v4173 = vcombine.low %v1545, %v1553
        %v4175 = vunpack.c.l.s4 1966171168
        %v4176 = vunpack.c.0.s8 %v4175
        %v4177 = vlaneseq
        %v4178 = vshrl.u32 %v4177, 7
        %v4179 = vsub.s32 %v4176, %v4178
        %v4180 = vrot.slane %v4170, %v4179
        %v4182 = vunpack.c.l.s4 1966171168
        %v4183 = vunpack.c.0.s8 %v4182
        %v4184 = vlaneseq
        %v4185 = vshrl.u32 %v4184, 7
        %v4186 = vsub.s32 %v4183, %v4185
        %v4187 = vrot.slane %v4171, %v4186
        %v4189 = vunpack.c.l.s4 1966171168
        %v4190 = vunpack.c.0.s8 %v4189
        %v4191 = vlaneseq
        %v4192 = vshrl.u32 %v4191, 7
        %v4193 = vsub.s32 %v4190, %v4192
        %v4194 = vrot.slane %v4172, %v4193
        %v4196 = vunpack.c.l.s4 1966171168
        %v4197 = vunpack.c.0.s8 %v4196
        %v4198 = vlaneseq
        %v4199 = vshrl.u32 %v4198, 7
        %v4200 = vsub.s32 %v4197, %v4199
        %v4201 = vrot.slane %v4173, %v4200
        %v4202 = vcombine.low %v4180, %v4187
        %v4203 = vcombine.low %v4194, %v4201
        %v4205 = vunpack.c.l.s4 1966171168
        %v4206 = vunpack.c.0.s8 %v4205
        %v4207 = vlaneseq
        %v4208 = vshrl.u32 %v4207, 7
        %v4209 = vsub.s32 %v4206, %v4208
        %v4210 = vrot.slane %v4202, %v4209
        %v4212 = vunpack.c.l.s4 1966171168
        %v4213 = vunpack.c.0.s8 %v4212
        %v4214 = vlaneseq
        %v4215 = vshrl.u32 %v4214, 7
        %v4216 = vsub.s32 %v4213, %v4215
        %v4217 = vrot.slane %v4203, %v4216
        %v4218 = vcombine.low %v4210, %v4217
        %v4219 = vcombine.low %v1561, %v1569
        %v4220 = vcombine.low %v1577, %v1585
        %v4221 = vcombine.low %v1593, %v1601
        %v4222 = vcombine.low %v1609, %v1618
        %v4224 = vunpack.c.l.s4 1966171168
        %v4225 = vunpack.c.0.s8 %v4224
        %v4226 = vlaneseq
        %v4227 = vshrl.u32 %v4226, 7
        %v4228 = vsub.s32 %v4225, %v4227
        %v4229 = vrot.slane %v4219, %v4228
        %v4231 = vunpack.c.l.s4 1966171168
        %v4232 = vunpack.c.0.s8 %v4231
        %v4233 = vlaneseq
        %v4234 = vshrl.u32 %v4233, 7
        %v4235 = vsub.s32 %v4232, %v4234
        %v4236 = vrot.slane %v4220, %v4235
        %v4238 = vunpack.c.l.s4 1966171168
        %v4239 = vunpack.c.0.s8 %v4238
        %v4240 = vlaneseq
        %v4241 = vshrl.u32 %v4240, 7
        %v4242 = vsub.s32 %v4239, %v4241
        %v4243 = vrot.slane %v4221, %v4242
        %v4245 = vunpack.c.l.s4 1966171168
        %v4246 = vunpack.c.0.s8 %v4245
        %v4247 = vlaneseq
        %v4248 = vshrl.u32 %v4247, 7
        %v4249 = vsub.s32 %v4246, %v4248
        %v4250 = vrot.slane %v4222, %v4249
        %v4251 = vcombine.low %v4229, %v4236
        %v4252 = vcombine.low %v4243, %v4250
        %v4254 = vunpack.c.l.s4 1966171168
        %v4255 = vunpack.c.0.s8 %v4254
        %v4256 = vlaneseq
        %v4257 = vshrl.u32 %v4256, 7
        %v4258 = vsub.s32 %v4255, %v4257
        %v4259 = vrot.slane %v4251, %v4258
        %v4261 = vunpack.c.l.s4 1966171168
        %v4262 = vunpack.c.0.s8 %v4261
        %v4263 = vlaneseq
        %v4264 = vshrl.u32 %v4263, 7
        %v4265 = vsub.s32 %v4262, %v4264
        %v4266 = vrot.slane %v4252, %v4265
        %v4267 = vcombine.low %v4259, %v4266
        %v4268 = vcombine.low %v1626, %v1634
        %v4269 = vcombine.low %v1642, %v1650
        %v4270 = vcombine.low %v1658, %v1666
        %v4271 = vcombine.low %v1674, %v1682
        %v4273 = vunpack.c.l.s4 1966171168
        %v4274 = vunpack.c.0.s8 %v4273
        %v4275 = vlaneseq
        %v4276 = vshrl.u32 %v4275, 7
        %v4277 = vsub.s32 %v4274, %v4276
        %v4278 = vrot.slane %v4268, %v4277
        %v4280 = vunpack.c.l.s4 1966171168
        %v4281 = vunpack.c.0.s8 %v4280
        %v4282 = vlaneseq
        %v4283 = vshrl.u32 %v4282, 7
        %v4284 = vsub.s32 %v4281, %v4283
        %v4285 = vrot.slane %v4269, %v4284
        %v4287 = vunpack.c.l.s4 1966171168
        %v4288 = vunpack.c.0.s8 %v4287
        %v4289 = vlaneseq
        %v4290 = vshrl.u32 %v4289, 7
        %v4291 = vsub.s32 %v4288, %v4290
        %v4292 = vrot.slane %v4270, %v4291
        %v4294 = vunpack.c.l.s4 1966171168
        %v4295 = vunpack.c.0.s8 %v4294
        %v4296 = vlaneseq
        %v4297 = vshrl.u32 %v4296, 7
        %v4298 = vsub.s32 %v4295, %v4297
        %v4299 = vrot.slane %v4271, %v4298
        %v4300 = vcombine.low %v4278, %v4285
        %v4301 = vcombine.low %v4292, %v4299
        %v4303 = vunpack.c.l.s4 1966171168
        %v4304 = vunpack.c.0.s8 %v4303
        %v4305 = vlaneseq
        %v4306 = vshrl.u32 %v4305, 7
        %v4307 = vsub.s32 %v4304, %v4306
        %v4308 = vrot.slane %v4300, %v4307
        %v4310 = vunpack.c.l.s4 1966171168
        %v4311 = vunpack.c.0.s8 %v4310
        %v4312 = vlaneseq
        %v4313 = vshrl.u32 %v4312, 7
        %v4314 = vsub.s32 %v4311, %v4313
        %v4315 = vrot.slane %v4301, %v4314
        %v4316 = vcombine.low %v4308, %v4315
        %v4317 = vcombine.low %v1691, %v1699
        %v4318 = vcombine.low %v1707, %v1715
        %v4319 = vcombine.low %v1723, %v1731
        %v4320 = vcombine.low %v1739, %v1747
        %v4322 = vunpack.c.l.s4 1966171168
        %v4323 = vunpack.c.0.s8 %v4322
        %v4324 = vlaneseq
        %v4325 = vshrl.u32 %v4324, 7
        %v4326 = vsub.s32 %v4323, %v4325
        %v4327 = vrot.slane %v4317, %v4326
        %v4329 = vunpack.c.l.s4 1966171168
        %v4330 = vunpack.c.0.s8 %v4329
        %v4331 = vlaneseq
        %v4332 = vshrl.u32 %v4331, 7
        %v4333 = vsub.s32 %v4330, %v4332
        %v4334 = vrot.slane %v4318, %v4333
        %v4336 = vunpack.c.l.s4 1966171168
        %v4337 = vunpack.c.0.s8 %v4336
        %v4338 = vlaneseq
        %v4339 = vshrl.u32 %v4338, 7
        %v4340 = vsub.s32 %v4337, %v4339
        %v4341 = vrot.slane %v4319, %v4340
        %v4343 = vunpack.c.l.s4 1966171168
        %v4344 = vunpack.c.0.s8 %v4343
        %v4345 = vlaneseq
        %v4346 = vshrl.u32 %v4345, 7
        %v4347 = vsub.s32 %v4344, %v4346
        %v4348 = vrot.slane %v4320, %v4347
        %v4349 = vcombine.low %v4327, %v4334
        %v4350 = vcombine.low %v4341, %v4348
        %v4352 = vunpack.c.l.s4 1966171168
        %v4353 = vunpack.c.0.s8 %v4352
        %v4354 = vlaneseq
        %v4355 = vshrl.u32 %v4354, 7
        %v4356 = vsub.s32 %v4353, %v4355
        %v4357 = vrot.slane %v4349, %v4356
        %v4359 = vunpack.c.l.s4 1966171168
        %v4360 = vunpack.c.0.s8 %v4359
        %v4361 = vlaneseq
        %v4362 = vshrl.u32 %v4361, 7
        %v4363 = vsub.s32 %v4360, %v4362
        %v4364 = vrot.slane %v4350, %v4363
        %v4365 = vcombine.low %v4357, %v4364
        %v4366 = vcombine.low %v1755, %v3583
        %v4367 = vcombine.low %v3591, %v3599
        %v4368 = vcombine.low %v3607, %v3615
        %v4369 = vcombine.low %v3623, %v3631
        %v4371 = vunpack.c.l.s4 1966171168
        %v4372 = vunpack.c.0.s8 %v4371
        %v4373 = vlaneseq
        %v4374 = vshrl.u32 %v4373, 7
        %v4375 = vsub.s32 %v4372, %v4374
        %v4376 = vrot.slane %v4366, %v4375
        %v4378 = vunpack.c.l.s4 1966171168
        %v4379 = vunpack.c.0.s8 %v4378
        %v4380 = vlaneseq
        %v4381 = vshrl.u32 %v4380, 7
        %v4382 = vsub.s32 %v4379, %v4381
        %v4383 = vrot.slane %v4367, %v4382
        %v4385 = vunpack.c.l.s4 1966171168
        %v4386 = vunpack.c.0.s8 %v4385
        %v4387 = vlaneseq
        %v4388 = vshrl.u32 %v4387, 7
        %v4389 = vsub.s32 %v4386, %v4388
        %v4390 = vrot.slane %v4368, %v4389
        %v4392 = vunpack.c.l.s4 1966171168
        %v4393 = vunpack.c.0.s8 %v4392
        %v4394 = vlaneseq
        %v4395 = vshrl.u32 %v4394, 7
        %v4396 = vsub.s32 %v4393, %v4395
        %v4397 = vrot.slane %v4369, %v4396
        %v4398 = vcombine.low %v4376, %v4383
        %v4399 = vcombine.low %v4390, %v4397
        %v4401 = vunpack.c.l.s4 1966171168
        %v4402 = vunpack.c.0.s8 %v4401
        %v4403 = vlaneseq
        %v4404 = vshrl.u32 %v4403, 7
        %v4405 = vsub.s32 %v4402, %v4404
        %v4406 = vrot.slane %v4398, %v4405
        %v4408 = vunpack.c.l.s4 1966171168
        %v4409 = vunpack.c.0.s8 %v4408
        %v4410 = vlaneseq
        %v4411 = vshrl.u32 %v4410, 7
        %v4412 = vsub.s32 %v4409, %v4411
        %v4413 = vrot.slane %v4399, %v4412
        %v4414 = vcombine.low %v4406, %v4413
        %v4415 = vcombine.low %v3639, %v3647
        %v4417 = vunpack.c.l.s4 1966171168
        %v4418 = vunpack.c.0.s8 %v4417
        %v4419 = vlaneseq
        %v4420 = vshrl.u32 %v4419, 7
        %v4421 = vsub.s32 %v4418, %v4420
        %v4422 = vrot.slane %v4415, %v4421
        %v4424 = vunpack.c.l.s4 1966171168
        %v4425 = vunpack.c.0.s8 %v4424
        %v4426 = vlaneseq
        %v4427 = vshrl.u32 %v4426, 7
        %v4428 = vsub.s32 %v4425, %v4427
        %v4429 = vrot.slane %v4422, %v4428
        %v4442 = vcombine.low %v1822, %v1829
        %v4443 = vcombine.low %v1836, %v1864
        %v4445 = vunpack.c.l.s4 1966171168
        %v4446 = vunpack.c.0.s8 %v4445
        %v4447 = vlaneseq
        %v4448 = vshrl.u32 %v4447, 7
        %v4449 = vsub.s32 %v4446, %v4448
        %v4450 = vrot.slane %v4442, %v4449
        %v4452 = vunpack.c.l.s4 1966171168
        %v4453 = vunpack.c.0.s8 %v4452
        %v4454 = vlaneseq
        %v4455 = vshrl.u32 %v4454, 7
        %v4456 = vsub.s32 %v4453, %v4455
        %v4457 = vrot.slane %v4443, %v4456
        %v4458 = vcombine.low %v4450, %v4457
        %v4459 = vcombine.low %v946, %v456
        %v4461 = vunpack.c.l.s4 1966171168
        %v4462 = vunpack.c.0.s8 %v4461
        %v4463 = vlaneseq
        %v4464 = vshrl.u32 %v4463, 7
        %v4465 = vsub.s32 %v4462, %v4464
        %v4466 = vrot.slane %v4459, %v4465
        %v4467 = vcombine.low %v4466, %v1878
        %v4468 = vcombine.low %v1885, %v1913
        %v4470 = vunpack.c.l.s4 1966171168
        %v4471 = vunpack.c.0.s8 %v4470
        %v4472 = vlaneseq
        %v4473 = vshrl.u32 %v4472, 7
        %v4474 = vsub.s32 %v4471, %v4473
        %v4475 = vrot.slane %v4467, %v4474
        %v4477 = vunpack.c.l.s4 1966171168
        %v4478 = vunpack.c.0.s8 %v4477
        %v4479 = vlaneseq
        %v4480 = vshrl.u32 %v4479, 7
        %v4481 = vsub.s32 %v4478, %v4480
        %v4482 = vrot.slane %v4468, %v4481
        %v4483 = vcombine.low %v4475, %v4482
        %v4484 = vcombine.low %v496, %v954
        %v4486 = vunpack.c.l.s4 1966171168
        %v4487 = vunpack.c.0.s8 %v4486
        %v4488 = vlaneseq
        %v4489 = vshrl.u32 %v4488, 7
        %v4490 = vsub.s32 %v4487, %v4489
        %v4491 = vrot.slane %v4484, %v4490
        %v4492 = vcombine.low %v4491, %v1927
        %v4493 = vcombine.low %v1934, %v1962
        %v4495 = vunpack.c.l.s4 1966171168
        %v4496 = vunpack.c.0.s8 %v4495
        %v4497 = vlaneseq
        %v4498 = vshrl.u32 %v4497, 7
        %v4499 = vsub.s32 %v4496, %v4498
        %v4500 = vrot.slane %v4492, %v4499
        %v4502 = vunpack.c.l.s4 1966171168
        %v4503 = vunpack.c.0.s8 %v4502
        %v4504 = vlaneseq
        %v4505 = vshrl.u32 %v4504, 7
        %v4506 = vsub.s32 %v4503, %v4505
        %v4507 = vrot.slane %v4493, %v4506
        %v4508 = vcombine.low %v4500, %v4507
        %v4509 = vcombine.low %v962, %v580
        %v4511 = vunpack.c.l.s4 1966171168
        %v4512 = vunpack.c.0.s8 %v4511
        %v4513 = vlaneseq
        %v4514 = vshrl.u32 %v4513, 7
        %v4515 = vsub.s32 %v4512, %v4514
        %v4516 = vrot.slane %v4509, %v4515
        %v4517 = vcombine.low %v1969, %v4516
        %v4518 = vcombine.low %v1983, %v2011
        %v4520 = vunpack.c.l.s4 1966171168
        %v4521 = vunpack.c.0.s8 %v4520
        %v4522 = vlaneseq
        %v4523 = vshrl.u32 %v4522, 7
        %v4524 = vsub.s32 %v4521, %v4523
        %v4525 = vrot.slane %v4517, %v4524
        %v4527 = vunpack.c.l.s4 1966171168
        %v4528 = vunpack.c.0.s8 %v4527
        %v4529 = vlaneseq
        %v4530 = vshrl.u32 %v4529, 7
        %v4531 = vsub.s32 %v4528, %v4530
        %v4532 = vrot.slane %v4518, %v4531
        %v4533 = vcombine.low %v4525, %v4532
        %v4534 = vcombine.low %v620, %v970
        %v4536 = vunpack.c.l.s4 1966171168
        %v4537 = vunpack.c.0.s8 %v4536
        %v4538 = vlaneseq
        %v4539 = vshrl.u32 %v4538, 7
        %v4540 = vsub.s32 %v4537, %v4539
        %v4541 = vrot.slane %v4534, %v4540
        %v4542 = vcombine.low %v2018, %v4541
        %v4543 = vcombine.low %v2032, %v2060
        %v4545 = vunpack.c.l.s4 1966171168
        %v4546 = vunpack.c.0.s8 %v4545
        %v4547 = vlaneseq
        %v4548 = vshrl.u32 %v4547, 7
        %v4549 = vsub.s32 %v4546, %v4548
        %v4550 = vrot.slane %v4542, %v4549
        %v4552 = vunpack.c.l.s4 1966171168
        %v4553 = vunpack.c.0.s8 %v4552
        %v4554 = vlaneseq
        %v4555 = vshrl.u32 %v4554, 7
        %v4556 = vsub.s32 %v4553, %v4555
        %v4557 = vrot.slane %v4543, %v4556
        %v4558 = vcombine.low %v4550, %v4557
        %v4559 = vcombine.low %v978, %v704
        %v4561 = vunpack.c.l.s4 1966171168
        %v4562 = vunpack.c.0.s8 %v4561
        %v4563 = vlaneseq
        %v4564 = vshrl.u32 %v4563, 7
        %v4565 = vsub.s32 %v4562, %v4564
        %v4566 = vrot.slane %v4559, %v4565
        %v4567 = vcombine.low %v2067, %v2074
        %v4568 = vcombine.low %v4566, %v2109
        %v4570 = vunpack.c.l.s4 1966171168
        %v4571 = vunpack.c.0.s8 %v4570
        %v4572 = vlaneseq
        %v4573 = vshrl.u32 %v4572, 7
        %v4574 = vsub.s32 %v4571, %v4573
        %v4575 = vrot.slane %v4567, %v4574
        %v4577 = vunpack.c.l.s4 1966171168
        %v4578 = vunpack.c.0.s8 %v4577
        %v4579 = vlaneseq
        %v4580 = vshrl.u32 %v4579, 7
        %v4581 = vsub.s32 %v4578, %v4580
        %v4582 = vrot.slane %v4568, %v4581
        %v4583 = vcombine.low %v4575, %v4582
        %v4584 = vcombine.low %v744, %v986
        %v4586 = vunpack.c.l.s4 1966171168
        %v4587 = vunpack.c.0.s8 %v4586
        %v4588 = vlaneseq
        %v4589 = vshrl.u32 %v4588, 7
        %v4590 = vsub.s32 %v4587, %v4589
        %v4591 = vrot.slane %v4584, %v4590
        %v4592 = vcombine.low %v2116, %v2123
        %v4593 = vcombine.low %v4591, %v2158
        %v4595 = vunpack.c.l.s4 1966171168
        %v4596 = vunpack.c.0.s8 %v4595
        %v4597 = vlaneseq
        %v4598 = vshrl.u32 %v4597, 7
        %v4599 = vsub.s32 %v4596, %v4598
        %v4600 = vrot.slane %v4592, %v4599
        %v4602 = vunpack.c.l.s4 1966171168
        %v4603 = vunpack.c.0.s8 %v4602
        %v4604 = vlaneseq
        %v4605 = vshrl.u32 %v4604, 7
        %v4606 = vsub.s32 %v4603, %v4605
        %v4607 = vrot.slane %v4593, %v4606
        %v4608 = vcombine.low %v4600, %v4607
        %v4609 = vcombine.low %v994, %v828
        %v4611 = vunpack.c.l.s4 1966171168
        %v4612 = vunpack.c.0.s8 %v4611
        %v4613 = vlaneseq
        %v4614 = vshrl.u32 %v4613, 7
        %v4615 = vsub.s32 %v4612, %v4614
        %v4616 = vrot.slane %v4609, %v4615
        %v4617 = vcombine.low %v2165, %v2172
        %v4618 = vcombine.low %v2179, %v4616
        %v4620 = vunpack.c.l.s4 1966171168
        %v4621 = vunpack.c.0.s8 %v4620
        %v4622 = vlaneseq
        %v4623 = vshrl.u32 %v4622, 7
        %v4624 = vsub.s32 %v4621, %v4623
        %v4625 = vrot.slane %v4617, %v4624
        %v4627 = vunpack.c.l.s4 1966171168
        %v4628 = vunpack.c.0.s8 %v4627
        %v4629 = vlaneseq
        %v4630 = vshrl.u32 %v4629, 7
        %v4631 = vsub.s32 %v4628, %v4630
        %v4632 = vrot.slane %v4618, %v4631
        %v4633 = vcombine.low %v4625, %v4632
        %v4634 = vcombine.low %v868, %v1002
        %v4636 = vunpack.c.l.s4 1966171168
        %v4637 = vunpack.c.0.s8 %v4636
        %v4638 = vlaneseq
        %v4639 = vshrl.u32 %v4638, 7
        %v4640 = vsub.s32 %v4637, %v4639
        %v4641 = vrot.slane %v4634, %v4640
        %v4642 = vcombine.low %v2214, %v2221
        %v4643 = vcombine.low %v2228, %v4641
        %v4645 = vunpack.c.l.s4 1966171168
        %v4646 = vunpack.c.0.s8 %v4645
        %v4647 = vlaneseq
        %v4648 = vshrl.u32 %v4647, 7
        %v4649 = vsub.s32 %v4646, %v4648
        %v4650 = vrot.slane %v4642, %v4649
        %v4652 = vunpack.c.l.s4 1966171168
        %v4653 = vunpack.c.0.s8 %v4652
        %v4654 = vlaneseq
        %v4655 = vshrl.u32 %v4654, 7
        %v4656 = vsub.s32 %v4653, %v4655
        %v4657 = vrot.slane %v4643, %v4656
        %v4658 = vcombine.low %v4650, %v4657
        %v4659 = vcombine.low %v2263, %v2270
        %v4660 = vcombine.low %v2277, %v2302
        %v4662 = vunpack.c.l.s4 1966171168
        %v4663 = vunpack.c.0.s8 %v4662
        %v4664 = vlaneseq
        %v4665 = vshrl.u32 %v4664, 7
        %v4666 = vsub.s32 %v4663, %v4665
        %v4667 = vrot.slane %v4659, %v4666
        %v4669 = vunpack.c.l.s4 1966171168
        %v4670 = vunpack.c.0.s8 %v4669
        %v4671 = vlaneseq
        %v4672 = vshrl.u32 %v4671, 7
        %v4673 = vsub.s32 %v4670, %v4672
        %v4674 = vrot.slane %v4660, %v4673
        %v4675 = vcombine.low %v4667, %v4674
        %v4676 = vcombine.low %v1010, %v3526
        %v4677 = vcombine.low %v3527, %v3528
        %v4678 = vcombine.low %v3543, %v3550
        %v4679 = vcombine.low %v3551, %v3552
        %v4681 = vunpack.c.l.s4 1966171168
        %v4682 = vunpack.c.0.s8 %v4681
        %v4683 = vlaneseq
        %v4684 = vshrl.u32 %v4683, 7
        %v4685 = vsub.s32 %v4682, %v4684
        %v4686 = vrot.slane %v4676, %v4685
        %v4688 = vunpack.c.l.s4 1966171168
        %v4689 = vunpack.c.0.s8 %v4688
        %v4690 = vlaneseq
        %v4691 = vshrl.u32 %v4690, 7
        %v4692 = vsub.s32 %v4689, %v4691
        %v4693 = vrot.slane %v4677, %v4692
        %v4695 = vunpack.c.l.s4 1966171168
        %v4696 = vunpack.c.0.s8 %v4695
        %v4697 = vlaneseq
        %v4698 = vshrl.u32 %v4697, 7
        %v4699 = vsub.s32 %v4696, %v4698
        %v4700 = vrot.slane %v4678, %v4699
        %v4702 = vunpack.c.l.s4 1966171168
        %v4703 = vunpack.c.0.s8 %v4702
        %v4704 = vlaneseq
        %v4705 = vshrl.u32 %v4704, 7
        %v4706 = vsub.s32 %v4703, %v4705
        %v4707 = vrot.slane %v4679, %v4706
        %v4708 = vcombine.low %v4686, %v4693
        %v4709 = vcombine.low %v4700, %v4707
        %v4711 = vunpack.c.l.s4 1966171168
        %v4712 = vunpack.c.0.s8 %v4711
        %v4713 = vlaneseq
        %v4714 = vshrl.u32 %v4713, 7
        %v4715 = vsub.s32 %v4712, %v4714
        %v4716 = vrot.slane %v4708, %v4715
        %v4718 = vunpack.c.l.s4 1966171168
        %v4719 = vunpack.c.0.s8 %v4718
        %v4720 = vlaneseq
        %v4721 = vshrl.u32 %v4720, 7
        %v4722 = vsub.s32 %v4719, %v4721
        %v4723 = vrot.slane %v4709, %v4722
        %v4724 = vcombine.low %v4716, %v4723
        %v4725 = vcombine.low %v3566, %v3574
        %v4727 = vunpack.c.l.s4 1966171168
        %v4728 = vunpack.c.0.s8 %v4727
        %v4729 = vlaneseq
        %v4730 = vshrl.u32 %v4729, 7
        %v4731 = vsub.s32 %v4728, %v4730
        %v4732 = vrot.slane %v4725, %v4731
        %v4734 = vunpack.c.l.s4 1966171168
        %v4735 = vunpack.c.0.s8 %v4734
        %v4736 = vlaneseq
        %v4737 = vshrl.u32 %v4736, 7
        %v4738 = vsub.s32 %v4735, %v4737
        %v4739 = vrot.slane %v4732, %v4738
        %v4752 = vld [vmem:[#allocation4 + $0xc0] sm:$0xf]
        %v4753 = vld [vmem:[#allocation4 + $0xc4] sm:$0xf]
        %v4754 = vld [vmem:[#allocation4 + $0xc8] sm:$0xf]
        %v4755 = vld [vmem:[#allocation4 + $0xcc] sm:$0xf]
        %v4756 = vld [vmem:[#allocation4 + $0xd0] sm:$0xf]
        %v4757 = vld [vmem:[#allocation4 + $0xd4] sm:$0xf]
        %v4758 = vld [vmem:[#allocation4 + $0xd8] sm:$0xf]
        %v4759 = vld [vmem:[#allocation4 + $0xdc] sm:$0xf]
        %v4760 = vld [vmem:[#allocation4 + $0xe0] sm:$0xf]
        %v4761 = vld [vmem:[#allocation4 + $0xe4] sm:$0xf]
        %v4762 = vld [vmem:[#allocation4 + $0xe8] sm:$0xf]
        %v4763 = vld [vmem:[#allocation4 + $0xec] sm:$0xf]
        %v4764 = vld [vmem:[#allocation4 + $0xf0] sm:$0xf]
        %v4765 = vld [vmem:[#allocation4 + $0xf4] sm:$0xf]
        %v4766 = vld [vmem:[#allocation4 + $0xf8] sm:$0xf]
        %v4767 = vld [vmem:[#allocation4 + $0xfc] sm:$0xf]
        %v4768 = vld [vmem:[#allocation4 + $0x100] sm:$0xf]
        %v4769 = vld [vmem:[#allocation4 + $0x104] sm:$0xf]
        %v4770 = vld [vmem:[#allocation4 + $0x108] sm:$0xf]
        %v4771 = vld [vmem:[#allocation4 + $0x10c] sm:$0xf]
        %v4772 = vld [vmem:[#allocation4 + $0x110] sm:$0xf]
        %v4773 = vld [vmem:[#allocation4 + $0x114] sm:$0xf]
        %v4774 = vld [vmem:[#allocation4 + $0x118] sm:$0xf]
        %v4775 = vld [vmem:[#allocation4 + $0x11c] sm:$0xf]
        %v4776 = vld [vmem:[#allocation4 + $0x120] sm:$0xf]
        %v4777 = vld [vmem:[#allocation4 + $0x124] sm:$0xf]
        %v4778 = vld [vmem:[#allocation4 + $0x128] sm:$0xf]
        %v4779 = vld [vmem:[#allocation4 + $0x12c] sm:$0xf]
        %v4780 = vld [vmem:[#allocation4 + $0x130] sm:$0xf]
        %v4781 = vld [vmem:[#allocation4 + $0x134] sm:$0xf]
        %v4782 = vld [vmem:[#allocation4 + $0x138] sm:$0xf]
        %v4783 = vld [vmem:[#allocation4 + $0x13c] sm:$0xf]
        %v4784 = vld [vmem:[#allocation4 + $0x140] sm:$0xf]
        %v4785 = vld [vmem:[#allocation4 + $0x144] sm:$0xf]
        %v4786 = vld [vmem:[#allocation4 + $0x148] sm:$0xf]
        %v4787 = vld [vmem:[#allocation4 + $0x14c] sm:$0xf]
        %v4788 = vld [vmem:[#allocation4 + $0x150] sm:$0xf]
        %v4789 = vld [vmem:[#allocation4 + $0x154] sm:$0xf]
        %v4790 = vld [vmem:[#allocation4 + $0x158] sm:$0xf]
        %v4791 = vld [vmem:[#allocation4 + $0x15c] sm:$0xf]
        %v4792 = vld [vmem:[#allocation4 + $0x160] sm:$0xf]
        %v4793 = vld [vmem:[#allocation4 + $0x164] sm:$0xf]
        %v4794 = vld [vmem:[#allocation4 + $0x168] sm:$0xf]
        %v4795 = vld [vmem:[#allocation4 + $0x16c] sm:$0xf]
        %v4796 = vld [vmem:[#allocation4 + $0x170] sm:$0xf]
        %v4797 = vld [vmem:[#allocation4 + $0x174] sm:$0xf]
        %v4798 = vld [vmem:[#allocation4 + $0x178] sm:$0xf]
        %v4799 = vld [vmem:[#allocation4 + $0x17c] sm:$0xf]
        %v4848 = vunpack.c.l.b16 %v4752
        %v4849 = vunpack.c.l.b16 %v4753
        %v4850 = vunpack.c.l.b16 %v4754
        %v4851 = vunpack.c.l.b16 %v4755
        %v4852 = vunpack.c.l.b16 %v4756
        %v4853 = vunpack.c.l.b16 %v4757
        %v4854 = vunpack.c.l.b16 %v4758
        %v4855 = vunpack.c.l.b16 %v4759
        %v4856 = vunpack.c.l.b16 %v4760
        %v4857 = vunpack.c.l.b16 %v4761
        %v4858 = vunpack.c.l.b16 %v4762
        %v4859 = vunpack.c.l.b16 %v4763
        %v4860 = vunpack.c.l.b16 %v4764
        %v4861 = vunpack.c.l.b16 %v4765
        %v4862 = vunpack.c.l.b16 %v4766
        %v4863 = vunpack.c.l.b16 %v4767
        %v4864 = vunpack.c.l.b16 %v4768
        %v4865 = vunpack.c.l.b16 %v4769
        %v4866 = vunpack.c.l.b16 %v4770
        %v4867 = vunpack.c.l.b16 %v4771
        %v4868 = vunpack.c.l.b16 %v4772
        %v4869 = vunpack.c.l.b16 %v4773
        %v4870 = vunpack.c.l.b16 %v4774
        %v4871 = vunpack.c.l.b16 %v4775
        %v4872 = vunpack.c.l.b16 %v4776
        %v4873 = vunpack.c.l.b16 %v4777
        %v4874 = vunpack.c.l.b16 %v4778
        %v4875 = vunpack.c.l.b16 %v4779
        %v4876 = vunpack.c.l.b16 %v4780
        %v4877 = vunpack.c.l.b16 %v4781
        %v4878 = vunpack.c.l.b16 %v4782
        %v4879 = vunpack.c.l.b16 %v4783
        %v4880 = vunpack.c.l.b16 %v4784
        %v4881 = vunpack.c.l.b16 %v4785
        %v4882 = vunpack.c.l.b16 %v4786
        %v4883 = vunpack.c.l.b16 %v4787
        %v4884 = vunpack.c.l.b16 %v4788
        %v4885 = vunpack.c.l.b16 %v4789
        %v4886 = vunpack.c.l.b16 %v4790
        %v4887 = vunpack.c.l.b16 %v4791
        %v4888 = vunpack.c.l.b16 %v4792
        %v4889 = vunpack.c.l.b16 %v4793
        %v4890 = vunpack.c.l.b16 %v4794
        %v4891 = vunpack.c.l.b16 %v4795
        %v4892 = vunpack.c.l.b16 %v4796
        %v4893 = vunpack.c.l.b16 %v4797
        %v4894 = vunpack.c.l.b16 %v4798
        %v4895 = vunpack.c.l.b16 %v4799
        %v4896 = vpack.c.b16 %v4849, %v4848
        %v4897 = vpack.c.b16 %v4851, %v4850
        %v4898 = vpack.c.b16 %v4853, %v4852
        %v4899 = vpack.c.b16 %v4855, %v4854
        %v4900 = vpack.c.b16 %v4857, %v4856
        %v4901 = vpack.c.b16 %v4859, %v4858
        %v4902 = vpack.c.b16 %v4861, %v4860
        %v4903 = vpack.c.b16 %v4863, %v4862
        %v4904 = vpack.c.b16 %v4865, %v4864
        %v4905 = vpack.c.b16 %v4867, %v4866
        %v4906 = vpack.c.b16 %v4869, %v4868
        %v4907 = vpack.c.b16 %v4871, %v4870
        %v4908 = vpack.c.b16 %v4873, %v4872
        %v4909 = vpack.c.b16 %v4875, %v4874
        %v4910 = vpack.c.b16 %v4877, %v4876
        %v4911 = vpack.c.b16 %v4879, %v4878
        %v4912 = vpack.c.b16 %v4881, %v4880
        %v4913 = vpack.c.b16 %v4883, %v4882
        %v4914 = vpack.c.b16 %v4885, %v4884
        %v4915 = vpack.c.b16 %v4887, %v4886
        %v4916 = vpack.c.b16 %v4889, %v4888
        %v4917 = vpack.c.b16 %v4891, %v4890
        %v4918 = vpack.c.b16 %v4893, %v4892
        %v4919 = vpack.c.b16 %v4895, %v4894
        %4944 = vmatprep.subr.bf16.mxu0 0
        %4945 = vmatpush1.bf16.msra.mxu0 %v4903
        %4946 = vmatprep.subr.bf16.mxu0 0
        %4947 = vmatpush1.bf16.msra.mxu0 %v4902
        %4948 = vmatprep.subr.bf16.mxu0 0
        %4949 = vmatpush1.bf16.msra.mxu0 %v4901
        %4950 = vmatprep.subr.bf16.mxu0 0
        %4951 = vmatpush1.bf16.msra.mxu0 %v4900
        %4952 = vmatprep.subr.bf16.mxu0 0
        %4953 = vmatpush1.bf16.msra.mxu0 %v4899
        %4954 = vmatprep.subr.bf16.mxu0 0
        %4955 = vmatpush1.bf16.msra.mxu0 %v4898
        %4956 = vmatprep.subr.bf16.mxu0 0
        %4957 = vmatpush1.bf16.msra.mxu0 %v4897
        %4958 = vmatprep.subr.bf16.mxu0 0
        %4959 = vmatpush1.bf16.msra.mxu0 %v4896
        %4960 = vmatprep.subr.bf16.mxu0 0
        %4961 = vmatpush2.bf16.msra.mxu0 %v4911
        %4962 = vmatprep.subr.bf16.mxu0 0
        %4963 = vmatpush2.bf16.msra.mxu0 %v4910
        %4964 = vmatprep.subr.bf16.mxu0 0
        %4965 = vmatpush2.bf16.msra.mxu0 %v4909
        %4966 = vmatprep.subr.bf16.mxu0 0
        %4967 = vmatpush2.bf16.msra.mxu0 %v4908
        %4968 = vmatprep.subr.bf16.mxu0 0
        %4969 = vmatpush2.bf16.msra.mxu0 %v4907
        %4970 = vmatprep.subr.bf16.mxu0 0
        %4971 = vmatpush2.bf16.msra.mxu0 %v4906
        %4972 = vmatprep.subr.bf16.mxu0 0
        %4973 = vmatpush2.bf16.msra.mxu0 %v4905
        %4974 = vmatprep.subr.bf16.mxu0 0
        %4975 = vmatpush2.bf16.msra.mxu0 %v4904
        %4976 = vmatprep.mubr.bf16.mxu0 %v3924
        %4977 = vmatmul.mubr.bf16.gmra.mxu0 %v3664
        %v4978 = vpop.f32.mrf.mxu0
        %v4979 = vadd.f32 0.0, %v4978
        %v4980 = vpop.f32.mrf.mxu0
        %v4981 = vpop.f32.mrf.mxu0
        %v4982 = vadd.f32 0.0, %v4981
        %v4983 = vpop.f32.mrf.mxu0
        %4984 = vmatprep.mubr.bf16.mxu0 %v3973
        %4985 = vmatmul.mubr.bf16.gmra.mxu0 %v3681
        %v4986 = vpop.f32.mrf.mxu0
        %v4987 = vadd.f32 0.0, %v4986
        %v4988 = vpop.f32.mrf.mxu0
        %v4989 = vpop.f32.mrf.mxu0
        %v4990 = vadd.f32 0.0, %v4989
        %v4991 = vpop.f32.mrf.mxu0
        %4992 = vmatprep.mubr.bf16.mxu0 %v4022
        %4993 = vmatmul.mubr.bf16.gmra.mxu0 %v3698
        %v4994 = vpop.f32.mrf.mxu0
        %v4995 = vadd.f32 0.0, %v4994
        %v4996 = vpop.f32.mrf.mxu0
        %v4997 = vpop.f32.mrf.mxu0
        %v4998 = vadd.f32 0.0, %v4997
        %v4999 = vpop.f32.mrf.mxu0
        %5000 = vmatprep.mubr.bf16.mxu0 %v4071
        %5001 = vmatmul.mubr.bf16.gmra.mxu0 %v3715
        %v5002 = vpop.f32.mrf.mxu0
        %v5003 = vadd.f32 0.0, %v5002
        %v5004 = vpop.f32.mrf.mxu0
        %v5005 = vpop.f32.mrf.mxu0
        %v5006 = vadd.f32 0.0, %v5005
        %v5007 = vpop.f32.mrf.mxu0
        %5008 = vmatprep.mubr.bf16.mxu0 %v4120
        %5009 = vmatmul.mubr.bf16.gmra.mxu0 %v3732
        %v5010 = vpop.f32.mrf.mxu0
        %v5011 = vadd.f32 0.0, %v5010
        %v5012 = vpop.f32.mrf.mxu0
        %v5013 = vpop.f32.mrf.mxu0
        %v5014 = vadd.f32 0.0, %v5013
        %v5015 = vpop.f32.mrf.mxu0
        %5016 = vmatprep.mubr.bf16.mxu0 %v4169
        %5017 = vmatmul.mubr.bf16.gmra.mxu0 %v3749
        %v5018 = vpop.f32.mrf.mxu0
        %v5019 = vadd.f32 0.0, %v5018
        %v5020 = vpop.f32.mrf.mxu0
        %v5021 = vpop.f32.mrf.mxu0
        %v5022 = vadd.f32 0.0, %v5021
        %v5023 = vpop.f32.mrf.mxu0
        %5024 = vmatprep.mubr.bf16.mxu0 %v4218
        %5025 = vmatmul.mubr.bf16.gmra.mxu0 %v3766
        %v5026 = vpop.f32.mrf.mxu0
        %v5027 = vadd.f32 0.0, %v5026
        %v5028 = vpop.f32.mrf.mxu0
        %v5029 = vpop.f32.mrf.mxu0
        %v5030 = vadd.f32 0.0, %v5029
        %v5031 = vpop.f32.mrf.mxu0
        %5032 = vmatprep.mubr.bf16.mxu0 %v4267
        %5033 = vmatmul.mubr.bf16.gmra.mxu0 %v3783
        %v5034 = vpop.f32.mrf.mxu0
        %v5035 = vadd.f32 0.0, %v5034
        %v5036 = vpop.f32.mrf.mxu0
        %v5037 = vpop.f32.mrf.mxu0
        %v5038 = vadd.f32 0.0, %v5037
        %v5039 = vpop.f32.mrf.mxu0
        %5040 = vmatprep.mubr.bf16.mxu0 %v4316
        %5041 = vmatmul.mubr.bf16.gmra.mxu0 %v3377
        %v5042 = vpop.f32.mrf.mxu0
        %v5043 = vadd.f32 0.0, %v5042
        %v5044 = vpop.f32.mrf.mxu0
        %v5045 = vpop.f32.mrf.mxu0
        %v5046 = vadd.f32 0.0, %v5045
        %v5047 = vpop.f32.mrf.mxu0
        %5048 = vmatprep.mubr.bf16.mxu0 %v4365
        %5049 = vmatmul.mubr.bf16.gmra.mxu0 %v3800
        %v5050 = vpop.f32.mrf.mxu0
        %v5051 = vadd.f32 0.0, %v5050
        %v5052 = vpop.f32.mrf.mxu0
        %v5053 = vpop.f32.mrf.mxu0
        %v5054 = vadd.f32 0.0, %v5053
        %v5055 = vpop.f32.mrf.mxu0
        %5056 = vmatprep.mubr.bf16.mxu0 %v4414
        %5057 = vmatmul.mubr.bf16.gmra.mxu0 %v3849
        %v5058 = vpop.f32.mrf.mxu0
        %v5059 = vadd.f32 0.0, %v5058
        %v5060 = vpop.f32.mrf.mxu0
        %v5061 = vpop.f32.mrf.mxu0
        %v5062 = vadd.f32 0.0, %v5061
        %v5063 = vpop.f32.mrf.mxu0
        %5064 = vmatprep.mubr.bf16.mxu0 %v4429
        %5065 = vmatmul.mubr.bf16.gmra.mxu0 %v3864
        %v5066 = vpop.f32.mrf.mxu0
        %v5067 = vadd.f32 0.0, %v5066
        %v5068 = vpop.f32.mrf.mxu0
        %v5069 = vpop.f32.mrf.mxu0
        %v5070 = vpop.f32.mrf.mxu0
        %5071 = vdwg.mxu0
        %5072 = vmatprep.subr.bf16.mxu0 0
        %5073 = vmatpush1.bf16.msra.mxu0 %v4919
        %5074 = vmatprep.subr.bf16.mxu0 0
        %5075 = vmatpush1.bf16.msra.mxu0 %v4918
        %5076 = vmatprep.subr.bf16.mxu0 0
        %5077 = vmatpush1.bf16.msra.mxu0 %v4917
        %5078 = vmatprep.subr.bf16.mxu0 0
        %5079 = vmatpush1.bf16.msra.mxu0 %v4916
        %5080 = vmatprep.subr.bf16.mxu0 0
        %5081 = vmatpush1.bf16.msra.mxu0 %v4915
        %5082 = vmatprep.subr.bf16.mxu0 0
        %5083 = vmatpush1.bf16.msra.mxu0 %v4914
        %5084 = vmatprep.subr.bf16.mxu0 0
        %5085 = vmatpush1.bf16.msra.mxu0 %v4913
        %5086 = vmatprep.subr.bf16.mxu0 0
        %5087 = vmatpush1.bf16.msra.mxu0 %v4912
        %5088 = vmatprep.subr.bf16.mxu0 0
        %5089 = vmatpush2.bf16.msra.mxu0 0
        %5090 = vmatprep.subr.bf16.mxu0 0
        %5091 = vmatpush2.bf16.msra.mxu0 0
        %5092 = vmatprep.subr.bf16.mxu0 0
        %5093 = vmatpush2.bf16.msra.mxu0 0
        %5094 = vmatprep.subr.bf16.mxu0 0
        %5095 = vmatpush2.bf16.msra.mxu0 0
        %5096 = vmatprep.subr.bf16.mxu0 0
        %5097 = vmatpush2.bf16.msra.mxu0 0
        %5098 = vmatprep.subr.bf16.mxu0 0
        %5099 = vmatpush2.bf16.msra.mxu0 0
        %5100 = vmatprep.subr.bf16.mxu0 0
        %5101 = vmatpush2.bf16.msra.mxu0 0
        %5102 = vmatprep.subr.bf16.mxu0 0
        %5103 = vmatpush2.bf16.msra.mxu0 0
        %5104 = vmatprep.mubr.bf16.mxu0 0
        %5105 = vmatmul.mubr.bf16.gmra.mxu0 %v4458
        %v5106 = vpop.f32.mrf.mxu0
        %v5107 = vadd.f32 %v4979, %v5106
        %v5108 = vpop.f32.mrf.mxu0
        %v5109 = vpop.f32.mrf.mxu0
        %v5110 = vadd.f32 %v4982, %v5109
        %v5111 = vpop.f32.mrf.mxu0
        %5112 = vmatprep.mubr.bf16.mxu0 0
        %5113 = vmatmul.mubr.bf16.gmra.mxu0 %v4483
        %v5114 = vpop.f32.mrf.mxu0
        %v5115 = vadd.f32 %v4987, %v5114
        %v5116 = vpop.f32.mrf.mxu0
        %v5117 = vpop.f32.mrf.mxu0
        %v5118 = vadd.f32 %v4990, %v5117
        %v5119 = vpop.f32.mrf.mxu0
        %5120 = vmatprep.mubr.bf16.mxu0 0
        %5121 = vmatmul.mubr.bf16.gmra.mxu0 %v4508
        %v5122 = vpop.f32.mrf.mxu0
        %v5123 = vadd.f32 %v4995, %v5122
        %v5124 = vpop.f32.mrf.mxu0
        %v5125 = vpop.f32.mrf.mxu0
        %v5126 = vadd.f32 %v4998, %v5125
        %v5127 = vpop.f32.mrf.mxu0
        %5128 = vmatprep.mubr.bf16.mxu0 0
        %5129 = vmatmul.mubr.bf16.gmra.mxu0 %v4533
        %v5130 = vpop.f32.mrf.mxu0
        %v5131 = vadd.f32 %v5003, %v5130
        %v5132 = vpop.f32.mrf.mxu0
        %v5133 = vpop.f32.mrf.mxu0
        %v5134 = vadd.f32 %v5006, %v5133
        %v5135 = vpop.f32.mrf.mxu0
        %5136 = vmatprep.mubr.bf16.mxu0 0
        %5137 = vmatmul.mubr.bf16.gmra.mxu0 %v4558
        %v5138 = vpop.f32.mrf.mxu0
        %v5139 = vadd.f32 %v5011, %v5138
        %v5140 = vpop.f32.mrf.mxu0
        %v5141 = vpop.f32.mrf.mxu0
        %v5142 = vadd.f32 %v5014, %v5141
        %v5143 = vpop.f32.mrf.mxu0
        %5144 = vmatprep.mubr.bf16.mxu0 0
        %5145 = vmatmul.mubr.bf16.gmra.mxu0 %v4583
        %v5146 = vpop.f32.mrf.mxu0
        %v5147 = vadd.f32 %v5019, %v5146
        %v5148 = vpop.f32.mrf.mxu0
        %v5149 = vpop.f32.mrf.mxu0
        %v5150 = vadd.f32 %v5022, %v5149
        %v5151 = vpop.f32.mrf.mxu0
        %5152 = vmatprep.mubr.bf16.mxu0 0
        %5153 = vmatmul.mubr.bf16.gmra.mxu0 %v4608
        %v5154 = vpop.f32.mrf.mxu0
        %v5155 = vadd.f32 %v5027, %v5154
        %v5156 = vpop.f32.mrf.mxu0
        %v5157 = vpop.f32.mrf.mxu0
        %v5158 = vadd.f32 %v5030, %v5157
        %v5159 = vpop.f32.mrf.mxu0
        %5160 = vmatprep.mubr.bf16.mxu0 0
        %5161 = vmatmul.mubr.bf16.gmra.mxu0 %v4633
        %v5162 = vpop.f32.mrf.mxu0
        %v5163 = vadd.f32 %v5035, %v5162
        %v5164 = vpop.f32.mrf.mxu0
        %v5165 = vpop.f32.mrf.mxu0
        %v5166 = vadd.f32 %v5038, %v5165
        %v5167 = vpop.f32.mrf.mxu0
        %5168 = vmatprep.mubr.bf16.mxu0 0
        %5169 = vmatmul.mubr.bf16.gmra.mxu0 %v4658
        %v5170 = vpop.f32.mrf.mxu0
        %v5171 = vadd.f32 %v5043, %v5170
        %v5172 = vpop.f32.mrf.mxu0
        %v5173 = vpop.f32.mrf.mxu0
        %v5174 = vadd.f32 %v5046, %v5173
        %v5175 = vpop.f32.mrf.mxu0
        %5176 = vmatprep.mubr.bf16.mxu0 0
        %5177 = vmatmul.mubr.bf16.gmra.mxu0 %v4675
        %v5178 = vpop.f32.mrf.mxu0
        %v5179 = vadd.f32 %v5051, %v5178
        %v5180 = vpop.f32.mrf.mxu0
        %v5181 = vpop.f32.mrf.mxu0
        %v5182 = vadd.f32 %v5054, %v5181
        %v5183 = vpop.f32.mrf.mxu0
        %5184 = vmatprep.mubr.bf16.mxu0 0
        %5185 = vmatmul.mubr.bf16.gmra.mxu0 %v4724
        %v5186 = vpop.f32.mrf.mxu0
        %v5187 = vadd.f32 %v5059, %v5186
        %v5188 = vpop.f32.mrf.mxu0
        %v5189 = vpop.f32.mrf.mxu0
        %v5190 = vadd.f32 %v5062, %v5189
        %v5191 = vpop.f32.mrf.mxu0
        %5192 = vmatprep.mubr.bf16.mxu0 0
        %5193 = vmatmul.mubr.bf16.gmra.mxu0 %v4739
        %v5194 = vpop.f32.mrf.mxu0
        %v5195 = vadd.f32 %v5067, %v5194
        %v5196 = vpop.f32.mrf.mxu0
        %v5197 = vpop.f32.mrf.mxu0
        %v5198 = vpop.f32.mrf.mxu0
        %5199 = vdwg.mxu0
        %v5248 = vunpack.c.l.b16 %v3454
        %v5249 = vunpack.c.l.b16 %v3455
        %v5250 = vunpack.c.l.b16 %v3456
        %v5251 = vunpack.c.l.b16 %v3457
        %v5252 = vunpack.c.l.b16 %v3458
        %v5253 = vunpack.c.l.b16 %v3459
        %v5254 = vunpack.c.l.b16 %v3460
        %v5255 = vunpack.c.l.b16 %v3461
        %v5256 = vunpack.c.l.b16 %v3462
        %v5257 = vunpack.c.l.b16 %v3463
        %v5258 = vunpack.c.l.b16 %v3464
        %v5259 = vunpack.c.l.b16 %v3465
        %v5260 = vunpack.c.l.b16 %v3466
        %v5261 = vunpack.c.l.b16 %v3467
        %v5262 = vunpack.c.l.b16 %v3468
        %v5263 = vunpack.c.l.b16 %v3469
        %v5264 = vunpack.c.l.b16 %v3470
        %v5265 = vunpack.c.l.b16 %v3471
        %v5266 = vunpack.c.l.b16 %v3472
        %v5267 = vunpack.c.l.b16 %v3473
        %v5268 = vunpack.c.l.b16 %v3474
        %v5269 = vunpack.c.l.b16 %v3475
        %v5270 = vunpack.c.l.b16 %v3476
        %v5271 = vunpack.c.l.b16 %v3477
        %v5272 = vunpack.c.l.b16 %v3478
        %v5273 = vunpack.c.l.b16 %v3479
        %v5274 = vunpack.c.l.b16 %v3480
        %v5275 = vunpack.c.l.b16 %v3481
        %v5276 = vunpack.c.l.b16 %v3482
        %v5277 = vunpack.c.l.b16 %v3483
        %v5278 = vunpack.c.l.b16 %v3484
        %v5279 = vunpack.c.l.b16 %v3485
        %v5280 = vunpack.c.l.b16 %v3486
        %v5281 = vunpack.c.l.b16 %v3487
        %v5282 = vunpack.c.l.b16 %v3488
        %v5283 = vunpack.c.l.b16 %v3489
        %v5284 = vunpack.c.l.b16 %v3490
        %v5285 = vunpack.c.l.b16 %v3491
        %v5286 = vunpack.c.l.b16 %v3492
        %v5287 = vunpack.c.l.b16 %v3493
        %v5288 = vunpack.c.l.b16 %v3494
        %v5289 = vunpack.c.l.b16 %v3495
        %v5290 = vunpack.c.l.b16 %v3496
        %v5291 = vunpack.c.l.b16 %v3497
        %v5292 = vunpack.c.l.b16 %v3498
        %v5293 = vunpack.c.l.b16 %v3499
        %v5294 = vunpack.c.l.b16 %v3500
        %v5295 = vunpack.c.l.b16 %v3501
        %v5296 = vpack.c.b16 %v5249, %v5248
        %v5297 = vpack.c.b16 %v5251, %v5250
        %v5298 = vpack.c.b16 %v5253, %v5252
        %v5299 = vpack.c.b16 %v5255, %v5254
        %v5300 = vpack.c.b16 %v5257, %v5256
        %v5301 = vpack.c.b16 %v5259, %v5258
        %v5302 = vpack.c.b16 %v5261, %v5260
        %v5303 = vpack.c.b16 %v5263, %v5262
        %v5304 = vpack.c.b16 %v5265, %v5264
        %v5305 = vpack.c.b16 %v5267, %v5266
        %v5306 = vpack.c.b16 %v5269, %v5268
        %v5307 = vpack.c.b16 %v5271, %v5270
        %v5308 = vpack.c.b16 %v5273, %v5272
        %v5309 = vpack.c.b16 %v5275, %v5274
        %v5310 = vpack.c.b16 %v5277, %v5276
        %v5311 = vpack.c.b16 %v5279, %v5278
        %v5312 = vpack.c.b16 %v5281, %v5280
        %v5313 = vpack.c.b16 %v5283, %v5282
        %v5314 = vpack.c.b16 %v5285, %v5284
        %v5315 = vpack.c.b16 %v5287, %v5286
        %v5316 = vpack.c.b16 %v5289, %v5288
        %v5317 = vpack.c.b16 %v5291, %v5290
        %v5318 = vpack.c.b16 %v5293, %v5292
        %v5319 = vpack.c.b16 %v5295, %v5294
        %5344 = vmatprep.subr.bf16.mxu0 0
        %5345 = vmatpush1.bf16.msra.mxu0 %v5303
        %5346 = vmatprep.subr.bf16.mxu0 0
        %5347 = vmatpush1.bf16.msra.mxu0 %v5302
        %5348 = vmatprep.subr.bf16.mxu0 0
        %5349 = vmatpush1.bf16.msra.mxu0 %v5301
        %5350 = vmatprep.subr.bf16.mxu0 0
        %5351 = vmatpush1.bf16.msra.mxu0 %v5300
        %5352 = vmatprep.subr.bf16.mxu0 0
        %5353 = vmatpush1.bf16.msra.mxu0 %v5299
        %5354 = vmatprep.subr.bf16.mxu0 0
        %5355 = vmatpush1.bf16.msra.mxu0 %v5298
        %5356 = vmatprep.subr.bf16.mxu0 0
        %5357 = vmatpush1.bf16.msra.mxu0 %v5297
        %5358 = vmatprep.subr.bf16.mxu0 0
        %5359 = vmatpush1.bf16.msra.mxu0 %v5296
        %5360 = vmatprep.subr.bf16.mxu0 0
        %5361 = vmatpush2.bf16.msra.mxu0 %v5311
        %5362 = vmatprep.subr.bf16.mxu0 0
        %5363 = vmatpush2.bf16.msra.mxu0 %v5310
        %5364 = vmatprep.subr.bf16.mxu0 0
        %5365 = vmatpush2.bf16.msra.mxu0 %v5309
        %5366 = vmatprep.subr.bf16.mxu0 0
        %5367 = vmatpush2.bf16.msra.mxu0 %v5308
        %5368 = vmatprep.subr.bf16.mxu0 0
        %5369 = vmatpush2.bf16.msra.mxu0 %v5307
        %5370 = vmatprep.subr.bf16.mxu0 0
        %5371 = vmatpush2.bf16.msra.mxu0 %v5306
        %5372 = vmatprep.subr.bf16.mxu0 0
        %5373 = vmatpush2.bf16.msra.mxu0 %v5305
        %5374 = vmatprep.subr.bf16.mxu0 0
        %5375 = vmatpush2.bf16.msra.mxu0 %v5304
        %5376 = vmatprep.mubr.bf16.mxu0 %v2370
        %5377 = vmatmul.mubr.bf16.gmra.mxu0 %v1804
        %v5378 = vpop.f32.mrf.mxu0
        %v5379 = vadd.f32 %v5107, %v5378
        %v5380 = vpop.f32.mrf.mxu0
        %v5381 = vpop.f32.mrf.mxu0
        %v5382 = vadd.f32 %v5110, %v5381
        %v5383 = vpop.f32.mrf.mxu0
        %5384 = vmatprep.mubr.bf16.mxu0 %v2419
        %5385 = vmatmul.mubr.bf16.gmra.mxu0 %v1853
        %v5386 = vpop.f32.mrf.mxu0
        %v5387 = vadd.f32 %v5115, %v5386
        %v5388 = vpop.f32.mrf.mxu0
        %v5389 = vpop.f32.mrf.mxu0
        %v5390 = vadd.f32 %v5118, %v5389
        %v5391 = vpop.f32.mrf.mxu0
        %5392 = vmatprep.mubr.bf16.mxu0 %v2468
        %5393 = vmatmul.mubr.bf16.gmra.mxu0 %v1902
        %v5394 = vpop.f32.mrf.mxu0
        %v5395 = vadd.f32 %v5123, %v5394
        %v5396 = vpop.f32.mrf.mxu0
        %v5397 = vpop.f32.mrf.mxu0
        %v5398 = vadd.f32 %v5126, %v5397
        %v5399 = vpop.f32.mrf.mxu0
        %5400 = vmatprep.mubr.bf16.mxu0 %v2517
        %5401 = vmatmul.mubr.bf16.gmra.mxu0 %v1951
        %v5402 = vpop.f32.mrf.mxu0
        %v5403 = vadd.f32 %v5131, %v5402
        %v5404 = vpop.f32.mrf.mxu0
        %v5405 = vpop.f32.mrf.mxu0
        %v5406 = vadd.f32 %v5134, %v5405
        %v5407 = vpop.f32.mrf.mxu0
        %5408 = vmatprep.mubr.bf16.mxu0 %v2566
        %5409 = vmatmul.mubr.bf16.gmra.mxu0 %v2000
        %v5410 = vpop.f32.mrf.mxu0
        %v5411 = vadd.f32 %v5139, %v5410
        %v5412 = vpop.f32.mrf.mxu0
        %v5413 = vpop.f32.mrf.mxu0
        %v5414 = vadd.f32 %v5142, %v5413
        %v5415 = vpop.f32.mrf.mxu0
        %5416 = vmatprep.mubr.bf16.mxu0 %v2615
        %5417 = vmatmul.mubr.bf16.gmra.mxu0 %v2049
        %v5418 = vpop.f32.mrf.mxu0
        %v5419 = vadd.f32 %v5147, %v5418
        %v5420 = vpop.f32.mrf.mxu0
        %v5421 = vpop.f32.mrf.mxu0
        %v5422 = vadd.f32 %v5150, %v5421
        %v5423 = vpop.f32.mrf.mxu0
        %5424 = vmatprep.mubr.bf16.mxu0 %v2664
        %5425 = vmatmul.mubr.bf16.gmra.mxu0 %v2098
        %v5426 = vpop.f32.mrf.mxu0
        %v5427 = vadd.f32 %v5155, %v5426
        %v5428 = vpop.f32.mrf.mxu0
        %v5429 = vpop.f32.mrf.mxu0
        %v5430 = vadd.f32 %v5158, %v5429
        %v5431 = vpop.f32.mrf.mxu0
        %5432 = vmatprep.mubr.bf16.mxu0 %v2713
        %5433 = vmatmul.mubr.bf16.gmra.mxu0 %v2147
        %v5434 = vpop.f32.mrf.mxu0
        %v5435 = vadd.f32 %v5163, %v5434
        %v5436 = vpop.f32.mrf.mxu0
        %v5437 = vpop.f32.mrf.mxu0
        %v5438 = vadd.f32 %v5166, %v5437
        %v5439 = vpop.f32.mrf.mxu0
        %5440 = vmatprep.mubr.bf16.mxu0 %v2762
        %5441 = vmatmul.mubr.bf16.gmra.mxu0 %v2196
        %v5442 = vpop.f32.mrf.mxu0
        %v5443 = vadd.f32 %v5171, %v5442
        %v5444 = vpop.f32.mrf.mxu0
        %v5445 = vpop.f32.mrf.mxu0
        %v5446 = vadd.f32 %v5174, %v5445
        %v5447 = vpop.f32.mrf.mxu0
        %5448 = vmatprep.mubr.bf16.mxu0 %v2811
        %5449 = vmatmul.mubr.bf16.gmra.mxu0 %v2245
        %v5450 = vpop.f32.mrf.mxu0
        %v5451 = vadd.f32 %v5179, %v5450
        %v5452 = vpop.f32.mrf.mxu0
        %v5453 = vpop.f32.mrf.mxu0
        %v5454 = vadd.f32 %v5182, %v5453
        %v5455 = vpop.f32.mrf.mxu0
        %5456 = vmatprep.mubr.bf16.mxu0 %v2860
        %5457 = vmatmul.mubr.bf16.gmra.mxu0 %v2294
        %v5458 = vpop.f32.mrf.mxu0
        %v5459 = vadd.f32 %v5187, %v5458
        %v5460 = vpop.f32.mrf.mxu0
        %v5461 = vpop.f32.mrf.mxu0
        %v5462 = vadd.f32 %v5190, %v5461
        %v5463 = vpop.f32.mrf.mxu0
        %5464 = vmatprep.mubr.bf16.mxu0 %v2875
        %5465 = vmatmul.mubr.bf16.gmra.mxu0 %v2309
        %v5466 = vpop.f32.mrf.mxu0
        %v5467 = vadd.f32 %v5195, %v5466
        %v5468 = vpop.f32.mrf.mxu0
        %v5469 = vpop.f32.mrf.mxu0
        %v5470 = vpop.f32.mrf.mxu0
        %5471 = vdwg.mxu0
        %5472 = vmatprep.subr.bf16.mxu0 0
        %5473 = vmatpush1.bf16.msra.mxu0 %v5319
        %5474 = vmatprep.subr.bf16.mxu0 0
        %5475 = vmatpush1.bf16.msra.mxu0 %v5318
        %5476 = vmatprep.subr.bf16.mxu0 0
        %5477 = vmatpush1.bf16.msra.mxu0 %v5317
        %5478 = vmatprep.subr.bf16.mxu0 0
        %5479 = vmatpush1.bf16.msra.mxu0 %v5316
        %5480 = vmatprep.subr.bf16.mxu0 0
        %5481 = vmatpush1.bf16.msra.mxu0 %v5315
        %5482 = vmatprep.subr.bf16.mxu0 0
        %5483 = vmatpush1.bf16.msra.mxu0 %v5314
        %5484 = vmatprep.subr.bf16.mxu0 0
        %5485 = vmatpush1.bf16.msra.mxu0 %v5313
        %5486 = vmatprep.subr.bf16.mxu0 0
        %5487 = vmatpush1.bf16.msra.mxu0 %v5312
        %5488 = vmatprep.subr.bf16.mxu0 0
        %5489 = vmatpush2.bf16.msra.mxu0 0
        %5490 = vmatprep.subr.bf16.mxu0 0
        %5491 = vmatpush2.bf16.msra.mxu0 0
        %5492 = vmatprep.subr.bf16.mxu0 0
        %5493 = vmatpush2.bf16.msra.mxu0 0
        %5494 = vmatprep.subr.bf16.mxu0 0
        %5495 = vmatpush2.bf16.msra.mxu0 0
        %5496 = vmatprep.subr.bf16.mxu0 0
        %5497 = vmatpush2.bf16.msra.mxu0 0
        %5498 = vmatprep.subr.bf16.mxu0 0
        %5499 = vmatpush2.bf16.msra.mxu0 0
        %5500 = vmatprep.subr.bf16.mxu0 0
        %5501 = vmatpush2.bf16.msra.mxu0 0
        %5502 = vmatprep.subr.bf16.mxu0 0
        %5503 = vmatpush2.bf16.msra.mxu0 0
        %5504 = vmatprep.mubr.bf16.mxu0 0
        %5505 = vmatmul.mubr.bf16.gmra.mxu0 %v2936
        %v5506 = vpop.f32.mrf.mxu0
        %v5507 = vadd.f32 %v5379, %v5506
        %v5508 = vpop.f32.mrf.mxu0
        %v5509 = vpop.f32.mrf.mxu0
        %v5510 = vadd.f32 %v5382, %v5509
        %v5511 = vpop.f32.mrf.mxu0
        %5512 = vmatprep.mubr.bf16.mxu0 0
        %5513 = vmatmul.mubr.bf16.gmra.mxu0 %v2985
        %v5514 = vpop.f32.mrf.mxu0
        %v5515 = vadd.f32 %v5387, %v5514
        %v5516 = vpop.f32.mrf.mxu0
        %v5517 = vpop.f32.mrf.mxu0
        %v5518 = vadd.f32 %v5390, %v5517
        %v5519 = vpop.f32.mrf.mxu0
        %5520 = vmatprep.mubr.bf16.mxu0 0
        %5521 = vmatmul.mubr.bf16.gmra.mxu0 %v3034
        %v5522 = vpop.f32.mrf.mxu0
        %v5523 = vadd.f32 %v5395, %v5522
        %v5524 = vpop.f32.mrf.mxu0
        %v5525 = vpop.f32.mrf.mxu0
        %v5526 = vadd.f32 %v5398, %v5525
        %v5527 = vpop.f32.mrf.mxu0
        %5528 = vmatprep.mubr.bf16.mxu0 0
        %5529 = vmatmul.mubr.bf16.gmra.mxu0 %v3083
        %v5530 = vpop.f32.mrf.mxu0
        %v5531 = vadd.f32 %v5403, %v5530
        %v5532 = vpop.f32.mrf.mxu0
        %v5533 = vpop.f32.mrf.mxu0
        %v5534 = vadd.f32 %v5406, %v5533
        %v5535 = vpop.f32.mrf.mxu0
        %5536 = vmatprep.mubr.bf16.mxu0 0
        %5537 = vmatmul.mubr.bf16.gmra.mxu0 %v3132
        %v5538 = vpop.f32.mrf.mxu0
        %v5539 = vadd.f32 %v5411, %v5538
        %v5540 = vpop.f32.mrf.mxu0
        %v5541 = vpop.f32.mrf.mxu0
        %v5542 = vadd.f32 %v5414, %v5541
        %v5543 = vpop.f32.mrf.mxu0
        %5544 = vmatprep.mubr.bf16.mxu0 0
        %5545 = vmatmul.mubr.bf16.gmra.mxu0 %v3181
        %v5546 = vpop.f32.mrf.mxu0
        %v5547 = vadd.f32 %v5419, %v5546
        %v5548 = vpop.f32.mrf.mxu0
        %v5549 = vpop.f32.mrf.mxu0
        %v5550 = vadd.f32 %v5422, %v5549
        %v5551 = vpop.f32.mrf.mxu0
        %5552 = vmatprep.mubr.bf16.mxu0 0
        %5553 = vmatmul.mubr.bf16.gmra.mxu0 %v3230
        %v5554 = vpop.f32.mrf.mxu0
        %v5555 = vadd.f32 %v5427, %v5554
        %v5556 = vpop.f32.mrf.mxu0
        %v5557 = vpop.f32.mrf.mxu0
        %v5558 = vadd.f32 %v5430, %v5557
        %v5559 = vpop.f32.mrf.mxu0
        %5560 = vmatprep.mubr.bf16.mxu0 0
        %5561 = vmatmul.mubr.bf16.gmra.mxu0 %v3279
        %v5562 = vpop.f32.mrf.mxu0
        %v5563 = vadd.f32 %v5435, %v5562
        %v5564 = vpop.f32.mrf.mxu0
        %v5565 = vpop.f32.mrf.mxu0
        %v5566 = vadd.f32 %v5438, %v5565
        %v5567 = vpop.f32.mrf.mxu0
        %5568 = vmatprep.mubr.bf16.mxu0 0
        %5569 = vmatmul.mubr.bf16.gmra.mxu0 %v3328
        %v5570 = vpop.f32.mrf.mxu0
        %v5571 = vadd.f32 %v5443, %v5570
        %v5572 = vpop.f32.mrf.mxu0
        %v5573 = vpop.f32.mrf.mxu0
        %v5574 = vadd.f32 %v5446, %v5573
        %v5575 = vpop.f32.mrf.mxu0
        %5576 = vmatprep.mubr.bf16.mxu0 0
        %5577 = vmatmul.mubr.bf16.gmra.mxu0 %v3377
        %v5578 = vpop.f32.mrf.mxu0
        %v5579 = vadd.f32 %v5451, %v5578
        %v5580 = vpop.f32.mrf.mxu0
        %v5581 = vpop.f32.mrf.mxu0
        %v5582 = vadd.f32 %v5454, %v5581
        %v5583 = vpop.f32.mrf.mxu0
        %5584 = vmatprep.mubr.bf16.mxu0 0
        %5585 = vmatmul.mubr.bf16.gmra.mxu0 %v3426
        %v5586 = vpop.f32.mrf.mxu0
        %v5587 = vadd.f32 %v5459, %v5586
        %v5588 = vpop.f32.mrf.mxu0
        %v5589 = vpop.f32.mrf.mxu0
        %v5590 = vadd.f32 %v5462, %v5589
        %v5591 = vpop.f32.mrf.mxu0
        %5592 = vmatprep.mubr.bf16.mxu0 0
        %5593 = vmatmul.mubr.bf16.gmra.mxu0 %v3441
        %v5594 = vpop.f32.mrf.mxu0
        %v5595 = vadd.f32 %v5467, %v5594
        %v5596 = vpop.f32.mrf.mxu0
        %v5597 = vpop.f32.mrf.mxu0
        %v5598 = vpop.f32.mrf.mxu0
        %5599 = vdwg.mxu0
        %v5604 = vunpack.c.l.s4 1966171168
        %v5605 = vunpack.c.0.s8 %v5604
        %v5606 = vlaneseq
        %v5607 = vshrl.u32 %v5606, 7
        %v5608 = vsub.s32 %v5605, %v5607
        %v5609 = vrot.slane %v278, %v5608
        %v5610 = vcombine.high %v5609, %v5609
        %v5612 = vunpack.c.l.s4 1966171168
        %v5613 = vunpack.c.0.s8 %v5612
        %v5614 = vlaneseq
        %v5615 = vshrl.u32 %v5614, 7
        %v5616 = vsub.s32 %v5613, %v5615
        %v5617 = vrot.slane %v5609, %v5616
        %v5619 = vunpack.c.l.s4 1966171168
        %v5620 = vunpack.c.0.s8 %v5619
        %v5621 = vlaneseq
        %v5622 = vshrl.u32 %v5621, 7
        %v5623 = vsub.s32 %v5620, %v5622
        %v5624 = vrot.slane %v5610, %v5623
        %v5625 = vcombine.high %v5617, %v5617
        %v5626 = vcombine.high %v5624, %v5624
        %v5628 = vunpack.c.l.s4 1966171168
        %v5629 = vunpack.c.0.s8 %v5628
        %v5630 = vlaneseq
        %v5631 = vshrl.u32 %v5630, 7
        %v5632 = vsub.s32 %v5629, %v5631
        %v5633 = vrot.slane %v279, %v5632
        %v5634 = vcombine.high %v5633, %v5633
        %v5636 = vunpack.c.l.s4 1966171168
        %v5637 = vunpack.c.0.s8 %v5636
        %v5638 = vlaneseq
        %v5639 = vshrl.u32 %v5638, 7
        %v5640 = vsub.s32 %v5637, %v5639
        %v5641 = vrot.slane %v5633, %v5640
        %v5643 = vunpack.c.l.s4 1966171168
        %v5644 = vunpack.c.0.s8 %v5643
        %v5645 = vlaneseq
        %v5646 = vshrl.u32 %v5645, 7
        %v5647 = vsub.s32 %v5644, %v5646
        %v5648 = vrot.slane %v5634, %v5647
        %v5649 = vcombine.high %v5641, %v5641
        %v5650 = vcombine.high %v5648, %v5648
        %v5652 = vunpack.c.l.s4 1966171168
        %v5653 = vunpack.c.0.s8 %v5652
        %v5654 = vlaneseq
        %v5655 = vshrl.u32 %v5654, 7
        %v5656 = vsub.s32 %v5653, %v5655
        %v5657 = vrot.slane %v280, %v5656
        %v5659 = vunpack.c.l.s4 1966171168
        %v5660 = vunpack.c.0.s8 %v5659
        %v5661 = vlaneseq
        %v5662 = vshrl.u32 %v5661, 7
        %v5663 = vsub.s32 %v5660, %v5662
        %v5664 = vrot.slane %v5657, %v5663
        %v5665 = vcombine.high %v5657, %v5657
        %v5667 = vunpack.c.l.s4 1966171168
        %v5668 = vunpack.c.0.s8 %v5667
        %v5669 = vlaneseq
        %v5670 = vshrl.u32 %v5669, 7
        %v5671 = vsub.s32 %v5668, %v5670
        %v5672 = vrot.slane %v5665, %v5671
        %v5674 = vshrl.u32 %v5617, 16
        %v5676 = vrot.slane %v5674, 7
        %v5677 = vrot.slane %v5676, 1
        %v5679 = vshll.u32 %v5624, 16
        %v5681 = vsel %vm1025, %v5677, %v5679
        %v5682 = vshrl.u32 %v5624, 16
        %v5684 = vrot.slane %v5682, 7
        %v5685 = vrot.slane %v5684, 1
        %v5687 = vshll.u32 %v5625, 16
        %v5689 = vsel %vm1025, %v5685, %v5687
        %v5690 = vshrl.u32 %v5625, 16
        %v5692 = vrot.slane %v5690, 7
        %v5693 = vrot.slane %v5692, 1
        %v5695 = vshll.u32 %v5626, 16
        %v5697 = vsel %vm1025, %v5693, %v5695
        %v5698 = vshrl.u32 %v5626, 16
        %v5700 = vrot.slane %v5698, 7
        %v5701 = vrot.slane %v5700, 1
        %v5703 = vshll.u32 %v5641, 16
        %v5705 = vsel %vm1025, %v5701, %v5703
        %v5706 = vshrl.u32 %v5641, 16
        %v5708 = vrot.slane %v5706, 7
        %v5709 = vrot.slane %v5708, 1
        %v5711 = vshll.u32 %v5648, 16
        %v5713 = vsel %vm1025, %v5709, %v5711
        %v5714 = vshrl.u32 %v5648, 16
        %v5716 = vrot.slane %v5714, 7
        %v5717 = vrot.slane %v5716, 1
        %v5719 = vshll.u32 %v5649, 16
        %v5721 = vsel %vm1025, %v5717, %v5719
        %v5722 = vshrl.u32 %v5649, 16
        %v5724 = vrot.slane %v5722, 7
        %v5725 = vrot.slane %v5724, 1
        %v5727 = vshll.u32 %v5650, 16
        %v5729 = vsel %vm1025, %v5725, %v5727
        %v5730 = vshrl.u32 %v5650, 16
        %v5732 = vrot.slane %v5730, 7
        %v5733 = vrot.slane %v5732, 1
        %v5735 = vshll.u32 %v5664, 16
        %v5737 = vsel %vm1025, %v5733, %v5735
        %v5738 = vshrl.u32 %v5664, 16
        %v5740 = vrot.slane %v5738, 7
        %v5741 = vrot.slane %v5740, 1
        %v5743 = vshll.u32 %v5672, 16
        %v5745 = vsel %vm1025, %v5741, %v5743
        %v5746 = vcombine.low %v1871, %v1878
        %v5748 = vunpack.c.l.s4 1966171168
        %v5749 = vunpack.c.0.s8 %v5748
        %v5750 = vlaneseq
        %v5751 = vshrl.u32 %v5750, 7
        %v5752 = vsub.s32 %v5749, %v5751
        %v5753 = vrot.slane %v5746, %v5752
        %v5754 = vcombine.low %v5753, %v4482
        %v5755 = vcombine.low %v1920, %v1927
        %v5757 = vunpack.c.l.s4 1966171168
        %v5758 = vunpack.c.0.s8 %v5757
        %v5759 = vlaneseq
        %v5760 = vshrl.u32 %v5759, 7
        %v5761 = vsub.s32 %v5758, %v5760
        %v5762 = vrot.slane %v5755, %v5761
        %v5763 = vcombine.low %v5762, %v4507
        %v5764 = vcombine.low %v1969, %v1976
        %v5766 = vunpack.c.l.s4 1966171168
        %v5767 = vunpack.c.0.s8 %v5766
        %v5768 = vlaneseq
        %v5769 = vshrl.u32 %v5768, 7
        %v5770 = vsub.s32 %v5767, %v5769
        %v5771 = vrot.slane %v5764, %v5770
        %v5772 = vcombine.low %v5771, %v4532
        %v5773 = vcombine.low %v2018, %v2025
        %v5775 = vunpack.c.l.s4 1966171168
        %v5776 = vunpack.c.0.s8 %v5775
        %v5777 = vlaneseq
        %v5778 = vshrl.u32 %v5777, 7
        %v5779 = vsub.s32 %v5776, %v5778
        %v5780 = vrot.slane %v5773, %v5779
        %v5781 = vcombine.low %v5780, %v4557
        %v5782 = vcombine.low %v2081, %v2109
        %v5784 = vunpack.c.l.s4 1966171168
        %v5785 = vunpack.c.0.s8 %v5784
        %v5786 = vlaneseq
        %v5787 = vshrl.u32 %v5786, 7
        %v5788 = vsub.s32 %v5785, %v5787
        %v5789 = vrot.slane %v5782, %v5788
        %v5790 = vcombine.low %v4575, %v5789
        %v5791 = vcombine.low %v2130, %v2158
        %v5793 = vunpack.c.l.s4 1966171168
        %v5794 = vunpack.c.0.s8 %v5793
        %v5795 = vlaneseq
        %v5796 = vshrl.u32 %v5795, 7
        %v5797 = vsub.s32 %v5794, %v5796
        %v5798 = vrot.slane %v5791, %v5797
        %v5799 = vcombine.low %v4600, %v5798
        %v5800 = vcombine.low %v2179, %v2207
        %v5802 = vunpack.c.l.s4 1966171168
        %v5803 = vunpack.c.0.s8 %v5802
        %v5804 = vlaneseq
        %v5805 = vshrl.u32 %v5804, 7
        %v5806 = vsub.s32 %v5803, %v5805
        %v5807 = vrot.slane %v5800, %v5806
        %v5808 = vcombine.low %v4625, %v5807
        %v5809 = vcombine.low %v2228, %v2256
        %v5811 = vunpack.c.l.s4 1966171168
        %v5812 = vunpack.c.0.s8 %v5811
        %v5813 = vlaneseq
        %v5814 = vshrl.u32 %v5813, 7
        %v5815 = vsub.s32 %v5812, %v5814
        %v5816 = vrot.slane %v5809, %v5815
        %v5817 = vcombine.low %v4650, %v5816
        %v5818 = vcombine.low %v3519, %v3526
        %v5820 = vunpack.c.l.s4 1966171168
        %v5821 = vunpack.c.0.s8 %v5820
        %v5822 = vlaneseq
        %v5823 = vshrl.u32 %v5822, 7
        %v5824 = vsub.s32 %v5821, %v5823
        %v5825 = vrot.slane %v5818, %v5824
        %v5826 = vcombine.low %v5825, %v4693
        %v5828 = vunpack.c.l.s4 1966171168
        %v5829 = vunpack.c.0.s8 %v5828
        %v5830 = vlaneseq
        %v5831 = vshrl.u32 %v5830, 7
        %v5832 = vsub.s32 %v5829, %v5831
        %v5833 = vrot.slane %v5826, %v5832
        %v5834 = vcombine.low %v5833, %v4723
        %v5835 = vcombine.low %v3566, %v5617
        %v5836 = vcombine.low %v5624, %v5625
        %v5837 = vcombine.low %v5626, %v5641
        %v5838 = vcombine.low %v5648, %v5649
        %v5840 = vunpack.c.l.s4 1966171168
        %v5841 = vunpack.c.0.s8 %v5840
        %v5842 = vlaneseq
        %v5843 = vshrl.u32 %v5842, 7
        %v5844 = vsub.s32 %v5841, %v5843
        %v5845 = vrot.slane %v5835, %v5844
        %v5847 = vunpack.c.l.s4 1966171168
        %v5848 = vunpack.c.0.s8 %v5847
        %v5849 = vlaneseq
        %v5850 = vshrl.u32 %v5849, 7
        %v5851 = vsub.s32 %v5848, %v5850
        %v5852 = vrot.slane %v5836, %v5851
        %v5854 = vunpack.c.l.s4 1966171168
        %v5855 = vunpack.c.0.s8 %v5854
        %v5856 = vlaneseq
        %v5857 = vshrl.u32 %v5856, 7
        %v5858 = vsub.s32 %v5855, %v5857
        %v5859 = vrot.slane %v5837, %v5858
        %v5861 = vunpack.c.l.s4 1966171168
        %v5862 = vunpack.c.0.s8 %v5861
        %v5863 = vlaneseq
        %v5864 = vshrl.u32 %v5863, 7
        %v5865 = vsub.s32 %v5862, %v5864
        %v5866 = vrot.slane %v5838, %v5865
        %v5867 = vcombine.low %v5845, %v5852
        %v5868 = vcombine.low %v5859, %v5866
        %v5870 = vunpack.c.l.s4 1966171168
        %v5871 = vunpack.c.0.s8 %v5870
        %v5872 = vlaneseq
        %v5873 = vshrl.u32 %v5872, 7
        %v5874 = vsub.s32 %v5871, %v5873
        %v5875 = vrot.slane %v5867, %v5874
        %v5877 = vunpack.c.l.s4 1966171168
        %v5878 = vunpack.c.0.s8 %v5877
        %v5879 = vlaneseq
        %v5880 = vshrl.u32 %v5879, 7
        %v5881 = vsub.s32 %v5878, %v5880
        %v5882 = vrot.slane %v5868, %v5881
        %v5883 = vcombine.low %v5875, %v5882
        %v5884 = vcombine.low %v5650, %v5664
        %v5886 = vunpack.c.l.s4 1966171168
        %v5887 = vunpack.c.0.s8 %v5886
        %v5888 = vlaneseq
        %v5889 = vshrl.u32 %v5888, 7
        %v5890 = vsub.s32 %v5887, %v5889
        %v5891 = vrot.slane %v5884, %v5890
        %v5893 = vunpack.c.l.s4 1966171168
        %v5894 = vunpack.c.0.s8 %v5893
        %v5895 = vlaneseq
        %v5896 = vshrl.u32 %v5895, 7
        %v5897 = vsub.s32 %v5894, %v5896
        %v5898 = vrot.slane %v5891, %v5897
        %v5910 = vcombine.low %v2437, %v2444
        %v5911 = vcombine.low %v2451, %v2479
        %v5913 = vunpack.c.l.s4 1966171168
        %v5914 = vunpack.c.0.s8 %v5913
        %v5915 = vlaneseq
        %v5916 = vshrl.u32 %v5915, 7
        %v5917 = vsub.s32 %v5914, %v5916
        %v5918 = vrot.slane %v5910, %v5917
        %v5920 = vunpack.c.l.s4 1966171168
        %v5921 = vunpack.c.0.s8 %v5920
        %v5922 = vlaneseq
        %v5923 = vshrl.u32 %v5922, 7
        %v5924 = vsub.s32 %v5921, %v5923
        %v5925 = vrot.slane %v5911, %v5924
        %v5926 = vcombine.low %v5918, %v5925
        %v5927 = vcombine.low %v2486, %v2493
        %v5928 = vcombine.low %v2500, %v2528
        %v5930 = vunpack.c.l.s4 1966171168
        %v5931 = vunpack.c.0.s8 %v5930
        %v5932 = vlaneseq
        %v5933 = vshrl.u32 %v5932, 7
        %v5934 = vsub.s32 %v5931, %v5933
        %v5935 = vrot.slane %v5927, %v5934
        %v5937 = vunpack.c.l.s4 1966171168
        %v5938 = vunpack.c.0.s8 %v5937
        %v5939 = vlaneseq
        %v5940 = vshrl.u32 %v5939, 7
        %v5941 = vsub.s32 %v5938, %v5940
        %v5942 = vrot.slane %v5928, %v5941
        %v5943 = vcombine.low %v5935, %v5942
        %v5944 = vcombine.low %v2535, %v2542
        %v5945 = vcombine.low %v2549, %v2577
        %v5947 = vunpack.c.l.s4 1966171168
        %v5948 = vunpack.c.0.s8 %v5947
        %v5949 = vlaneseq
        %v5950 = vshrl.u32 %v5949, 7
        %v5951 = vsub.s32 %v5948, %v5950
        %v5952 = vrot.slane %v5944, %v5951
        %v5954 = vunpack.c.l.s4 1966171168
        %v5955 = vunpack.c.0.s8 %v5954
        %v5956 = vlaneseq
        %v5957 = vshrl.u32 %v5956, 7
        %v5958 = vsub.s32 %v5955, %v5957
        %v5959 = vrot.slane %v5945, %v5958
        %v5960 = vcombine.low %v5952, %v5959
        %v5961 = vcombine.low %v2584, %v2591
        %v5962 = vcombine.low %v2598, %v2626
        %v5964 = vunpack.c.l.s4 1966171168
        %v5965 = vunpack.c.0.s8 %v5964
        %v5966 = vlaneseq
        %v5967 = vshrl.u32 %v5966, 7
        %v5968 = vsub.s32 %v5965, %v5967
        %v5969 = vrot.slane %v5961, %v5968
        %v5971 = vunpack.c.l.s4 1966171168
        %v5972 = vunpack.c.0.s8 %v5971
        %v5973 = vlaneseq
        %v5974 = vshrl.u32 %v5973, 7
        %v5975 = vsub.s32 %v5972, %v5974
        %v5976 = vrot.slane %v5962, %v5975
        %v5977 = vcombine.low %v5969, %v5976
        %v5978 = vcombine.low %v2633, %v2640
        %v5979 = vcombine.low %v2647, %v2675
        %v5981 = vunpack.c.l.s4 1966171168
        %v5982 = vunpack.c.0.s8 %v5981
        %v5983 = vlaneseq
        %v5984 = vshrl.u32 %v5983, 7
        %v5985 = vsub.s32 %v5982, %v5984
        %v5986 = vrot.slane %v5978, %v5985
        %v5988 = vunpack.c.l.s4 1966171168
        %v5989 = vunpack.c.0.s8 %v5988
        %v5990 = vlaneseq
        %v5991 = vshrl.u32 %v5990, 7
        %v5992 = vsub.s32 %v5989, %v5991
        %v5993 = vrot.slane %v5979, %v5992
        %v5994 = vcombine.low %v5986, %v5993
        %v5995 = vcombine.low %v2682, %v2689
        %v5996 = vcombine.low %v2696, %v2724
        %v5998 = vunpack.c.l.s4 1966171168
        %v5999 = vunpack.c.0.s8 %v5998
        %v6000 = vlaneseq
        %v6001 = vshrl.u32 %v6000, 7
        %v6002 = vsub.s32 %v5999, %v6001
        %v6003 = vrot.slane %v5995, %v6002
        %v6005 = vunpack.c.l.s4 1966171168
        %v6006 = vunpack.c.0.s8 %v6005
        %v6007 = vlaneseq
        %v6008 = vshrl.u32 %v6007, 7
        %v6009 = vsub.s32 %v6006, %v6008
        %v6010 = vrot.slane %v5996, %v6009
        %v6011 = vcombine.low %v6003, %v6010
        %v6012 = vcombine.low %v2731, %v2738
        %v6013 = vcombine.low %v2745, %v2773
        %v6015 = vunpack.c.l.s4 1966171168
        %v6016 = vunpack.c.0.s8 %v6015
        %v6017 = vlaneseq
        %v6018 = vshrl.u32 %v6017, 7
        %v6019 = vsub.s32 %v6016, %v6018
        %v6020 = vrot.slane %v6012, %v6019
        %v6022 = vunpack.c.l.s4 1966171168
        %v6023 = vunpack.c.0.s8 %v6022
        %v6024 = vlaneseq
        %v6025 = vshrl.u32 %v6024, 7
        %v6026 = vsub.s32 %v6023, %v6025
        %v6027 = vrot.slane %v6013, %v6026
        %v6028 = vcombine.low %v6020, %v6027
        %v6029 = vcombine.low %v2780, %v2787
        %v6030 = vcombine.low %v2794, %v2822
        %v6032 = vunpack.c.l.s4 1966171168
        %v6033 = vunpack.c.0.s8 %v6032
        %v6034 = vlaneseq
        %v6035 = vshrl.u32 %v6034, 7
        %v6036 = vsub.s32 %v6033, %v6035
        %v6037 = vrot.slane %v6029, %v6036
        %v6039 = vunpack.c.l.s4 1966171168
        %v6040 = vunpack.c.0.s8 %v6039
        %v6041 = vlaneseq
        %v6042 = vshrl.u32 %v6041, 7
        %v6043 = vsub.s32 %v6040, %v6042
        %v6044 = vrot.slane %v6030, %v6043
        %v6045 = vcombine.low %v6037, %v6044
        %v6046 = vcombine.low %v2829, %v2836
        %v6047 = vcombine.low %v2843, %v2868
        %v6049 = vunpack.c.l.s4 1966171168
        %v6050 = vunpack.c.0.s8 %v6049
        %v6051 = vlaneseq
        %v6052 = vshrl.u32 %v6051, 7
        %v6053 = vsub.s32 %v6050, %v6052
        %v6054 = vrot.slane %v6046, %v6053
        %v6056 = vunpack.c.l.s4 1966171168
        %v6057 = vunpack.c.0.s8 %v6056
        %v6058 = vlaneseq
        %v6059 = vshrl.u32 %v6058, 7
        %v6060 = vsub.s32 %v6057, %v6059
        %v6061 = vrot.slane %v6047, %v6060
        %v6062 = vcombine.low %v6054, %v6061
        %v6063 = vcombine.low %v3583, %v3591
        %v6064 = vcombine.low %v3599, %v3607
        %v6065 = vcombine.low %v3615, %v3623
        %v6066 = vcombine.low %v3631, %v3639
        %v6068 = vunpack.c.l.s4 1966171168
        %v6069 = vunpack.c.0.s8 %v6068
        %v6070 = vlaneseq
        %v6071 = vshrl.u32 %v6070, 7
        %v6072 = vsub.s32 %v6069, %v6071
        %v6073 = vrot.slane %v6063, %v6072
        %v6075 = vunpack.c.l.s4 1966171168
        %v6076 = vunpack.c.0.s8 %v6075
        %v6077 = vlaneseq
        %v6078 = vshrl.u32 %v6077, 7
        %v6079 = vsub.s32 %v6076, %v6078
        %v6080 = vrot.slane %v6064, %v6079
        %v6082 = vunpack.c.l.s4 1966171168
        %v6083 = vunpack.c.0.s8 %v6082
        %v6084 = vlaneseq
        %v6085 = vshrl.u32 %v6084, 7
        %v6086 = vsub.s32 %v6083, %v6085
        %v6087 = vrot.slane %v6065, %v6086
        %v6089 = vunpack.c.l.s4 1966171168
        %v6090 = vunpack.c.0.s8 %v6089
        %v6091 = vlaneseq
        %v6092 = vshrl.u32 %v6091, 7
        %v6093 = vsub.s32 %v6090, %v6092
        %v6094 = vrot.slane %v6066, %v6093
        %v6095 = vcombine.low %v6073, %v6080
        %v6096 = vcombine.low %v6087, %v6094
        %v6098 = vunpack.c.l.s4 1966171168
        %v6099 = vunpack.c.0.s8 %v6098
        %v6100 = vlaneseq
        %v6101 = vshrl.u32 %v6100, 7
        %v6102 = vsub.s32 %v6099, %v6101
        %v6103 = vrot.slane %v6095, %v6102
        %v6105 = vunpack.c.l.s4 1966171168
        %v6106 = vunpack.c.0.s8 %v6105
        %v6107 = vlaneseq
        %v6108 = vshrl.u32 %v6107, 7
        %v6109 = vsub.s32 %v6106, %v6108
        %v6110 = vrot.slane %v6096, %v6109
        %v6111 = vcombine.low %v6103, %v6110
        %v6112 = vcombine.low %v3647, %v5681
        %v6113 = vcombine.low %v5689, %v5697
        %v6114 = vcombine.low %v5705, %v5713
        %v6115 = vcombine.low %v5721, %v5729
        %v6117 = vunpack.c.l.s4 1966171168
        %v6118 = vunpack.c.0.s8 %v6117
        %v6119 = vlaneseq
        %v6120 = vshrl.u32 %v6119, 7
        %v6121 = vsub.s32 %v6118, %v6120
        %v6122 = vrot.slane %v6112, %v6121
        %v6124 = vunpack.c.l.s4 1966171168
        %v6125 = vunpack.c.0.s8 %v6124
        %v6126 = vlaneseq
        %v6127 = vshrl.u32 %v6126, 7
        %v6128 = vsub.s32 %v6125, %v6127
        %v6129 = vrot.slane %v6113, %v6128
        %v6131 = vunpack.c.l.s4 1966171168
        %v6132 = vunpack.c.0.s8 %v6131
        %v6133 = vlaneseq
        %v6134 = vshrl.u32 %v6133, 7
        %v6135 = vsub.s32 %v6132, %v6134
        %v6136 = vrot.slane %v6114, %v6135
        %v6138 = vunpack.c.l.s4 1966171168
        %v6139 = vunpack.c.0.s8 %v6138
        %v6140 = vlaneseq
        %v6141 = vshrl.u32 %v6140, 7
        %v6142 = vsub.s32 %v6139, %v6141
        %v6143 = vrot.slane %v6115, %v6142
        %v6144 = vcombine.low %v6122, %v6129
        %v6145 = vcombine.low %v6136, %v6143
        %v6147 = vunpack.c.l.s4 1966171168
        %v6148 = vunpack.c.0.s8 %v6147
        %v6149 = vlaneseq
        %v6150 = vshrl.u32 %v6149, 7
        %v6151 = vsub.s32 %v6148, %v6150
        %v6152 = vrot.slane %v6144, %v6151
        %v6154 = vunpack.c.l.s4 1966171168
        %v6155 = vunpack.c.0.s8 %v6154
        %v6156 = vlaneseq
        %v6157 = vshrl.u32 %v6156, 7
        %v6158 = vsub.s32 %v6155, %v6157
        %v6159 = vrot.slane %v6145, %v6158
        %v6160 = vcombine.low %v6152, %v6159
        %v6161 = vcombine.low %v5737, %v5745
        %v6163 = vunpack.c.l.s4 1966171168
        %v6164 = vunpack.c.0.s8 %v6163
        %v6165 = vlaneseq
        %v6166 = vshrl.u32 %v6165, 7
        %v6167 = vsub.s32 %v6164, %v6166
        %v6168 = vrot.slane %v6161, %v6167
        %v6170 = vunpack.c.l.s4 1966171168
        %v6171 = vunpack.c.0.s8 %v6170
        %v6172 = vlaneseq
        %v6173 = vshrl.u32 %v6172, 7
        %v6174 = vsub.s32 %v6171, %v6173
        %v6175 = vrot.slane %v6168, %v6174
        %v6188 = vcombine.low %v3003, %v3010
        %v6189 = vcombine.low %v3017, %v3045
        %v6191 = vunpack.c.l.s4 1966171168
        %v6192 = vunpack.c.0.s8 %v6191
        %v6193 = vlaneseq
        %v6194 = vshrl.u32 %v6193, 7
        %v6195 = vsub.s32 %v6192, %v6194
        %v6196 = vrot.slane %v6188, %v6195
        %v6198 = vunpack.c.l.s4 1966171168
        %v6199 = vunpack.c.0.s8 %v6198
        %v6200 = vlaneseq
        %v6201 = vshrl.u32 %v6200, 7
        %v6202 = vsub.s32 %v6199, %v6201
        %v6203 = vrot.slane %v6189, %v6202
        %v6204 = vcombine.low %v6196, %v6203
        %v6205 = vcombine.low %v3052, %v3059
        %v6206 = vcombine.low %v3066, %v3094
        %v6208 = vunpack.c.l.s4 1966171168
        %v6209 = vunpack.c.0.s8 %v6208
        %v6210 = vlaneseq
        %v6211 = vshrl.u32 %v6210, 7
        %v6212 = vsub.s32 %v6209, %v6211
        %v6213 = vrot.slane %v6205, %v6212
        %v6215 = vunpack.c.l.s4 1966171168
        %v6216 = vunpack.c.0.s8 %v6215
        %v6217 = vlaneseq
        %v6218 = vshrl.u32 %v6217, 7
        %v6219 = vsub.s32 %v6216, %v6218
        %v6220 = vrot.slane %v6206, %v6219
        %v6221 = vcombine.low %v6213, %v6220
        %v6222 = vcombine.low %v3101, %v3108
        %v6223 = vcombine.low %v3115, %v3143
        %v6225 = vunpack.c.l.s4 1966171168
        %v6226 = vunpack.c.0.s8 %v6225
        %v6227 = vlaneseq
        %v6228 = vshrl.u32 %v6227, 7
        %v6229 = vsub.s32 %v6226, %v6228
        %v6230 = vrot.slane %v6222, %v6229
        %v6232 = vunpack.c.l.s4 1966171168
        %v6233 = vunpack.c.0.s8 %v6232
        %v6234 = vlaneseq
        %v6235 = vshrl.u32 %v6234, 7
        %v6236 = vsub.s32 %v6233, %v6235
        %v6237 = vrot.slane %v6223, %v6236
        %v6238 = vcombine.low %v6230, %v6237
        %v6239 = vcombine.low %v3150, %v3157
        %v6240 = vcombine.low %v3164, %v3192
        %v6242 = vunpack.c.l.s4 1966171168
        %v6243 = vunpack.c.0.s8 %v6242
        %v6244 = vlaneseq
        %v6245 = vshrl.u32 %v6244, 7
        %v6246 = vsub.s32 %v6243, %v6245
        %v6247 = vrot.slane %v6239, %v6246
        %v6249 = vunpack.c.l.s4 1966171168
        %v6250 = vunpack.c.0.s8 %v6249
        %v6251 = vlaneseq
        %v6252 = vshrl.u32 %v6251, 7
        %v6253 = vsub.s32 %v6250, %v6252
        %v6254 = vrot.slane %v6240, %v6253
        %v6255 = vcombine.low %v6247, %v6254
        %v6256 = vcombine.low %v3199, %v3206
        %v6257 = vcombine.low %v3213, %v3241
        %v6259 = vunpack.c.l.s4 1966171168
        %v6260 = vunpack.c.0.s8 %v6259
        %v6261 = vlaneseq
        %v6262 = vshrl.u32 %v6261, 7
        %v6263 = vsub.s32 %v6260, %v6262
        %v6264 = vrot.slane %v6256, %v6263
        %v6266 = vunpack.c.l.s4 1966171168
        %v6267 = vunpack.c.0.s8 %v6266
        %v6268 = vlaneseq
        %v6269 = vshrl.u32 %v6268, 7
        %v6270 = vsub.s32 %v6267, %v6269
        %v6271 = vrot.slane %v6257, %v6270
        %v6272 = vcombine.low %v6264, %v6271
        %v6273 = vcombine.low %v3248, %v3255
        %v6274 = vcombine.low %v3262, %v3290
        %v6276 = vunpack.c.l.s4 1966171168
        %v6277 = vunpack.c.0.s8 %v6276
        %v6278 = vlaneseq
        %v6279 = vshrl.u32 %v6278, 7
        %v6280 = vsub.s32 %v6277, %v6279
        %v6281 = vrot.slane %v6273, %v6280
        %v6283 = vunpack.c.l.s4 1966171168
        %v6284 = vunpack.c.0.s8 %v6283
        %v6285 = vlaneseq
        %v6286 = vshrl.u32 %v6285, 7
        %v6287 = vsub.s32 %v6284, %v6286
        %v6288 = vrot.slane %v6274, %v6287
        %v6289 = vcombine.low %v6281, %v6288
        %v6290 = vcombine.low %v3297, %v3304
        %v6291 = vcombine.low %v3311, %v3339
        %v6293 = vunpack.c.l.s4 1966171168
        %v6294 = vunpack.c.0.s8 %v6293
        %v6295 = vlaneseq
        %v6296 = vshrl.u32 %v6295, 7
        %v6297 = vsub.s32 %v6294, %v6296
        %v6298 = vrot.slane %v6290, %v6297
        %v6300 = vunpack.c.l.s4 1966171168
        %v6301 = vunpack.c.0.s8 %v6300
        %v6302 = vlaneseq
        %v6303 = vshrl.u32 %v6302, 7
        %v6304 = vsub.s32 %v6301, %v6303
        %v6305 = vrot.slane %v6291, %v6304
        %v6306 = vcombine.low %v6298, %v6305
        %v6307 = vcombine.low %v3346, %v3353
        %v6308 = vcombine.low %v3360, %v3388
        %v6310 = vunpack.c.l.s4 1966171168
        %v6311 = vunpack.c.0.s8 %v6310
        %v6312 = vlaneseq
        %v6313 = vshrl.u32 %v6312, 7
        %v6314 = vsub.s32 %v6311, %v6313
        %v6315 = vrot.slane %v6307, %v6314
        %v6317 = vunpack.c.l.s4 1966171168
        %v6318 = vunpack.c.0.s8 %v6317
        %v6319 = vlaneseq
        %v6320 = vshrl.u32 %v6319, 7
        %v6321 = vsub.s32 %v6318, %v6320
        %v6322 = vrot.slane %v6308, %v6321
        %v6323 = vcombine.low %v6315, %v6322
        %v6324 = vcombine.low %v3395, %v3402
        %v6325 = vcombine.low %v3409, %v3434
        %v6327 = vunpack.c.l.s4 1966171168
        %v6328 = vunpack.c.0.s8 %v6327
        %v6329 = vlaneseq
        %v6330 = vshrl.u32 %v6329, 7
        %v6331 = vsub.s32 %v6328, %v6330
        %v6332 = vrot.slane %v6324, %v6331
        %v6334 = vunpack.c.l.s4 1966171168
        %v6335 = vunpack.c.0.s8 %v6334
        %v6336 = vlaneseq
        %v6337 = vshrl.u32 %v6336, 7
        %v6338 = vsub.s32 %v6335, %v6337
        %v6339 = vrot.slane %v6325, %v6338
        %v6340 = vcombine.low %v6332, %v6339
        %v6341 = vcombine.low %v3818, %v3825
        %v6342 = vcombine.low %v3832, %v3857
        %v6344 = vunpack.c.l.s4 1966171168
        %v6345 = vunpack.c.0.s8 %v6344
        %v6346 = vlaneseq
        %v6347 = vshrl.u32 %v6346, 7
        %v6348 = vsub.s32 %v6345, %v6347
        %v6349 = vrot.slane %v6341, %v6348
        %v6351 = vunpack.c.l.s4 1966171168
        %v6352 = vunpack.c.0.s8 %v6351
        %v6353 = vlaneseq
        %v6354 = vshrl.u32 %v6353, 7
        %v6355 = vsub.s32 %v6352, %v6354
        %v6356 = vrot.slane %v6342, %v6355
        %v6357 = vcombine.low %v6349, %v6356
        %v6358 = vcombine.low %v3574, %v5624
        %v6359 = vcombine.low %v5625, %v5626
        %v6360 = vcombine.low %v5641, %v5648
        %v6361 = vcombine.low %v5649, %v5650
        %v6363 = vunpack.c.l.s4 1966171168
        %v6364 = vunpack.c.0.s8 %v6363
        %v6365 = vlaneseq
        %v6366 = vshrl.u32 %v6365, 7
        %v6367 = vsub.s32 %v6364, %v6366
        %v6368 = vrot.slane %v6358, %v6367
        %v6370 = vunpack.c.l.s4 1966171168
        %v6371 = vunpack.c.0.s8 %v6370
        %v6372 = vlaneseq
        %v6373 = vshrl.u32 %v6372, 7
        %v6374 = vsub.s32 %v6371, %v6373
        %v6375 = vrot.slane %v6359, %v6374
        %v6377 = vunpack.c.l.s4 1966171168
        %v6378 = vunpack.c.0.s8 %v6377
        %v6379 = vlaneseq
        %v6380 = vshrl.u32 %v6379, 7
        %v6381 = vsub.s32 %v6378, %v6380
        %v6382 = vrot.slane %v6360, %v6381
        %v6384 = vunpack.c.l.s4 1966171168
        %v6385 = vunpack.c.0.s8 %v6384
        %v6386 = vlaneseq
        %v6387 = vshrl.u32 %v6386, 7
        %v6388 = vsub.s32 %v6385, %v6387
        %v6389 = vrot.slane %v6361, %v6388
        %v6390 = vcombine.low %v6368, %v6375
        %v6391 = vcombine.low %v6382, %v6389
        %v6393 = vunpack.c.l.s4 1966171168
        %v6394 = vunpack.c.0.s8 %v6393
        %v6395 = vlaneseq
        %v6396 = vshrl.u32 %v6395, 7
        %v6397 = vsub.s32 %v6394, %v6396
        %v6398 = vrot.slane %v6390, %v6397
        %v6400 = vunpack.c.l.s4 1966171168
        %v6401 = vunpack.c.0.s8 %v6400
        %v6402 = vlaneseq
        %v6403 = vshrl.u32 %v6402, 7
        %v6404 = vsub.s32 %v6401, %v6403
        %v6405 = vrot.slane %v6391, %v6404
        %v6406 = vcombine.low %v6398, %v6405
        %v6407 = vcombine.low %v5664, %v5672
        %v6409 = vunpack.c.l.s4 1966171168
        %v6410 = vunpack.c.0.s8 %v6409
        %v6411 = vlaneseq
        %v6412 = vshrl.u32 %v6411, 7
        %v6413 = vsub.s32 %v6410, %v6412
        %v6414 = vrot.slane %v6407, %v6413
        %v6416 = vunpack.c.l.s4 1966171168
        %v6417 = vunpack.c.0.s8 %v6416
        %v6418 = vlaneseq
        %v6419 = vshrl.u32 %v6418, 7
        %v6420 = vsub.s32 %v6417, %v6419
        %v6421 = vrot.slane %v6414, %v6420
        %v6434 = vld [vmem:[#allocation4 + $0x180] sm:$0xf]
        %v6435 = vld [vmem:[#allocation4 + $0x184] sm:$0xf]
        %v6436 = vld [vmem:[#allocation4 + $0x188] sm:$0xf]
        %v6437 = vld [vmem:[#allocation4 + $0x18c] sm:$0xf]
        %v6438 = vld [vmem:[#allocation4 + $0x190] sm:$0xf]
        %v6439 = vld [vmem:[#allocation4 + $0x194] sm:$0xf]
        %v6440 = vld [vmem:[#allocation4 + $0x198] sm:$0xf]
        %v6441 = vld [vmem:[#allocation4 + $0x19c] sm:$0xf]
        %v6442 = vld [vmem:[#allocation4 + $0x1a0] sm:$0xf]
        %v6443 = vld [vmem:[#allocation4 + $0x1a4] sm:$0xf]
        %v6444 = vld [vmem:[#allocation4 + $0x1a8] sm:$0xf]
        %v6445 = vld [vmem:[#allocation4 + $0x1ac] sm:$0xf]
        %v6446 = vld [vmem:[#allocation4 + $0x1b0] sm:$0xf]
        %v6447 = vld [vmem:[#allocation4 + $0x1b4] sm:$0xf]
        %v6448 = vld [vmem:[#allocation4 + $0x1b8] sm:$0xf]
        %v6449 = vld [vmem:[#allocation4 + $0x1bc] sm:$0xf]
        %v6450 = vld [vmem:[#allocation4 + $0x1c0] sm:$0xf]
        %v6451 = vld [vmem:[#allocation4 + $0x1c4] sm:$0xf]
        %v6452 = vld [vmem:[#allocation4 + $0x1c8] sm:$0xf]
        %v6453 = vld [vmem:[#allocation4 + $0x1cc] sm:$0xf]
        %v6454 = vld [vmem:[#allocation4 + $0x1d0] sm:$0xf]
        %v6455 = vld [vmem:[#allocation4 + $0x1d4] sm:$0xf]
        %v6456 = vld [vmem:[#allocation4 + $0x1d8] sm:$0xf]
        %v6457 = vld [vmem:[#allocation4 + $0x1dc] sm:$0xf]
        %v6458 = vld [vmem:[#allocation4 + $0x1e0] sm:$0xf]
        %v6459 = vld [vmem:[#allocation4 + $0x1e4] sm:$0xf]
        %v6460 = vld [vmem:[#allocation4 + $0x1e8] sm:$0xf]
        %v6461 = vld [vmem:[#allocation4 + $0x1ec] sm:$0xf]
        %v6462 = vld [vmem:[#allocation4 + $0x1f0] sm:$0xf]
        %v6463 = vld [vmem:[#allocation4 + $0x1f4] sm:$0xf]
        %v6464 = vld [vmem:[#allocation4 + $0x1f8] sm:$0xf]
        %v6465 = vld [vmem:[#allocation4 + $0x1fc] sm:$0xf]
        %v6466 = vld [vmem:[#allocation4 + $0x200] sm:$0xf]
        %v6467 = vld [vmem:[#allocation4 + $0x204] sm:$0xf]
        %v6468 = vld [vmem:[#allocation4 + $0x208] sm:$0xf]
        %v6469 = vld [vmem:[#allocation4 + $0x20c] sm:$0xf]
        %v6470 = vld [vmem:[#allocation4 + $0x210] sm:$0xf]
        %v6471 = vld [vmem:[#allocation4 + $0x214] sm:$0xf]
        %v6472 = vld [vmem:[#allocation4 + $0x218] sm:$0xf]
        %v6473 = vld [vmem:[#allocation4 + $0x21c] sm:$0xf]
        %v6474 = vld [vmem:[#allocation4 + $0x220] sm:$0xf]
        %v6475 = vld [vmem:[#allocation4 + $0x224] sm:$0xf]
        %v6476 = vld [vmem:[#allocation4 + $0x228] sm:$0xf]
        %v6477 = vld [vmem:[#allocation4 + $0x22c] sm:$0xf]
        %v6478 = vld [vmem:[#allocation4 + $0x230] sm:$0xf]
        %v6479 = vld [vmem:[#allocation4 + $0x234] sm:$0xf]
        %v6480 = vld [vmem:[#allocation4 + $0x238] sm:$0xf]
        %v6481 = vld [vmem:[#allocation4 + $0x23c] sm:$0xf]
        %v6530 = vunpack.c.l.b16 %v6434
        %v6531 = vunpack.c.l.b16 %v6435
        %v6532 = vunpack.c.l.b16 %v6436
        %v6533 = vunpack.c.l.b16 %v6437
        %v6534 = vunpack.c.l.b16 %v6438
        %v6535 = vunpack.c.l.b16 %v6439
        %v6536 = vunpack.c.l.b16 %v6440
        %v6537 = vunpack.c.l.b16 %v6441
        %v6538 = vunpack.c.l.b16 %v6442
        %v6539 = vunpack.c.l.b16 %v6443
        %v6540 = vunpack.c.l.b16 %v6444
        %v6541 = vunpack.c.l.b16 %v6445
        %v6542 = vunpack.c.l.b16 %v6446
        %v6543 = vunpack.c.l.b16 %v6447
        %v6544 = vunpack.c.l.b16 %v6448
        %v6545 = vunpack.c.l.b16 %v6449
        %v6546 = vunpack.c.l.b16 %v6450
        %v6547 = vunpack.c.l.b16 %v6451
        %v6548 = vunpack.c.l.b16 %v6452
        %v6549 = vunpack.c.l.b16 %v6453
        %v6550 = vunpack.c.l.b16 %v6454
        %v6551 = vunpack.c.l.b16 %v6455
        %v6552 = vunpack.c.l.b16 %v6456
        %v6553 = vunpack.c.l.b16 %v6457
        %v6554 = vunpack.c.l.b16 %v6458
        %v6555 = vunpack.c.l.b16 %v6459
        %v6556 = vunpack.c.l.b16 %v6460
        %v6557 = vunpack.c.l.b16 %v6461
        %v6558 = vunpack.c.l.b16 %v6462
        %v6559 = vunpack.c.l.b16 %v6463
        %v6560 = vunpack.c.l.b16 %v6464
        %v6561 = vunpack.c.l.b16 %v6465
        %v6562 = vunpack.c.l.b16 %v6466
        %v6563 = vunpack.c.l.b16 %v6467
        %v6564 = vunpack.c.l.b16 %v6468
        %v6565 = vunpack.c.l.b16 %v6469
        %v6566 = vunpack.c.l.b16 %v6470
        %v6567 = vunpack.c.l.b16 %v6471
        %v6568 = vunpack.c.l.b16 %v6472
        %v6569 = vunpack.c.l.b16 %v6473
        %v6570 = vunpack.c.l.b16 %v6474
        %v6571 = vunpack.c.l.b16 %v6475
        %v6572 = vunpack.c.l.b16 %v6476
        %v6573 = vunpack.c.l.b16 %v6477
        %v6574 = vunpack.c.l.b16 %v6478
        %v6575 = vunpack.c.l.b16 %v6479
        %v6576 = vunpack.c.l.b16 %v6480
        %v6577 = vunpack.c.l.b16 %v6481
        %v6578 = vpack.c.b16 %v6531, %v6530
        %v6579 = vpack.c.b16 %v6533, %v6532
        %v6580 = vpack.c.b16 %v6535, %v6534
        %v6581 = vpack.c.b16 %v6537, %v6536
        %v6582 = vpack.c.b16 %v6539, %v6538
        %v6583 = vpack.c.b16 %v6541, %v6540
        %v6584 = vpack.c.b16 %v6543, %v6542
        %v6585 = vpack.c.b16 %v6545, %v6544
        %v6586 = vpack.c.b16 %v6547, %v6546
        %v6587 = vpack.c.b16 %v6549, %v6548
        %v6588 = vpack.c.b16 %v6551, %v6550
        %v6589 = vpack.c.b16 %v6553, %v6552
        %v6590 = vpack.c.b16 %v6555, %v6554
        %v6591 = vpack.c.b16 %v6557, %v6556
        %v6592 = vpack.c.b16 %v6559, %v6558
        %v6593 = vpack.c.b16 %v6561, %v6560
        %v6594 = vpack.c.b16 %v6563, %v6562
        %v6595 = vpack.c.b16 %v6565, %v6564
        %v6596 = vpack.c.b16 %v6567, %v6566
        %v6597 = vpack.c.b16 %v6569, %v6568
        %v6598 = vpack.c.b16 %v6571, %v6570
        %v6599 = vpack.c.b16 %v6573, %v6572
        %v6600 = vpack.c.b16 %v6575, %v6574
        %v6601 = vpack.c.b16 %v6577, %v6576
        %6626 = vmatprep.subr.bf16.mxu0 0
        %6627 = vmatpush1.bf16.msra.mxu0 %v6585
        %6628 = vmatprep.subr.bf16.mxu0 0
        %6629 = vmatpush1.bf16.msra.mxu0 %v6584
        %6630 = vmatprep.subr.bf16.mxu0 0
        %6631 = vmatpush1.bf16.msra.mxu0 %v6583
        %6632 = vmatprep.subr.bf16.mxu0 0
        %6633 = vmatpush1.bf16.msra.mxu0 %v6582
        %6634 = vmatprep.subr.bf16.mxu0 0
        %6635 = vmatpush1.bf16.msra.mxu0 %v6581
        %6636 = vmatprep.subr.bf16.mxu0 0
        %6637 = vmatpush1.bf16.msra.mxu0 %v6580
        %6638 = vmatprep.subr.bf16.mxu0 0
        %6639 = vmatpush1.bf16.msra.mxu0 %v6579
        %6640 = vmatprep.subr.bf16.mxu0 0
        %6641 = vmatpush1.bf16.msra.mxu0 %v6578
        %6642 = vmatprep.subr.bf16.mxu0 0
        %6643 = vmatpush2.bf16.msra.mxu0 %v6593
        %6644 = vmatprep.subr.bf16.mxu0 0
        %6645 = vmatpush2.bf16.msra.mxu0 %v6592
        %6646 = vmatprep.subr.bf16.mxu0 0
        %6647 = vmatpush2.bf16.msra.mxu0 %v6591
        %6648 = vmatprep.subr.bf16.mxu0 0
        %6649 = vmatpush2.bf16.msra.mxu0 %v6590
        %6650 = vmatprep.subr.bf16.mxu0 0
        %6651 = vmatpush2.bf16.msra.mxu0 %v6589
        %6652 = vmatprep.subr.bf16.mxu0 0
        %6653 = vmatpush2.bf16.msra.mxu0 %v6588
        %6654 = vmatprep.subr.bf16.mxu0 0
        %6655 = vmatpush2.bf16.msra.mxu0 %v6587
        %6656 = vmatprep.subr.bf16.mxu0 0
        %6657 = vmatpush2.bf16.msra.mxu0 %v6586
        %6658 = vmatprep.mubr.bf16.mxu0 %v5926
        %6659 = vmatmul.mubr.bf16.gmra.mxu0 %v5754
        %v6660 = vpop.f32.mrf.mxu0
        %v6661 = vadd.f32 0.0, %v6660
        %v6662 = vpop.f32.mrf.mxu0
        %v6663 = vpop.f32.mrf.mxu0
        %v6664 = vadd.f32 0.0, %v6663
        %v6665 = vpop.f32.mrf.mxu0
        %6666 = vmatprep.mubr.bf16.mxu0 %v5943
        %6667 = vmatmul.mubr.bf16.gmra.mxu0 %v5763
        %v6668 = vpop.f32.mrf.mxu0
        %v6669 = vadd.f32 0.0, %v6668
        %v6670 = vpop.f32.mrf.mxu0
        %v6671 = vpop.f32.mrf.mxu0
        %v6672 = vadd.f32 0.0, %v6671
        %v6673 = vpop.f32.mrf.mxu0
        %6674 = vmatprep.mubr.bf16.mxu0 %v5960
        %6675 = vmatmul.mubr.bf16.gmra.mxu0 %v5772
        %v6676 = vpop.f32.mrf.mxu0
        %v6677 = vadd.f32 0.0, %v6676
        %v6678 = vpop.f32.mrf.mxu0
        %v6679 = vpop.f32.mrf.mxu0
        %v6680 = vadd.f32 0.0, %v6679
        %v6681 = vpop.f32.mrf.mxu0
        %6682 = vmatprep.mubr.bf16.mxu0 %v5977
        %6683 = vmatmul.mubr.bf16.gmra.mxu0 %v5781
        %v6684 = vpop.f32.mrf.mxu0
        %v6685 = vadd.f32 0.0, %v6684
        %v6686 = vpop.f32.mrf.mxu0
        %v6687 = vpop.f32.mrf.mxu0
        %v6688 = vadd.f32 0.0, %v6687
        %v6689 = vpop.f32.mrf.mxu0
        %6690 = vmatprep.mubr.bf16.mxu0 %v5994
        %6691 = vmatmul.mubr.bf16.gmra.mxu0 %v5790
        %v6692 = vpop.f32.mrf.mxu0
        %v6693 = vadd.f32 0.0, %v6692
        %v6694 = vpop.f32.mrf.mxu0
        %v6695 = vpop.f32.mrf.mxu0
        %v6696 = vadd.f32 0.0, %v6695
        %v6697 = vpop.f32.mrf.mxu0
        %6698 = vmatprep.mubr.bf16.mxu0 %v6011
        %6699 = vmatmul.mubr.bf16.gmra.mxu0 %v5799
        %v6700 = vpop.f32.mrf.mxu0
        %v6701 = vadd.f32 0.0, %v6700
        %v6702 = vpop.f32.mrf.mxu0
        %v6703 = vpop.f32.mrf.mxu0
        %v6704 = vadd.f32 0.0, %v6703
        %v6705 = vpop.f32.mrf.mxu0
        %6706 = vmatprep.mubr.bf16.mxu0 %v6028
        %6707 = vmatmul.mubr.bf16.gmra.mxu0 %v5808
        %v6708 = vpop.f32.mrf.mxu0
        %v6709 = vadd.f32 0.0, %v6708
        %v6710 = vpop.f32.mrf.mxu0
        %v6711 = vpop.f32.mrf.mxu0
        %v6712 = vadd.f32 0.0, %v6711
        %v6713 = vpop.f32.mrf.mxu0
        %6714 = vmatprep.mubr.bf16.mxu0 %v6045
        %6715 = vmatmul.mubr.bf16.gmra.mxu0 %v5817
        %v6716 = vpop.f32.mrf.mxu0
        %v6717 = vadd.f32 0.0, %v6716
        %v6718 = vpop.f32.mrf.mxu0
        %v6719 = vpop.f32.mrf.mxu0
        %v6720 = vadd.f32 0.0, %v6719
        %v6721 = vpop.f32.mrf.mxu0
        %6722 = vmatprep.mubr.bf16.mxu0 %v6062
        %6723 = vmatmul.mubr.bf16.gmra.mxu0 %v4675
        %v6724 = vpop.f32.mrf.mxu0
        %v6725 = vadd.f32 0.0, %v6724
        %v6726 = vpop.f32.mrf.mxu0
        %v6727 = vpop.f32.mrf.mxu0
        %v6728 = vadd.f32 0.0, %v6727
        %v6729 = vpop.f32.mrf.mxu0
        %6730 = vmatprep.mubr.bf16.mxu0 %v6111
        %6731 = vmatmul.mubr.bf16.gmra.mxu0 %v5834
        %v6732 = vpop.f32.mrf.mxu0
        %v6733 = vadd.f32 0.0, %v6732
        %v6734 = vpop.f32.mrf.mxu0
        %v6735 = vpop.f32.mrf.mxu0
        %v6736 = vadd.f32 0.0, %v6735
        %v6737 = vpop.f32.mrf.mxu0
        %6738 = vmatprep.mubr.bf16.mxu0 %v6160
        %6739 = vmatmul.mubr.bf16.gmra.mxu0 %v5883
        %v6740 = vpop.f32.mrf.mxu0
        %v6741 = vadd.f32 0.0, %v6740
        %v6742 = vpop.f32.mrf.mxu0
        %v6743 = vpop.f32.mrf.mxu0
        %v6744 = vadd.f32 0.0, %v6743
        %v6745 = vpop.f32.mrf.mxu0
        %6746 = vmatprep.mubr.bf16.mxu0 %v6175
        %6747 = vmatmul.mubr.bf16.gmra.mxu0 %v5898
        %v6748 = vpop.f32.mrf.mxu0
        %v6749 = vadd.f32 0.0, %v6748
        %v6750 = vpop.f32.mrf.mxu0
        %v6751 = vpop.f32.mrf.mxu0
        %v6752 = vpop.f32.mrf.mxu0
        %6753 = vdwg.mxu0
        %6754 = vmatprep.subr.bf16.mxu0 0
        %6755 = vmatpush1.bf16.msra.mxu0 %v6601
        %6756 = vmatprep.subr.bf16.mxu0 0
        %6757 = vmatpush1.bf16.msra.mxu0 %v6600
        %6758 = vmatprep.subr.bf16.mxu0 0
        %6759 = vmatpush1.bf16.msra.mxu0 %v6599
        %6760 = vmatprep.subr.bf16.mxu0 0
        %6761 = vmatpush1.bf16.msra.mxu0 %v6598
        %6762 = vmatprep.subr.bf16.mxu0 0
        %6763 = vmatpush1.bf16.msra.mxu0 %v6597
        %6764 = vmatprep.subr.bf16.mxu0 0
        %6765 = vmatpush1.bf16.msra.mxu0 %v6596
        %6766 = vmatprep.subr.bf16.mxu0 0
        %6767 = vmatpush1.bf16.msra.mxu0 %v6595
        %6768 = vmatprep.subr.bf16.mxu0 0
        %6769 = vmatpush1.bf16.msra.mxu0 %v6594
        %6770 = vmatprep.subr.bf16.mxu0 0
        %6771 = vmatpush2.bf16.msra.mxu0 0
        %6772 = vmatprep.subr.bf16.mxu0 0
        %6773 = vmatpush2.bf16.msra.mxu0 0
        %6774 = vmatprep.subr.bf16.mxu0 0
        %6775 = vmatpush2.bf16.msra.mxu0 0
        %6776 = vmatprep.subr.bf16.mxu0 0
        %6777 = vmatpush2.bf16.msra.mxu0 0
        %6778 = vmatprep.subr.bf16.mxu0 0
        %6779 = vmatpush2.bf16.msra.mxu0 0
        %6780 = vmatprep.subr.bf16.mxu0 0
        %6781 = vmatpush2.bf16.msra.mxu0 0
        %6782 = vmatprep.subr.bf16.mxu0 0
        %6783 = vmatpush2.bf16.msra.mxu0 0
        %6784 = vmatprep.subr.bf16.mxu0 0
        %6785 = vmatpush2.bf16.msra.mxu0 0
        %6786 = vmatprep.mubr.bf16.mxu0 0
        %6787 = vmatmul.mubr.bf16.gmra.mxu0 %v6204
        %v6788 = vpop.f32.mrf.mxu0
        %v6789 = vadd.f32 %v6661, %v6788
        %v6790 = vpop.f32.mrf.mxu0
        %v6791 = vpop.f32.mrf.mxu0
        %v6792 = vadd.f32 %v6664, %v6791
        %v6793 = vpop.f32.mrf.mxu0
        %6794 = vmatprep.mubr.bf16.mxu0 0
        %6795 = vmatmul.mubr.bf16.gmra.mxu0 %v6221
        %v6796 = vpop.f32.mrf.mxu0
        %v6797 = vadd.f32 %v6669, %v6796
        %v6798 = vpop.f32.mrf.mxu0
        %v6799 = vpop.f32.mrf.mxu0
        %v6800 = vadd.f32 %v6672, %v6799
        %v6801 = vpop.f32.mrf.mxu0
        %6802 = vmatprep.mubr.bf16.mxu0 0
        %6803 = vmatmul.mubr.bf16.gmra.mxu0 %v6238
        %v6804 = vpop.f32.mrf.mxu0
        %v6805 = vadd.f32 %v6677, %v6804
        %v6806 = vpop.f32.mrf.mxu0
        %v6807 = vpop.f32.mrf.mxu0
        %v6808 = vadd.f32 %v6680, %v6807
        %v6809 = vpop.f32.mrf.mxu0
        %6810 = vmatprep.mubr.bf16.mxu0 0
        %6811 = vmatmul.mubr.bf16.gmra.mxu0 %v6255
        %v6812 = vpop.f32.mrf.mxu0
        %v6813 = vadd.f32 %v6685, %v6812
        %v6814 = vpop.f32.mrf.mxu0
        %v6815 = vpop.f32.mrf.mxu0
        %v6816 = vadd.f32 %v6688, %v6815
        %v6817 = vpop.f32.mrf.mxu0
        %6818 = vmatprep.mubr.bf16.mxu0 0
        %6819 = vmatmul.mubr.bf16.gmra.mxu0 %v6272
        %v6820 = vpop.f32.mrf.mxu0
        %v6821 = vadd.f32 %v6693, %v6820
        %v6822 = vpop.f32.mrf.mxu0
        %v6823 = vpop.f32.mrf.mxu0
        %v6824 = vadd.f32 %v6696, %v6823
        %v6825 = vpop.f32.mrf.mxu0
        %6826 = vmatprep.mubr.bf16.mxu0 0
        %6827 = vmatmul.mubr.bf16.gmra.mxu0 %v6289
        %v6828 = vpop.f32.mrf.mxu0
        %v6829 = vadd.f32 %v6701, %v6828
        %v6830 = vpop.f32.mrf.mxu0
        %v6831 = vpop.f32.mrf.mxu0
        %v6832 = vadd.f32 %v6704, %v6831
        %v6833 = vpop.f32.mrf.mxu0
        %6834 = vmatprep.mubr.bf16.mxu0 0
        %6835 = vmatmul.mubr.bf16.gmra.mxu0 %v6306
        %v6836 = vpop.f32.mrf.mxu0
        %v6837 = vadd.f32 %v6709, %v6836
        %v6838 = vpop.f32.mrf.mxu0
        %v6839 = vpop.f32.mrf.mxu0
        %v6840 = vadd.f32 %v6712, %v6839
        %v6841 = vpop.f32.mrf.mxu0
        %6842 = vmatprep.mubr.bf16.mxu0 0
        %6843 = vmatmul.mubr.bf16.gmra.mxu0 %v6323
        %v6844 = vpop.f32.mrf.mxu0
        %v6845 = vadd.f32 %v6717, %v6844
        %v6846 = vpop.f32.mrf.mxu0
        %v6847 = vpop.f32.mrf.mxu0
        %v6848 = vadd.f32 %v6720, %v6847
        %v6849 = vpop.f32.mrf.mxu0
        %6850 = vmatprep.mubr.bf16.mxu0 0
        %6851 = vmatmul.mubr.bf16.gmra.mxu0 %v6340
        %v6852 = vpop.f32.mrf.mxu0
        %v6853 = vadd.f32 %v6725, %v6852
        %v6854 = vpop.f32.mrf.mxu0
        %v6855 = vpop.f32.mrf.mxu0
        %v6856 = vadd.f32 %v6728, %v6855
        %v6857 = vpop.f32.mrf.mxu0
        %6858 = vmatprep.mubr.bf16.mxu0 0
        %6859 = vmatmul.mubr.bf16.gmra.mxu0 %v6357
        %v6860 = vpop.f32.mrf.mxu0
        %v6861 = vadd.f32 %v6733, %v6860
        %v6862 = vpop.f32.mrf.mxu0
        %v6863 = vpop.f32.mrf.mxu0
        %v6864 = vadd.f32 %v6736, %v6863
        %v6865 = vpop.f32.mrf.mxu0
        %6866 = vmatprep.mubr.bf16.mxu0 0
        %6867 = vmatmul.mubr.bf16.gmra.mxu0 %v6406
        %v6868 = vpop.f32.mrf.mxu0
        %v6869 = vadd.f32 %v6741, %v6868
        %v6870 = vpop.f32.mrf.mxu0
        %v6871 = vpop.f32.mrf.mxu0
        %v6872 = vadd.f32 %v6744, %v6871
        %v6873 = vpop.f32.mrf.mxu0
        %6874 = vmatprep.mubr.bf16.mxu0 0
        %6875 = vmatmul.mubr.bf16.gmra.mxu0 %v6421
        %v6876 = vpop.f32.mrf.mxu0
        %v6877 = vadd.f32 %v6749, %v6876
        %v6878 = vpop.f32.mrf.mxu0
        %v6879 = vpop.f32.mrf.mxu0
        %v6880 = vpop.f32.mrf.mxu0
        %6881 = vdwg.mxu0
        %v6882 = vadd.f32 %v5507, %v6789
        %v6883 = vadd.f32 %v5510, %v6792
        %v6884 = vadd.f32 %v5515, %v6797
        %v6885 = vadd.f32 %v5518, %v6800
        %v6886 = vadd.f32 %v5523, %v6805
        %v6887 = vadd.f32 %v5526, %v6808
        %v6888 = vadd.f32 %v5531, %v6813
        %v6889 = vadd.f32 %v5534, %v6816
        %v6890 = vadd.f32 %v5539, %v6821
        %v6891 = vadd.f32 %v5542, %v6824
        %v6892 = vadd.f32 %v5547, %v6829
        %v6893 = vadd.f32 %v5550, %v6832
        %v6894 = vadd.f32 %v5555, %v6837
        %v6895 = vadd.f32 %v5558, %v6840
        %v6896 = vadd.f32 %v5563, %v6845
        %v6897 = vadd.f32 %v5566, %v6848
        %v6898 = vadd.f32 %v5571, %v6853
        %v6899 = vadd.f32 %v5574, %v6856
        %v6900 = vadd.f32 %v5579, %v6861
        %v6901 = vadd.f32 %v5582, %v6864
        %v6902 = vadd.f32 %v5587, %v6869
        %v6903 = vadd.f32 %v5590, %v6872
        %v6904 = vadd.f32 %v5595, %v6877
        %v6905 = vld [vmem:[%s2] sm:$0x1]
        %v6907 = vlaneseq
        %v6908 = vshrl.u32 %v6907, 7
        %v6909 = vsub.s32 0, %v6908
        %v6910 = vrot.slane %v6905, %v6909
        %v6912 = vadd.f32 %v6882, %v6910
        %v6913 = vadd.f32 %v6883, %v6910
        %v6914 = vadd.f32 %v6884, %v6910
        %v6915 = vadd.f32 %v6885, %v6910
        %v6916 = vadd.f32 %v6886, %v6910
        %v6917 = vadd.f32 %v6887, %v6910
        %v6918 = vadd.f32 %v6888, %v6910
        %v6919 = vadd.f32 %v6889, %v6910
        %v6920 = vadd.f32 %v6890, %v6910
        %v6921 = vadd.f32 %v6891, %v6910
        %v6922 = vadd.f32 %v6892, %v6910
        %v6923 = vadd.f32 %v6893, %v6910
        %v6924 = vadd.f32 %v6894, %v6910
        %v6925 = vadd.f32 %v6895, %v6910
        %v6926 = vadd.f32 %v6896, %v6910
        %v6927 = vadd.f32 %v6897, %v6910
        %v6928 = vadd.f32 %v6898, %v6910
        %v6929 = vadd.f32 %v6899, %v6910
        %v6930 = vadd.f32 %v6900, %v6910
        %v6931 = vadd.f32 %v6901, %v6910
        %v6932 = vadd.f32 %v6902, %v6910
        %v6933 = vadd.f32 %v6903, %v6910
        %v6934 = vadd.f32 %v6904, %v6910
        %v6935 = vmax.f32 %v6912, 0.0
        %v6936 = vmax.f32 %v6913, 0.0
        %v6937 = vmax.f32 %v6914, 0.0
        %v6938 = vmax.f32 %v6915, 0.0
        %v6939 = vmax.f32 %v6916, 0.0
        %v6940 = vmax.f32 %v6917, 0.0
        %v6941 = vmax.f32 %v6918, 0.0
        %v6942 = vmax.f32 %v6919, 0.0
        %v6943 = vmax.f32 %v6920, 0.0
        %v6944 = vmax.f32 %v6921, 0.0
        %v6945 = vmax.f32 %v6922, 0.0
        %v6946 = vmax.f32 %v6923, 0.0
        %v6947 = vmax.f32 %v6924, 0.0
        %v6948 = vmax.f32 %v6925, 0.0
        %v6949 = vmax.f32 %v6926, 0.0
        %v6950 = vmax.f32 %v6927, 0.0
        %v6951 = vmax.f32 %v6928, 0.0
        %v6952 = vmax.f32 %v6929, 0.0
        %v6953 = vmax.f32 %v6930, 0.0
        %v6954 = vmax.f32 %v6931, 0.0
        %v6955 = vmax.f32 %v6932, 0.0
        %v6956 = vmax.f32 %v6933, 0.0
        %v6957 = vmax.f32 %v6934, 0.0
        %v6981 = vcombine.high %v6935, %v6935
        %v6983 = vunpack.c.l.s4 1983009808
        %v6984 = vunpack.c.0.s8 %v6983
        %v6985 = vlaneseq
        %v6986 = vshrl.u32 %v6985, 7
        %v6987 = vsub.s32 %v6984, %v6986
        %v6988 = vrot.slane %v6935, %v6987
        %v6990 = vunpack.c.l.s4 1983009808
        %v6991 = vunpack.c.0.s8 %v6990
        %v6992 = vlaneseq
        %v6993 = vshrl.u32 %v6992, 7
        %v6994 = vsub.s32 %v6991, %v6993
        %v6995 = vrot.slane %v6981, %v6994
        %v6996 = vcombine.high %v6988, %v6988
        %v6997 = vcombine.high %v6995, %v6995
        %v6998 = vcombine.high %v6936, %v6936
        %v7000 = vunpack.c.l.s4 1983009808
        %v7001 = vunpack.c.0.s8 %v7000
        %v7002 = vlaneseq
        %v7003 = vshrl.u32 %v7002, 7
        %v7004 = vsub.s32 %v7001, %v7003
        %v7005 = vrot.slane %v6936, %v7004
        %v7007 = vunpack.c.l.s4 1983009808
        %v7008 = vunpack.c.0.s8 %v7007
        %v7009 = vlaneseq
        %v7010 = vshrl.u32 %v7009, 7
        %v7011 = vsub.s32 %v7008, %v7010
        %v7012 = vrot.slane %v6998, %v7011
        %v7013 = vcombine.high %v7005, %v7005
        %v7014 = vcombine.high %v7012, %v7012
        %v7015 = vcombine.high %v6937, %v6937
        %v7017 = vunpack.c.l.s4 1983009808
        %v7018 = vunpack.c.0.s8 %v7017
        %v7019 = vlaneseq
        %v7020 = vshrl.u32 %v7019, 7
        %v7021 = vsub.s32 %v7018, %v7020
        %v7022 = vrot.slane %v6937, %v7021
        %v7024 = vunpack.c.l.s4 1983009808
        %v7025 = vunpack.c.0.s8 %v7024
        %v7026 = vlaneseq
        %v7027 = vshrl.u32 %v7026, 7
        %v7028 = vsub.s32 %v7025, %v7027
        %v7029 = vrot.slane %v7015, %v7028
        %v7030 = vcombine.high %v7022, %v7022
        %v7031 = vcombine.high %v7029, %v7029
        %v7032 = vcombine.high %v6938, %v6938
        %v7034 = vunpack.c.l.s4 1983009808
        %v7035 = vunpack.c.0.s8 %v7034
        %v7036 = vlaneseq
        %v7037 = vshrl.u32 %v7036, 7
        %v7038 = vsub.s32 %v7035, %v7037
        %v7039 = vrot.slane %v6938, %v7038
        %v7041 = vunpack.c.l.s4 1983009808
        %v7042 = vunpack.c.0.s8 %v7041
        %v7043 = vlaneseq
        %v7044 = vshrl.u32 %v7043, 7
        %v7045 = vsub.s32 %v7042, %v7044
        %v7046 = vrot.slane %v7032, %v7045
        %v7047 = vcombine.high %v7039, %v7039
        %v7048 = vcombine.high %v7046, %v7046
        %v7049 = vcombine.high %v6939, %v6939
        %v7051 = vunpack.c.l.s4 1983009808
        %v7052 = vunpack.c.0.s8 %v7051
        %v7053 = vlaneseq
        %v7054 = vshrl.u32 %v7053, 7
        %v7055 = vsub.s32 %v7052, %v7054
        %v7056 = vrot.slane %v6939, %v7055
        %v7058 = vunpack.c.l.s4 1983009808
        %v7059 = vunpack.c.0.s8 %v7058
        %v7060 = vlaneseq
        %v7061 = vshrl.u32 %v7060, 7
        %v7062 = vsub.s32 %v7059, %v7061
        %v7063 = vrot.slane %v7049, %v7062
        %v7064 = vcombine.high %v7056, %v7056
        %v7065 = vcombine.high %v7063, %v7063
        %v7066 = vcombine.high %v6940, %v6940
        %v7068 = vunpack.c.l.s4 1983009808
        %v7069 = vunpack.c.0.s8 %v7068
        %v7070 = vlaneseq
        %v7071 = vshrl.u32 %v7070, 7
        %v7072 = vsub.s32 %v7069, %v7071
        %v7073 = vrot.slane %v6940, %v7072
        %v7075 = vunpack.c.l.s4 1983009808
        %v7076 = vunpack.c.0.s8 %v7075
        %v7077 = vlaneseq
        %v7078 = vshrl.u32 %v7077, 7
        %v7079 = vsub.s32 %v7076, %v7078
        %v7080 = vrot.slane %v7066, %v7079
        %v7081 = vcombine.high %v7073, %v7073
        %v7082 = vcombine.high %v7080, %v7080
        %v7083 = vcombine.high %v6941, %v6941
        %v7085 = vunpack.c.l.s4 1983009808
        %v7086 = vunpack.c.0.s8 %v7085
        %v7087 = vlaneseq
        %v7088 = vshrl.u32 %v7087, 7
        %v7089 = vsub.s32 %v7086, %v7088
        %v7090 = vrot.slane %v6941, %v7089
        %v7092 = vunpack.c.l.s4 1983009808
        %v7093 = vunpack.c.0.s8 %v7092
        %v7094 = vlaneseq
        %v7095 = vshrl.u32 %v7094, 7
        %v7096 = vsub.s32 %v7093, %v7095
        %v7097 = vrot.slane %v7083, %v7096
        %v7098 = vcombine.high %v7090, %v7090
        %v7099 = vcombine.high %v7097, %v7097
        %v7100 = vcombine.high %v6942, %v6942
        %v7102 = vunpack.c.l.s4 1983009808
        %v7103 = vunpack.c.0.s8 %v7102
        %v7104 = vlaneseq
        %v7105 = vshrl.u32 %v7104, 7
        %v7106 = vsub.s32 %v7103, %v7105
        %v7107 = vrot.slane %v6942, %v7106
        %v7109 = vunpack.c.l.s4 1983009808
        %v7110 = vunpack.c.0.s8 %v7109
        %v7111 = vlaneseq
        %v7112 = vshrl.u32 %v7111, 7
        %v7113 = vsub.s32 %v7110, %v7112
        %v7114 = vrot.slane %v7100, %v7113
        %v7115 = vcombine.high %v7107, %v7107
        %v7116 = vcombine.high %v7114, %v7114
        %v7117 = vcombine.high %v6943, %v6943
        %v7119 = vunpack.c.l.s4 1983009808
        %v7120 = vunpack.c.0.s8 %v7119
        %v7121 = vlaneseq
        %v7122 = vshrl.u32 %v7121, 7
        %v7123 = vsub.s32 %v7120, %v7122
        %v7124 = vrot.slane %v6943, %v7123
        %v7126 = vunpack.c.l.s4 1983009808
        %v7127 = vunpack.c.0.s8 %v7126
        %v7128 = vlaneseq
        %v7129 = vshrl.u32 %v7128, 7
        %v7130 = vsub.s32 %v7127, %v7129
        %v7131 = vrot.slane %v7117, %v7130
        %v7132 = vcombine.high %v7124, %v7124
        %v7133 = vcombine.high %v7131, %v7131
        %v7134 = vcombine.high %v6944, %v6944
        %v7136 = vunpack.c.l.s4 1983009808
        %v7137 = vunpack.c.0.s8 %v7136
        %v7138 = vlaneseq
        %v7139 = vshrl.u32 %v7138, 7
        %v7140 = vsub.s32 %v7137, %v7139
        %v7141 = vrot.slane %v6944, %v7140
        %v7143 = vunpack.c.l.s4 1983009808
        %v7144 = vunpack.c.0.s8 %v7143
        %v7145 = vlaneseq
        %v7146 = vshrl.u32 %v7145, 7
        %v7147 = vsub.s32 %v7144, %v7146
        %v7148 = vrot.slane %v7134, %v7147
        %v7149 = vcombine.high %v7141, %v7141
        %v7150 = vcombine.high %v7148, %v7148
        %v7151 = vcombine.high %v6945, %v6945
        %v7153 = vunpack.c.l.s4 1983009808
        %v7154 = vunpack.c.0.s8 %v7153
        %v7155 = vlaneseq
        %v7156 = vshrl.u32 %v7155, 7
        %v7157 = vsub.s32 %v7154, %v7156
        %v7158 = vrot.slane %v6945, %v7157
        %v7160 = vunpack.c.l.s4 1983009808
        %v7161 = vunpack.c.0.s8 %v7160
        %v7162 = vlaneseq
        %v7163 = vshrl.u32 %v7162, 7
        %v7164 = vsub.s32 %v7161, %v7163
        %v7165 = vrot.slane %v7151, %v7164
        %v7166 = vcombine.high %v7158, %v7158
        %v7167 = vcombine.high %v7165, %v7165
        %v7168 = vcombine.high %v6946, %v6946
        %v7170 = vunpack.c.l.s4 1983009808
        %v7171 = vunpack.c.0.s8 %v7170
        %v7172 = vlaneseq
        %v7173 = vshrl.u32 %v7172, 7
        %v7174 = vsub.s32 %v7171, %v7173
        %v7175 = vrot.slane %v6946, %v7174
        %v7177 = vunpack.c.l.s4 1983009808
        %v7178 = vunpack.c.0.s8 %v7177
        %v7179 = vlaneseq
        %v7180 = vshrl.u32 %v7179, 7
        %v7181 = vsub.s32 %v7178, %v7180
        %v7182 = vrot.slane %v7168, %v7181
        %v7183 = vcombine.high %v7175, %v7175
        %v7184 = vcombine.high %v7182, %v7182
        %v7185 = vcombine.high %v6947, %v6947
        %v7187 = vunpack.c.l.s4 1983009808
        %v7188 = vunpack.c.0.s8 %v7187
        %v7189 = vlaneseq
        %v7190 = vshrl.u32 %v7189, 7
        %v7191 = vsub.s32 %v7188, %v7190
        %v7192 = vrot.slane %v6947, %v7191
        %v7194 = vunpack.c.l.s4 1983009808
        %v7195 = vunpack.c.0.s8 %v7194
        %v7196 = vlaneseq
        %v7197 = vshrl.u32 %v7196, 7
        %v7198 = vsub.s32 %v7195, %v7197
        %v7199 = vrot.slane %v7185, %v7198
        %v7200 = vcombine.high %v7192, %v7192
        %v7201 = vcombine.high %v7199, %v7199
        %v7202 = vcombine.high %v6948, %v6948
        %v7204 = vunpack.c.l.s4 1983009808
        %v7205 = vunpack.c.0.s8 %v7204
        %v7206 = vlaneseq
        %v7207 = vshrl.u32 %v7206, 7
        %v7208 = vsub.s32 %v7205, %v7207
        %v7209 = vrot.slane %v6948, %v7208
        %v7211 = vunpack.c.l.s4 1983009808
        %v7212 = vunpack.c.0.s8 %v7211
        %v7213 = vlaneseq
        %v7214 = vshrl.u32 %v7213, 7
        %v7215 = vsub.s32 %v7212, %v7214
        %v7216 = vrot.slane %v7202, %v7215
        %v7217 = vcombine.high %v7209, %v7209
        %v7218 = vcombine.high %v7216, %v7216
        %v7219 = vcombine.high %v6949, %v6949
        %v7221 = vunpack.c.l.s4 1983009808
        %v7222 = vunpack.c.0.s8 %v7221
        %v7223 = vlaneseq
        %v7224 = vshrl.u32 %v7223, 7
        %v7225 = vsub.s32 %v7222, %v7224
        %v7226 = vrot.slane %v6949, %v7225
        %v7228 = vunpack.c.l.s4 1983009808
        %v7229 = vunpack.c.0.s8 %v7228
        %v7230 = vlaneseq
        %v7231 = vshrl.u32 %v7230, 7
        %v7232 = vsub.s32 %v7229, %v7231
        %v7233 = vrot.slane %v7219, %v7232
        %v7234 = vcombine.high %v7226, %v7226
        %v7235 = vcombine.high %v7233, %v7233
        %v7236 = vcombine.high %v6950, %v6950
        %v7238 = vunpack.c.l.s4 1983009808
        %v7239 = vunpack.c.0.s8 %v7238
        %v7240 = vlaneseq
        %v7241 = vshrl.u32 %v7240, 7
        %v7242 = vsub.s32 %v7239, %v7241
        %v7243 = vrot.slane %v6950, %v7242
        %v7245 = vunpack.c.l.s4 1983009808
        %v7246 = vunpack.c.0.s8 %v7245
        %v7247 = vlaneseq
        %v7248 = vshrl.u32 %v7247, 7
        %v7249 = vsub.s32 %v7246, %v7248
        %v7250 = vrot.slane %v7236, %v7249
        %v7251 = vcombine.high %v7243, %v7243
        %v7252 = vcombine.high %v7250, %v7250
        %v7253 = vcombine.high %v6951, %v6951
        %v7255 = vunpack.c.l.s4 1983009808
        %v7256 = vunpack.c.0.s8 %v7255
        %v7257 = vlaneseq
        %v7258 = vshrl.u32 %v7257, 7
        %v7259 = vsub.s32 %v7256, %v7258
        %v7260 = vrot.slane %v6951, %v7259
        %v7262 = vunpack.c.l.s4 1983009808
        %v7263 = vunpack.c.0.s8 %v7262
        %v7264 = vlaneseq
        %v7265 = vshrl.u32 %v7264, 7
        %v7266 = vsub.s32 %v7263, %v7265
        %v7267 = vrot.slane %v7253, %v7266
        %v7268 = vcombine.high %v7260, %v7260
        %v7269 = vcombine.high %v7267, %v7267
        %v7270 = vcombine.high %v6952, %v6952
        %v7272 = vunpack.c.l.s4 1983009808
        %v7273 = vunpack.c.0.s8 %v7272
        %v7274 = vlaneseq
        %v7275 = vshrl.u32 %v7274, 7
        %v7276 = vsub.s32 %v7273, %v7275
        %v7277 = vrot.slane %v6952, %v7276
        %v7279 = vunpack.c.l.s4 1983009808
        %v7280 = vunpack.c.0.s8 %v7279
        %v7281 = vlaneseq
        %v7282 = vshrl.u32 %v7281, 7
        %v7283 = vsub.s32 %v7280, %v7282
        %v7284 = vrot.slane %v7270, %v7283
        %v7285 = vcombine.high %v7277, %v7277
        %v7286 = vcombine.high %v7284, %v7284
        %v7287 = vcombine.high %v6953, %v6953
        %v7289 = vunpack.c.l.s4 1983009808
        %v7290 = vunpack.c.0.s8 %v7289
        %v7291 = vlaneseq
        %v7292 = vshrl.u32 %v7291, 7
        %v7293 = vsub.s32 %v7290, %v7292
        %v7294 = vrot.slane %v6953, %v7293
        %v7296 = vunpack.c.l.s4 1983009808
        %v7297 = vunpack.c.0.s8 %v7296
        %v7298 = vlaneseq
        %v7299 = vshrl.u32 %v7298, 7
        %v7300 = vsub.s32 %v7297, %v7299
        %v7301 = vrot.slane %v7287, %v7300
        %v7302 = vcombine.high %v7294, %v7294
        %v7303 = vcombine.high %v7301, %v7301
        %v7304 = vcombine.high %v6954, %v6954
        %v7306 = vunpack.c.l.s4 1983009808
        %v7307 = vunpack.c.0.s8 %v7306
        %v7308 = vlaneseq
        %v7309 = vshrl.u32 %v7308, 7
        %v7310 = vsub.s32 %v7307, %v7309
        %v7311 = vrot.slane %v6954, %v7310
        %v7313 = vunpack.c.l.s4 1983009808
        %v7314 = vunpack.c.0.s8 %v7313
        %v7315 = vlaneseq
        %v7316 = vshrl.u32 %v7315, 7
        %v7317 = vsub.s32 %v7314, %v7316
        %v7318 = vrot.slane %v7304, %v7317
        %v7319 = vcombine.high %v7311, %v7311
        %v7320 = vcombine.high %v7318, %v7318
        %v7321 = vcombine.high %v6955, %v6955
        %v7323 = vunpack.c.l.s4 1983009808
        %v7324 = vunpack.c.0.s8 %v7323
        %v7325 = vlaneseq
        %v7326 = vshrl.u32 %v7325, 7
        %v7327 = vsub.s32 %v7324, %v7326
        %v7328 = vrot.slane %v6955, %v7327
        %v7330 = vunpack.c.l.s4 1983009808
        %v7331 = vunpack.c.0.s8 %v7330
        %v7332 = vlaneseq
        %v7333 = vshrl.u32 %v7332, 7
        %v7334 = vsub.s32 %v7331, %v7333
        %v7335 = vrot.slane %v7321, %v7334
        %v7336 = vcombine.high %v7328, %v7328
        %v7337 = vcombine.high %v7335, %v7335
        %v7338 = vcombine.high %v6956, %v6956
        %v7340 = vunpack.c.l.s4 1983009808
        %v7341 = vunpack.c.0.s8 %v7340
        %v7342 = vlaneseq
        %v7343 = vshrl.u32 %v7342, 7
        %v7344 = vsub.s32 %v7341, %v7343
        %v7345 = vrot.slane %v6956, %v7344
        %v7347 = vunpack.c.l.s4 1983009808
        %v7348 = vunpack.c.0.s8 %v7347
        %v7349 = vlaneseq
        %v7350 = vshrl.u32 %v7349, 7
        %v7351 = vsub.s32 %v7348, %v7350
        %v7352 = vrot.slane %v7338, %v7351
        %v7353 = vcombine.high %v7345, %v7345
        %v7354 = vcombine.high %v7352, %v7352
        %v7356 = vunpack.c.l.s4 1983009808
        %v7357 = vunpack.c.0.s8 %v7356
        %v7358 = vlaneseq
        %v7359 = vshrl.u32 %v7358, 7
        %v7360 = vsub.s32 %v7357, %v7359
        %v7361 = vrot.slane %v6957, %v7360
        %v7362 = vcombine.high %v7361, %v7361
        %v7363 = vlaneseq
        %v7364 = vshrl.u32 %v7363, 7
        %v7365 = vadd.s32 %v7364, 8
        %v7366 = vadd.s32 %v7364, 16
        %vm7367 = vcmp.gt.s32.totalorder %v7364, 0
        %vm7368 = vcmp.gt.s32.totalorder %v7365, 0
        %vm7369 = vcmp.gt.s32.totalorder %v7366, 0
        %vm7370 = vcmp.lt.s32.totalorder %v7364, 17
        %vm7371 = vcmp.lt.s32.totalorder %v7365, 17
        %vm7372 = vcmp.lt.s32.totalorder %v7366, 17
        %vm7373 = vmand %vm7367, %vm7370
        %vm7374 = vmand %vm7368, %vm7371
        %vm7375 = vmand %vm7369, %vm7372
        %p7376 = scmp.ne.s32.totalorder %s26, 0
        %s7377 = scalar_select %p7376, 1, 0
        %v7378 = vstv %s7377
        %vm7379 = vcmp.eq.s32.totalorder %v7378, 1
        %vm7380 = vmand %vm7373, %vm7379
        %vm7381 = vmand %vm7374, %vm7379
        %vm7382 = vmand %vm7375, %vm7379
        %vm7383 = vmand %vm7373, 1
        %vm7384 = vmand %vm7374, 1
        %vm7385 = vmand %vm7375, 1
        %p7386 = scmp.ne.s32.totalorder %s26, 1
        %s7387 = scalar_select %p7386, 1, 0
        %v7388 = vstv %s7387
        %vm7389 = vcmp.eq.s32.totalorder %v7388, 1
        %vm7390 = vmand %vm7380, 1
        %vm7391 = vmand %vm7381, 1
        %vm7392 = vmand %vm7382, 1
        %vm7393 = vmand %vm7383, %vm7389
        %vm7394 = vmand %vm7384, %vm7389
        %vm7395 = vmand %vm7385, %vm7389
        %v7396 = vsel %vm7390, 1, 0
        %v7397 = vsel %vm7391, 1, 0
        %v7398 = vsel %vm7392, 1, 0
        %v7399 = vsel %vm7383, 1, 0
        %v7400 = vsel %vm7384, 1, 0
        %v7401 = vsel %vm7385, 1, 0
        %v7402 = vsel %vm7393, 1, 0
        %v7403 = vsel %vm7394, 1, 0
        %v7404 = vsel %vm7395, 1, 0
        %vm7405 = vcmp.eq.s32.totalorder %v7396, 1
        %vm7406 = vcmp.eq.s32.totalorder %v7397, 1
        %vm7407 = vcmp.eq.s32.totalorder %v7398, 1
        %vm7408 = vcmp.eq.s32.totalorder %v7399, 1
        %vm7409 = vcmp.eq.s32.totalorder %v7400, 1
        %vm7410 = vcmp.eq.s32.totalorder %v7401, 1
        %vm7411 = vcmp.eq.s32.totalorder %v7402, 1
        %vm7412 = vcmp.eq.s32.totalorder %v7403, 1
        %vm7413 = vcmp.eq.s32.totalorder %v7404, 1
        %v7414 = vcombine.low %v6988, %v6996
        %v7415 = vcombine.low %v6995, %v6997
        %v7417 = vunpack.c.l.s4 1983009808
        %v7418 = vunpack.c.0.s8 %v7417
        %v7419 = vlaneseq
        %v7420 = vshrl.u32 %v7419, 7
        %v7421 = vsub.s32 %v7418, %v7420
        %v7422 = vrot.slane %v7414, %v7421
        %v7424 = vunpack.c.l.s4 1983009808
        %v7425 = vunpack.c.0.s8 %v7424
        %v7426 = vlaneseq
        %v7427 = vshrl.u32 %v7426, 7
        %v7428 = vsub.s32 %v7425, %v7427
        %v7429 = vrot.slane %v7415, %v7428
        %v7430 = vcombine.low %v7422, %v7429
        %v7431 = vcombine.low %v7005, %v7013
        %v7432 = vcombine.low %v7012, %v7014
        %v7434 = vunpack.c.l.s4 1983009808
        %v7435 = vunpack.c.0.s8 %v7434
        %v7436 = vlaneseq
        %v7437 = vshrl.u32 %v7436, 7
        %v7438 = vsub.s32 %v7435, %v7437
        %v7439 = vrot.slane %v7431, %v7438
        %v7441 = vunpack.c.l.s4 1983009808
        %v7442 = vunpack.c.0.s8 %v7441
        %v7443 = vlaneseq
        %v7444 = vshrl.u32 %v7443, 7
        %v7445 = vsub.s32 %v7442, %v7444
        %v7446 = vrot.slane %v7432, %v7445
        %v7447 = vcombine.low %v7439, %v7446
        %v7449 = vunpack.c.l.s4 1983009808
        %v7450 = vunpack.c.0.s8 %v7449
        %v7451 = vlaneseq
        %v7452 = vshrl.u32 %v7451, 7
        %v7453 = vsub.s32 %v7450, %v7452
        %v7454 = vrot.slane %v7022, %v7453
        %v7455 = vcombine.low %v7030, %v7029
        %v7456 = vcombine.low %v7031, %v7039
        %v7458 = vunpack.c.l.s4 1983009808
        %v7459 = vunpack.c.0.s8 %v7458
        %v7460 = vlaneseq
        %v7461 = vshrl.u32 %v7460, 7
        %v7462 = vsub.s32 %v7459, %v7461
        %v7463 = vrot.slane %v7455, %v7462
        %v7465 = vunpack.c.l.s4 1983009808
        %v7466 = vunpack.c.0.s8 %v7465
        %v7467 = vlaneseq
        %v7468 = vshrl.u32 %v7467, 7
        %v7469 = vsub.s32 %v7466, %v7468
        %v7470 = vrot.slane %v7456, %v7469
        %v7471 = vcombine.low %v7463, %v7470
        %v7472 = vcombine.low %v7047, %v7046
        %v7473 = vcombine.low %v7048, %v7056
        %v7475 = vunpack.c.l.s4 1983009808
        %v7476 = vunpack.c.0.s8 %v7475
        %v7477 = vlaneseq
        %v7478 = vshrl.u32 %v7477, 7
        %v7479 = vsub.s32 %v7476, %v7478
        %v7480 = vrot.slane %v7472, %v7479
        %v7482 = vunpack.c.l.s4 1983009808
        %v7483 = vunpack.c.0.s8 %v7482
        %v7484 = vlaneseq
        %v7485 = vshrl.u32 %v7484, 7
        %v7486 = vsub.s32 %v7483, %v7485
        %v7487 = vrot.slane %v7473, %v7486
        %v7488 = vcombine.low %v7480, %v7487
        %v7490 = vunpack.c.l.s4 1983009808
        %v7491 = vunpack.c.0.s8 %v7490
        %v7492 = vlaneseq
        %v7493 = vshrl.u32 %v7492, 7
        %v7494 = vsub.s32 %v7491, %v7493
        %v7495 = vrot.slane %v7064, %v7494
        %v7496 = vcombine.low %v7063, %v7065
        %v7497 = vcombine.low %v7073, %v7081
        %v7499 = vunpack.c.l.s4 1983009808
        %v7500 = vunpack.c.0.s8 %v7499
        %v7501 = vlaneseq
        %v7502 = vshrl.u32 %v7501, 7
        %v7503 = vsub.s32 %v7500, %v7502
        %v7504 = vrot.slane %v7496, %v7503
        %v7506 = vunpack.c.l.s4 1983009808
        %v7507 = vunpack.c.0.s8 %v7506
        %v7508 = vlaneseq
        %v7509 = vshrl.u32 %v7508, 7
        %v7510 = vsub.s32 %v7507, %v7509
        %v7511 = vrot.slane %v7497, %v7510
        %v7512 = vcombine.low %v7504, %v7511
        %v7513 = vcombine.low %v7080, %v7082
        %v7514 = vcombine.low %v7090, %v7098
        %v7516 = vunpack.c.l.s4 1983009808
        %v7517 = vunpack.c.0.s8 %v7516
        %v7518 = vlaneseq
        %v7519 = vshrl.u32 %v7518, 7
        %v7520 = vsub.s32 %v7517, %v7519
        %v7521 = vrot.slane %v7513, %v7520
        %v7523 = vunpack.c.l.s4 1983009808
        %v7524 = vunpack.c.0.s8 %v7523
        %v7525 = vlaneseq
        %v7526 = vshrl.u32 %v7525, 7
        %v7527 = vsub.s32 %v7524, %v7526
        %v7528 = vrot.slane %v7514, %v7527
        %v7529 = vcombine.low %v7521, %v7528
        %v7531 = vunpack.c.l.s4 1983009808
        %v7532 = vunpack.c.0.s8 %v7531
        %v7533 = vlaneseq
        %v7534 = vshrl.u32 %v7533, 7
        %v7535 = vsub.s32 %v7532, %v7534
        %v7536 = vrot.slane %v7097, %v7535
        %v7537 = vcombine.low %v7099, %v7107
        %v7538 = vcombine.low %v7115, %v7114
        %v7540 = vunpack.c.l.s4 1983009808
        %v7541 = vunpack.c.0.s8 %v7540
        %v7542 = vlaneseq
        %v7543 = vshrl.u32 %v7542, 7
        %v7544 = vsub.s32 %v7541, %v7543
        %v7545 = vrot.slane %v7537, %v7544
        %v7547 = vunpack.c.l.s4 1983009808
        %v7548 = vunpack.c.0.s8 %v7547
        %v7549 = vlaneseq
        %v7550 = vshrl.u32 %v7549, 7
        %v7551 = vsub.s32 %v7548, %v7550
        %v7552 = vrot.slane %v7538, %v7551
        %v7553 = vcombine.low %v7545, %v7552
        %v7554 = vcombine.low %v7116, %v7124
        %v7555 = vcombine.low %v7132, %v7131
        %v7557 = vunpack.c.l.s4 1983009808
        %v7558 = vunpack.c.0.s8 %v7557
        %v7559 = vlaneseq
        %v7560 = vshrl.u32 %v7559, 7
        %v7561 = vsub.s32 %v7558, %v7560
        %v7562 = vrot.slane %v7554, %v7561
        %v7564 = vunpack.c.l.s4 1983009808
        %v7565 = vunpack.c.0.s8 %v7564
        %v7566 = vlaneseq
        %v7567 = vshrl.u32 %v7566, 7
        %v7568 = vsub.s32 %v7565, %v7567
        %v7569 = vrot.slane %v7555, %v7568
        %v7570 = vcombine.low %v7562, %v7569
        %v7572 = vunpack.c.l.s4 1983009808
        %v7573 = vunpack.c.0.s8 %v7572
        %v7574 = vlaneseq
        %v7575 = vshrl.u32 %v7574, 7
        %v7576 = vsub.s32 %v7573, %v7575
        %v7577 = vrot.slane %v7133, %v7576
        %v7578 = vcombine.low %v7141, %v7149
        %v7579 = vcombine.low %v7148, %v7150
        %v7581 = vunpack.c.l.s4 1983009808
        %v7582 = vunpack.c.0.s8 %v7581
        %v7583 = vlaneseq
        %v7584 = vshrl.u32 %v7583, 7
        %v7585 = vsub.s32 %v7582, %v7584
        %v7586 = vrot.slane %v7578, %v7585
        %v7588 = vunpack.c.l.s4 1983009808
        %v7589 = vunpack.c.0.s8 %v7588
        %v7590 = vlaneseq
        %v7591 = vshrl.u32 %v7590, 7
        %v7592 = vsub.s32 %v7589, %v7591
        %v7593 = vrot.slane %v7579, %v7592
        %v7594 = vcombine.low %v7586, %v7593
        %v7595 = vcombine.low %v7158, %v7166
        %v7596 = vcombine.low %v7165, %v7167
        %v7598 = vunpack.c.l.s4 1983009808
        %v7599 = vunpack.c.0.s8 %v7598
        %v7600 = vlaneseq
        %v7601 = vshrl.u32 %v7600, 7
        %v7602 = vsub.s32 %v7599, %v7601
        %v7603 = vrot.slane %v7595, %v7602
        %v7605 = vunpack.c.l.s4 1983009808
        %v7606 = vunpack.c.0.s8 %v7605
        %v7607 = vlaneseq
        %v7608 = vshrl.u32 %v7607, 7
        %v7609 = vsub.s32 %v7606, %v7608
        %v7610 = vrot.slane %v7596, %v7609
        %v7611 = vcombine.low %v7603, %v7610
        %v7613 = vunpack.c.l.s4 1983009808
        %v7614 = vunpack.c.0.s8 %v7613
        %v7615 = vlaneseq
        %v7616 = vshrl.u32 %v7615, 7
        %v7617 = vsub.s32 %v7614, %v7616
        %v7618 = vrot.slane %v7175, %v7617
        %v7619 = vcombine.low %v7183, %v7182
        %v7620 = vcombine.low %v7184, %v7192
        %v7622 = vunpack.c.l.s4 1983009808
        %v7623 = vunpack.c.0.s8 %v7622
        %v7624 = vlaneseq
        %v7625 = vshrl.u32 %v7624, 7
        %v7626 = vsub.s32 %v7623, %v7625
        %v7627 = vrot.slane %v7619, %v7626
        %v7629 = vunpack.c.l.s4 1983009808
        %v7630 = vunpack.c.0.s8 %v7629
        %v7631 = vlaneseq
        %v7632 = vshrl.u32 %v7631, 7
        %v7633 = vsub.s32 %v7630, %v7632
        %v7634 = vrot.slane %v7620, %v7633
        %v7635 = vcombine.low %v7627, %v7634
        %v7636 = vcombine.low %v7200, %v7199
        %v7637 = vcombine.low %v7201, %v7209
        %v7639 = vunpack.c.l.s4 1983009808
        %v7640 = vunpack.c.0.s8 %v7639
        %v7641 = vlaneseq
        %v7642 = vshrl.u32 %v7641, 7
        %v7643 = vsub.s32 %v7640, %v7642
        %v7644 = vrot.slane %v7636, %v7643
        %v7646 = vunpack.c.l.s4 1983009808
        %v7647 = vunpack.c.0.s8 %v7646
        %v7648 = vlaneseq
        %v7649 = vshrl.u32 %v7648, 7
        %v7650 = vsub.s32 %v7647, %v7649
        %v7651 = vrot.slane %v7637, %v7650
        %v7652 = vcombine.low %v7644, %v7651
        %v7654 = vunpack.c.l.s4 1983009808
        %v7655 = vunpack.c.0.s8 %v7654
        %v7656 = vlaneseq
        %v7657 = vshrl.u32 %v7656, 7
        %v7658 = vsub.s32 %v7655, %v7657
        %v7659 = vrot.slane %v7217, %v7658
        %v7660 = vcombine.low %v7216, %v7218
        %v7661 = vcombine.low %v7226, %v7234
        %v7663 = vunpack.c.l.s4 1983009808
        %v7664 = vunpack.c.0.s8 %v7663
        %v7665 = vlaneseq
        %v7666 = vshrl.u32 %v7665, 7
        %v7667 = vsub.s32 %v7664, %v7666
        %v7668 = vrot.slane %v7660, %v7667
        %v7670 = vunpack.c.l.s4 1983009808
        %v7671 = vunpack.c.0.s8 %v7670
        %v7672 = vlaneseq
        %v7673 = vshrl.u32 %v7672, 7
        %v7674 = vsub.s32 %v7671, %v7673
        %v7675 = vrot.slane %v7661, %v7674
        %v7676 = vcombine.low %v7668, %v7675
        %v7677 = vcombine.low %v7233, %v7235
        %v7678 = vcombine.low %v7243, %v7251
        %v7680 = vunpack.c.l.s4 1983009808
        %v7681 = vunpack.c.0.s8 %v7680
        %v7682 = vlaneseq
        %v7683 = vshrl.u32 %v7682, 7
        %v7684 = vsub.s32 %v7681, %v7683
        %v7685 = vrot.slane %v7677, %v7684
        %v7687 = vunpack.c.l.s4 1983009808
        %v7688 = vunpack.c.0.s8 %v7687
        %v7689 = vlaneseq
        %v7690 = vshrl.u32 %v7689, 7
        %v7691 = vsub.s32 %v7688, %v7690
        %v7692 = vrot.slane %v7678, %v7691
        %v7693 = vcombine.low %v7685, %v7692
        %v7695 = vunpack.c.l.s4 1983009808
        %v7696 = vunpack.c.0.s8 %v7695
        %v7697 = vlaneseq
        %v7698 = vshrl.u32 %v7697, 7
        %v7699 = vsub.s32 %v7696, %v7698
        %v7700 = vrot.slane %v7250, %v7699
        %v7701 = vcombine.low %v7252, %v7260
        %v7702 = vcombine.low %v7268, %v7267
        %v7704 = vunpack.c.l.s4 1983009808
        %v7705 = vunpack.c.0.s8 %v7704
        %v7706 = vlaneseq
        %v7707 = vshrl.u32 %v7706, 7
        %v7708 = vsub.s32 %v7705, %v7707
        %v7709 = vrot.slane %v7701, %v7708
        %v7711 = vunpack.c.l.s4 1983009808
        %v7712 = vunpack.c.0.s8 %v7711
        %v7713 = vlaneseq
        %v7714 = vshrl.u32 %v7713, 7
        %v7715 = vsub.s32 %v7712, %v7714
        %v7716 = vrot.slane %v7702, %v7715
        %v7717 = vcombine.low %v7709, %v7716
        %v7718 = vcombine.low %v7269, %v7277
        %v7719 = vcombine.low %v7285, %v7284
        %v7721 = vunpack.c.l.s4 1983009808
        %v7722 = vunpack.c.0.s8 %v7721
        %v7723 = vlaneseq
        %v7724 = vshrl.u32 %v7723, 7
        %v7725 = vsub.s32 %v7722, %v7724
        %v7726 = vrot.slane %v7718, %v7725
        %v7728 = vunpack.c.l.s4 1983009808
        %v7729 = vunpack.c.0.s8 %v7728
        %v7730 = vlaneseq
        %v7731 = vshrl.u32 %v7730, 7
        %v7732 = vsub.s32 %v7729, %v7731
        %v7733 = vrot.slane %v7719, %v7732
        %v7734 = vcombine.low %v7726, %v7733
        %v7736 = vunpack.c.l.s4 1983009808
        %v7737 = vunpack.c.0.s8 %v7736
        %v7738 = vlaneseq
        %v7739 = vshrl.u32 %v7738, 7
        %v7740 = vsub.s32 %v7737, %v7739
        %v7741 = vrot.slane %v7286, %v7740
        %v7742 = vcombine.low %v7294, %v7302
        %v7743 = vcombine.low %v7301, %v7303
        %v7745 = vunpack.c.l.s4 1983009808
        %v7746 = vunpack.c.0.s8 %v7745
        %v7747 = vlaneseq
        %v7748 = vshrl.u32 %v7747, 7
        %v7749 = vsub.s32 %v7746, %v7748
        %v7750 = vrot.slane %v7742, %v7749
        %v7752 = vunpack.c.l.s4 1983009808
        %v7753 = vunpack.c.0.s8 %v7752
        %v7754 = vlaneseq
        %v7755 = vshrl.u32 %v7754, 7
        %v7756 = vsub.s32 %v7753, %v7755
        %v7757 = vrot.slane %v7743, %v7756
        %v7758 = vcombine.low %v7750, %v7757
        %v7759 = vcombine.low %v7311, %v7319
        %v7760 = vcombine.low %v7318, %v7320
        %v7762 = vunpack.c.l.s4 1983009808
        %v7763 = vunpack.c.0.s8 %v7762
        %v7764 = vlaneseq
        %v7765 = vshrl.u32 %v7764, 7
        %v7766 = vsub.s32 %v7763, %v7765
        %v7767 = vrot.slane %v7759, %v7766
        %v7769 = vunpack.c.l.s4 1983009808
        %v7770 = vunpack.c.0.s8 %v7769
        %v7771 = vlaneseq
        %v7772 = vshrl.u32 %v7771, 7
        %v7773 = vsub.s32 %v7770, %v7772
        %v7774 = vrot.slane %v7760, %v7773
        %v7775 = vcombine.low %v7767, %v7774
        %v7777 = vunpack.c.l.s4 1983009808
        %v7778 = vunpack.c.0.s8 %v7777
        %v7779 = vlaneseq
        %v7780 = vshrl.u32 %v7779, 7
        %v7781 = vsub.s32 %v7778, %v7780
        %v7782 = vrot.slane %v7328, %v7781
        %v7783 = vcombine.low %v7336, %v7335
        %v7784 = vcombine.low %v7337, %v7345
        %v7786 = vunpack.c.l.s4 1983009808
        %v7787 = vunpack.c.0.s8 %v7786
        %v7788 = vlaneseq
        %v7789 = vshrl.u32 %v7788, 7
        %v7790 = vsub.s32 %v7787, %v7789
        %v7791 = vrot.slane %v7783, %v7790
        %v7793 = vunpack.c.l.s4 1983009808
        %v7794 = vunpack.c.0.s8 %v7793
        %v7795 = vlaneseq
        %v7796 = vshrl.u32 %v7795, 7
        %v7797 = vsub.s32 %v7794, %v7796
        %v7798 = vrot.slane %v7784, %v7797
        %v7799 = vcombine.low %v7791, %v7798
        %v7800 = vcombine.low %v7353, %v7352
        %v7801 = vcombine.low %v7354, %v7361
        %v7803 = vunpack.c.l.s4 1983009808
        %v7804 = vunpack.c.0.s8 %v7803
        %v7805 = vlaneseq
        %v7806 = vshrl.u32 %v7805, 7
        %v7807 = vsub.s32 %v7804, %v7806
        %v7808 = vrot.slane %v7800, %v7807
        %v7810 = vunpack.c.l.s4 1983009808
        %v7811 = vunpack.c.0.s8 %v7810
        %v7812 = vlaneseq
        %v7813 = vshrl.u32 %v7812, 7
        %v7814 = vsub.s32 %v7811, %v7813
        %v7815 = vrot.slane %v7801, %v7814
        %v7816 = vcombine.low %v7808, %v7815
        %v7818 = vunpack.c.l.s4 1983009808
        %v7819 = vunpack.c.0.s8 %v7818
        %v7820 = vlaneseq
        %v7821 = vshrl.u32 %v7820, 7
        %v7822 = vsub.s32 %v7819, %v7821
        %v7823 = vrot.slane %v7362, %v7822
        %v7854 = vsel %vm7405, %v7430, 0.0
        %v7855 = vsel %vm7406, %v7447, 0.0
        %v7856 = vsel %vm7407, %v7454, 0.0
        %v7857 = vsel %vm7408, %v7471, 0.0
        %v7858 = vsel %vm7409, %v7488, 0.0
        %v7859 = vsel %vm7410, %v7495, 0.0
        %v7860 = vsel %vm7408, %v7512, 0.0
        %v7861 = vsel %vm7409, %v7529, 0.0
        %v7862 = vsel %vm7410, %v7536, 0.0
        %v7863 = vsel %vm7408, %v7553, 0.0
        %v7864 = vsel %vm7409, %v7570, 0.0
        %v7865 = vsel %vm7410, %v7577, 0.0
        %v7866 = vsel %vm7408, %v7594, 0.0
        %v7867 = vsel %vm7409, %v7611, 0.0
        %v7868 = vsel %vm7410, %v7618, 0.0
        %v7869 = vsel %vm7408, %v7635, 0.0
        %v7870 = vsel %vm7409, %v7652, 0.0
        %v7871 = vsel %vm7410, %v7659, 0.0
        %v7872 = vsel %vm7408, %v7676, 0.0
        %v7873 = vsel %vm7409, %v7693, 0.0
        %v7874 = vsel %vm7410, %v7700, 0.0
        %v7875 = vsel %vm7408, %v7717, 0.0
        %v7876 = vsel %vm7409, %v7734, 0.0
        %v7877 = vsel %vm7410, %v7741, 0.0
        %v7878 = vsel %vm7408, %v7758, 0.0
        %v7879 = vsel %vm7409, %v7775, 0.0
        %v7880 = vsel %vm7410, %v7782, 0.0
        %v7881 = vsel %vm7411, %v7799, 0.0
        %v7882 = vsel %vm7412, %v7816, 0.0
        %v7883 = vsel %vm7413, %v7823, 0.0
        %v7884 = vpack.c.bf16 %v7855, %v7854
        %v7885 = vpack.c.bf16 %v7856, %v7856
        %v7886 = vpack.c.bf16 %v7858, %v7857
        %v7887 = vpack.c.bf16 %v7859, %v7859
        %v7888 = vpack.c.bf16 %v7861, %v7860
        %v7889 = vpack.c.bf16 %v7862, %v7862
        %v7890 = vpack.c.bf16 %v7864, %v7863
        %v7891 = vpack.c.bf16 %v7865, %v7865
        %v7892 = vpack.c.bf16 %v7867, %v7866
        %v7893 = vpack.c.bf16 %v7868, %v7868
        %v7894 = vpack.c.bf16 %v7870, %v7869
        %v7895 = vpack.c.bf16 %v7871, %v7871
        %v7896 = vpack.c.bf16 %v7873, %v7872
        %v7897 = vpack.c.bf16 %v7874, %v7874
        %v7898 = vpack.c.bf16 %v7876, %v7875
        %v7899 = vpack.c.bf16 %v7877, %v7877
        %v7900 = vpack.c.bf16 %v7879, %v7878
        %v7901 = vpack.c.bf16 %v7880, %v7880
        %v7902 = vpack.c.bf16 %v7882, %v7881
        %v7903 = vpack.c.bf16 %v7883, %v7883
        %vm7904 = vsmask.f32 7424
        %v7906 = vshrl.u32 %v7884, 16
        %v7908 = vshll.u32 %v7884, 16
        %v7910 = vrot.slane %v7908, 1
        %v7911 = vor.u32 %v7906, %v7910
        %v7913 = vshll.u32 %v7885, 16
        %v7915 = vrot.slane %v7913, 1
        %v7916 = vsel %vm7904, %v7911, %v7915
        %v7918 = vshrl.u32 %v7886, 16
        %v7920 = vshll.u32 %v7886, 16
        %v7922 = vrot.slane %v7920, 1
        %v7923 = vor.u32 %v7918, %v7922
        %v7925 = vshll.u32 %v7887, 16
        %v7927 = vrot.slane %v7925, 1
        %v7928 = vsel %vm7904, %v7923, %v7927
        %v7930 = vshrl.u32 %v7888, 16
        %v7932 = vshll.u32 %v7888, 16
        %v7934 = vrot.slane %v7932, 1
        %v7935 = vor.u32 %v7930, %v7934
        %v7937 = vshll.u32 %v7889, 16
        %v7939 = vrot.slane %v7937, 1
        %v7940 = vsel %vm7904, %v7935, %v7939
        %v7942 = vshrl.u32 %v7890, 16
        %v7944 = vshll.u32 %v7890, 16
        %v7946 = vrot.slane %v7944, 1
        %v7947 = vor.u32 %v7942, %v7946
        %v7949 = vshll.u32 %v7891, 16
        %v7951 = vrot.slane %v7949, 1
        %v7952 = vsel %vm7904, %v7947, %v7951
        %v7954 = vshrl.u32 %v7892, 16
        %v7956 = vshll.u32 %v7892, 16
        %v7958 = vrot.slane %v7956, 1
        %v7959 = vor.u32 %v7954, %v7958
        %v7961 = vshll.u32 %v7893, 16
        %v7963 = vrot.slane %v7961, 1
        %v7964 = vsel %vm7904, %v7959, %v7963
        %v7966 = vshrl.u32 %v7894, 16
        %v7968 = vshll.u32 %v7894, 16
        %v7970 = vrot.slane %v7968, 1
        %v7971 = vor.u32 %v7966, %v7970
        %v7973 = vshll.u32 %v7895, 16
        %v7975 = vrot.slane %v7973, 1
        %v7976 = vsel %vm7904, %v7971, %v7975
        %v7978 = vshrl.u32 %v7896, 16
        %v7980 = vshll.u32 %v7896, 16
        %v7982 = vrot.slane %v7980, 1
        %v7983 = vor.u32 %v7978, %v7982
        %v7985 = vshll.u32 %v7897, 16
        %v7987 = vrot.slane %v7985, 1
        %v7988 = vsel %vm7904, %v7983, %v7987
        %v7990 = vshrl.u32 %v7898, 16
        %v7992 = vshll.u32 %v7898, 16
        %v7994 = vrot.slane %v7992, 1
        %v7995 = vor.u32 %v7990, %v7994
        %v7997 = vshll.u32 %v7899, 16
        %v7999 = vrot.slane %v7997, 1
        %v8000 = vsel %vm7904, %v7995, %v7999
        %vm8025 = vcmask 1046528
        %v8026 = vrot.slane %v7884, 1
        %v8027 = vrot.slane %v7885, 1
        %v8028 = vsel %vm8025, %v8026, %v8027
        %v8029 = vrot.slane %v7886, 1
        %v8030 = vrot.slane %v7887, 1
        %v8031 = vsel %vm8025, %v8029, %v8030
        %v8032 = vrot.slane %v7888, 1
        %v8033 = vrot.slane %v7889, 1
        %v8034 = vsel %vm8025, %v8032, %v8033
        %v8035 = vrot.slane %v7890, 1
        %v8036 = vrot.slane %v7891, 1
        %v8037 = vsel %vm8025, %v8035, %v8036
        %v8038 = vrot.slane %v7892, 1
        %v8039 = vrot.slane %v7893, 1
        %v8040 = vsel %vm8025, %v8038, %v8039
        %v8041 = vrot.slane %v7894, 1
        %v8042 = vrot.slane %v7895, 1
        %v8043 = vsel %vm8025, %v8041, %v8042
        %v8044 = vrot.slane %v7896, 1
        %v8045 = vrot.slane %v7897, 1
        %v8046 = vsel %vm8025, %v8044, %v8045
        %v8047 = vrot.slane %v7898, 1
        %v8048 = vrot.slane %v7899, 1
        %v8049 = vsel %vm8025, %v8047, %v8048
        %v8058 = vld [vmem:[#allocation7] sm:$0xf]
        %v8059 = vld [vmem:[#allocation7 + $0x4] sm:$0xf]
        %v8060 = vld [vmem:[#allocation7 + $0x8] sm:$0xf]
        %v8061 = vld [vmem:[#allocation7 + $0xc] sm:$0xf]
        %v8062 = vld [vmem:[#allocation7 + $0x10] sm:$0xf]
        %v8063 = vld [vmem:[#allocation7 + $0x14] sm:$0xf]
        %v8064 = vld [vmem:[#allocation7 + $0x18] sm:$0xf]
        %v8065 = vld [vmem:[#allocation7 + $0x1c] sm:$0xf]
        %v8066 = vld [vmem:[#allocation7 + $0x20] sm:$0xf]
        %v8067 = vld [vmem:[#allocation7 + $0x24] sm:$0xf]
        %v8068 = vld [vmem:[#allocation7 + $0x28] sm:$0xf]
        %v8069 = vld [vmem:[#allocation7 + $0x2c] sm:$0xf]
        %v8070 = vld [vmem:[#allocation7 + $0x30] sm:$0xf]
        %v8071 = vld [vmem:[#allocation7 + $0x34] sm:$0xf]
        %v8072 = vld [vmem:[#allocation7 + $0x38] sm:$0xf]
        %v8073 = vld [vmem:[#allocation7 + $0x3c] sm:$0xf]
        %v8074 = vld [vmem:[#allocation7 + $0x40] sm:$0xf]
        %v8075 = vld [vmem:[#allocation7 + $0x44] sm:$0xf]
        %v8076 = vld [vmem:[#allocation7 + $0x48] sm:$0xf]
        %v8077 = vld [vmem:[#allocation7 + $0x4c] sm:$0xf]
        %v8078 = vld [vmem:[#allocation7 + $0x50] sm:$0xf]
        %v8079 = vld [vmem:[#allocation7 + $0x54] sm:$0xf]
        %v8080 = vld [vmem:[#allocation7 + $0x58] sm:$0xf]
        %v8081 = vld [vmem:[#allocation7 + $0x5c] sm:$0xf]
        %v8082 = vld [vmem:[#allocation7 + $0x60] sm:$0xf]
        %v8083 = vld [vmem:[#allocation7 + $0x64] sm:$0xf]
        %v8084 = vld [vmem:[#allocation7 + $0x68] sm:$0xf]
        %v8085 = vld [vmem:[#allocation7 + $0x6c] sm:$0xf]
        %v8086 = vld [vmem:[#allocation7 + $0x70] sm:$0xf]
        %v8087 = vld [vmem:[#allocation7 + $0x74] sm:$0xf]
        %v8088 = vld [vmem:[#allocation7 + $0x78] sm:$0xf]
        %v8089 = vld [vmem:[#allocation7 + $0x7c] sm:$0xf]
        %v8090 = vld [vmem:[#allocation7 + $0x80] sm:$0xf]
        %v8091 = vld [vmem:[#allocation7 + $0x84] sm:$0xf]
        %v8092 = vld [vmem:[#allocation7 + $0x88] sm:$0xf]
        %v8093 = vld [vmem:[#allocation7 + $0x8c] sm:$0xf]
        %v8094 = vld [vmem:[#allocation7 + $0x90] sm:$0xf]
        %v8095 = vld [vmem:[#allocation7 + $0x94] sm:$0xf]
        %v8096 = vld [vmem:[#allocation7 + $0x98] sm:$0xf]
        %v8097 = vld [vmem:[#allocation7 + $0x9c] sm:$0xf]
        %v8098 = vld [vmem:[#allocation7 + $0xa0] sm:$0xf]
        %v8099 = vld [vmem:[#allocation7 + $0xa4] sm:$0xf]
        %v8100 = vld [vmem:[#allocation7 + $0xa8] sm:$0xf]
        %v8101 = vld [vmem:[#allocation7 + $0xac] sm:$0xf]
        %v8102 = vld [vmem:[#allocation7 + $0xb0] sm:$0xf]
        %v8103 = vld [vmem:[#allocation7 + $0xb4] sm:$0xf]
        %v8104 = vld [vmem:[#allocation7 + $0xb8] sm:$0xf]
        %v8105 = vld [vmem:[#allocation7 + $0xbc] sm:$0xf]
        %v8107 = vshrl.u32 %v7900, 16
        %v8109 = vshll.u32 %v7900, 16
        %v8111 = vrot.slane %v8109, 1
        %v8112 = vor.u32 %v8107, %v8111
        %v8114 = vshll.u32 %v7901, 16
        %v8116 = vrot.slane %v8114, 1
        %v8117 = vsel %vm7904, %v8112, %v8116
        %v8121 = vrot.slane %v7900, 1
        %v8122 = vrot.slane %v7901, 1
        %v8123 = vsel %vm8025, %v8121, %v8122
        %v8125 = vld [vmem:[#allocation7 + $0xc0] sm:$0xf]
        %v8126 = vld [vmem:[#allocation7 + $0xc4] sm:$0xf]
        %v8127 = vld [vmem:[#allocation7 + $0xc8] sm:$0xf]
        %v8128 = vld [vmem:[#allocation7 + $0xcc] sm:$0xf]
        %v8129 = vld [vmem:[#allocation7 + $0xd0] sm:$0xf]
        %v8130 = vld [vmem:[#allocation7 + $0xd4] sm:$0xf]
        %v8131 = vld [vmem:[#allocation7 + $0xd8] sm:$0xf]
        %v8132 = vld [vmem:[#allocation7 + $0xdc] sm:$0xf]
        %v8133 = vld [vmem:[#allocation7 + $0xe0] sm:$0xf]
        %v8134 = vld [vmem:[#allocation7 + $0xe4] sm:$0xf]
        %v8135 = vld [vmem:[#allocation7 + $0xe8] sm:$0xf]
        %v8136 = vld [vmem:[#allocation7 + $0xec] sm:$0xf]
        %v8137 = vld [vmem:[#allocation7 + $0xf0] sm:$0xf]
        %v8138 = vld [vmem:[#allocation7 + $0xf4] sm:$0xf]
        %v8139 = vld [vmem:[#allocation7 + $0xf8] sm:$0xf]
        %v8140 = vld [vmem:[#allocation7 + $0xfc] sm:$0xf]
        %v8141 = vld [vmem:[#allocation7 + $0x100] sm:$0xf]
        %v8142 = vld [vmem:[#allocation7 + $0x104] sm:$0xf]
        %v8143 = vld [vmem:[#allocation7 + $0x108] sm:$0xf]
        %v8144 = vld [vmem:[#allocation7 + $0x10c] sm:$0xf]
        %v8145 = vld [vmem:[#allocation7 + $0x110] sm:$0xf]
        %v8146 = vld [vmem:[#allocation7 + $0x114] sm:$0xf]
        %v8147 = vld [vmem:[#allocation7 + $0x118] sm:$0xf]
        %v8148 = vld [vmem:[#allocation7 + $0x11c] sm:$0xf]
        %v8149 = vld [vmem:[#allocation7 + $0x120] sm:$0xf]
        %v8150 = vld [vmem:[#allocation7 + $0x124] sm:$0xf]
        %v8151 = vld [vmem:[#allocation7 + $0x128] sm:$0xf]
        %v8152 = vld [vmem:[#allocation7 + $0x12c] sm:$0xf]
        %v8153 = vld [vmem:[#allocation7 + $0x130] sm:$0xf]
        %v8154 = vld [vmem:[#allocation7 + $0x134] sm:$0xf]
        %v8155 = vld [vmem:[#allocation7 + $0x138] sm:$0xf]
        %v8156 = vld [vmem:[#allocation7 + $0x13c] sm:$0xf]
        %v8157 = vld [vmem:[#allocation7 + $0x140] sm:$0xf]
        %v8158 = vld [vmem:[#allocation7 + $0x144] sm:$0xf]
        %v8159 = vld [vmem:[#allocation7 + $0x148] sm:$0xf]
        %v8160 = vld [vmem:[#allocation7 + $0x14c] sm:$0xf]
        %v8161 = vld [vmem:[#allocation7 + $0x150] sm:$0xf]
        %v8162 = vld [vmem:[#allocation7 + $0x154] sm:$0xf]
        %v8163 = vld [vmem:[#allocation7 + $0x158] sm:$0xf]
        %v8164 = vld [vmem:[#allocation7 + $0x15c] sm:$0xf]
        %v8165 = vld [vmem:[#allocation7 + $0x160] sm:$0xf]
        %v8166 = vld [vmem:[#allocation7 + $0x164] sm:$0xf]
        %v8167 = vld [vmem:[#allocation7 + $0x168] sm:$0xf]
        %v8168 = vld [vmem:[#allocation7 + $0x16c] sm:$0xf]
        %v8169 = vld [vmem:[#allocation7 + $0x170] sm:$0xf]
        %v8170 = vld [vmem:[#allocation7 + $0x174] sm:$0xf]
        %v8171 = vld [vmem:[#allocation7 + $0x178] sm:$0xf]
        %v8172 = vld [vmem:[#allocation7 + $0x17c] sm:$0xf]
        %v8221 = vunpack.c.l.b16 %v8125
        %v8222 = vunpack.c.l.b16 %v8126
        %v8223 = vunpack.c.l.b16 %v8127
        %v8224 = vunpack.c.l.b16 %v8128
        %v8225 = vunpack.c.l.b16 %v8129
        %v8226 = vunpack.c.l.b16 %v8130
        %v8227 = vunpack.c.l.b16 %v8131
        %v8228 = vunpack.c.l.b16 %v8132
        %v8229 = vunpack.c.l.b16 %v8133
        %v8230 = vunpack.c.l.b16 %v8134
        %v8231 = vunpack.c.l.b16 %v8135
        %v8232 = vunpack.c.l.b16 %v8136
        %v8233 = vunpack.c.l.b16 %v8137
        %v8234 = vunpack.c.l.b16 %v8138
        %v8235 = vunpack.c.l.b16 %v8139
        %v8236 = vunpack.c.l.b16 %v8140
        %v8237 = vunpack.c.l.b16 %v8141
        %v8238 = vunpack.c.l.b16 %v8142
        %v8239 = vunpack.c.l.b16 %v8143
        %v8240 = vunpack.c.l.b16 %v8144
        %v8241 = vunpack.c.l.b16 %v8145
        %v8242 = vunpack.c.l.b16 %v8146
        %v8243 = vunpack.c.l.b16 %v8147
        %v8244 = vunpack.c.l.b16 %v8148
        %v8245 = vunpack.c.l.b16 %v8149
        %v8246 = vunpack.c.l.b16 %v8150
        %v8247 = vunpack.c.l.b16 %v8151
        %v8248 = vunpack.c.l.b16 %v8152
        %v8249 = vunpack.c.l.b16 %v8153
        %v8250 = vunpack.c.l.b16 %v8154
        %v8251 = vunpack.c.l.b16 %v8155
        %v8252 = vunpack.c.l.b16 %v8156
        %v8253 = vunpack.c.l.b16 %v8157
        %v8254 = vunpack.c.l.b16 %v8158
        %v8255 = vunpack.c.l.b16 %v8159
        %v8256 = vunpack.c.l.b16 %v8160
        %v8257 = vunpack.c.l.b16 %v8161
        %v8258 = vunpack.c.l.b16 %v8162
        %v8259 = vunpack.c.l.b16 %v8163
        %v8260 = vunpack.c.l.b16 %v8164
        %v8261 = vunpack.c.l.b16 %v8165
        %v8262 = vunpack.c.l.b16 %v8166
        %v8263 = vunpack.c.l.b16 %v8167
        %v8264 = vunpack.c.l.b16 %v8168
        %v8265 = vunpack.c.l.b16 %v8169
        %v8266 = vunpack.c.l.b16 %v8170
        %v8267 = vunpack.c.l.b16 %v8171
        %v8268 = vunpack.c.l.b16 %v8172
        %v8269 = vpack.c.b16 %v8222, %v8221
        %v8270 = vpack.c.b16 %v8224, %v8223
        %v8271 = vpack.c.b16 %v8226, %v8225
        %v8272 = vpack.c.b16 %v8228, %v8227
        %v8273 = vpack.c.b16 %v8230, %v8229
        %v8274 = vpack.c.b16 %v8232, %v8231
        %v8275 = vpack.c.b16 %v8234, %v8233
        %v8276 = vpack.c.b16 %v8236, %v8235
        %v8277 = vpack.c.b16 %v8238, %v8237
        %v8278 = vpack.c.b16 %v8240, %v8239
        %v8279 = vpack.c.b16 %v8242, %v8241
        %v8280 = vpack.c.b16 %v8244, %v8243
        %v8281 = vpack.c.b16 %v8246, %v8245
        %v8282 = vpack.c.b16 %v8248, %v8247
        %v8283 = vpack.c.b16 %v8250, %v8249
        %v8284 = vpack.c.b16 %v8252, %v8251
        %v8285 = vpack.c.b16 %v8254, %v8253
        %v8286 = vpack.c.b16 %v8256, %v8255
        %v8287 = vpack.c.b16 %v8258, %v8257
        %v8288 = vpack.c.b16 %v8260, %v8259
        %v8289 = vpack.c.b16 %v8262, %v8261
        %v8290 = vpack.c.b16 %v8264, %v8263
        %v8291 = vpack.c.b16 %v8266, %v8265
        %v8292 = vpack.c.b16 %v8268, %v8267
        %8317 = vmatprep.subr.bf16.mxu0 0
        %8318 = vmatpush1.bf16.msra.mxu0 %v8276
        %8319 = vmatprep.subr.bf16.mxu0 0
        %8320 = vmatpush1.bf16.msra.mxu0 %v8275
        %8321 = vmatprep.subr.bf16.mxu0 0
        %8322 = vmatpush1.bf16.msra.mxu0 %v8274
        %8323 = vmatprep.subr.bf16.mxu0 0
        %8324 = vmatpush1.bf16.msra.mxu0 %v8273
        %8325 = vmatprep.subr.bf16.mxu0 0
        %8326 = vmatpush1.bf16.msra.mxu0 %v8272
        %8327 = vmatprep.subr.bf16.mxu0 0
        %8328 = vmatpush1.bf16.msra.mxu0 %v8271
        %8329 = vmatprep.subr.bf16.mxu0 0
        %8330 = vmatpush1.bf16.msra.mxu0 %v8270
        %8331 = vmatprep.subr.bf16.mxu0 0
        %8332 = vmatpush1.bf16.msra.mxu0 %v8269
        %8333 = vmatprep.subr.bf16.mxu0 0
        %8334 = vmatpush2.bf16.msra.mxu0 %v8284
        %8335 = vmatprep.subr.bf16.mxu0 0
        %8336 = vmatpush2.bf16.msra.mxu0 %v8283
        %8337 = vmatprep.subr.bf16.mxu0 0
        %8338 = vmatpush2.bf16.msra.mxu0 %v8282
        %8339 = vmatprep.subr.bf16.mxu0 0
        %8340 = vmatpush2.bf16.msra.mxu0 %v8281
        %8341 = vmatprep.subr.bf16.mxu0 0
        %8342 = vmatpush2.bf16.msra.mxu0 %v8280
        %8343 = vmatprep.subr.bf16.mxu0 0
        %8344 = vmatpush2.bf16.msra.mxu0 %v8279
        %8345 = vmatprep.subr.bf16.mxu0 0
        %8346 = vmatpush2.bf16.msra.mxu0 %v8278
        %8347 = vmatprep.subr.bf16.mxu0 0
        %8348 = vmatpush2.bf16.msra.mxu0 %v8277
        %8349 = vmatprep.mubr.bf16.mxu0 %v7928
        %8350 = vmatmul.mubr.bf16.gmra.mxu0 %v7886
        %v8351 = vpop.f32.mrf.mxu0
        %v8352 = vadd.f32 0.0, %v8351
        %v8353 = vpop.f32.mrf.mxu0
        %v8354 = vpop.f32.mrf.mxu0
        %v8355 = vadd.f32 0.0, %v8354
        %v8356 = vpop.f32.mrf.mxu0
        %8357 = vmatprep.mubr.bf16.mxu0 %v7940
        %8358 = vmatmul.mubr.bf16.gmra.mxu0 %v7888
        %v8359 = vpop.f32.mrf.mxu0
        %v8360 = vadd.f32 0.0, %v8359
        %v8361 = vpop.f32.mrf.mxu0
        %v8362 = vpop.f32.mrf.mxu0
        %v8363 = vadd.f32 0.0, %v8362
        %v8364 = vpop.f32.mrf.mxu0
        %8365 = vmatprep.mubr.bf16.mxu0 %v7952
        %8366 = vmatmul.mubr.bf16.gmra.mxu0 %v7890
        %v8367 = vpop.f32.mrf.mxu0
        %v8368 = vadd.f32 0.0, %v8367
        %v8369 = vpop.f32.mrf.mxu0
        %v8370 = vpop.f32.mrf.mxu0
        %v8371 = vadd.f32 0.0, %v8370
        %v8372 = vpop.f32.mrf.mxu0
        %8373 = vmatprep.mubr.bf16.mxu0 %v7964
        %8374 = vmatmul.mubr.bf16.gmra.mxu0 %v7892
        %v8375 = vpop.f32.mrf.mxu0
        %v8376 = vadd.f32 0.0, %v8375
        %v8377 = vpop.f32.mrf.mxu0
        %v8378 = vpop.f32.mrf.mxu0
        %v8379 = vadd.f32 0.0, %v8378
        %v8380 = vpop.f32.mrf.mxu0
        %8381 = vmatprep.mubr.bf16.mxu0 %v7976
        %8382 = vmatmul.mubr.bf16.gmra.mxu0 %v7894
        %v8383 = vpop.f32.mrf.mxu0
        %v8384 = vadd.f32 0.0, %v8383
        %v8385 = vpop.f32.mrf.mxu0
        %v8386 = vpop.f32.mrf.mxu0
        %v8387 = vadd.f32 0.0, %v8386
        %v8388 = vpop.f32.mrf.mxu0
        %8389 = vmatprep.mubr.bf16.mxu0 %v7988
        %8390 = vmatmul.mubr.bf16.gmra.mxu0 %v7896
        %v8391 = vpop.f32.mrf.mxu0
        %v8392 = vadd.f32 0.0, %v8391
        %v8393 = vpop.f32.mrf.mxu0
        %v8394 = vpop.f32.mrf.mxu0
        %v8395 = vadd.f32 0.0, %v8394
        %v8396 = vpop.f32.mrf.mxu0
        %8397 = vmatprep.mubr.bf16.mxu0 %v8000
        %8398 = vmatmul.mubr.bf16.gmra.mxu0 %v7898
        %v8399 = vpop.f32.mrf.mxu0
        %v8400 = vadd.f32 0.0, %v8399
        %v8401 = vpop.f32.mrf.mxu0
        %v8402 = vpop.f32.mrf.mxu0
        %v8403 = vadd.f32 0.0, %v8402
        %v8404 = vpop.f32.mrf.mxu0
        %8405 = vmatprep.mubr.bf16.mxu0 %v8117
        %8406 = vmatmul.mubr.bf16.gmra.mxu0 %v7900
        %v8407 = vpop.f32.mrf.mxu0
        %v8408 = vadd.f32 0.0, %v8407
        %v8409 = vpop.f32.mrf.mxu0
        %v8410 = vpop.f32.mrf.mxu0
        %v8411 = vadd.f32 0.0, %v8410
        %v8412 = vpop.f32.mrf.mxu0
        %8413 = vdwg.mxu0
        %8414 = vmatprep.subr.bf16.mxu0 0
        %8415 = vmatpush1.bf16.msra.mxu0 %v8292
        %8416 = vmatprep.subr.bf16.mxu0 0
        %8417 = vmatpush1.bf16.msra.mxu0 %v8291
        %8418 = vmatprep.subr.bf16.mxu0 0
        %8419 = vmatpush1.bf16.msra.mxu0 %v8290
        %8420 = vmatprep.subr.bf16.mxu0 0
        %8421 = vmatpush1.bf16.msra.mxu0 %v8289
        %8422 = vmatprep.subr.bf16.mxu0 0
        %8423 = vmatpush1.bf16.msra.mxu0 %v8288
        %8424 = vmatprep.subr.bf16.mxu0 0
        %8425 = vmatpush1.bf16.msra.mxu0 %v8287
        %8426 = vmatprep.subr.bf16.mxu0 0
        %8427 = vmatpush1.bf16.msra.mxu0 %v8286
        %8428 = vmatprep.subr.bf16.mxu0 0
        %8429 = vmatpush1.bf16.msra.mxu0 %v8285
        %8430 = vmatprep.subr.bf16.mxu0 0
        %8431 = vmatpush2.bf16.msra.mxu0 0
        %8432 = vmatprep.subr.bf16.mxu0 0
        %8433 = vmatpush2.bf16.msra.mxu0 0
        %8434 = vmatprep.subr.bf16.mxu0 0
        %8435 = vmatpush2.bf16.msra.mxu0 0
        %8436 = vmatprep.subr.bf16.mxu0 0
        %8437 = vmatpush2.bf16.msra.mxu0 0
        %8438 = vmatprep.subr.bf16.mxu0 0
        %8439 = vmatpush2.bf16.msra.mxu0 0
        %8440 = vmatprep.subr.bf16.mxu0 0
        %8441 = vmatpush2.bf16.msra.mxu0 0
        %8442 = vmatprep.subr.bf16.mxu0 0
        %8443 = vmatpush2.bf16.msra.mxu0 0
        %8444 = vmatprep.subr.bf16.mxu0 0
        %8445 = vmatpush2.bf16.msra.mxu0 0
        %8446 = vmatprep.mubr.bf16.mxu0 0
        %8447 = vmatmul.mubr.bf16.gmra.mxu0 %v8031
        %v8448 = vpop.f32.mrf.mxu0
        %v8449 = vadd.f32 %v8352, %v8448
        %v8450 = vpop.f32.mrf.mxu0
        %v8451 = vpop.f32.mrf.mxu0
        %v8452 = vadd.f32 %v8355, %v8451
        %v8453 = vpop.f32.mrf.mxu0
        %8454 = vmatprep.mubr.bf16.mxu0 0
        %8455 = vmatmul.mubr.bf16.gmra.mxu0 %v8034
        %v8456 = vpop.f32.mrf.mxu0
        %v8457 = vadd.f32 %v8360, %v8456
        %v8458 = vpop.f32.mrf.mxu0
        %v8459 = vpop.f32.mrf.mxu0
        %v8460 = vadd.f32 %v8363, %v8459
        %v8461 = vpop.f32.mrf.mxu0
        %8462 = vmatprep.mubr.bf16.mxu0 0
        %8463 = vmatmul.mubr.bf16.gmra.mxu0 %v8037
        %v8464 = vpop.f32.mrf.mxu0
        %v8465 = vadd.f32 %v8368, %v8464
        %v8466 = vpop.f32.mrf.mxu0
        %v8467 = vpop.f32.mrf.mxu0
        %v8468 = vadd.f32 %v8371, %v8467
        %v8469 = vpop.f32.mrf.mxu0
        %8470 = vmatprep.mubr.bf16.mxu0 0
        %8471 = vmatmul.mubr.bf16.gmra.mxu0 %v8040
        %v8472 = vpop.f32.mrf.mxu0
        %v8473 = vadd.f32 %v8376, %v8472
        %v8474 = vpop.f32.mrf.mxu0
        %v8475 = vpop.f32.mrf.mxu0
        %v8476 = vadd.f32 %v8379, %v8475
        %v8477 = vpop.f32.mrf.mxu0
        %8478 = vmatprep.mubr.bf16.mxu0 0
        %8479 = vmatmul.mubr.bf16.gmra.mxu0 %v8043
        %v8480 = vpop.f32.mrf.mxu0
        %v8481 = vadd.f32 %v8384, %v8480
        %v8482 = vpop.f32.mrf.mxu0
        %v8483 = vpop.f32.mrf.mxu0
        %v8484 = vadd.f32 %v8387, %v8483
        %v8485 = vpop.f32.mrf.mxu0
        %8486 = vmatprep.mubr.bf16.mxu0 0
        %8487 = vmatmul.mubr.bf16.gmra.mxu0 %v8046
        %v8488 = vpop.f32.mrf.mxu0
        %v8489 = vadd.f32 %v8392, %v8488
        %v8490 = vpop.f32.mrf.mxu0
        %v8491 = vpop.f32.mrf.mxu0
        %v8492 = vadd.f32 %v8395, %v8491
        %v8493 = vpop.f32.mrf.mxu0
        %8494 = vmatprep.mubr.bf16.mxu0 0
        %8495 = vmatmul.mubr.bf16.gmra.mxu0 %v8049
        %v8496 = vpop.f32.mrf.mxu0
        %v8497 = vadd.f32 %v8400, %v8496
        %v8498 = vpop.f32.mrf.mxu0
        %v8499 = vpop.f32.mrf.mxu0
        %v8500 = vadd.f32 %v8403, %v8499
        %v8501 = vpop.f32.mrf.mxu0
        %8502 = vmatprep.mubr.bf16.mxu0 0
        %8503 = vmatmul.mubr.bf16.gmra.mxu0 %v8123
        %v8504 = vpop.f32.mrf.mxu0
        %v8505 = vadd.f32 %v8408, %v8504
        %v8506 = vpop.f32.mrf.mxu0
        %v8507 = vpop.f32.mrf.mxu0
        %v8508 = vadd.f32 %v8411, %v8507
        %v8509 = vpop.f32.mrf.mxu0
        %8510 = vdwg.mxu0
        %v8559 = vunpack.c.l.b16 %v8058
        %v8560 = vunpack.c.l.b16 %v8059
        %v8561 = vunpack.c.l.b16 %v8060
        %v8562 = vunpack.c.l.b16 %v8061
        %v8563 = vunpack.c.l.b16 %v8062
        %v8564 = vunpack.c.l.b16 %v8063
        %v8565 = vunpack.c.l.b16 %v8064
        %v8566 = vunpack.c.l.b16 %v8065
        %v8567 = vunpack.c.l.b16 %v8066
        %v8568 = vunpack.c.l.b16 %v8067
        %v8569 = vunpack.c.l.b16 %v8068
        %v8570 = vunpack.c.l.b16 %v8069
        %v8571 = vunpack.c.l.b16 %v8070
        %v8572 = vunpack.c.l.b16 %v8071
        %v8573 = vunpack.c.l.b16 %v8072
        %v8574 = vunpack.c.l.b16 %v8073
        %v8575 = vunpack.c.l.b16 %v8074
        %v8576 = vunpack.c.l.b16 %v8075
        %v8577 = vunpack.c.l.b16 %v8076
        %v8578 = vunpack.c.l.b16 %v8077
        %v8579 = vunpack.c.l.b16 %v8078
        %v8580 = vunpack.c.l.b16 %v8079
        %v8581 = vunpack.c.l.b16 %v8080
        %v8582 = vunpack.c.l.b16 %v8081
        %v8583 = vunpack.c.l.b16 %v8082
        %v8584 = vunpack.c.l.b16 %v8083
        %v8585 = vunpack.c.l.b16 %v8084
        %v8586 = vunpack.c.l.b16 %v8085
        %v8587 = vunpack.c.l.b16 %v8086
        %v8588 = vunpack.c.l.b16 %v8087
        %v8589 = vunpack.c.l.b16 %v8088
        %v8590 = vunpack.c.l.b16 %v8089
        %v8591 = vunpack.c.l.b16 %v8090
        %v8592 = vunpack.c.l.b16 %v8091
        %v8593 = vunpack.c.l.b16 %v8092
        %v8594 = vunpack.c.l.b16 %v8093
        %v8595 = vunpack.c.l.b16 %v8094
        %v8596 = vunpack.c.l.b16 %v8095
        %v8597 = vunpack.c.l.b16 %v8096
        %v8598 = vunpack.c.l.b16 %v8097
        %v8599 = vunpack.c.l.b16 %v8098
        %v8600 = vunpack.c.l.b16 %v8099
        %v8601 = vunpack.c.l.b16 %v8100
        %v8602 = vunpack.c.l.b16 %v8101
        %v8603 = vunpack.c.l.b16 %v8102
        %v8604 = vunpack.c.l.b16 %v8103
        %v8605 = vunpack.c.l.b16 %v8104
        %v8606 = vunpack.c.l.b16 %v8105
        %v8607 = vpack.c.b16 %v8560, %v8559
        %v8608 = vpack.c.b16 %v8562, %v8561
        %v8609 = vpack.c.b16 %v8564, %v8563
        %v8610 = vpack.c.b16 %v8566, %v8565
        %v8611 = vpack.c.b16 %v8568, %v8567
        %v8612 = vpack.c.b16 %v8570, %v8569
        %v8613 = vpack.c.b16 %v8572, %v8571
        %v8614 = vpack.c.b16 %v8574, %v8573
        %v8615 = vpack.c.b16 %v8576, %v8575
        %v8616 = vpack.c.b16 %v8578, %v8577
        %v8617 = vpack.c.b16 %v8580, %v8579
        %v8618 = vpack.c.b16 %v8582, %v8581
        %v8619 = vpack.c.b16 %v8584, %v8583
        %v8620 = vpack.c.b16 %v8586, %v8585
        %v8621 = vpack.c.b16 %v8588, %v8587
        %v8622 = vpack.c.b16 %v8590, %v8589
        %v8623 = vpack.c.b16 %v8592, %v8591
        %v8624 = vpack.c.b16 %v8594, %v8593
        %v8625 = vpack.c.b16 %v8596, %v8595
        %v8626 = vpack.c.b16 %v8598, %v8597
        %v8627 = vpack.c.b16 %v8600, %v8599
        %v8628 = vpack.c.b16 %v8602, %v8601
        %v8629 = vpack.c.b16 %v8604, %v8603
        %v8630 = vpack.c.b16 %v8606, %v8605
        %8655 = vmatprep.subr.bf16.mxu0 0
        %8656 = vmatpush1.bf16.msra.mxu0 %v8614
        %8657 = vmatprep.subr.bf16.mxu0 0
        %8658 = vmatpush1.bf16.msra.mxu0 %v8613
        %8659 = vmatprep.subr.bf16.mxu0 0
        %8660 = vmatpush1.bf16.msra.mxu0 %v8612
        %8661 = vmatprep.subr.bf16.mxu0 0
        %8662 = vmatpush1.bf16.msra.mxu0 %v8611
        %8663 = vmatprep.subr.bf16.mxu0 0
        %8664 = vmatpush1.bf16.msra.mxu0 %v8610
        %8665 = vmatprep.subr.bf16.mxu0 0
        %8666 = vmatpush1.bf16.msra.mxu0 %v8609
        %8667 = vmatprep.subr.bf16.mxu0 0
        %8668 = vmatpush1.bf16.msra.mxu0 %v8608
        %8669 = vmatprep.subr.bf16.mxu0 0
        %8670 = vmatpush1.bf16.msra.mxu0 %v8607
        %8671 = vmatprep.subr.bf16.mxu0 0
        %8672 = vmatpush2.bf16.msra.mxu0 %v8622
        %8673 = vmatprep.subr.bf16.mxu0 0
        %8674 = vmatpush2.bf16.msra.mxu0 %v8621
        %8675 = vmatprep.subr.bf16.mxu0 0
        %8676 = vmatpush2.bf16.msra.mxu0 %v8620
        %8677 = vmatprep.subr.bf16.mxu0 0
        %8678 = vmatpush2.bf16.msra.mxu0 %v8619
        %8679 = vmatprep.subr.bf16.mxu0 0
        %8680 = vmatpush2.bf16.msra.mxu0 %v8618
        %8681 = vmatprep.subr.bf16.mxu0 0
        %8682 = vmatpush2.bf16.msra.mxu0 %v8617
        %8683 = vmatprep.subr.bf16.mxu0 0
        %8684 = vmatpush2.bf16.msra.mxu0 %v8616
        %8685 = vmatprep.subr.bf16.mxu0 0
        %8686 = vmatpush2.bf16.msra.mxu0 %v8615
        %8687 = vmatprep.mubr.bf16.mxu0 %v7916
        %8688 = vmatmul.mubr.bf16.gmra.mxu0 %v7884
        %v8689 = vpop.f32.mrf.mxu0
        %v8690 = vadd.f32 %v8449, %v8689
        %v8691 = vpop.f32.mrf.mxu0
        %v8692 = vpop.f32.mrf.mxu0
        %v8693 = vadd.f32 %v8452, %v8692
        %v8694 = vpop.f32.mrf.mxu0
        %8695 = vmatprep.mubr.bf16.mxu0 %v7928
        %8696 = vmatmul.mubr.bf16.gmra.mxu0 %v7886
        %v8697 = vpop.f32.mrf.mxu0
        %v8698 = vadd.f32 %v8457, %v8697
        %v8699 = vpop.f32.mrf.mxu0
        %v8700 = vpop.f32.mrf.mxu0
        %v8701 = vadd.f32 %v8460, %v8700
        %v8702 = vpop.f32.mrf.mxu0
        %8703 = vmatprep.mubr.bf16.mxu0 %v7940
        %8704 = vmatmul.mubr.bf16.gmra.mxu0 %v7888
        %v8705 = vpop.f32.mrf.mxu0
        %v8706 = vadd.f32 %v8465, %v8705
        %v8707 = vpop.f32.mrf.mxu0
        %v8708 = vpop.f32.mrf.mxu0
        %v8709 = vadd.f32 %v8468, %v8708
        %v8710 = vpop.f32.mrf.mxu0
        %8711 = vmatprep.mubr.bf16.mxu0 %v7952
        %8712 = vmatmul.mubr.bf16.gmra.mxu0 %v7890
        %v8713 = vpop.f32.mrf.mxu0
        %v8714 = vadd.f32 %v8473, %v8713
        %v8715 = vpop.f32.mrf.mxu0
        %v8716 = vpop.f32.mrf.mxu0
        %v8717 = vadd.f32 %v8476, %v8716
        %v8718 = vpop.f32.mrf.mxu0
        %8719 = vmatprep.mubr.bf16.mxu0 %v7964
        %8720 = vmatmul.mubr.bf16.gmra.mxu0 %v7892
        %v8721 = vpop.f32.mrf.mxu0
        %v8722 = vadd.f32 %v8481, %v8721
        %v8723 = vpop.f32.mrf.mxu0
        %v8724 = vpop.f32.mrf.mxu0
        %v8725 = vadd.f32 %v8484, %v8724
        %v8726 = vpop.f32.mrf.mxu0
        %8727 = vmatprep.mubr.bf16.mxu0 %v7976
        %8728 = vmatmul.mubr.bf16.gmra.mxu0 %v7894
        %v8729 = vpop.f32.mrf.mxu0
        %v8730 = vadd.f32 %v8489, %v8729
        %v8731 = vpop.f32.mrf.mxu0
        %v8732 = vpop.f32.mrf.mxu0
        %v8733 = vadd.f32 %v8492, %v8732
        %v8734 = vpop.f32.mrf.mxu0
        %8735 = vmatprep.mubr.bf16.mxu0 %v7988
        %8736 = vmatmul.mubr.bf16.gmra.mxu0 %v7896
        %v8737 = vpop.f32.mrf.mxu0
        %v8738 = vadd.f32 %v8497, %v8737
        %v8739 = vpop.f32.mrf.mxu0
        %v8740 = vpop.f32.mrf.mxu0
        %v8741 = vadd.f32 %v8500, %v8740
        %v8742 = vpop.f32.mrf.mxu0
        %8743 = vmatprep.mubr.bf16.mxu0 %v8000
        %8744 = vmatmul.mubr.bf16.gmra.mxu0 %v7898
        %v8745 = vpop.f32.mrf.mxu0
        %v8746 = vadd.f32 %v8505, %v8745
        %v8747 = vpop.f32.mrf.mxu0
        %v8748 = vpop.f32.mrf.mxu0
        %v8749 = vadd.f32 %v8508, %v8748
        %v8750 = vpop.f32.mrf.mxu0
        %8751 = vdwg.mxu0
        %8752 = vmatprep.subr.bf16.mxu0 0
        %8753 = vmatpush1.bf16.msra.mxu0 %v8630
        %8754 = vmatprep.subr.bf16.mxu0 0
        %8755 = vmatpush1.bf16.msra.mxu0 %v8629
        %8756 = vmatprep.subr.bf16.mxu0 0
        %8757 = vmatpush1.bf16.msra.mxu0 %v8628
        %8758 = vmatprep.subr.bf16.mxu0 0
        %8759 = vmatpush1.bf16.msra.mxu0 %v8627
        %8760 = vmatprep.subr.bf16.mxu0 0
        %8761 = vmatpush1.bf16.msra.mxu0 %v8626
        %8762 = vmatprep.subr.bf16.mxu0 0
        %8763 = vmatpush1.bf16.msra.mxu0 %v8625
        %8764 = vmatprep.subr.bf16.mxu0 0
        %8765 = vmatpush1.bf16.msra.mxu0 %v8624
        %8766 = vmatprep.subr.bf16.mxu0 0
        %8767 = vmatpush1.bf16.msra.mxu0 %v8623
        %8768 = vmatprep.subr.bf16.mxu0 0
        %8769 = vmatpush2.bf16.msra.mxu0 0
        %8770 = vmatprep.subr.bf16.mxu0 0
        %8771 = vmatpush2.bf16.msra.mxu0 0
        %8772 = vmatprep.subr.bf16.mxu0 0
        %8773 = vmatpush2.bf16.msra.mxu0 0
        %8774 = vmatprep.subr.bf16.mxu0 0
        %8775 = vmatpush2.bf16.msra.mxu0 0
        %8776 = vmatprep.subr.bf16.mxu0 0
        %8777 = vmatpush2.bf16.msra.mxu0 0
        %8778 = vmatprep.subr.bf16.mxu0 0
        %8779 = vmatpush2.bf16.msra.mxu0 0
        %8780 = vmatprep.subr.bf16.mxu0 0
        %8781 = vmatpush2.bf16.msra.mxu0 0
        %8782 = vmatprep.subr.bf16.mxu0 0
        %8783 = vmatpush2.bf16.msra.mxu0 0
        %8784 = vmatprep.mubr.bf16.mxu0 0
        %8785 = vmatmul.mubr.bf16.gmra.mxu0 %v8028
        %v8786 = vpop.f32.mrf.mxu0
        %v8787 = vadd.f32 %v8690, %v8786
        %v8788 = vpop.f32.mrf.mxu0
        %v8789 = vpop.f32.mrf.mxu0
        %v8790 = vadd.f32 %v8693, %v8789
        %v8791 = vpop.f32.mrf.mxu0
        %8792 = vmatprep.mubr.bf16.mxu0 0
        %8793 = vmatmul.mubr.bf16.gmra.mxu0 %v8031
        %v8794 = vpop.f32.mrf.mxu0
        %v8795 = vadd.f32 %v8698, %v8794
        %v8796 = vpop.f32.mrf.mxu0
        %v8797 = vpop.f32.mrf.mxu0
        %v8798 = vadd.f32 %v8701, %v8797
        %v8799 = vpop.f32.mrf.mxu0
        %8800 = vmatprep.mubr.bf16.mxu0 0
        %8801 = vmatmul.mubr.bf16.gmra.mxu0 %v8034
        %v8802 = vpop.f32.mrf.mxu0
        %v8803 = vadd.f32 %v8706, %v8802
        %v8804 = vpop.f32.mrf.mxu0
        %v8805 = vpop.f32.mrf.mxu0
        %v8806 = vadd.f32 %v8709, %v8805
        %v8807 = vpop.f32.mrf.mxu0
        %8808 = vmatprep.mubr.bf16.mxu0 0
        %8809 = vmatmul.mubr.bf16.gmra.mxu0 %v8037
        %v8810 = vpop.f32.mrf.mxu0
        %v8811 = vadd.f32 %v8714, %v8810
        %v8812 = vpop.f32.mrf.mxu0
        %v8813 = vpop.f32.mrf.mxu0
        %v8814 = vadd.f32 %v8717, %v8813
        %v8815 = vpop.f32.mrf.mxu0
        %8816 = vmatprep.mubr.bf16.mxu0 0
        %8817 = vmatmul.mubr.bf16.gmra.mxu0 %v8040
        %v8818 = vpop.f32.mrf.mxu0
        %v8819 = vadd.f32 %v8722, %v8818
        %v8820 = vpop.f32.mrf.mxu0
        %v8821 = vpop.f32.mrf.mxu0
        %v8822 = vadd.f32 %v8725, %v8821
        %v8823 = vpop.f32.mrf.mxu0
        %8824 = vmatprep.mubr.bf16.mxu0 0
        %8825 = vmatmul.mubr.bf16.gmra.mxu0 %v8043
        %v8826 = vpop.f32.mrf.mxu0
        %v8827 = vadd.f32 %v8730, %v8826
        %v8828 = vpop.f32.mrf.mxu0
        %v8829 = vpop.f32.mrf.mxu0
        %v8830 = vadd.f32 %v8733, %v8829
        %v8831 = vpop.f32.mrf.mxu0
        %8832 = vmatprep.mubr.bf16.mxu0 0
        %8833 = vmatmul.mubr.bf16.gmra.mxu0 %v8046
        %v8834 = vpop.f32.mrf.mxu0
        %v8835 = vadd.f32 %v8738, %v8834
        %v8836 = vpop.f32.mrf.mxu0
        %v8837 = vpop.f32.mrf.mxu0
        %v8838 = vadd.f32 %v8741, %v8837
        %v8839 = vpop.f32.mrf.mxu0
        %8840 = vmatprep.mubr.bf16.mxu0 0
        %8841 = vmatmul.mubr.bf16.gmra.mxu0 %v8049
        %v8842 = vpop.f32.mrf.mxu0
        %v8843 = vadd.f32 %v8746, %v8842
        %v8844 = vpop.f32.mrf.mxu0
        %v8845 = vpop.f32.mrf.mxu0
        %v8846 = vadd.f32 %v8749, %v8845
        %v8847 = vpop.f32.mrf.mxu0
        %8848 = vdwg.mxu0
        %v8850 = vshrl.u32 %v7902, 16
        %v8852 = vshll.u32 %v7902, 16
        %v8854 = vrot.slane %v8852, 1
        %v8855 = vor.u32 %v8850, %v8854
        %v8857 = vshll.u32 %v7903, 16
        %v8859 = vrot.slane %v8857, 1
        %v8860 = vsel %vm7904, %v8855, %v8859
        %v8864 = vrot.slane %v7902, 1
        %v8865 = vrot.slane %v7903, 1
        %v8866 = vsel %vm8025, %v8864, %v8865
        %v8868 = vld [vmem:[#allocation7 + $0x180] sm:$0xf]
        %v8869 = vld [vmem:[#allocation7 + $0x184] sm:$0xf]
        %v8870 = vld [vmem:[#allocation7 + $0x188] sm:$0xf]
        %v8871 = vld [vmem:[#allocation7 + $0x18c] sm:$0xf]
        %v8872 = vld [vmem:[#allocation7 + $0x190] sm:$0xf]
        %v8873 = vld [vmem:[#allocation7 + $0x194] sm:$0xf]
        %v8874 = vld [vmem:[#allocation7 + $0x198] sm:$0xf]
        %v8875 = vld [vmem:[#allocation7 + $0x19c] sm:$0xf]
        %v8876 = vld [vmem:[#allocation7 + $0x1a0] sm:$0xf]
        %v8877 = vld [vmem:[#allocation7 + $0x1a4] sm:$0xf]
        %v8878 = vld [vmem:[#allocation7 + $0x1a8] sm:$0xf]
        %v8879 = vld [vmem:[#allocation7 + $0x1ac] sm:$0xf]
        %v8880 = vld [vmem:[#allocation7 + $0x1b0] sm:$0xf]
        %v8881 = vld [vmem:[#allocation7 + $0x1b4] sm:$0xf]
        %v8882 = vld [vmem:[#allocation7 + $0x1b8] sm:$0xf]
        %v8883 = vld [vmem:[#allocation7 + $0x1bc] sm:$0xf]
        %v8884 = vld [vmem:[#allocation7 + $0x1c0] sm:$0xf]
        %v8885 = vld [vmem:[#allocation7 + $0x1c4] sm:$0xf]
        %v8886 = vld [vmem:[#allocation7 + $0x1c8] sm:$0xf]
        %v8887 = vld [vmem:[#allocation7 + $0x1cc] sm:$0xf]
        %v8888 = vld [vmem:[#allocation7 + $0x1d0] sm:$0xf]
        %v8889 = vld [vmem:[#allocation7 + $0x1d4] sm:$0xf]
        %v8890 = vld [vmem:[#allocation7 + $0x1d8] sm:$0xf]
        %v8891 = vld [vmem:[#allocation7 + $0x1dc] sm:$0xf]
        %v8892 = vld [vmem:[#allocation7 + $0x1e0] sm:$0xf]
        %v8893 = vld [vmem:[#allocation7 + $0x1e4] sm:$0xf]
        %v8894 = vld [vmem:[#allocation7 + $0x1e8] sm:$0xf]
        %v8895 = vld [vmem:[#allocation7 + $0x1ec] sm:$0xf]
        %v8896 = vld [vmem:[#allocation7 + $0x1f0] sm:$0xf]
        %v8897 = vld [vmem:[#allocation7 + $0x1f4] sm:$0xf]
        %v8898 = vld [vmem:[#allocation7 + $0x1f8] sm:$0xf]
        %v8899 = vld [vmem:[#allocation7 + $0x1fc] sm:$0xf]
        %v8900 = vld [vmem:[#allocation7 + $0x200] sm:$0xf]
        %v8901 = vld [vmem:[#allocation7 + $0x204] sm:$0xf]
        %v8902 = vld [vmem:[#allocation7 + $0x208] sm:$0xf]
        %v8903 = vld [vmem:[#allocation7 + $0x20c] sm:$0xf]
        %v8904 = vld [vmem:[#allocation7 + $0x210] sm:$0xf]
        %v8905 = vld [vmem:[#allocation7 + $0x214] sm:$0xf]
        %v8906 = vld [vmem:[#allocation7 + $0x218] sm:$0xf]
        %v8907 = vld [vmem:[#allocation7 + $0x21c] sm:$0xf]
        %v8908 = vld [vmem:[#allocation7 + $0x220] sm:$0xf]
        %v8909 = vld [vmem:[#allocation7 + $0x224] sm:$0xf]
        %v8910 = vld [vmem:[#allocation7 + $0x228] sm:$0xf]
        %v8911 = vld [vmem:[#allocation7 + $0x22c] sm:$0xf]
        %v8912 = vld [vmem:[#allocation7 + $0x230] sm:$0xf]
        %v8913 = vld [vmem:[#allocation7 + $0x234] sm:$0xf]
        %v8914 = vld [vmem:[#allocation7 + $0x238] sm:$0xf]
        %v8915 = vld [vmem:[#allocation7 + $0x23c] sm:$0xf]
        %v8964 = vunpack.c.l.b16 %v8868
        %v8965 = vunpack.c.l.b16 %v8869
        %v8966 = vunpack.c.l.b16 %v8870
        %v8967 = vunpack.c.l.b16 %v8871
        %v8968 = vunpack.c.l.b16 %v8872
        %v8969 = vunpack.c.l.b16 %v8873
        %v8970 = vunpack.c.l.b16 %v8874
        %v8971 = vunpack.c.l.b16 %v8875
        %v8972 = vunpack.c.l.b16 %v8876
        %v8973 = vunpack.c.l.b16 %v8877
        %v8974 = vunpack.c.l.b16 %v8878
        %v8975 = vunpack.c.l.b16 %v8879
        %v8976 = vunpack.c.l.b16 %v8880
        %v8977 = vunpack.c.l.b16 %v8881
        %v8978 = vunpack.c.l.b16 %v8882
        %v8979 = vunpack.c.l.b16 %v8883
        %v8980 = vunpack.c.l.b16 %v8884
        %v8981 = vunpack.c.l.b16 %v8885
        %v8982 = vunpack.c.l.b16 %v8886
        %v8983 = vunpack.c.l.b16 %v8887
        %v8984 = vunpack.c.l.b16 %v8888
        %v8985 = vunpack.c.l.b16 %v8889
        %v8986 = vunpack.c.l.b16 %v8890
        %v8987 = vunpack.c.l.b16 %v8891
        %v8988 = vunpack.c.l.b16 %v8892
        %v8989 = vunpack.c.l.b16 %v8893
        %v8990 = vunpack.c.l.b16 %v8894
        %v8991 = vunpack.c.l.b16 %v8895
        %v8992 = vunpack.c.l.b16 %v8896
        %v8993 = vunpack.c.l.b16 %v8897
        %v8994 = vunpack.c.l.b16 %v8898
        %v8995 = vunpack.c.l.b16 %v8899
        %v8996 = vunpack.c.l.b16 %v8900
        %v8997 = vunpack.c.l.b16 %v8901
        %v8998 = vunpack.c.l.b16 %v8902
        %v8999 = vunpack.c.l.b16 %v8903
        %v9000 = vunpack.c.l.b16 %v8904
        %v9001 = vunpack.c.l.b16 %v8905
        %v9002 = vunpack.c.l.b16 %v8906
        %v9003 = vunpack.c.l.b16 %v8907
        %v9004 = vunpack.c.l.b16 %v8908
        %v9005 = vunpack.c.l.b16 %v8909
        %v9006 = vunpack.c.l.b16 %v8910
        %v9007 = vunpack.c.l.b16 %v8911
        %v9008 = vunpack.c.l.b16 %v8912
        %v9009 = vunpack.c.l.b16 %v8913
        %v9010 = vunpack.c.l.b16 %v8914
        %v9011 = vunpack.c.l.b16 %v8915
        %v9012 = vpack.c.b16 %v8965, %v8964
        %v9013 = vpack.c.b16 %v8967, %v8966
        %v9014 = vpack.c.b16 %v8969, %v8968
        %v9015 = vpack.c.b16 %v8971, %v8970
        %v9016 = vpack.c.b16 %v8973, %v8972
        %v9017 = vpack.c.b16 %v8975, %v8974
        %v9018 = vpack.c.b16 %v8977, %v8976
        %v9019 = vpack.c.b16 %v8979, %v8978
        %v9020 = vpack.c.b16 %v8981, %v8980
        %v9021 = vpack.c.b16 %v8983, %v8982
        %v9022 = vpack.c.b16 %v8985, %v8984
        %v9023 = vpack.c.b16 %v8987, %v8986
        %v9024 = vpack.c.b16 %v8989, %v8988
        %v9025 = vpack.c.b16 %v8991, %v8990
        %v9026 = vpack.c.b16 %v8993, %v8992
        %v9027 = vpack.c.b16 %v8995, %v8994
        %v9028 = vpack.c.b16 %v8997, %v8996
        %v9029 = vpack.c.b16 %v8999, %v8998
        %v9030 = vpack.c.b16 %v9001, %v9000
        %v9031 = vpack.c.b16 %v9003, %v9002
        %v9032 = vpack.c.b16 %v9005, %v9004
        %v9033 = vpack.c.b16 %v9007, %v9006
        %v9034 = vpack.c.b16 %v9009, %v9008
        %v9035 = vpack.c.b16 %v9011, %v9010
        %9060 = vmatprep.subr.bf16.mxu0 0
        %9061 = vmatpush1.bf16.msra.mxu0 %v9019
        %9062 = vmatprep.subr.bf16.mxu0 0
        %9063 = vmatpush1.bf16.msra.mxu0 %v9018
        %9064 = vmatprep.subr.bf16.mxu0 0
        %9065 = vmatpush1.bf16.msra.mxu0 %v9017
        %9066 = vmatprep.subr.bf16.mxu0 0
        %9067 = vmatpush1.bf16.msra.mxu0 %v9016
        %9068 = vmatprep.subr.bf16.mxu0 0
        %9069 = vmatpush1.bf16.msra.mxu0 %v9015
        %9070 = vmatprep.subr.bf16.mxu0 0
        %9071 = vmatpush1.bf16.msra.mxu0 %v9014
        %9072 = vmatprep.subr.bf16.mxu0 0
        %9073 = vmatpush1.bf16.msra.mxu0 %v9013
        %9074 = vmatprep.subr.bf16.mxu0 0
        %9075 = vmatpush1.bf16.msra.mxu0 %v9012
        %9076 = vmatprep.subr.bf16.mxu0 0
        %9077 = vmatpush2.bf16.msra.mxu0 %v9027
        %9078 = vmatprep.subr.bf16.mxu0 0
        %9079 = vmatpush2.bf16.msra.mxu0 %v9026
        %9080 = vmatprep.subr.bf16.mxu0 0
        %9081 = vmatpush2.bf16.msra.mxu0 %v9025
        %9082 = vmatprep.subr.bf16.mxu0 0
        %9083 = vmatpush2.bf16.msra.mxu0 %v9024
        %9084 = vmatprep.subr.bf16.mxu0 0
        %9085 = vmatpush2.bf16.msra.mxu0 %v9023
        %9086 = vmatprep.subr.bf16.mxu0 0
        %9087 = vmatpush2.bf16.msra.mxu0 %v9022
        %9088 = vmatprep.subr.bf16.mxu0 0
        %9089 = vmatpush2.bf16.msra.mxu0 %v9021
        %9090 = vmatprep.subr.bf16.mxu0 0
        %9091 = vmatpush2.bf16.msra.mxu0 %v9020
        %9092 = vmatprep.mubr.bf16.mxu0 %v7940
        %9093 = vmatmul.mubr.bf16.gmra.mxu0 %v7888
        %v9094 = vpop.f32.mrf.mxu0
        %v9095 = vadd.f32 0.0, %v9094
        %v9096 = vpop.f32.mrf.mxu0
        %v9097 = vpop.f32.mrf.mxu0
        %v9098 = vadd.f32 0.0, %v9097
        %v9099 = vpop.f32.mrf.mxu0
        %9100 = vmatprep.mubr.bf16.mxu0 %v7952
        %9101 = vmatmul.mubr.bf16.gmra.mxu0 %v7890
        %v9102 = vpop.f32.mrf.mxu0
        %v9103 = vadd.f32 0.0, %v9102
        %v9104 = vpop.f32.mrf.mxu0
        %v9105 = vpop.f32.mrf.mxu0
        %v9106 = vadd.f32 0.0, %v9105
        %v9107 = vpop.f32.mrf.mxu0
        %9108 = vmatprep.mubr.bf16.mxu0 %v7964
        %9109 = vmatmul.mubr.bf16.gmra.mxu0 %v7892
        %v9110 = vpop.f32.mrf.mxu0
        %v9111 = vadd.f32 0.0, %v9110
        %v9112 = vpop.f32.mrf.mxu0
        %v9113 = vpop.f32.mrf.mxu0
        %v9114 = vadd.f32 0.0, %v9113
        %v9115 = vpop.f32.mrf.mxu0
        %9116 = vmatprep.mubr.bf16.mxu0 %v7976
        %9117 = vmatmul.mubr.bf16.gmra.mxu0 %v7894
        %v9118 = vpop.f32.mrf.mxu0
        %v9119 = vadd.f32 0.0, %v9118
        %v9120 = vpop.f32.mrf.mxu0
        %v9121 = vpop.f32.mrf.mxu0
        %v9122 = vadd.f32 0.0, %v9121
        %v9123 = vpop.f32.mrf.mxu0
        %9124 = vmatprep.mubr.bf16.mxu0 %v7988
        %9125 = vmatmul.mubr.bf16.gmra.mxu0 %v7896
        %v9126 = vpop.f32.mrf.mxu0
        %v9127 = vadd.f32 0.0, %v9126
        %v9128 = vpop.f32.mrf.mxu0
        %v9129 = vpop.f32.mrf.mxu0
        %v9130 = vadd.f32 0.0, %v9129
        %v9131 = vpop.f32.mrf.mxu0
        %9132 = vmatprep.mubr.bf16.mxu0 %v8000
        %9133 = vmatmul.mubr.bf16.gmra.mxu0 %v7898
        %v9134 = vpop.f32.mrf.mxu0
        %v9135 = vadd.f32 0.0, %v9134
        %v9136 = vpop.f32.mrf.mxu0
        %v9137 = vpop.f32.mrf.mxu0
        %v9138 = vadd.f32 0.0, %v9137
        %v9139 = vpop.f32.mrf.mxu0
        %9140 = vmatprep.mubr.bf16.mxu0 %v8117
        %9141 = vmatmul.mubr.bf16.gmra.mxu0 %v7900
        %v9142 = vpop.f32.mrf.mxu0
        %v9143 = vadd.f32 0.0, %v9142
        %v9144 = vpop.f32.mrf.mxu0
        %v9145 = vpop.f32.mrf.mxu0
        %v9146 = vadd.f32 0.0, %v9145
        %v9147 = vpop.f32.mrf.mxu0
        %9148 = vmatprep.mubr.bf16.mxu0 %v8860
        %9149 = vmatmul.mubr.bf16.gmra.mxu0 %v7902
        %v9150 = vpop.f32.mrf.mxu0
        %v9151 = vadd.f32 0.0, %v9150
        %v9152 = vpop.f32.mrf.mxu0
        %v9153 = vpop.f32.mrf.mxu0
        %v9154 = vadd.f32 0.0, %v9153
        %v9155 = vpop.f32.mrf.mxu0
        %9156 = vdwg.mxu0
        %9157 = vmatprep.subr.bf16.mxu0 0
        %9158 = vmatpush1.bf16.msra.mxu0 %v9035
        %9159 = vmatprep.subr.bf16.mxu0 0
        %9160 = vmatpush1.bf16.msra.mxu0 %v9034
        %9161 = vmatprep.subr.bf16.mxu0 0
        %9162 = vmatpush1.bf16.msra.mxu0 %v9033
        %9163 = vmatprep.subr.bf16.mxu0 0
        %9164 = vmatpush1.bf16.msra.mxu0 %v9032
        %9165 = vmatprep.subr.bf16.mxu0 0
        %9166 = vmatpush1.bf16.msra.mxu0 %v9031
        %9167 = vmatprep.subr.bf16.mxu0 0
        %9168 = vmatpush1.bf16.msra.mxu0 %v9030
        %9169 = vmatprep.subr.bf16.mxu0 0
        %9170 = vmatpush1.bf16.msra.mxu0 %v9029
        %9171 = vmatprep.subr.bf16.mxu0 0
        %9172 = vmatpush1.bf16.msra.mxu0 %v9028
        %9173 = vmatprep.subr.bf16.mxu0 0
        %9174 = vmatpush2.bf16.msra.mxu0 0
        %9175 = vmatprep.subr.bf16.mxu0 0
        %9176 = vmatpush2.bf16.msra.mxu0 0
        %9177 = vmatprep.subr.bf16.mxu0 0
        %9178 = vmatpush2.bf16.msra.mxu0 0
        %9179 = vmatprep.subr.bf16.mxu0 0
        %9180 = vmatpush2.bf16.msra.mxu0 0
        %9181 = vmatprep.subr.bf16.mxu0 0
        %9182 = vmatpush2.bf16.msra.mxu0 0
        %9183 = vmatprep.subr.bf16.mxu0 0
        %9184 = vmatpush2.bf16.msra.mxu0 0
        %9185 = vmatprep.subr.bf16.mxu0 0
        %9186 = vmatpush2.bf16.msra.mxu0 0
        %9187 = vmatprep.subr.bf16.mxu0 0
        %9188 = vmatpush2.bf16.msra.mxu0 0
        %9189 = vmatprep.mubr.bf16.mxu0 0
        %9190 = vmatmul.mubr.bf16.gmra.mxu0 %v8034
        %v9191 = vpop.f32.mrf.mxu0
        %v9192 = vadd.f32 %v9095, %v9191
        %v9193 = vpop.f32.mrf.mxu0
        %v9194 = vpop.f32.mrf.mxu0
        %v9195 = vadd.f32 %v9098, %v9194
        %v9196 = vpop.f32.mrf.mxu0
        %9197 = vmatprep.mubr.bf16.mxu0 0
        %9198 = vmatmul.mubr.bf16.gmra.mxu0 %v8037
        %v9199 = vpop.f32.mrf.mxu0
        %v9200 = vadd.f32 %v9103, %v9199
        %v9201 = vpop.f32.mrf.mxu0
        %v9202 = vpop.f32.mrf.mxu0
        %v9203 = vadd.f32 %v9106, %v9202
        %v9204 = vpop.f32.mrf.mxu0
        %9205 = vmatprep.mubr.bf16.mxu0 0
        %9206 = vmatmul.mubr.bf16.gmra.mxu0 %v8040
        %v9207 = vpop.f32.mrf.mxu0
        %v9208 = vadd.f32 %v9111, %v9207
        %v9209 = vpop.f32.mrf.mxu0
        %v9210 = vpop.f32.mrf.mxu0
        %v9211 = vadd.f32 %v9114, %v9210
        %v9212 = vpop.f32.mrf.mxu0
        %9213 = vmatprep.mubr.bf16.mxu0 0
        %9214 = vmatmul.mubr.bf16.gmra.mxu0 %v8043
        %v9215 = vpop.f32.mrf.mxu0
        %v9216 = vadd.f32 %v9119, %v9215
        %v9217 = vpop.f32.mrf.mxu0
        %v9218 = vpop.f32.mrf.mxu0
        %v9219 = vadd.f32 %v9122, %v9218
        %v9220 = vpop.f32.mrf.mxu0
        %9221 = vmatprep.mubr.bf16.mxu0 0
        %9222 = vmatmul.mubr.bf16.gmra.mxu0 %v8046
        %v9223 = vpop.f32.mrf.mxu0
        %v9224 = vadd.f32 %v9127, %v9223
        %v9225 = vpop.f32.mrf.mxu0
        %v9226 = vpop.f32.mrf.mxu0
        %v9227 = vadd.f32 %v9130, %v9226
        %v9228 = vpop.f32.mrf.mxu0
        %9229 = vmatprep.mubr.bf16.mxu0 0
        %9230 = vmatmul.mubr.bf16.gmra.mxu0 %v8049
        %v9231 = vpop.f32.mrf.mxu0
        %v9232 = vadd.f32 %v9135, %v9231
        %v9233 = vpop.f32.mrf.mxu0
        %v9234 = vpop.f32.mrf.mxu0
        %v9235 = vadd.f32 %v9138, %v9234
        %v9236 = vpop.f32.mrf.mxu0
        %9237 = vmatprep.mubr.bf16.mxu0 0
        %9238 = vmatmul.mubr.bf16.gmra.mxu0 %v8123
        %v9239 = vpop.f32.mrf.mxu0
        %v9240 = vadd.f32 %v9143, %v9239
        %v9241 = vpop.f32.mrf.mxu0
        %v9242 = vpop.f32.mrf.mxu0
        %v9243 = vadd.f32 %v9146, %v9242
        %v9244 = vpop.f32.mrf.mxu0
        %9245 = vmatprep.mubr.bf16.mxu0 0
        %9246 = vmatmul.mubr.bf16.gmra.mxu0 %v8866
        %v9247 = vpop.f32.mrf.mxu0
        %v9248 = vadd.f32 %v9151, %v9247
        %v9249 = vpop.f32.mrf.mxu0
        %v9250 = vpop.f32.mrf.mxu0
        %v9251 = vadd.f32 %v9154, %v9250
        %v9252 = vpop.f32.mrf.mxu0
        %9253 = vdwg.mxu0
        %v9254 = vadd.f32 %v8787, %v9192
        %v9255 = vadd.f32 %v8790, %v9195
        %v9256 = vadd.f32 %v8795, %v9200
        %v9257 = vadd.f32 %v8798, %v9203
        %v9258 = vadd.f32 %v8803, %v9208
        %v9259 = vadd.f32 %v8806, %v9211
        %v9260 = vadd.f32 %v8811, %v9216
        %v9261 = vadd.f32 %v8814, %v9219
        %v9262 = vadd.f32 %v8819, %v9224
        %v9263 = vadd.f32 %v8822, %v9227
        %v9264 = vadd.f32 %v8827, %v9232
        %v9265 = vadd.f32 %v8830, %v9235
        %v9266 = vadd.f32 %v8835, %v9240
        %v9267 = vadd.f32 %v8838, %v9243
        %v9268 = vadd.f32 %v8843, %v9248
        %v9269 = vadd.f32 %v8846, %v9251
        %vm9270 = vcmask 1042432
        %vm9271 = vcmask 1046532
        %vm9272 = vmor %vm9270, %vm9271
        %v9273 = vrot.slane %v251, 5
        %v9274 = vrot.slane %v9273, 4
        %v9275 = vrot.slane %v252, 5
        %v9276 = vsel %vm9272, %v9274, %v9275
        %v9277 = vrot.slane %v9275, 4
        %v9278 = vrot.slane %v253, 5
        %v9279 = vsel %vm9272, %v9277, %v9278
        %v9280 = vrot.slane %v254, 5
        %v9281 = vrot.slane %v9280, 4
        %v9282 = vrot.slane %v255, 5
        %v9283 = vsel %vm9272, %v9281, %v9282
        %v9284 = vrot.slane %v9282, 4
        %v9285 = vrot.slane %v256, 5
        %v9286 = vsel %vm9272, %v9284, %v9285
        %v9287 = vrot.slane %v257, 5
        %v9288 = vrot.slane %v9287, 4
        %v9289 = vrot.slane %v258, 5
        %v9290 = vsel %vm9272, %v9288, %v9289
        %v9291 = vrot.slane %v9289, 4
        %v9292 = vrot.slane %v259, 5
        %v9293 = vsel %vm9272, %v9291, %v9292
        %v9294 = vrot.slane %v260, 5
        %v9295 = vrot.slane %v9294, 4
        %v9296 = vrot.slane %v261, 5
        %v9297 = vsel %vm9272, %v9295, %v9296
        %v9298 = vrot.slane %v9296, 4
        %v9299 = vrot.slane %v262, 5
        %v9300 = vsel %vm9272, %v9298, %v9299
        %v9301 = vrot.slane %v263, 5
        %v9302 = vrot.slane %v9301, 4
        %v9303 = vrot.slane %v264, 5
        %v9304 = vsel %vm9272, %v9302, %v9303
        %v9305 = vrot.slane %v9303, 4
        %v9306 = vrot.slane %v265, 5
        %v9307 = vsel %vm9272, %v9305, %v9306
        %v9308 = vrot.slane %v266, 5
        %v9309 = vrot.slane %v9308, 4
        %v9310 = vrot.slane %v267, 5
        %v9311 = vsel %vm9272, %v9309, %v9310
        %v9312 = vrot.slane %v9310, 4
        %v9313 = vrot.slane %v268, 5
        %v9314 = vsel %vm9272, %v9312, %v9313
        %v9315 = vrot.slane %v269, 5
        %v9316 = vrot.slane %v9315, 4
        %v9317 = vrot.slane %v270, 5
        %v9318 = vsel %vm9272, %v9316, %v9317
        %v9319 = vrot.slane %v9317, 4
        %v9320 = vrot.slane %v271, 5
        %v9321 = vsel %vm9272, %v9319, %v9320
        %v9322 = vrot.slane %v272, 5
        %v9323 = vrot.slane %v9322, 4
        %v9324 = vrot.slane %v273, 5
        %v9325 = vsel %vm9272, %v9323, %v9324
        %v9326 = vrot.slane %v9324, 4
        %v9327 = vrot.slane %v274, 5
        %v9328 = vsel %vm9272, %v9326, %v9327
        %v9345 = vunpack.c.l.bf16 %v9276
        %v9346 = vunpack.c.l.bf16 %v9279
        %v9347 = vunpack.c.l.bf16 %v9283
        %v9348 = vunpack.c.l.bf16 %v9286
        %v9349 = vunpack.c.l.bf16 %v9290
        %v9350 = vunpack.c.l.bf16 %v9293
        %v9351 = vunpack.c.l.bf16 %v9297
        %v9352 = vunpack.c.l.bf16 %v9300
        %v9353 = vunpack.c.l.bf16 %v9304
        %v9354 = vunpack.c.l.bf16 %v9307
        %v9355 = vunpack.c.l.bf16 %v9311
        %v9356 = vunpack.c.l.bf16 %v9314
        %v9357 = vunpack.c.l.bf16 %v9318
        %v9358 = vunpack.c.l.bf16 %v9321
        %v9359 = vunpack.c.l.bf16 %v9325
        %v9360 = vunpack.c.l.bf16 %v9328
        %v9361 = vld [vmem:[%s4] sm:$0x1]
        %v9363 = vlaneseq
        %v9364 = vshrl.u32 %v9363, 7
        %v9365 = vsub.s32 0, %v9364
        %v9366 = vrot.slane %v9361, %v9365
        %v9368 = vadd.f32 %v9254, %v9366
        %v9369 = vadd.f32 %v9255, %v9366
        %v9370 = vadd.f32 %v9256, %v9366
        %v9371 = vadd.f32 %v9257, %v9366
        %v9372 = vadd.f32 %v9258, %v9366
        %v9373 = vadd.f32 %v9259, %v9366
        %v9374 = vadd.f32 %v9260, %v9366
        %v9375 = vadd.f32 %v9261, %v9366
        %v9376 = vadd.f32 %v9262, %v9366
        %v9377 = vadd.f32 %v9263, %v9366
        %v9378 = vadd.f32 %v9264, %v9366
        %v9379 = vadd.f32 %v9265, %v9366
        %v9380 = vadd.f32 %v9266, %v9366
        %v9381 = vadd.f32 %v9267, %v9366
        %v9382 = vadd.f32 %v9268, %v9366
        %v9383 = vadd.f32 %v9269, %v9366
        %v9384 = vadd.f32 %v9368, %v9345
        %v9385 = vadd.f32 %v9369, %v9346
        %v9386 = vadd.f32 %v9370, %v9347
        %v9387 = vadd.f32 %v9371, %v9348
        %v9388 = vadd.f32 %v9372, %v9349
        %v9389 = vadd.f32 %v9373, %v9350
        %v9390 = vadd.f32 %v9374, %v9351
        %v9391 = vadd.f32 %v9375, %v9352
        %v9392 = vadd.f32 %v9376, %v9353
        %v9393 = vadd.f32 %v9377, %v9354
        %v9394 = vadd.f32 %v9378, %v9355
        %v9395 = vadd.f32 %v9379, %v9356
        %v9396 = vadd.f32 %v9380, %v9357
        %v9397 = vadd.f32 %v9381, %v9358
        %v9398 = vadd.f32 %v9382, %v9359
        %v9399 = vadd.f32 %v9383, %v9360
        %v9400 = vmax.f32 %v9384, 0.0
        %v9401 = vmax.f32 %v9385, 0.0
        %v9402 = vmax.f32 %v9386, 0.0
        %v9403 = vmax.f32 %v9387, 0.0
        %v9404 = vmax.f32 %v9388, 0.0
        %v9405 = vmax.f32 %v9389, 0.0
        %v9406 = vmax.f32 %v9390, 0.0
        %v9407 = vmax.f32 %v9391, 0.0
        %v9408 = vmax.f32 %v9392, 0.0
        %v9409 = vmax.f32 %v9393, 0.0
        %v9410 = vmax.f32 %v9394, 0.0
        %v9411 = vmax.f32 %v9395, 0.0
        %v9412 = vmax.f32 %v9396, 0.0
        %v9413 = vmax.f32 %v9397, 0.0
        %v9414 = vmax.f32 %v9398, 0.0
        %v9415 = vmax.f32 %v9399, 0.0
        %v9416 = vpack.c.bf16 %v9401, %v9400
        %v9417 = vpack.c.bf16 %v9403, %v9402
        %v9418 = vpack.c.bf16 %v9405, %v9404
        %v9419 = vpack.c.bf16 %v9407, %v9406
        %v9420 = vpack.c.bf16 %v9409, %v9408
        %v9421 = vpack.c.bf16 %v9411, %v9410
        %v9422 = vpack.c.bf16 %v9413, %v9412
        %v9423 = vpack.c.bf16 %v9415, %v9414
        %v9432 = vunpack.c.l.b16 %v9416
        %v9433 = vunpack.c.h.b16 %v9416
        %v9434 = vunpack.c.l.b16 %v9417
        %v9435 = vunpack.c.h.b16 %v9417
        %v9436 = vunpack.c.l.b16 %v9418
        %v9437 = vunpack.c.h.b16 %v9418
        %v9438 = vunpack.c.l.b16 %v9419
        %v9439 = vunpack.c.h.b16 %v9419
        %v9440 = vunpack.c.l.b16 %v9420
        %v9441 = vunpack.c.h.b16 %v9420
        %v9442 = vunpack.c.l.b16 %v9421
        %v9443 = vunpack.c.h.b16 %v9421
        %v9444 = vunpack.c.l.b16 %v9422
        %v9445 = vunpack.c.h.b16 %v9422
        %v9446 = vunpack.c.l.b16 %v9423
        %v9447 = vunpack.c.h.b16 %v9423
        %v9448 = vpack.c.b16 %v9432, %v9432
        %v9449 = vpack.c.b16 %v9433, %v9433
        %v9450 = vpack.c.b16 %v9434, %v9434
        %v9451 = vpack.c.b16 %v9435, %v9435
        %v9452 = vpack.c.b16 %v9436, %v9436
        %v9453 = vpack.c.b16 %v9437, %v9437
        %v9454 = vpack.c.b16 %v9438, %v9438
        %v9455 = vpack.c.b16 %v9439, %v9439
        %v9456 = vpack.c.b16 %v9440, %v9440
        %v9457 = vpack.c.b16 %v9441, %v9441
        %v9458 = vpack.c.b16 %v9442, %v9442
        %v9459 = vpack.c.b16 %v9443, %v9443
        %v9460 = vpack.c.b16 %v9444, %v9444
        %v9461 = vpack.c.b16 %v9445, %v9445
        %v9462 = vpack.c.b16 %v9446, %v9446
        %v9463 = vpack.c.b16 %v9447, %v9447
        %9480 = vst [vmem:[%s220] sm:$0xf] %v9448
        %9481 = vst [vmem:[%s220 + $0x4] sm:$0xf] %v9449
        %9482 = vst [vmem:[%s220 + $0x8] sm:$0xf] %v9450
        %9483 = vst [vmem:[%s220 + $0xc] sm:$0xf] %v9451
        %9484 = vst [vmem:[%s220 + $0x10] sm:$0xf] %v9452
        %9485 = vst [vmem:[%s220 + $0x14] sm:$0xf] %v9453
        %9486 = vst [vmem:[%s220 + $0x18] sm:$0xf] %v9454
        %9487 = vst [vmem:[%s220 + $0x1c] sm:$0xf] %v9455
        %9488 = vst [vmem:[%s220 + $0x20] sm:$0xf] %v9456
        %9489 = vst [vmem:[%s220 + $0x24] sm:$0xf] %v9457
        %9490 = vst [vmem:[%s220 + $0x28] sm:$0xf] %v9458
        %9491 = vst [vmem:[%s220 + $0x2c] sm:$0xf] %v9459
        %9492 = vst [vmem:[%s220 + $0x30] sm:$0xf] %v9460
        %9493 = vst [vmem:[%s220 + $0x34] sm:$0xf] %v9461
        %9494 = vst [vmem:[%s220 + $0x38] sm:$0xf] %v9462
        %9495 = vst [vmem:[%s220 + $0x3c] sm:$0xf] %v9463
        %s9496 = sand.u32 %s127, 1
        %s9497 = scalar_lea.sflag [#allocation6], %s9496
        %s9498 = sand.u32 %s127, 1
        %s9499 = smul.addr %s9498, 64
        %s9500 = scalar_lea.vmem [#allocation9], %s9499
        // Predicated region
        $region49: #{tpu_custom_call.1} parent=35 // pred_check
          %p9501 = pneg %p137
        $region50: #{tpu_custom_call.1} parent=35 // pred_check_branch
          %9503 = sbr.rel (%p9501) target = $region52
        $region51: #{tpu_custom_call.1} parent=35 // pred_region
          %s9504 = smul.u32 8, %s26
          %s9506 = ssub.s32 1024, 1024
          %9507 = vsyncadd %s9497, %s9506
          %s9508 = smul.addr %s9504, 2
          %s9509 = smul.addr %s25, 32
          %s9510 = sadd.s32 %s9508, %s9509
          %s9511 = smul.addr %s9510, 64
          %s9512 = scalar_lea.hbm %s5, %s9511
          %s9513 = sshll.u32 %s9500, 4
          %s9514 = int_to_ptr.vmem [resolvable:$true] %s9513
          %9519 = dma.vmem_to_hbm [thread:$0]  %s9514, 1024, %s9512, %s9497, 64, 64, 4
        $region52: #{tpu_custom_call.1} parent=35 // pred_fallthru
          _
      $region36: #{tpu_custom_call.1} parent=5 // pred_fallthru
        _
      %p9520 = scmp.le.s32.totalorder 2, %s16
      // Predicated region
      $region53: #{tpu_custom_call.1} parent=5 // pred_check
        %p9521 = pneg %p9520
      $region54: #{tpu_custom_call.1} parent=5 // pred_check_branch
        %9523 = sbr.rel (%p9521) target = $region56
      $region55: #{tpu_custom_call.1} parent=5 // pred_region
        %s9524 = ssub.s32 %s16, 2
        // Predicated region
        $region57: #{tpu_custom_call.1} parent=55 // pred_check
          %p9525 = pneg %p143
        $region58: #{tpu_custom_call.1} parent=55 // pred_check_branch
          %9527 = sbr.rel (%p9525) target = $region60
        $region59: #{tpu_custom_call.1} parent=55 // pred_region
          %s9528 = sand.u32 %s128, 1
          %s9529 = scalar_lea.sflag [#allocation6], %s9528
          %s9530 = sand.u32 %s128, 1
          %s9531 = smul.addr %s9530, 64
          %s9532 = scalar_lea.vmem [#allocation9], %s9531
          %9533 = dma.done %s9529, 1024
        $region60: #{tpu_custom_call.1} parent=55 // pred_fallthru
          _
      $region56: #{tpu_custom_call.1} parent=5 // pred_fallthru
        _
    $region6: #{tpu_custom_call.1} parent=1 // loop_footer
      %s20 = sadd.s32 1, %s16
    $region7: #{tpu_custom_call.1} parent=1 // loop_footer_branch
      %15 = sbr.rel target = $region3
    $region8: #{tpu_custom_call.1} parent=1 // loop_exit
      _
    %9534 = vsyncpa [#allocation5], 1
    %s9535 = scalar_lea.sflag [#allocation5], 1
    %9536 = vsyncpa %s9535, 1
    %9537 = vsyncpa [#allocation8], 1
    %9538 = vsyncpa [#allocation6], 1
    %s9539 = scalar_lea.sflag [#allocation6], 1
    %9540 = vsyncpa %s9539, 1
  %9541 = vsyncmov [#allocation3]
  %s9542 = vpop.sfrf %9541
  %p9543 = scmp.eq.s32.totalorder %s9542, 0
  %p9544 = pneg %p9543
  %9546 = shalt.err (%p9544)

</llo_original>
